<compile_context>
chip_gen: v7x
topology: tpu7x:2x2x1
jax: 0.10.0
libtpu: 0.0.40
codegen_flags: <defaults>
</compile_context>

<pallas_src>
import functools
import math

import jax
import jax.numpy as jnp
from jax.experimental import pallas as pl
from jax.experimental.pallas import tpu as pltpu


# ----------------------------- helpers --------------------------------------

def _ln_f32(x, g, b, eps=1e-5):
    mean = jnp.mean(x, axis=-1, keepdims=True)
    var = jnp.mean(jnp.square(x - mean), axis=-1, keepdims=True)
    return (x - mean) * jax.lax.rsqrt(var + eps) * g + b


def _gelu_new_f32(h):
    # GPT-2 "gelu_new" (tanh approximation), f32.
    return 0.5 * h * (1.0 + jnp.tanh(0.7978845608028654 * (h + 0.044715 * h * h * h)))


def _split_tile(n, align, max_tile):
    """Largest tile <= max_tile that is a multiple of `align` and divides n."""
    t = min(max_tile, n)
    t -= t % align
    while t >= align:
        if n % t == 0:
            return t
        t -= align
    return n


def _choose_q_tile(s):
    for t in (64, 32, 16, 8):
        if s % t == 0:
            return t
    return s


# ------------------ fused full-stack transformer kernel ---------------------

def _stack_kernel(x_ref, ln1g, ln1b, wq, bq, wk, bk, wv, bv, wo, bo,
                  ln2g, ln2b, wfc, bfc, wfc2, bfc2, o_ref, *, n_head, q_tile):
    # grid = (B, L); one step == one (batch, layer) pair.  The residual stream
    # lives in o_ref (output block index constant over l => resident in VMEM).
    l = pl.program_id(1)

    @pl.when(l == 0)
    def _():
        o_ref[...] = x_ref[...]

    x = o_ref[0].astype(jnp.float32)                      # (S, D)
    S, D = x.shape
    hd = D // n_head

    # ---- LN1 (f32 stats) ----------------------------------------------------
    a = _ln_f32(x, ln1g[0], ln1b[0])
    ab = a.astype(jnp.bfloat16)

    # ---- causal additive biases per q-tile (hoisted out of the head loop) ---
    nqt = S // q_tile
    biases = []
    for i in range(nqt):
        kvlen = (i + 1) * q_tile
        r = jax.lax.broadcasted_iota(jnp.int32, (q_tile, kvlen), 0) + i * q_tile
        c = jax.lax.broadcasted_iota(jnp.int32, (q_tile, kvlen), 1)
        biases.append(jnp.where(c <= r, 0.0, -1e30).astype(jnp.float32))

    # ---- multi-head causal attention (head-major weights, no lane slices) ---
    attn = jnp.zeros((S, D), jnp.float32)
    for h in range(n_head):
        # scale already folded into wq/bq at prep time
        qh = (jnp.dot(ab, wq[0, h], preferred_element_type=jnp.float32)
              + bq[0, h]).astype(jnp.bfloat16)            # (S, hd)
        kh = (jnp.dot(ab, wk[0, h], preferred_element_type=jnp.float32)
              + bk[0, h]).astype(jnp.bfloat16)            # (S, hd)
        vh = (jnp.dot(ab, wv[0, h], preferred_element_type=jnp.float32)
              + bv[0, h]).astype(jnp.bfloat16)            # (S, hd)

        tiles = []
        for i in range(nqt):
            kvlen = (i + 1) * q_tile                      # skip keys > q rows
            s = jax.lax.dot_general(
                qh[i * q_tile:(i + 1) * q_tile, :], kh[:kvlen, :],
                dimension_numbers=(((1,), (1,)), ((), ())),
                preferred_element_type=jnp.float32) + biases[i]
            s = s - jnp.max(s, axis=-1, keepdims=True)
            p = jnp.exp(s)
            p = p * pl.reciprocal(jnp.sum(p, axis=-1, keepdims=True), approx=True)
            tiles.append(jnp.dot(p.astype(jnp.bfloat16), vh[:kvlen, :],
                                 preferred_element_type=jnp.float32))
        oh = tiles[0] if nqt == 1 else jnp.concatenate(tiles, axis=0)  # (S, hd)
        # per-head accumulation into the out-projection (no lane concat)
        attn = attn + jnp.dot(oh.astype(jnp.bfloat16), wo[0, h],
                              preferred_element_type=jnp.float32)

    x = x + attn + bo[0]

    # ---- LN2 + MLP (GELU) + residual ----------------------------------------
    m = _ln_f32(x, ln2g[0], ln2b[0])
    hmid = jnp.dot(m.astype(jnp.bfloat16), wfc[0],
                   preferred_element_type=jnp.float32) + bfc[0]
    hmid = _gelu_new_f32(hmid)
    x = x + jnp.dot(hmid.astype(jnp.bfloat16), wfc2[0],
                    preferred_element_type=jnp.float32) + bfc2[0]

    o_ref[0] = x.astype(o_ref.dtype)


def transformer_stack(x, p, n_head):
    B, S, D = x.shape
    L, H, _, hd = p["wq"].shape
    F = p["wfc"].shape[2]
    q_tile = _choose_q_tile(S)

    def layer_spec(arr):
        blk = (1,) + arr.shape[1:]
        if arr.ndim == 3:
            return pl.BlockSpec(blk, lambda b, l: (l, 0, 0))
        return pl.BlockSpec(blk, lambda b, l: (l, 0, 0, 0))

    in_specs = [
        pl.BlockSpec((1, S, D), lambda b, l: (b, 0, 0)),   # x (fetched once / b)
        layer_spec(p["ln1_g"]), layer_spec(p["ln1_b"]),
        layer_spec(p["wq"]), layer_spec(p["bq"]),
        layer_spec(p["wk"]), layer_spec(p["bk"]),
        layer_spec(p["wv"]), layer_spec(p["bv"]),
        layer_spec(p["wo"]), layer_spec(p["bo"]),
        layer_spec(p["ln2_g"]), layer_spec(p["ln2_b"]),
        layer_spec(p["wfc"]), layer_spec(p["bfc"]),
        layer_spec(p["wfc2"]), layer_spec(p["bfc2"]),
    ]
    return pl.pallas_call(
        functools.partial(_stack_kernel, n_head=H, q_tile=q_tile),
        grid=(B, L),
        in_specs=in_specs,
        out_specs=pl.BlockSpec((1, S, D), lambda b, l: (b, 0, 0)),
        out_shape=jax.ShapeDtypeStruct((B, S, D), jnp.float32),
        compiler_params=pltpu.CompilerParams(
            dimension_semantics=("parallel", "arbitrary")),
    )(x, p["ln1_g"], p["ln1_b"], p["wq"], p["bq"], p["wk"], p["bk"],
      p["wv"], p["bv"], p["wo"], p["bo"], p["ln2_g"], p["ln2_b"],
      p["wfc"], p["bfc"], p["wfc2"], p["bfc2"])


# -------------------- fused final-LN + tied lm_head --------------------------

def _lmhead_kernel(x_ref, g_ref, b_ref, wte_ref, o_ref, y_scr):
    # Final LN + bf16 cast computed once per row tile (vocab axis innermost).
    @pl.when(pl.program_id(1) == 0)
    def _():
        xf = x_ref[...].astype(jnp.float32)
        y_scr[...] = _ln_f32(xf, g_ref[...], b_ref[...]).astype(jnp.bfloat16)

    # logits_tile = LN(x_tile) @ wte_tile^T (no transpose materialized).
    o_ref[...] = jax.lax.dot_general(
        y_scr[...], wte_ref[...],
        dimension_numbers=(((1,), (1,)), ((), ())),
        preferred_element_type=jnp.float32).astype(o_ref.dtype)


def lm_head(x, g, b, wte):
    M, D = x.shape
    V = wte.shape[0]
    tm = _split_tile(M, 8, 256)      # row tile (sublane-aligned, MXU rows)
    tv = _split_tile(V, 128, 512)    # vocab tile (lane-dense)
    grid = (M // tm, V // tv)
    return pl.pallas_call(
        _lmhead_kernel,
        grid=grid,
        in_specs=[
            pl.BlockSpec((tm, D), lambda i, j: (i, 0)),
            pl.BlockSpec((1, D), lambda i, j: (0, 0)),
            pl.BlockSpec((1, D), lambda i, j: (0, 0)),
            pl.BlockSpec((tv, D), lambda i, j: (j, 0)),
        ],
        out_specs=pl.BlockSpec((tm, tv), lambda i, j: (i, j)),
        out_shape=jax.ShapeDtypeStruct((M, V), jnp.float32),
        scratch_shapes=[pltpu.VMEM((tm, D), jnp.bfloat16)],
        compiler_params=pltpu.CompilerParams(
            dimension_semantics=("parallel", "arbitrary")),
    )(x, g, b, wte)


# ------------------------- parameter construction ----------------------------

def init_params(key, vocab, max_pos, d_model, n_head, d_ff, n_layer):
    """Canonical GPT-2-layout parameters (what the PyTorch module holds)."""
    def nrm(k, shape, std=0.02, dtype=jnp.float32):
        return (std * jax.random.normal(k, shape, dtype=jnp.float32)).astype(dtype)

    keys = jax.random.split(key, 2 + n_layer)
    params = {
        # MXU operand weights stored in bf16; biases / LN params in f32.
        "wte": nrm(keys[0], (vocab, d_model), dtype=jnp.bfloat16),
        "wpe": nrm(keys[1], (max_pos, d_model)),
        "lnf_g": jnp.ones((1, d_model), jnp.float32),
        "lnf_b": jnp.zeros((1, d_model), jnp.float32),
        "layers": [],
    }
    for li in range(n_layer):
        k0, k1, k2, k3, k4, k5, k6, k7 = jax.random.split(keys[2 + li], 8)
        params["layers"].append({
            "ln1_g": jnp.ones((1, d_model), jnp.float32),
            "ln1_b": jnp.zeros((1, d_model), jnp.float32),
            "attn_w": nrm(k0, (d_model, 3 * d_model), dtype=jnp.bfloat16),
            "attn_b": nrm(k1, (1, 3 * d_model)),
            "proj_w": nrm(k2, (d_model, d_model), dtype=jnp.bfloat16),
            "proj_b": nrm(k3, (1, d_model)),
            "ln2_g": jnp.ones((1, d_model), jnp.float32),
            "ln2_b": jnp.zeros((1, d_model), jnp.float32),
            "fc_w": nrm(k4, (d_model, d_ff), dtype=jnp.bfloat16),
            "fc_b": nrm(k5, (1, d_ff)),
            "fc2_w": nrm(k6, (d_ff, d_model), dtype=jnp.bfloat16),
            "fc2_b": nrm(k7, (1, d_model)),
        })
    return params


def prepare_params(params, n_head):
    """Stack layers (leading L dim), split QKV head-major, fold the q scale."""
    V, D = params["wte"].shape
    assert D % n_head == 0
    hd = D // n_head
    scale = 1.0 / math.sqrt(hd)
    L = len(params["layers"])

    def stack(name):
        return jnp.stack([lyr[name] for lyr in params["layers"]])

    attn_w = stack("attn_w").astype(jnp.float32)          # (L, D, 3D)
    attn_b = stack("attn_b").astype(jnp.float32)          # (L, 1, 3D)

    def hm_w(w):                                          # (L, D, D) -> (L,H,D,hd)
        return w.reshape(L, D, n_head, hd).transpose(0, 2, 1, 3)

    def hm_b(b):                                          # (L, 1, D) -> (L,H,1,hd)
        return b.reshape(L, n_head, hd)[:, :, None, :]

    prep = {
        "wte": params["wte"],                             # (V, D) bf16
        "wpe": params["wpe"],                             # (P, D) f32
        "lnf_g": params["lnf_g"], "lnf_b": params["lnf_b"],
        "ln1_g": stack("ln1_g"), "ln1_b": stack("ln1_b"),
        "wq": hm_w(attn_w[:, :, 0:D] * scale).astype(jnp.bfloat16),
        "bq": hm_b(attn_b[:, :, 0:D] * scale),
        "wk": hm_w(attn_w[:, :, D:2 * D]).astype(jnp.bfloat16),
        "bk": hm_b(attn_b[:, :, D:2 * D]),
        "wv": hm_w(attn_w[:, :, 2 * D:3 * D]).astype(jnp.bfloat16),
        "bv": hm_b(attn_b[:, :, 2 * D:3 * D]),
        "wo": stack("proj_w").reshape(L, n_head, hd, D),  # bf16, head-major rows
        "bo": stack("proj_b"),
        "ln2_g": stack("ln2_g"), "ln2_b": stack("ln2_b"),
        "wfc": stack("fc_w"), "bfc": stack("fc_b"),
        "wfc2": stack("fc2_w"), "bfc2": stack("fc2_b"),
    }
    return prep


# ------------------------------ model wrapper --------------------------------

def pretrained_decoder_forward(prep, token_ids, n_head):
    """Equivalent of PretrainedDecoder.forward: returns (logits, {})."""
    B, S = token_ids.shape
    V, D = prep["wte"].shape

    # Embedding lookup + position embedding (plain-JAX gather glue).
    # TODO(synk): the decode()/past_key_values kv-cache path is not implemented
    # (forward() under translation does not use it).
    x = prep["wte"][token_ids].astype(jnp.float32) + prep["wpe"][:S][None, :, :]

    x = transformer_stack(x, prep, n_head)                # ONE fused pallas_call
    logits = lm_head(x.reshape(B * S, D), prep["lnf_g"], prep["lnf_b"],
                     prep["wte"])                          # fused final LN + head
    return logits.reshape(B, S, V), {}


# ------------------------- pure-JAX reference --------------------------------

def reference_forward(params, token_ids, n_head):
    B, S = token_ids.shape
    V, D = params["wte"].shape
    hd = D // n_head
    wte = params["wte"].astype(jnp.float32)

    def ln(x, g, b):
        m = jnp.mean(x, -1, keepdims=True)
        v = jnp.mean((x - m) ** 2, -1, keepdims=True)
        return (x - m) * jax.lax.rsqrt(v + 1e-5) * g + b

    x = wte[token_ids] + params["wpe"][:S][None, :, :]
    for layer in params["layers"]:
        a = ln(x, layer["ln1_g"], layer["ln1_b"])
        qkv = a @ layer["attn_w"].astype(jnp.float32) + layer["attn_b"]
        q, k, v = jnp.split(qkv, 3, axis=-1)
        q = q.reshape(B, S, n_head, hd).transpose(0, 2, 1, 3) * (1.0 / math.sqrt(hd))
        k = k.reshape(B, S, n_head, hd).transpose(0, 2, 1, 3)
        v = v.reshape(B, S, n_head, hd).transpose(0, 2, 1, 3)
        s = q @ k.transpose(0, 1, 3, 2)
        mask = jnp.tril(jnp.ones((S, S), bool))
        s = jnp.where(mask, s, -1e30)
        p = jax.nn.softmax(s, axis=-1)
        o = (p @ v).transpose(0, 2, 1, 3).reshape(B, S, D)
        x = x + o @ layer["proj_w"].astype(jnp.float32) + layer["proj_b"]
        m_ = ln(x, layer["ln2_g"], layer["ln2_b"])
        h = m_ @ layer["fc_w"].astype(jnp.float32) + layer["fc_b"]
        h = 0.5 * h * (1.0 + jnp.tanh(0.7978845608028654 * (h + 0.044715 * h ** 3)))
        x = x + h @ layer["fc2_w"].astype(jnp.float32) + layer["fc2_b"]
    x = ln(x, params["lnf_g"], params["lnf_b"])
    return x @ wte.T


# ---------------------------------- main -------------------------------------

if __name__ == "__main__":
    # Small but TPU-friendly synthetic config (lane-dense dims); B=4 / V=1024
    # so the lm_head (2,2) grid exercises the scratch-hoist path and the block
    # kernel gets a multi-step parallel batch axis.
    B, S = 4, 128
    VOCAB, MAX_POS = 1024, 128
    D_MODEL, N_HEAD, D_FF, N_LAYER = 128, 4, 512, 2

    key = jax.random.PRNGKey(0)
    kp, kt = jax.random.split(key)
    params = init_params(kp, VOCAB, MAX_POS, D_MODEL, N_HEAD, D_FF, N_LAYER)
    prep = prepare_params(params, N_HEAD)
    token_ids = jax.random.randint(kt, (B, S), 0, VOCAB, dtype=jnp.int32)

    fwd = jax.jit(lambda p, t: pretrained_decoder_forward(p, t, N_HEAD))
    logits, extras = fwd(prep, token_ids)
    jax.block_until_ready(logits)

    assert logits.shape == (B, S, VOCAB), logits.shape
    assert extras == {}

    # Loose-tolerance check vs. a pure-JAX f32 reference (kernel uses bf16 MXU
    # operands with f32 accumulation + approx reciprocal in softmax).
    ref = jax.jit(lambda p, t: reference_forward(p, t, N_HEAD))(params, token_ids)
    ref = ref.reshape(B, S, VOCAB)
    max_err = float(jnp.max(jnp.abs(logits - ref)))
    assert max_err < 5e-2, f"max |pallas - reference| = {max_err}"

    print("KERNEL_OK")
</pallas_src>

<mosaic_0001>
module attributes {stable_mosaic.version = 11 : i64} {
  func.func @_stack_kernel(%arg0: i32, %arg1: i32, %arg2: memref<1x128x128xf32, #tpu.memory_space<vmem>>, %arg3: memref<1x1x128xf32, #tpu.memory_space<vmem>>, %arg4: memref<1x1x128xf32, #tpu.memory_space<vmem>>, %arg5: memref<1x4x128x32xbf16, #tpu.memory_space<vmem>>, %arg6: memref<1x4x1x32xf32, #tpu.memory_space<vmem>>, %arg7: memref<1x4x128x32xbf16, #tpu.memory_space<vmem>>, %arg8: memref<1x4x1x32xf32, #tpu.memory_space<vmem>>, %arg9: memref<1x4x128x32xbf16, #tpu.memory_space<vmem>>, %arg10: memref<1x4x1x32xf32, #tpu.memory_space<vmem>>, %arg11: memref<1x4x32x128xbf16, #tpu.memory_space<vmem>>, %arg12: memref<1x1x128xf32, #tpu.memory_space<vmem>>, %arg13: memref<1x1x128xf32, #tpu.memory_space<vmem>>, %arg14: memref<1x1x128xf32, #tpu.memory_space<vmem>>, %arg15: memref<1x128x512xbf16, #tpu.memory_space<vmem>>, %arg16: memref<1x1x512xf32, #tpu.memory_space<vmem>>, %arg17: memref<1x512x128xbf16, #tpu.memory_space<vmem>>, %arg18: memref<1x1x128xf32, #tpu.memory_space<vmem>>, %arg19: memref<1x128x128xf32, #tpu.memory_space<vmem>>) attributes {dimension_semantics = [#tpu.dimension_semantics<parallel>, #tpu.dimension_semantics<arbitrary>], iteration_bounds = array<i64: 4, 2>, scalar_prefetch = 0 : i64, scratch_operands = 0 : i64, tpu.core_type = #tpu.core_type<tc>, window_params = [{transform_indices = @transform_0, window_bounds = array<i64: 1, 128, 128>}, {transform_indices = @transform_1, window_bounds = array<i64: 1, 1, 128>}, {transform_indices = @transform_2, window_bounds = array<i64: 1, 1, 128>}, {transform_indices = @transform_3, window_bounds = array<i64: 1, 4, 128, 32>}, {transform_indices = @transform_4, window_bounds = array<i64: 1, 4, 1, 32>}, {transform_indices = @transform_5, window_bounds = array<i64: 1, 4, 128, 32>}, {transform_indices = @transform_6, window_bounds = array<i64: 1, 4, 1, 32>}, {transform_indices = @transform_7, window_bounds = array<i64: 1, 4, 128, 32>}, {transform_indices = @transform_8, window_bounds = array<i64: 1, 4, 1, 32>}, {transform_indices = @transform_9, window_bounds = array<i64: 1, 4, 32, 128>}, {transform_indices = @transform_10, window_bounds = array<i64: 1, 1, 128>}, {transform_indices = @transform_11, window_bounds = array<i64: 1, 1, 128>}, {transform_indices = @transform_12, window_bounds = array<i64: 1, 1, 128>}, {transform_indices = @transform_13, window_bounds = array<i64: 1, 128, 512>}, {transform_indices = @transform_14, window_bounds = array<i64: 1, 1, 512>}, {transform_indices = @transform_15, window_bounds = array<i64: 1, 512, 128>}, {transform_indices = @transform_16, window_bounds = array<i64: 1, 1, 128>}, {transform_indices = @transform_17, window_bounds = array<i64: 1, 128, 128>}]} {
    %c0_i32 = arith.constant 0 : i32
    %0 = arith.cmpi eq, %arg1, %c0_i32 : i32
    %1 = arith.extui %0 : i1 to i32
    %c0_i32_0 = arith.constant 0 : i32
    %2 = arith.cmpi ne, %1, %c0_i32_0 : i32
    scf.if %2 {
      %c0_211 = arith.constant 0 : index
      %c0_212 = arith.constant 0 : index
      %c0_213 = arith.constant 0 : index
      %361 = vector.load %arg2[%c0_211, %c0_212, %c0_213] : memref<1x128x128xf32, #tpu.memory_space<vmem>>, vector<1x128x128xf32>
      %c0_214 = arith.constant 0 : index
      %c0_215 = arith.constant 0 : index
      %c0_216 = arith.constant 0 : index
      %362 = vector.load %arg19[%c0_214, %c0_215, %c0_216] : memref<1x128x128xf32, #tpu.memory_space<vmem>>, vector<1x128x128xf32>
      tpu.vector_store %arg19[%c0_214, %c0_215, %c0_216], %361 {strides = array<i32>} : memref<1x128x128xf32, #tpu.memory_space<vmem>>, vector<1x128x128xf32>,
    } else {
    }
    %c0 = arith.constant 0 : index
    %c0_1 = arith.constant 0 : index
    %c0_2 = arith.constant 0 : index
    %3 = vector.load %arg19[%c0, %c0_1, %c0_2] : memref<1x128x128xf32, #tpu.memory_space<vmem>>, vector<1x128x128xf32>
    %4 = vector.shape_cast %3 : vector<1x128x128xf32> to vector<128x128xf32>
    %c0_3 = arith.constant 0 : index
    %c0_4 = arith.constant 0 : index
    %c0_5 = arith.constant 0 : index
    %5 = vector.load %arg3[%c0_3, %c0_4, %c0_5] : memref<1x1x128xf32, #tpu.memory_space<vmem>>, vector<1x1x128xf32>
    %6 = vector.shape_cast %5 : vector<1x1x128xf32> to vector<1x128xf32>
    %c0_6 = arith.constant 0 : index
    %c0_7 = arith.constant 0 : index
    %c0_8 = arith.constant 0 : index
    %7 = vector.load %arg4[%c0_6, %c0_7, %c0_8] : memref<1x1x128xf32, #tpu.memory_space<vmem>>, vector<1x1x128xf32>
    %8 = vector.shape_cast %7 : vector<1x1x128xf32> to vector<1x128xf32>
    %cst = arith.constant dense<0.000000e+00> : vector<128xf32>
    %9 = vector.multi_reduction <add>, %4, %cst [1] : vector<128x128xf32> to vector<128xf32>
    %10 = vector.shape_cast %9 : vector<128xf32> to vector<128x1xf32>
    %cst_9 = arith.constant 1.280000e+02 : f32
    %11 = vector.broadcast %cst_9 : f32 to vector<128x1xf32>
    %12 = arith.divf %10, %11 : vector<128x1xf32>
    %13 = vector.broadcast %12 : vector<128x1xf32> to vector<128x128xf32>
    %14 = arith.subf %4, %13 : vector<128x128xf32>
    %15 = arith.mulf %14, %14 : vector<128x128xf32>
    %cst_10 = arith.constant dense<0.000000e+00> : vector<128xf32>
    %16 = vector.multi_reduction <add>, %15, %cst_10 [1] : vector<128x128xf32> to vector<128xf32>
    %17 = vector.shape_cast %16 : vector<128xf32> to vector<128x1xf32>
    %cst_11 = arith.constant 1.280000e+02 : f32
    %18 = vector.broadcast %cst_11 : f32 to vector<128x1xf32>
    %19 = arith.divf %17, %18 : vector<128x1xf32>
    %20 = vector.broadcast %12 : vector<128x1xf32> to vector<128x128xf32>
    %21 = arith.subf %4, %20 : vector<128x128xf32>
    %cst_12 = arith.constant 9.99999974E-6 : f32
    %22 = vector.broadcast %cst_12 : f32 to vector<128x1xf32>
    %23 = arith.addf %19, %22 : vector<128x1xf32>
    %24 = math.rsqrt %23 : vector<128x1xf32>
    %25 = vector.broadcast %24 : vector<128x1xf32> to vector<128x128xf32>
    %26 = arith.mulf %21, %25 : vector<128x128xf32>
    %27 = vector.broadcast %6 : vector<1x128xf32> to vector<128x128xf32>
    %28 = arith.mulf %26, %27 : vector<128x128xf32>
    %29 = vector.broadcast %8 : vector<1x128xf32> to vector<128x128xf32>
    %30 = arith.addf %28, %29 : vector<128x128xf32>
    %31 = arith.truncf %30 : vector<128x128xf32> to vector<128x128xbf16>
    %32 = tpu.iota {dimensions = array<i32: 0>} : vector<64x64xi32>
    %c0_i32_13 = arith.constant 0 : i32
    %33 = vector.broadcast %c0_i32_13 : i32 to vector<64x64xi32>
    %34 = arith.addi %32, %33 : vector<64x64xi32>
    %35 = tpu.iota {dimensions = array<i32: 1>} : vector<64x64xi32>
    %36 = arith.cmpi sle, %35, %34 : vector<64x64xi32>
    %cst_14 = arith.constant 0.000000e+00 : f32
    %cst_15 = arith.constant -1.000000e+30 : f32
    %37 = vector.broadcast %cst_14 : f32 to vector<64x64xf32>
    %38 = vector.broadcast %cst_15 : f32 to vector<64x64xf32>
    %39 = arith.select %36, %37, %38 : vector<64x64xi1>, vector<64x64xf32>
    %40 = tpu.iota {dimensions = array<i32: 0>} : vector<64x128xi32>
    %c64_i32 = arith.constant 64 : i32
    %41 = vector.broadcast %c64_i32 : i32 to vector<64x128xi32>
    %42 = arith.addi %40, %41 : vector<64x128xi32>
    %43 = tpu.iota {dimensions = array<i32: 1>} : vector<64x128xi32>
    %44 = arith.cmpi sle, %43, %42 : vector<64x128xi32>
    %cst_16 = arith.constant 0.000000e+00 : f32
    %cst_17 = arith.constant -1.000000e+30 : f32
    %45 = vector.broadcast %cst_16 : f32 to vector<64x128xf32>
    %46 = vector.broadcast %cst_17 : f32 to vector<64x128xf32>
    %47 = arith.select %44, %45, %46 : vector<64x128xi1>, vector<64x128xf32>
    %cst_18 = arith.constant 0.000000e+00 : f32
    %48 = vector.broadcast %cst_18 : f32 to vector<128x128xf32>
    %c0_19 = arith.constant 0 : index
    %c0_20 = arith.constant 0 : index
    %c0_21 = arith.constant 0 : index
    %c0_22 = arith.constant 0 : index
    %49 = vector.load %arg5[%c0_19, %c0_20, %c0_21, %c0_22] : memref<1x4x128x32xbf16, #tpu.memory_space<vmem>>, vector<1x1x128x32xbf16>
    %50 = vector.shape_cast %49 : vector<1x1x128x32xbf16> to vector<128x32xbf16>
    %cst_23 = arith.constant dense<0.000000e+00> : vector<128x32xf32>
    %51 = tpu.matmul %31, %50, %cst_23 {dimension_numbers = #tpu.dot_dimension_numbers<[1], [0], [0], [1], [0, 0, 1, 1], [], []>} : vector<128x128xbf16>, vector<128x32xbf16>, vector<128x32xf32> -> vector<128x32xf32>
    %c0_24 = arith.constant 0 : index
    %c0_25 = arith.constant 0 : index
    %c0_26 = arith.constant 0 : index
    %c0_27 = arith.constant 0 : index
    %52 = vector.load %arg6[%c0_24, %c0_25, %c0_26, %c0_27] : memref<1x4x1x32xf32, #tpu.memory_space<vmem>>, vector<1x1x1x32xf32>
    %53 = vector.shape_cast %52 : vector<1x1x1x32xf32> to vector<1x32xf32>
    %54 = vector.broadcast %53 : vector<1x32xf32> to vector<128x32xf32>
    %55 = arith.addf %51, %54 : vector<128x32xf32>
    %56 = arith.truncf %55 : vector<128x32xf32> to vector<128x32xbf16>
    %c0_28 = arith.constant 0 : index
    %c0_29 = arith.constant 0 : index
    %c0_30 = arith.constant 0 : index
    %c0_31 = arith.constant 0 : index
    %57 = vector.load %arg7[%c0_28, %c0_29, %c0_30, %c0_31] : memref<1x4x128x32xbf16, #tpu.memory_space<vmem>>, vector<1x1x128x32xbf16>
    %58 = vector.shape_cast %57 : vector<1x1x128x32xbf16> to vector<128x32xbf16>
    %cst_32 = arith.constant dense<0.000000e+00> : vector<128x32xf32>
    %59 = tpu.matmul %31, %58, %cst_32 {dimension_numbers = #tpu.dot_dimension_numbers<[1], [0], [0], [1], [0, 0, 1, 1], [], []>} : vector<128x128xbf16>, vector<128x32xbf16>, vector<128x32xf32> -> vector<128x32xf32>
    %c0_33 = arith.constant 0 : index
    %c0_34 = arith.constant 0 : index
    %c0_35 = arith.constant 0 : index
    %c0_36 = arith.constant 0 : index
    %60 = vector.load %arg8[%c0_33, %c0_34, %c0_35, %c0_36] : memref<1x4x1x32xf32, #tpu.memory_space<vmem>>, vector<1x1x1x32xf32>
    %61 = vector.shape_cast %60 : vector<1x1x1x32xf32> to vector<1x32xf32>
    %62 = vector.broadcast %61 : vector<1x32xf32> to vector<128x32xf32>
    %63 = arith.addf %59, %62 : vector<128x32xf32>
    %64 = arith.truncf %63 : vector<128x32xf32> to vector<128x32xbf16>
    %c0_37 = arith.constant 0 : index
    %c0_38 = arith.constant 0 : index
    %c0_39 = arith.constant 0 : index
    %c0_40 = arith.constant 0 : index
    %65 = vector.load %arg9[%c0_37, %c0_38, %c0_39, %c0_40] : memref<1x4x128x32xbf16, #tpu.memory_space<vmem>>, vector<1x1x128x32xbf16>
    %66 = vector.shape_cast %65 : vector<1x1x128x32xbf16> to vector<128x32xbf16>
    %cst_41 = arith.constant dense<0.000000e+00> : vector<128x32xf32>
    %67 = tpu.matmul %31, %66, %cst_41 {dimension_numbers = #tpu.dot_dimension_numbers<[1], [0], [0], [1], [0, 0, 1, 1], [], []>} : vector<128x128xbf16>, vector<128x32xbf16>, vector<128x32xf32> -> vector<128x32xf32>
    %c0_42 = arith.constant 0 : index
    %c0_43 = arith.constant 0 : index
    %c0_44 = arith.constant 0 : index
    %c0_45 = arith.constant 0 : index
    %68 = vector.load %arg10[%c0_42, %c0_43, %c0_44, %c0_45] : memref<1x4x1x32xf32, #tpu.memory_space<vmem>>, vector<1x1x1x32xf32>
    %69 = vector.shape_cast %68 : vector<1x1x1x32xf32> to vector<1x32xf32>
    %70 = vector.broadcast %69 : vector<1x32xf32> to vector<128x32xf32>
    %71 = arith.addf %67, %70 : vector<128x32xf32>
    %72 = arith.truncf %71 : vector<128x32xf32> to vector<128x32xbf16>
    %73 = vector.extract_strided_slice %56 {offsets = [0, 0], sizes = [64, 32], strides = [1, 1]} : vector<128x32xbf16> to vector<64x32xbf16>
    %74 = vector.extract_strided_slice %64 {offsets = [0, 0], sizes = [64, 32], strides = [1, 1]} : vector<128x32xbf16> to vector<64x32xbf16>
    %cst_46 = arith.constant dense<0.000000e+00> : vector<64x64xf32>
    %75 = tpu.matmul %73, %74, %cst_46 {dimension_numbers = #tpu.dot_dimension_numbers<[1], [1], [0], [0], [0, 0, 1, 0], [], []>} : vector<64x32xbf16>, vector<64x32xbf16>, vector<64x64xf32> -> vector<64x64xf32>
    %76 = arith.addf %75, %39 : vector<64x64xf32>
    %cst_47 = arith.constant dense<0xFF800000> : vector<64xf32>
    %77 = vector.multi_reduction <maximumf>, %76, %cst_47 [1] : vector<64x64xf32> to vector<64xf32>
    %78 = vector.shape_cast %77 : vector<64xf32> to vector<64x1xf32>
    %79 = vector.broadcast %78 : vector<64x1xf32> to vector<64x64xf32>
    %80 = arith.subf %76, %79 : vector<64x64xf32>
    %81 = math.exp %80 : vector<64x64xf32>
    %cst_48 = arith.constant dense<0.000000e+00> : vector<64xf32>
    %82 = vector.multi_reduction <add>, %81, %cst_48 [1] : vector<64x64xf32> to vector<64xf32>
    %83 = vector.shape_cast %82 : vector<64xf32> to vector<64x1xf32>
    %84 = tpu.reciprocal %83 {approx = true} : vector<64x1xf32> -> vector<64x1xf32>
    %85 = vector.broadcast %84 : vector<64x1xf32> to vector<64x64xf32>
    %86 = arith.mulf %81, %85 : vector<64x64xf32>
    %87 = arith.truncf %86 : vector<64x64xf32> to vector<64x64xbf16>
    %88 = vector.extract_strided_slice %72 {offsets = [0, 0], sizes = [64, 32], strides = [1, 1]} : vector<128x32xbf16> to vector<64x32xbf16>
    %cst_49 = arith.constant dense<0.000000e+00> : vector<64x32xf32>
    %89 = tpu.matmul %87, %88, %cst_49 {dimension_numbers = #tpu.dot_dimension_numbers<[1], [0], [0], [1], [0, 0, 1, 1], [], []>} : vector<64x64xbf16>, vector<64x32xbf16>, vector<64x32xf32> -> vector<64x32xf32>
    %90 = vector.extract_strided_slice %56 {offsets = [64, 0], sizes = [64, 32], strides = [1, 1]} : vector<128x32xbf16> to vector<64x32xbf16>
    %cst_50 = arith.constant dense<0.000000e+00> : vector<64x128xf32>
    %91 = tpu.matmul %90, %64, %cst_50 {dimension_numbers = #tpu.dot_dimension_numbers<[1], [1], [0], [0], [0, 0, 1, 0], [], []>} : vector<64x32xbf16>, vector<128x32xbf16>, vector<64x128xf32> -> vector<64x128xf32>
    %92 = arith.addf %91, %47 : vector<64x128xf32>
    %cst_51 = arith.constant dense<0xFF800000> : vector<64xf32>
    %93 = vector.multi_reduction <maximumf>, %92, %cst_51 [1] : vector<64x128xf32> to vector<64xf32>
    %94 = vector.shape_cast %93 : vector<64xf32> to vector<64x1xf32>
    %95 = vector.broadcast %94 : vector<64x1xf32> to vector<64x128xf32>
    %96 = arith.subf %92, %95 : vector<64x128xf32>
    %97 = math.exp %96 : vector<64x128xf32>
    %cst_52 = arith.constant dense<0.000000e+00> : vector<64xf32>
    %98 = vector.multi_reduction <add>, %97, %cst_52 [1] : vector<64x128xf32> to vector<64xf32>
    %99 = vector.shape_cast %98 : vector<64xf32> to vector<64x1xf32>
    %100 = tpu.reciprocal %99 {approx = true} : vector<64x1xf32> -> vector<64x1xf32>
    %101 = vector.broadcast %100 : vector<64x1xf32> to vector<64x128xf32>
    %102 = arith.mulf %97, %101 : vector<64x128xf32>
    %103 = arith.truncf %102 : vector<64x128xf32> to vector<64x128xbf16>
    %cst_53 = arith.constant dense<0.000000e+00> : vector<64x32xf32>
    %104 = tpu.matmul %103, %72, %cst_53 {dimension_numbers = #tpu.dot_dimension_numbers<[1], [0], [0], [1], [0, 0, 1, 1], [], []>} : vector<64x128xbf16>, vector<128x32xbf16>, vector<64x32xf32> -> vector<64x32xf32>
    %105 = tpu.concatenate %89, %104 in 0 : vector<64x32xf32>, vector<64x32xf32> -> vector<128x32xf32>
    %106 = arith.truncf %105 : vector<128x32xf32> to vector<128x32xbf16>
    %c0_54 = arith.constant 0 : index
    %c0_55 = arith.constant 0 : index
    %c0_56 = arith.constant 0 : index
    %c0_57 = arith.constant 0 : index
    %107 = vector.load %arg11[%c0_54, %c0_55, %c0_56, %c0_57] : memref<1x4x32x128xbf16, #tpu.memory_space<vmem>>, vector<1x1x32x128xbf16>
    %108 = vector.shape_cast %107 : vector<1x1x32x128xbf16> to vector<32x128xbf16>
    %cst_58 = arith.constant dense<0.000000e+00> : vector<128x128xf32>
    %109 = tpu.matmul %106, %108, %cst_58 {dimension_numbers = #tpu.dot_dimension_numbers<[1], [0], [0], [1], [0, 0, 1, 1], [], []>} : vector<128x32xbf16>, vector<32x128xbf16>, vector<128x128xf32> -> vector<128x128xf32>
    %110 = arith.addf %48, %109 : vector<128x128xf32>
    %c0_59 = arith.constant 0 : index
    %c1 = arith.constant 1 : index
    %c0_60 = arith.constant 0 : index
    %c0_61 = arith.constant 0 : index
    %111 = vector.load %arg5[%c0_59, %c1, %c0_60, %c0_61] : memref<1x4x128x32xbf16, #tpu.memory_space<vmem>>, vector<1x1x128x32xbf16>
    %112 = vector.shape_cast %111 : vector<1x1x128x32xbf16> to vector<128x32xbf16>
    %cst_62 = arith.constant dense<0.000000e+00> : vector<128x32xf32>
    %113 = tpu.matmul %31, %112, %cst_62 {dimension_numbers = #tpu.dot_dimension_numbers<[1], [0], [0], [1], [0, 0, 1, 1], [], []>} : vector<128x128xbf16>, vector<128x32xbf16>, vector<128x32xf32> -> vector<128x32xf32>
    %c0_63 = arith.constant 0 : index
    %c1_64 = arith.constant 1 : index
    %c0_65 = arith.constant 0 : index
    %c0_66 = arith.constant 0 : index
    %114 = vector.load %arg6[%c0_63, %c1_64, %c0_65, %c0_66] : memref<1x4x1x32xf32, #tpu.memory_space<vmem>>, vector<1x1x1x32xf32>
    %115 = vector.shape_cast %114 : vector<1x1x1x32xf32> to vector<1x32xf32>
    %116 = vector.broadcast %115 : vector<1x32xf32> to vector<128x32xf32>
    %117 = arith.addf %113, %116 : vector<128x32xf32>
    %118 = arith.truncf %117 : vector<128x32xf32> to vector<128x32xbf16>
    %c0_67 = arith.constant 0 : index
    %c1_68 = arith.constant 1 : index
    %c0_69 = arith.constant 0 : index
    %c0_70 = arith.constant 0 : index
    %119 = vector.load %arg7[%c0_67, %c1_68, %c0_69, %c0_70] : memref<1x4x128x32xbf16, #tpu.memory_space<vmem>>, vector<1x1x128x32xbf16>
    %120 = vector.shape_cast %119 : vector<1x1x128x32xbf16> to vector<128x32xbf16>
    %cst_71 = arith.constant dense<0.000000e+00> : vector<128x32xf32>
    %121 = tpu.matmul %31, %120, %cst_71 {dimension_numbers = #tpu.dot_dimension_numbers<[1], [0], [0], [1], [0, 0, 1, 1], [], []>} : vector<128x128xbf16>, vector<128x32xbf16>, vector<128x32xf32> -> vector<128x32xf32>
    %c0_72 = arith.constant 0 : index
    %c1_73 = arith.constant 1 : index
    %c0_74 = arith.constant 0 : index
    %c0_75 = arith.constant 0 : index
    %122 = vector.load %arg8[%c0_72, %c1_73, %c0_74, %c0_75] : memref<1x4x1x32xf32, #tpu.memory_space<vmem>>, vector<1x1x1x32xf32>
    %123 = vector.shape_cast %122 : vector<1x1x1x32xf32> to vector<1x32xf32>
    %124 = vector.broadcast %123 : vector<1x32xf32> to vector<128x32xf32>
    %125 = arith.addf %121, %124 : vector<128x32xf32>
    %126 = arith.truncf %125 : vector<128x32xf32> to vector<128x32xbf16>
    %c0_76 = arith.constant 0 : index
    %c1_77 = arith.constant 1 : index
    %c0_78 = arith.constant 0 : index
    %c0_79 = arith.constant 0 : index
    %127 = vector.load %arg9[%c0_76, %c1_77, %c0_78, %c0_79] : memref<1x4x128x32xbf16, #tpu.memory_space<vmem>>, vector<1x1x128x32xbf16>
    %128 = vector.shape_cast %127 : vector<1x1x128x32xbf16> to vector<128x32xbf16>
    %cst_80 = arith.constant dense<0.000000e+00> : vector<128x32xf32>
    %129 = tpu.matmul %31, %128, %cst_80 {dimension_numbers = #tpu.dot_dimension_numbers<[1], [0], [0], [1], [0, 0, 1, 1], [], []>} : vector<128x128xbf16>, vector<128x32xbf16>, vector<128x32xf32> -> vector<128x32xf32>
    %c0_81 = arith.constant 0 : index
    %c1_82 = arith.constant 1 : index
    %c0_83 = arith.constant 0 : index
    %c0_84 = arith.constant 0 : index
    %130 = vector.load %arg10[%c0_81, %c1_82, %c0_83, %c0_84] : memref<1x4x1x32xf32, #tpu.memory_space<vmem>>, vector<1x1x1x32xf32>
    %131 = vector.shape_cast %130 : vector<1x1x1x32xf32> to vector<1x32xf32>
    %132 = vector.broadcast %131 : vector<1x32xf32> to vector<128x32xf32>
    %133 = arith.addf %129, %132 : vector<128x32xf32>
    %134 = arith.truncf %133 : vector<128x32xf32> to vector<128x32xbf16>
    %135 = vector.extract_strided_slice %118 {offsets = [0, 0], sizes = [64, 32], strides = [1, 1]} : vector<128x32xbf16> to vector<64x32xbf16>
    %136 = vector.extract_strided_slice %126 {offsets = [0, 0], sizes = [64, 32], strides = [1, 1]} : vector<128x32xbf16> to vector<64x32xbf16>
    %cst_85 = arith.constant dense<0.000000e+00> : vector<64x64xf32>
    %137 = tpu.matmul %135, %136, %cst_85 {dimension_numbers = #tpu.dot_dimension_numbers<[1], [1], [0], [0], [0, 0, 1, 0], [], []>} : vector<64x32xbf16>, vector<64x32xbf16>, vector<64x64xf32> -> vector<64x64xf32>
    %138 = arith.addf %137, %39 : vector<64x64xf32>
    %cst_86 = arith.constant dense<0xFF800000> : vector<64xf32>
    %139 = vector.multi_reduction <maximumf>, %138, %cst_86 [1] : vector<64x64xf32> to vector<64xf32>
    %140 = vector.shape_cast %139 : vector<64xf32> to vector<64x1xf32>
    %141 = vector.broadcast %140 : vector<64x1xf32> to vector<64x64xf32>
    %142 = arith.subf %138, %141 : vector<64x64xf32>
    %143 = math.exp %142 : vector<64x64xf32>
    %cst_87 = arith.constant dense<0.000000e+00> : vector<64xf32>
    %144 = vector.multi_reduction <add>, %143, %cst_87 [1] : vector<64x64xf32> to vector<64xf32>
    %145 = vector.shape_cast %144 : vector<64xf32> to vector<64x1xf32>
    %146 = tpu.reciprocal %145 {approx = true} : vector<64x1xf32> -> vector<64x1xf32>
    %147 = vector.broadcast %146 : vector<64x1xf32> to vector<64x64xf32>
    %148 = arith.mulf %143, %147 : vector<64x64xf32>
    %149 = arith.truncf %148 : vector<64x64xf32> to vector<64x64xbf16>
    %150 = vector.extract_strided_slice %134 {offsets = [0, 0], sizes = [64, 32], strides = [1, 1]} : vector<128x32xbf16> to vector<64x32xbf16>
    %cst_88 = arith.constant dense<0.000000e+00> : vector<64x32xf32>
    %151 = tpu.matmul %149, %150, %cst_88 {dimension_numbers = #tpu.dot_dimension_numbers<[1], [0], [0], [1], [0, 0, 1, 1], [], []>} : vector<64x64xbf16>, vector<64x32xbf16>, vector<64x32xf32> -> vector<64x32xf32>
    %152 = vector.extract_strided_slice %118 {offsets = [64, 0], sizes = [64, 32], strides = [1, 1]} : vector<128x32xbf16> to vector<64x32xbf16>
    %cst_89 = arith.constant dense<0.000000e+00> : vector<64x128xf32>
    %153 = tpu.matmul %152, %126, %cst_89 {dimension_numbers = #tpu.dot_dimension_numbers<[1], [1], [0], [0], [0, 0, 1, 0], [], []>} : vector<64x32xbf16>, vector<128x32xbf16>, vector<64x128xf32> -> vector<64x128xf32>
    %154 = arith.addf %153, %47 : vector<64x128xf32>
    %cst_90 = arith.constant dense<0xFF800000> : vector<64xf32>
    %155 = vector.multi_reduction <maximumf>, %154, %cst_90 [1] : vector<64x128xf32> to vector<64xf32>
    %156 = vector.shape_cast %155 : vector<64xf32> to vector<64x1xf32>
    %157 = vector.broadcast %156 : vector<64x1xf32> to vector<64x128xf32>
    %158 = arith.subf %154, %157 : vector<64x128xf32>
    %159 = math.exp %158 : vector<64x128xf32>
    %cst_91 = arith.constant dense<0.000000e+00> : vector<64xf32>
    %160 = vector.multi_reduction <add>, %159, %cst_91 [1] : vector<64x128xf32> to vector<64xf32>
    %161 = vector.shape_cast %160 : vector<64xf32> to vector<64x1xf32>
    %162 = tpu.reciprocal %161 {approx = true} : vector<64x1xf32> -> vector<64x1xf32>
    %163 = vector.broadcast %162 : vector<64x1xf32> to vector<64x128xf32>
    %164 = arith.mulf %159, %163 : vector<64x128xf32>
    %165 = arith.truncf %164 : vector<64x128xf32> to vector<64x128xbf16>
    %cst_92 = arith.constant dense<0.000000e+00> : vector<64x32xf32>
    %166 = tpu.matmul %165, %134, %cst_92 {dimension_numbers = #tpu.dot_dimension_numbers<[1], [0], [0], [1], [0, 0, 1, 1], [], []>} : vector<64x128xbf16>, vector<128x32xbf16>, vector<64x32xf32> -> vector<64x32xf32>
    %167 = tpu.concatenate %151, %166 in 0 : vector<64x32xf32>, vector<64x32xf32> -> vector<128x32xf32>
    %168 = arith.truncf %167 : vector<128x32xf32> to vector<128x32xbf16>
    %c0_93 = arith.constant 0 : index
    %c1_94 = arith.constant 1 : index
    %c0_95 = arith.constant 0 : index
    %c0_96 = arith.constant 0 : index
    %169 = vector.load %arg11[%c0_93, %c1_94, %c0_95, %c0_96] : memref<1x4x32x128xbf16, #tpu.memory_space<vmem>>, vector<1x1x32x128xbf16>
    %170 = vector.shape_cast %169 : vector<1x1x32x128xbf16> to vector<32x128xbf16>
    %cst_97 = arith.constant dense<0.000000e+00> : vector<128x128xf32>
    %171 = tpu.matmul %168, %170, %cst_97 {dimension_numbers = #tpu.dot_dimension_numbers<[1], [0], [0], [1], [0, 0, 1, 1], [], []>} : vector<128x32xbf16>, vector<32x128xbf16>, vector<128x128xf32> -> vector<128x128xf32>
    %172 = arith.addf %110, %171 : vector<128x128xf32>
    %c0_98 = arith.constant 0 : index
    %c2 = arith.constant 2 : index
    %c0_99 = arith.constant 0 : index
    %c0_100 = arith.constant 0 : index
    %173 = vector.load %arg5[%c0_98, %c2, %c0_99, %c0_100] : memref<1x4x128x32xbf16, #tpu.memory_space<vmem>>, vector<1x1x128x32xbf16>
    %174 = vector.shape_cast %173 : vector<1x1x128x32xbf16> to vector<128x32xbf16>
    %cst_101 = arith.constant dense<0.000000e+00> : vector<128x32xf32>
    %175 = tpu.matmul %31, %174, %cst_101 {dimension_numbers = #tpu.dot_dimension_numbers<[1], [0], [0], [1], [0, 0, 1, 1], [], []>} : vector<128x128xbf16>, vector<128x32xbf16>, vector<128x32xf32> -> vector<128x32xf32>
    %c0_102 = arith.constant 0 : index
    %c2_103 = arith.constant 2 : index
    %c0_104 = arith.constant 0 : index
    %c0_105 = arith.constant 0 : index
    %176 = vector.load %arg6[%c0_102, %c2_103, %c0_104, %c0_105] : memref<1x4x1x32xf32, #tpu.memory_space<vmem>>, vector<1x1x1x32xf32>
    %177 = vector.shape_cast %176 : vector<1x1x1x32xf32> to vector<1x32xf32>
    %178 = vector.broadcast %177 : vector<1x32xf32> to vector<128x32xf32>
    %179 = arith.addf %175, %178 : vector<128x32xf32>
    %180 = arith.truncf %179 : vector<128x32xf32> to vector<128x32xbf16>
    %c0_106 = arith.constant 0 : index
    %c2_107 = arith.constant 2 : index
    %c0_108 = arith.constant 0 : index
    %c0_109 = arith.constant 0 : index
    %181 = vector.load %arg7[%c0_106, %c2_107, %c0_108, %c0_109] : memref<1x4x128x32xbf16, #tpu.memory_space<vmem>>, vector<1x1x128x32xbf16>
    %182 = vector.shape_cast %181 : vector<1x1x128x32xbf16> to vector<128x32xbf16>
    %cst_110 = arith.constant dense<0.000000e+00> : vector<128x32xf32>
    %183 = tpu.matmul %31, %182, %cst_110 {dimension_numbers = #tpu.dot_dimension_numbers<[1], [0], [0], [1], [0, 0, 1, 1], [], []>} : vector<128x128xbf16>, vector<128x32xbf16>, vector<128x32xf32> -> vector<128x32xf32>
    %c0_111 = arith.constant 0 : index
    %c2_112 = arith.constant 2 : index
    %c0_113 = arith.constant 0 : index
    %c0_114 = arith.constant 0 : index
    %184 = vector.load %arg8[%c0_111, %c2_112, %c0_113, %c0_114] : memref<1x4x1x32xf32, #tpu.memory_space<vmem>>, vector<1x1x1x32xf32>
    %185 = vector.shape_cast %184 : vector<1x1x1x32xf32> to vector<1x32xf32>
    %186 = vector.broadcast %185 : vector<1x32xf32> to vector<128x32xf32>
    %187 = arith.addf %183, %186 : vector<128x32xf32>
    %188 = arith.truncf %187 : vector<128x32xf32> to vector<128x32xbf16>
    %c0_115 = arith.constant 0 : index
    %c2_116 = arith.constant 2 : index
    %c0_117 = arith.constant 0 : index
    %c0_118 = arith.constant 0 : index
    %189 = vector.load %arg9[%c0_115, %c2_116, %c0_117, %c0_118] : memref<1x4x128x32xbf16, #tpu.memory_space<vmem>>, vector<1x1x128x32xbf16>
    %190 = vector.shape_cast %189 : vector<1x1x128x32xbf16> to vector<128x32xbf16>
    %cst_119 = arith.constant dense<0.000000e+00> : vector<128x32xf32>
    %191 = tpu.matmul %31, %190, %cst_119 {dimension_numbers = #tpu.dot_dimension_numbers<[1], [0], [0], [1], [0, 0, 1, 1], [], []>} : vector<128x128xbf16>, vector<128x32xbf16>, vector<128x32xf32> -> vector<128x32xf32>
    %c0_120 = arith.constant 0 : index
    %c2_121 = arith.constant 2 : index
    %c0_122 = arith.constant 0 : index
    %c0_123 = arith.constant 0 : index
    %192 = vector.load %arg10[%c0_120, %c2_121, %c0_122, %c0_123] : memref<1x4x1x32xf32, #tpu.memory_space<vmem>>, vector<1x1x1x32xf32>
    %193 = vector.shape_cast %192 : vector<1x1x1x32xf32> to vector<1x32xf32>
    %194 = vector.broadcast %193 : vector<1x32xf32> to vector<128x32xf32>
    %195 = arith.addf %191, %194 : vector<128x32xf32>
    %196 = arith.truncf %195 : vector<128x32xf32> to vector<128x32xbf16>
    %197 = vector.extract_strided_slice %180 {offsets = [0, 0], sizes = [64, 32], strides = [1, 1]} : vector<128x32xbf16> to vector<64x32xbf16>
    %198 = vector.extract_strided_slice %188 {offsets = [0, 0], sizes = [64, 32], strides = [1, 1]} : vector<128x32xbf16> to vector<64x32xbf16>
    %cst_124 = arith.constant dense<0.000000e+00> : vector<64x64xf32>
    %199 = tpu.matmul %197, %198, %cst_124 {dimension_numbers = #tpu.dot_dimension_numbers<[1], [1], [0], [0], [0, 0, 1, 0], [], []>} : vector<64x32xbf16>, vector<64x32xbf16>, vector<64x64xf32> -> vector<64x64xf32>
    %200 = arith.addf %199, %39 : vector<64x64xf32>
    %cst_125 = arith.constant dense<0xFF800000> : vector<64xf32>
    %201 = vector.multi_reduction <maximumf>, %200, %cst_125 [1] : vector<64x64xf32> to vector<64xf32>
    %202 = vector.shape_cast %201 : vector<64xf32> to vector<64x1xf32>
    %203 = vector.broadcast %202 : vector<64x1xf32> to vector<64x64xf32>
    %204 = arith.subf %200, %203 : vector<64x64xf32>
    %205 = math.exp %204 : vector<64x64xf32>
    %cst_126 = arith.constant dense<0.000000e+00> : vector<64xf32>
    %206 = vector.multi_reduction <add>, %205, %cst_126 [1] : vector<64x64xf32> to vector<64xf32>
    %207 = vector.shape_cast %206 : vector<64xf32> to vector<64x1xf32>
    %208 = tpu.reciprocal %207 {approx = true} : vector<64x1xf32> -> vector<64x1xf32>
    %209 = vector.broadcast %208 : vector<64x1xf32> to vector<64x64xf32>
    %210 = arith.mulf %205, %209 : vector<64x64xf32>
    %211 = arith.truncf %210 : vector<64x64xf32> to vector<64x64xbf16>
    %212 = vector.extract_strided_slice %196 {offsets = [0, 0], sizes = [64, 32], strides = [1, 1]} : vector<128x32xbf16> to vector<64x32xbf16>
    %cst_127 = arith.constant dense<0.000000e+00> : vector<64x32xf32>
    %213 = tpu.matmul %211, %212, %cst_127 {dimension_numbers = #tpu.dot_dimension_numbers<[1], [0], [0], [1], [0, 0, 1, 1], [], []>} : vector<64x64xbf16>, vector<64x32xbf16>, vector<64x32xf32> -> vector<64x32xf32>
    %214 = vector.extract_strided_slice %180 {offsets = [64, 0], sizes = [64, 32], strides = [1, 1]} : vector<128x32xbf16> to vector<64x32xbf16>
    %cst_128 = arith.constant dense<0.000000e+00> : vector<64x128xf32>
    %215 = tpu.matmul %214, %188, %cst_128 {dimension_numbers = #tpu.dot_dimension_numbers<[1], [1], [0], [0], [0, 0, 1, 0], [], []>} : vector<64x32xbf16>, vector<128x32xbf16>, vector<64x128xf32> -> vector<64x128xf32>
    %216 = arith.addf %215, %47 : vector<64x128xf32>
    %cst_129 = arith.constant dense<0xFF800000> : vector<64xf32>
    %217 = vector.multi_reduction <maximumf>, %216, %cst_129 [1] : vector<64x128xf32> to vector<64xf32>
    %218 = vector.shape_cast %217 : vector<64xf32> to vector<64x1xf32>
    %219 = vector.broadcast %218 : vector<64x1xf32> to vector<64x128xf32>
    %220 = arith.subf %216, %219 : vector<64x128xf32>
    %221 = math.exp %220 : vector<64x128xf32>
    %cst_130 = arith.constant dense<0.000000e+00> : vector<64xf32>
    %222 = vector.multi_reduction <add>, %221, %cst_130 [1] : vector<64x128xf32> to vector<64xf32>
    %223 = vector.shape_cast %222 : vector<64xf32> to vector<64x1xf32>
    %224 = tpu.reciprocal %223 {approx = true} : vector<64x1xf32> -> vector<64x1xf32>
    %225 = vector.broadcast %224 : vector<64x1xf32> to vector<64x128xf32>
    %226 = arith.mulf %221, %225 : vector<64x128xf32>
    %227 = arith.truncf %226 : vector<64x128xf32> to vector<64x128xbf16>
    %cst_131 = arith.constant dense<0.000000e+00> : vector<64x32xf32>
    %228 = tpu.matmul %227, %196, %cst_131 {dimension_numbers = #tpu.dot_dimension_numbers<[1], [0], [0], [1], [0, 0, 1, 1], [], []>} : vector<64x128xbf16>, vector<128x32xbf16>, vector<64x32xf32> -> vector<64x32xf32>
    %229 = tpu.concatenate %213, %228 in 0 : vector<64x32xf32>, vector<64x32xf32> -> vector<128x32xf32>
    %230 = arith.truncf %229 : vector<128x32xf32> to vector<128x32xbf16>
    %c0_132 = arith.constant 0 : index
    %c2_133 = arith.constant 2 : index
    %c0_134 = arith.constant 0 : index
    %c0_135 = arith.constant 0 : index
    %231 = vector.load %arg11[%c0_132, %c2_133, %c0_134, %c0_135] : memref<1x4x32x128xbf16, #tpu.memory_space<vmem>>, vector<1x1x32x128xbf16>
    %232 = vector.shape_cast %231 : vector<1x1x32x128xbf16> to vector<32x128xbf16>
    %cst_136 = arith.constant dense<0.000000e+00> : vector<128x128xf32>
    %233 = tpu.matmul %230, %232, %cst_136 {dimension_numbers = #tpu.dot_dimension_numbers<[1], [0], [0], [1], [0, 0, 1, 1], [], []>} : vector<128x32xbf16>, vector<32x128xbf16>, vector<128x128xf32> -> vector<128x128xf32>
    %234 = arith.addf %172, %233 : vector<128x128xf32>
    %c0_137 = arith.constant 0 : index
    %c3 = arith.constant 3 : index
    %c0_138 = arith.constant 0 : index
    %c0_139 = arith.constant 0 : index
    %235 = vector.load %arg5[%c0_137, %c3, %c0_138, %c0_139] : memref<1x4x128x32xbf16, #tpu.memory_space<vmem>>, vector<1x1x128x32xbf16>
    %236 = vector.shape_cast %235 : vector<1x1x128x32xbf16> to vector<128x32xbf16>
    %cst_140 = arith.constant dense<0.000000e+00> : vector<128x32xf32>
    %237 = tpu.matmul %31, %236, %cst_140 {dimension_numbers = #tpu.dot_dimension_numbers<[1], [0], [0], [1], [0, 0, 1, 1], [], []>} : vector<128x128xbf16>, vector<128x32xbf16>, vector<128x32xf32> -> vector<128x32xf32>
    %c0_141 = arith.constant 0 : index
    %c3_142 = arith.constant 3 : index
    %c0_143 = arith.constant 0 : index
    %c0_144 = arith.constant 0 : index
    %238 = vector.load %arg6[%c0_141, %c3_142, %c0_143, %c0_144] : memref<1x4x1x32xf32, #tpu.memory_space<vmem>>, vector<1x1x1x32xf32>
    %239 = vector.shape_cast %238 : vector<1x1x1x32xf32> to vector<1x32xf32>
    %240 = vector.broadcast %239 : vector<1x32xf32> to vector<128x32xf32>
    %241 = arith.addf %237, %240 : vector<128x32xf32>
    %242 = arith.truncf %241 : vector<128x32xf32> to vector<128x32xbf16>
    %c0_145 = arith.constant 0 : index
    %c3_146 = arith.constant 3 : index
    %c0_147 = arith.constant 0 : index
    %c0_148 = arith.constant 0 : index
    %243 = vector.load %arg7[%c0_145, %c3_146, %c0_147, %c0_148] : memref<1x4x128x32xbf16, #tpu.memory_space<vmem>>, vector<1x1x128x32xbf16>
    %244 = vector.shape_cast %243 : vector<1x1x128x32xbf16> to vector<128x32xbf16>
    %cst_149 = arith.constant dense<0.000000e+00> : vector<128x32xf32>
    %245 = tpu.matmul %31, %244, %cst_149 {dimension_numbers = #tpu.dot_dimension_numbers<[1], [0], [0], [1], [0, 0, 1, 1], [], []>} : vector<128x128xbf16>, vector<128x32xbf16>, vector<128x32xf32> -> vector<128x32xf32>
    %c0_150 = arith.constant 0 : index
    %c3_151 = arith.constant 3 : index
    %c0_152 = arith.constant 0 : index
    %c0_153 = arith.constant 0 : index
    %246 = vector.load %arg8[%c0_150, %c3_151, %c0_152, %c0_153] : memref<1x4x1x32xf32, #tpu.memory_space<vmem>>, vector<1x1x1x32xf32>
    %247 = vector.shape_cast %246 : vector<1x1x1x32xf32> to vector<1x32xf32>
    %248 = vector.broadcast %247 : vector<1x32xf32> to vector<128x32xf32>
    %249 = arith.addf %245, %248 : vector<128x32xf32>
    %250 = arith.truncf %249 : vector<128x32xf32> to vector<128x32xbf16>
    %c0_154 = arith.constant 0 : index
    %c3_155 = arith.constant 3 : index
    %c0_156 = arith.constant 0 : index
    %c0_157 = arith.constant 0 : index
    %251 = vector.load %arg9[%c0_154, %c3_155, %c0_156, %c0_157] : memref<1x4x128x32xbf16, #tpu.memory_space<vmem>>, vector<1x1x128x32xbf16>
    %252 = vector.shape_cast %251 : vector<1x1x128x32xbf16> to vector<128x32xbf16>
    %cst_158 = arith.constant dense<0.000000e+00> : vector<128x32xf32>
    %253 = tpu.matmul %31, %252, %cst_158 {dimension_numbers = #tpu.dot_dimension_numbers<[1], [0], [0], [1], [0, 0, 1, 1], [], []>} : vector<128x128xbf16>, vector<128x32xbf16>, vector<128x32xf32> -> vector<128x32xf32>
    %c0_159 = arith.constant 0 : index
    %c3_160 = arith.constant 3 : index
    %c0_161 = arith.constant 0 : index
    %c0_162 = arith.constant 0 : index
    %254 = vector.load %arg10[%c0_159, %c3_160, %c0_161, %c0_162] : memref<1x4x1x32xf32, #tpu.memory_space<vmem>>, vector<1x1x1x32xf32>
    %255 = vector.shape_cast %254 : vector<1x1x1x32xf32> to vector<1x32xf32>
    %256 = vector.broadcast %255 : vector<1x32xf32> to vector<128x32xf32>
    %257 = arith.addf %253, %256 : vector<128x32xf32>
    %258 = arith.truncf %257 : vector<128x32xf32> to vector<128x32xbf16>
    %259 = vector.extract_strided_slice %242 {offsets = [0, 0], sizes = [64, 32], strides = [1, 1]} : vector<128x32xbf16> to vector<64x32xbf16>
    %260 = vector.extract_strided_slice %250 {offsets = [0, 0], sizes = [64, 32], strides = [1, 1]} : vector<128x32xbf16> to vector<64x32xbf16>
    %cst_163 = arith.constant dense<0.000000e+00> : vector<64x64xf32>
    %261 = tpu.matmul %259, %260, %cst_163 {dimension_numbers = #tpu.dot_dimension_numbers<[1], [1], [0], [0], [0, 0, 1, 0], [], []>} : vector<64x32xbf16>, vector<64x32xbf16>, vector<64x64xf32> -> vector<64x64xf32>
    %262 = arith.addf %261, %39 : vector<64x64xf32>
    %cst_164 = arith.constant dense<0xFF800000> : vector<64xf32>
    %263 = vector.multi_reduction <maximumf>, %262, %cst_164 [1] : vector<64x64xf32> to vector<64xf32>
    %264 = vector.shape_cast %263 : vector<64xf32> to vector<64x1xf32>
    %265 = vector.broadcast %264 : vector<64x1xf32> to vector<64x64xf32>
    %266 = arith.subf %262, %265 : vector<64x64xf32>
    %267 = math.exp %266 : vector<64x64xf32>
    %cst_165 = arith.constant dense<0.000000e+00> : vector<64xf32>
    %268 = vector.multi_reduction <add>, %267, %cst_165 [1] : vector<64x64xf32> to vector<64xf32>
    %269 = vector.shape_cast %268 : vector<64xf32> to vector<64x1xf32>
    %270 = tpu.reciprocal %269 {approx = true} : vector<64x1xf32> -> vector<64x1xf32>
    %271 = vector.broadcast %270 : vector<64x1xf32> to vector<64x64xf32>
    %272 = arith.mulf %267, %271 : vector<64x64xf32>
    %273 = arith.truncf %272 : vector<64x64xf32> to vector<64x64xbf16>
    %274 = vector.extract_strided_slice %258 {offsets = [0, 0], sizes = [64, 32], strides = [1, 1]} : vector<128x32xbf16> to vector<64x32xbf16>
    %cst_166 = arith.constant dense<0.000000e+00> : vector<64x32xf32>
    %275 = tpu.matmul %273, %274, %cst_166 {dimension_numbers = #tpu.dot_dimension_numbers<[1], [0], [0], [1], [0, 0, 1, 1], [], []>} : vector<64x64xbf16>, vector<64x32xbf16>, vector<64x32xf32> -> vector<64x32xf32>
    %276 = vector.extract_strided_slice %242 {offsets = [64, 0], sizes = [64, 32], strides = [1, 1]} : vector<128x32xbf16> to vector<64x32xbf16>
    %cst_167 = arith.constant dense<0.000000e+00> : vector<64x128xf32>
    %277 = tpu.matmul %276, %250, %cst_167 {dimension_numbers = #tpu.dot_dimension_numbers<[1], [1], [0], [0], [0, 0, 1, 0], [], []>} : vector<64x32xbf16>, vector<128x32xbf16>, vector<64x128xf32> -> vector<64x128xf32>
    %278 = arith.addf %277, %47 : vector<64x128xf32>
    %cst_168 = arith.constant dense<0xFF800000> : vector<64xf32>
    %279 = vector.multi_reduction <maximumf>, %278, %cst_168 [1] : vector<64x128xf32> to vector<64xf32>
    %280 = vector.shape_cast %279 : vector<64xf32> to vector<64x1xf32>
    %281 = vector.broadcast %280 : vector<64x1xf32> to vector<64x128xf32>
    %282 = arith.subf %278, %281 : vector<64x128xf32>
    %283 = math.exp %282 : vector<64x128xf32>
    %cst_169 = arith.constant dense<0.000000e+00> : vector<64xf32>
    %284 = vector.multi_reduction <add>, %283, %cst_169 [1] : vector<64x128xf32> to vector<64xf32>
    %285 = vector.shape_cast %284 : vector<64xf32> to vector<64x1xf32>
    %286 = tpu.reciprocal %285 {approx = true} : vector<64x1xf32> -> vector<64x1xf32>
    %287 = vector.broadcast %286 : vector<64x1xf32> to vector<64x128xf32>
    %288 = arith.mulf %283, %287 : vector<64x128xf32>
    %289 = arith.truncf %288 : vector<64x128xf32> to vector<64x128xbf16>
    %cst_170 = arith.constant dense<0.000000e+00> : vector<64x32xf32>
    %290 = tpu.matmul %289, %258, %cst_170 {dimension_numbers = #tpu.dot_dimension_numbers<[1], [0], [0], [1], [0, 0, 1, 1], [], []>} : vector<64x128xbf16>, vector<128x32xbf16>, vector<64x32xf32> -> vector<64x32xf32>
    %291 = tpu.concatenate %275, %290 in 0 : vector<64x32xf32>, vector<64x32xf32> -> vector<128x32xf32>
    %292 = arith.truncf %291 : vector<128x32xf32> to vector<128x32xbf16>
    %c0_171 = arith.constant 0 : index
    %c3_172 = arith.constant 3 : index
    %c0_173 = arith.constant 0 : index
    %c0_174 = arith.constant 0 : index
    %293 = vector.load %arg11[%c0_171, %c3_172, %c0_173, %c0_174] : memref<1x4x32x128xbf16, #tpu.memory_space<vmem>>, vector<1x1x32x128xbf16>
    %294 = vector.shape_cast %293 : vector<1x1x32x128xbf16> to vector<32x128xbf16>
    %cst_175 = arith.constant dense<0.000000e+00> : vector<128x128xf32>
    %295 = tpu.matmul %292, %294, %cst_175 {dimension_numbers = #tpu.dot_dimension_numbers<[1], [0], [0], [1], [0, 0, 1, 1], [], []>} : vector<128x32xbf16>, vector<32x128xbf16>, vector<128x128xf32> -> vector<128x128xf32>
    %296 = arith.addf %234, %295 : vector<128x128xf32>
    %297 = arith.addf %4, %296 : vector<128x128xf32>
    %c0_176 = arith.constant 0 : index
    %c0_177 = arith.constant 0 : index
    %c0_178 = arith.constant 0 : index
    %298 = vector.load %arg12[%c0_176, %c0_177, %c0_178] : memref<1x1x128xf32, #tpu.memory_space<vmem>>, vector<1x1x128xf32>
    %299 = vector.shape_cast %298 : vector<1x1x128xf32> to vector<1x128xf32>
    %300 = vector.broadcast %299 : vector<1x128xf32> to vector<128x128xf32>
    %301 = arith.addf %297, %300 : vector<128x128xf32>
    %c0_179 = arith.constant 0 : index
    %c0_180 = arith.constant 0 : index
    %c0_181 = arith.constant 0 : index
    %302 = vector.load %arg13[%c0_179, %c0_180, %c0_181] : memref<1x1x128xf32, #tpu.memory_space<vmem>>, vector<1x1x128xf32>
    %303 = vector.shape_cast %302 : vector<1x1x128xf32> to vector<1x128xf32>
    %c0_182 = arith.constant 0 : index
    %c0_183 = arith.constant 0 : index
    %c0_184 = arith.constant 0 : index
    %304 = vector.load %arg14[%c0_182, %c0_183, %c0_184] : memref<1x1x128xf32, #tpu.memory_space<vmem>>, vector<1x1x128xf32>
    %305 = vector.shape_cast %304 : vector<1x1x128xf32> to vector<1x128xf32>
    %cst_185 = arith.constant dense<0.000000e+00> : vector<128xf32>
    %306 = vector.multi_reduction <add>, %301, %cst_185 [1] : vector<128x128xf32> to vector<128xf32>
    %307 = vector.shape_cast %306 : vector<128xf32> to vector<128x1xf32>
    %cst_186 = arith.constant 1.280000e+02 : f32
    %308 = vector.broadcast %cst_186 : f32 to vector<128x1xf32>
    %309 = arith.divf %307, %308 : vector<128x1xf32>
    %310 = vector.broadcast %309 : vector<128x1xf32> to vector<128x128xf32>
    %311 = arith.subf %301, %310 : vector<128x128xf32>
    %312 = arith.mulf %311, %311 : vector<128x128xf32>
    %cst_187 = arith.constant dense<0.000000e+00> : vector<128xf32>
    %313 = vector.multi_reduction <add>, %312, %cst_187 [1] : vector<128x128xf32> to vector<128xf32>
    %314 = vector.shape_cast %313 : vector<128xf32> to vector<128x1xf32>
    %cst_188 = arith.constant 1.280000e+02 : f32
    %315 = vector.broadcast %cst_188 : f32 to vector<128x1xf32>
    %316 = arith.divf %314, %315 : vector<128x1xf32>
    %317 = vector.broadcast %309 : vector<128x1xf32> to vector<128x128xf32>
    %318 = arith.subf %301, %317 : vector<128x128xf32>
    %cst_189 = arith.constant 9.99999974E-6 : f32
    %319 = vector.broadcast %cst_189 : f32 to vector<128x1xf32>
    %320 = arith.addf %316, %319 : vector<128x1xf32>
    %321 = math.rsqrt %320 : vector<128x1xf32>
    %322 = vector.broadcast %321 : vector<128x1xf32> to vector<128x128xf32>
    %323 = arith.mulf %318, %322 : vector<128x128xf32>
    %324 = vector.broadcast %303 : vector<1x128xf32> to vector<128x128xf32>
    %325 = arith.mulf %323, %324 : vector<128x128xf32>
    %326 = vector.broadcast %305 : vector<1x128xf32> to vector<128x128xf32>
    %327 = arith.addf %325, %326 : vector<128x128xf32>
    %328 = arith.truncf %327 : vector<128x128xf32> to vector<128x128xbf16>
    %c0_190 = arith.constant 0 : index
    %c0_191 = arith.constant 0 : index
    %c0_192 = arith.constant 0 : index
    %329 = vector.load %arg15[%c0_190, %c0_191, %c0_192] : memref<1x128x512xbf16, #tpu.memory_space<vmem>>, vector<1x128x512xbf16>
    %330 = vector.shape_cast %329 : vector<1x128x512xbf16> to vector<128x512xbf16>
    %cst_193 = arith.constant dense<0.000000e+00> : vector<128x512xf32>
    %331 = tpu.matmul %328, %330, %cst_193 {dimension_numbers = #tpu.dot_dimension_numbers<[1], [0], [0], [1], [0, 0, 1, 1], [], []>} : vector<128x128xbf16>, vector<128x512xbf16>, vector<128x512xf32> -> vector<128x512xf32>
    %c0_194 = arith.constant 0 : index
    %c0_195 = arith.constant 0 : index
    %c0_196 = arith.constant 0 : index
    %332 = vector.load %arg16[%c0_194, %c0_195, %c0_196] : memref<1x1x512xf32, #tpu.memory_space<vmem>>, vector<1x1x512xf32>
    %333 = vector.shape_cast %332 : vector<1x1x512xf32> to vector<1x512xf32>
    %334 = vector.broadcast %333 : vector<1x512xf32> to vector<128x512xf32>
    %335 = arith.addf %331, %334 : vector<128x512xf32>
    %cst_197 = arith.constant 5.000000e-01 : f32
    %336 = vector.broadcast %cst_197 : f32 to vector<128x512xf32>
    %337 = arith.mulf %336, %335 : vector<128x512xf32>
    %cst_198 = arith.constant 4.471500e-02 : f32
    %338 = vector.broadcast %cst_198 : f32 to vector<128x512xf32>
    %339 = arith.mulf %338, %335 : vector<128x512xf32>
    %340 = arith.mulf %339, %335 : vector<128x512xf32>
    %341 = arith.mulf %340, %335 : vector<128x512xf32>
    %342 = arith.addf %335, %341 : vector<128x512xf32>
    %cst_199 = arith.constant 0.797884583 : f32
    %343 = vector.broadcast %cst_199 : f32 to vector<128x512xf32>
    %344 = arith.mulf %343, %342 : vector<128x512xf32>
    %345 = math.tanh %344 : vector<128x512xf32>
    %cst_200 = arith.constant 1.000000e+00 : f32
    %346 = vector.broadcast %cst_200 : f32 to vector<128x512xf32>
    %347 = arith.addf %346, %345 : vector<128x512xf32>
    %348 = arith.mulf %337, %347 : vector<128x512xf32>
    %349 = arith.truncf %348 : vector<128x512xf32> to vector<128x512xbf16>
    %c0_201 = arith.constant 0 : index
    %c0_202 = arith.constant 0 : index
    %c0_203 = arith.constant 0 : index
    %350 = vector.load %arg17[%c0_201, %c0_202, %c0_203] : memref<1x512x128xbf16, #tpu.memory_space<vmem>>, vector<1x512x128xbf16>
    %351 = vector.shape_cast %350 : vector<1x512x128xbf16> to vector<512x128xbf16>
    %cst_204 = arith.constant dense<0.000000e+00> : vector<128x128xf32>
    %352 = tpu.matmul %349, %351, %cst_204 {dimension_numbers = #tpu.dot_dimension_numbers<[1], [0], [0], [1], [0, 0, 1, 1], [], []>} : vector<128x512xbf16>, vector<512x128xbf16>, vector<128x128xf32> -> vector<128x128xf32>
    %353 = arith.addf %301, %352 : vector<128x128xf32>
    %c0_205 = arith.constant 0 : index
    %c0_206 = arith.constant 0 : index
    %c0_207 = arith.constant 0 : index
    %354 = vector.load %arg18[%c0_205, %c0_206, %c0_207] : memref<1x1x128xf32, #tpu.memory_space<vmem>>, vector<1x1x128xf32>
    %355 = vector.shape_cast %354 : vector<1x1x128xf32> to vector<1x128xf32>
    %356 = vector.broadcast %355 : vector<1x128xf32> to vector<128x128xf32>
    %357 = arith.addf %353, %356 : vector<128x128xf32>
    %c0_208 = arith.constant 0 : index
    %c0_209 = arith.constant 0 : index
    %c0_210 = arith.constant 0 : index
    %358 = vector.load %arg19[%c0_208, %c0_209, %c0_210] : memref<1x128x128xf32, #tpu.memory_space<vmem>>, vector<1x128x128xf32>
    %359 = vector.shape_cast %358 : vector<1x128x128xf32> to vector<128x128xf32>
    %360 = vector.shape_cast %357 : vector<128x128xf32> to vector<1x128x128xf32>
    tpu.vector_store %arg19[%c0_208, %c0_209, %c0_210], %360 {strides = array<i32>} : memref<1x128x128xf32, #tpu.memory_space<vmem>>, vector<1x128x128xf32>,
    return
  }
  func.func @transform_0(%arg0: i32, %arg1: i32) -> (i32, i32, i32) {
    %c0_i32 = arith.constant 0 : i32
    %c0_i32_0 = arith.constant 0 : i32
    %c0_i32_1 = arith.constant 0 : i32
    return %arg0, %c0_i32, %c0_i32_0 : i32, i32, i32
  }
  func.func @transform_1(%arg0: i32, %arg1: i32) -> (i32, i32, i32) {
    %c0_i32 = arith.constant 0 : i32
    %c0_i32_0 = arith.constant 0 : i32
    %c0_i32_1 = arith.constant 0 : i32
    return %arg1, %c0_i32, %c0_i32_0 : i32, i32, i32
  }
  func.func @transform_2(%arg0: i32, %arg1: i32) -> (i32, i32, i32) {
    %c0_i32 = arith.constant 0 : i32
    %c0_i32_0 = arith.constant 0 : i32
    %c0_i32_1 = arith.constant 0 : i32
    return %arg1, %c0_i32, %c0_i32_0 : i32, i32, i32
  }
  func.func @transform_3(%arg0: i32, %arg1: i32) -> (i32, i32, i32, i32) {
    %c0_i32 = arith.constant 0 : i32
    %c0_i32_0 = arith.constant 0 : i32
    %c0_i32_1 = arith.constant 0 : i32
    %c0_i32_2 = arith.constant 0 : i32
    return %arg1, %c0_i32, %c0_i32_0, %c0_i32_1 : i32, i32, i32, i32
  }
  func.func @transform_4(%arg0: i32, %arg1: i32) -> (i32, i32, i32, i32) {
    %c0_i32 = arith.constant 0 : i32
    %c0_i32_0 = arith.constant 0 : i32
    %c0_i32_1 = arith.constant 0 : i32
    %c0_i32_2 = arith.constant 0 : i32
    return %arg1, %c0_i32, %c0_i32_0, %c0_i32_1 : i32, i32, i32, i32
  }
  func.func @transform_5(%arg0: i32, %arg1: i32) -> (i32, i32, i32, i32) {
    %c0_i32 = arith.constant 0 : i32
    %c0_i32_0 = arith.constant 0 : i32
    %c0_i32_1 = arith.constant 0 : i32
    %c0_i32_2 = arith.constant 0 : i32
    return %arg1, %c0_i32, %c0_i32_0, %c0_i32_1 : i32, i32, i32, i32
  }
  func.func @transform_6(%arg0: i32, %arg1: i32) -> (i32, i32, i32, i32) {
    %c0_i32 = arith.constant 0 : i32
    %c0_i32_0 = arith.constant 0 : i32
    %c0_i32_1 = arith.constant 0 : i32
    %c0_i32_2 = arith.constant 0 : i32
    return %arg1, %c0_i32, %c0_i32_0, %c0_i32_1 : i32, i32, i32, i32
  }
  func.func @transform_7(%arg0: i32, %arg1: i32) -> (i32, i32, i32, i32) {
    %c0_i32 = arith.constant 0 : i32
    %c0_i32_0 = arith.constant 0 : i32
    %c0_i32_1 = arith.constant 0 : i32
    %c0_i32_2 = arith.constant 0 : i32
    return %arg1, %c0_i32, %c0_i32_0, %c0_i32_1 : i32, i32, i32, i32
  }
  func.func @transform_8(%arg0: i32, %arg1: i32) -> (i32, i32, i32, i32) {
    %c0_i32 = arith.constant 0 : i32
    %c0_i32_0 = arith.constant 0 : i32
    %c0_i32_1 = arith.constant 0 : i32
    %c0_i32_2 = arith.constant 0 : i32
    return %arg1, %c0_i32, %c0_i32_0, %c0_i32_1 : i32, i32, i32, i32
  }
  func.func @transform_9(%arg0: i32, %arg1: i32) -> (i32, i32, i32, i32) {
    %c0_i32 = arith.constant 0 : i32
    %c0_i32_0 = arith.constant 0 : i32
    %c0_i32_1 = arith.constant 0 : i32
    %c0_i32_2 = arith.constant 0 : i32
    return %arg1, %c0_i32, %c0_i32_0, %c0_i32_1 : i32, i32, i32, i32
  }
  func.func @transform_10(%arg0: i32, %arg1: i32) -> (i32, i32, i32) {
    %c0_i32 = arith.constant 0 : i32
    %c0_i32_0 = arith.constant 0 : i32
    %c0_i32_1 = arith.constant 0 : i32
    return %arg1, %c0_i32, %c0_i32_0 : i32, i32, i32
  }
  func.func @transform_11(%arg0: i32, %arg1: i32) -> (i32, i32, i32) {
    %c0_i32 = arith.constant 0 : i32
    %c0_i32_0 = arith.constant 0 : i32
    %c0_i32_1 = arith.constant 0 : i32
    return %arg1, %c0_i32, %c0_i32_0 : i32, i32, i32
  }
  func.func @transform_12(%arg0: i32, %arg1: i32) -> (i32, i32, i32) {
    %c0_i32 = arith.constant 0 : i32
    %c0_i32_0 = arith.constant 0 : i32
    %c0_i32_1 = arith.constant 0 : i32
    return %arg1, %c0_i32, %c0_i32_0 : i32, i32, i32
  }
  func.func @transform_13(%arg0: i32, %arg1: i32) -> (i32, i32, i32) {
    %c0_i32 = arith.constant 0 : i32
    %c0_i32_0 = arith.constant 0 : i32
    %c0_i32_1 = arith.constant 0 : i32
    return %arg1, %c0_i32, %c0_i32_0 : i32, i32, i32
  }
  func.func @transform_14(%arg0: i32, %arg1: i32) -> (i32, i32, i32) {
    %c0_i32 = arith.constant 0 : i32
    %c0_i32_0 = arith.constant 0 : i32
    %c0_i32_1 = arith.constant 0 : i32
    return %arg1, %c0_i32, %c0_i32_0 : i32, i32, i32
  }
  func.func @transform_15(%arg0: i32, %arg1: i32) -> (i32, i32, i32) {
    %c0_i32 = arith.constant 0 : i32
    %c0_i32_0 = arith.constant 0 : i32
    %c0_i32_1 = arith.constant 0 : i32
    return %arg1, %c0_i32, %c0_i32_0 : i32, i32, i32
  }
  func.func @transform_16(%arg0: i32, %arg1: i32) -> (i32, i32, i32) {
    %c0_i32 = arith.constant 0 : i32
    %c0_i32_0 = arith.constant 0 : i32
    %c0_i32_1 = arith.constant 0 : i32
    return %arg1, %c0_i32, %c0_i32_0 : i32, i32, i32
  }
  func.func @transform_17(%arg0: i32, %arg1: i32) -> (i32, i32, i32) {
    %c0_i32 = arith.constant 0 : i32
    %c0_i32_0 = arith.constant 0 : i32
    %c0_i32_1 = arith.constant 0 : i32
    return %arg0, %c0_i32, %c0_i32_0 : i32, i32, i32
  }
}

module attributes {stable_mosaic.version = 11 : i64} {
  func.func @_lmhead_kernel(%arg0: i32, %arg1: i32, %arg2: memref<256x128xf32, #tpu.memory_space<vmem>>, %arg3: memref<1x128xf32, #tpu.memory_space<vmem>>, %arg4: memref<1x128xf32, #tpu.memory_space<vmem>>, %arg5: memref<512x128xbf16, #tpu.memory_space<vmem>>, %arg6: memref<256x512xf32, #tpu.memory_space<vmem>>, %arg7: memref<256x128xbf16, #tpu.memory_space<vmem>>) attributes {dimension_semantics = [#tpu.dimension_semantics<parallel>, #tpu.dimension_semantics<arbitrary>], iteration_bounds = array<i64: 2, 2>, scalar_prefetch = 0 : i64, scratch_operands = 1 : i64, tpu.core_type = #tpu.core_type<tc>, window_params = [{transform_indices = @transform_0, window_bounds = array<i64: 256, 128>}, {pipeline_mode = #tpu.pipeline_mode<synchronous>, transform_indices = @transform_1, window_bounds = array<i64: 1, 128>}, {pipeline_mode = #tpu.pipeline_mode<synchronous>, transform_indices = @transform_2, window_bounds = array<i64: 1, 128>}, {transform_indices = @transform_3, window_bounds = array<i64: 512, 128>}, {transform_indices = @transform_4, window_bounds = array<i64: 256, 512>}]} {
    %c0_i32 = arith.constant 0 : i32
    %0 = arith.cmpi eq, %arg1, %c0_i32 : i32
    %1 = arith.extui %0 : i1 to i32
    %c0_i32_0 = arith.constant 0 : i32
    %2 = arith.cmpi ne, %1, %c0_i32_0 : i32
    scf.if %2 {
      %c0_6 = arith.constant 0 : index
      %c0_7 = arith.constant 0 : index
      %7 = vector.load %arg2[%c0_6, %c0_7] : memref<256x128xf32, #tpu.memory_space<vmem>>, vector<256x128xf32>
      %c0_8 = arith.constant 0 : index
      %c0_9 = arith.constant 0 : index
      %8 = vector.load %arg3[%c0_8, %c0_9] : memref<1x128xf32, #tpu.memory_space<vmem>>, vector<1x128xf32>
      %c0_10 = arith.constant 0 : index
      %c0_11 = arith.constant 0 : index
      %9 = vector.load %arg4[%c0_10, %c0_11] : memref<1x128xf32, #tpu.memory_space<vmem>>, vector<1x128xf32>
      %cst_12 = arith.constant dense<0.000000e+00> : vector<256xf32>
      %10 = vector.multi_reduction <add>, %7, %cst_12 [1] : vector<256x128xf32> to vector<256xf32>
      %11 = vector.shape_cast %10 : vector<256xf32> to vector<256x1xf32>
      %cst_13 = arith.constant 1.280000e+02 : f32
      %12 = vector.broadcast %cst_13 : f32 to vector<256x1xf32>
      %13 = arith.divf %11, %12 : vector<256x1xf32>
      %14 = vector.broadcast %13 : vector<256x1xf32> to vector<256x128xf32>
      %15 = arith.subf %7, %14 : vector<256x128xf32>
      %16 = arith.mulf %15, %15 : vector<256x128xf32>
      %cst_14 = arith.constant dense<0.000000e+00> : vector<256xf32>
      %17 = vector.multi_reduction <add>, %16, %cst_14 [1] : vector<256x128xf32> to vector<256xf32>
      %18 = vector.shape_cast %17 : vector<256xf32> to vector<256x1xf32>
      %cst_15 = arith.constant 1.280000e+02 : f32
      %19 = vector.broadcast %cst_15 : f32 to vector<256x1xf32>
      %20 = arith.divf %18, %19 : vector<256x1xf32>
      %21 = vector.broadcast %13 : vector<256x1xf32> to vector<256x128xf32>
      %22 = arith.subf %7, %21 : vector<256x128xf32>
      %cst_16 = arith.constant 9.99999974E-6 : f32
      %23 = vector.broadcast %cst_16 : f32 to vector<256x1xf32>
      %24 = arith.addf %20, %23 : vector<256x1xf32>
      %25 = math.rsqrt %24 : vector<256x1xf32>
      %26 = vector.broadcast %25 : vector<256x1xf32> to vector<256x128xf32>
      %27 = arith.mulf %22, %26 : vector<256x128xf32>
      %28 = vector.broadcast %8 : vector<1x128xf32> to vector<256x128xf32>
      %29 = arith.mulf %27, %28 : vector<256x128xf32>
      %30 = vector.broadcast %9 : vector<1x128xf32> to vector<256x128xf32>
      %31 = arith.addf %29, %30 : vector<256x128xf32>
      %32 = arith.truncf %31 : vector<256x128xf32> to vector<256x128xbf16>
      %c0_17 = arith.constant 0 : index
      %c0_18 = arith.constant 0 : index
      %33 = vector.load %arg7[%c0_17, %c0_18] : memref<256x128xbf16, #tpu.memory_space<vmem>>, vector<256x128xbf16>
      tpu.vector_store %arg7[%c0_17, %c0_18], %32 {strides = array<i32>} : memref<256x128xbf16, #tpu.memory_space<vmem>>, vector<256x128xbf16>,
    } else {
    }
    %c0 = arith.constant 0 : index
    %c0_1 = arith.constant 0 : index
    %3 = vector.load %arg7[%c0, %c0_1] : memref<256x128xbf16, #tpu.memory_space<vmem>>, vector<256x128xbf16>
    %c0_2 = arith.constant 0 : index
    %c0_3 = arith.constant 0 : index
    %4 = vector.load %arg5[%c0_2, %c0_3] : memref<512x128xbf16, #tpu.memory_space<vmem>>, vector<512x128xbf16>
    %cst = arith.constant dense<0.000000e+00> : vector<256x512xf32>
    %5 = tpu.matmul %3, %4, %cst {dimension_numbers = #tpu.dot_dimension_numbers<[1], [1], [0], [0], [0, 0, 1, 0], [], []>} : vector<256x128xbf16>, vector<512x128xbf16>, vector<256x512xf32> -> vector<256x512xf32>
    %c0_4 = arith.constant 0 : index
    %c0_5 = arith.constant 0 : index
    %6 = vector.load %arg6[%c0_4, %c0_5] : memref<256x512xf32, #tpu.memory_space<vmem>>, vector<256x512xf32>
    tpu.vector_store %arg6[%c0_4, %c0_5], %5 {strides = array<i32>} : memref<256x512xf32, #tpu.memory_space<vmem>>, vector<256x512xf32>,
    return
  }
  func.func @transform_0(%arg0: i32, %arg1: i32) -> (i32, i32) {
    %c0_i32 = arith.constant 0 : i32
    %c0_i32_0 = arith.constant 0 : i32
    return %arg0, %c0_i32 : i32, i32
  }
  func.func @transform_1(%arg0: i32, %arg1: i32) -> (i32, i32) {
    %c0_i32 = arith.constant 0 : i32
    %c0_i32_0 = arith.constant 0 : i32
    %c0_i32_1 = arith.constant 0 : i32
    return %c0_i32, %c0_i32_0 : i32, i32
  }
  func.func @transform_2(%arg0: i32, %arg1: i32) -> (i32, i32) {
    %c0_i32 = arith.constant 0 : i32
    %c0_i32_0 = arith.constant 0 : i32
    %c0_i32_1 = arith.constant 0 : i32
    return %c0_i32, %c0_i32_0 : i32, i32
  }
  func.func @transform_3(%arg0: i32, %arg1: i32) -> (i32, i32) {
    %c0_i32 = arith.constant 0 : i32
    %c0_i32_0 = arith.constant 0 : i32
    return %arg1, %c0_i32 : i32, i32
  }
  func.func @transform_4(%arg0: i32, %arg1: i32) -> (i32, i32) {
    %c0_i32 = arith.constant 0 : i32
    return %arg0, %arg1 : i32, i32
  }
}

</mosaic_0001>

<llo_original>
// kernel: _lambda_.3
$region0: #{_lambda_.3}
  #allocation0 [shape = 'u32[]', space=smem, size = 0x4, offset = 0x4, fixed_abs, tag = 'smem constant byte address 0x4 - core index']
  #allocation1 [shape = 'u32[144,128]{1,0:T(1,128)}', space=vmem, size = 0x12000, scoped, tag = 'internal scratch']
  #allocation2 [shape = 'bf16[256,128]{1,0:T(16,128)(2,1)}', space=vmem, size = 0x10000, scoped, tag = 'scratch operand']
  %s0 = inlined_call_operand.vmem [shape: f32[512,128], index: 0, kind: input, shape index: {}]
  %s1 = inlined_call_operand.vmem [shape: f32[1,128], index: 1, kind: input, shape index: {}]
  %s2 = inlined_call_operand.vmem [shape: f32[1,128], index: 2, kind: input, shape index: {}]
  %s3 = inlined_call_operand.vmem [shape: bf16[1024,128], index: 3, kind: input, shape index: {}]
  %s4 = inlined_call_operand.hbm [shape: f32[512,1024], index: 4, kind: output, shape index: {}]
  %s5 = sld [smem:[#allocation0]]
  $region53: #{_lambda_.3} parent=0
    _
  %s7 = ssub.s32 1, %s5
  %s8 = scalar_select 0, %s7, %s5
  $region1: #{_lambda_.3} parent=0
    #allocation3 [shape = 'u8[1048576]{0}', space=vmem, size = 0x100000, scoped, tag = 'output window, operand 0']
    #allocation4 [shape = 's32[2]{0}', space=sflag, size = 0x8, scoped, tag = 'scoped memory for _lambda_.3']
    %9 = vsyncpa [#allocation4], 0
    %s10 = scalar_lea.sflag [#allocation4], 1
    %11 = vsyncpa %s10, 0
    loop: start=0, step=1, limit=6
    $region2: #{_lambda_.3} parent=1 // loop_pre_header
      _
    $region3: #{_lambda_.3} parent=1 // loop_header
      %s13 = sphi 0, %s17
      %p14 = scmp.ge.s32.totalorder %s13, 6
      %s20 = sphi 0, %s32
      %s21 = sphi 0, %s28
      %s22 = sphi 0, %s20
      %s23 = sphi 0, %s21
      %s24 = sphi 0, %s22
      %s25 = sphi 0, %s23
      %s35 = sphi 0, %s37
      %s38 = sphi 0, %s35
      %s39 = sphi 0, %s38
      %s55 = sphi 0, %s39
      %s59 = sphi 0, %s59
      %s61 = sphi 0, %s59
      %s62 = sphi 0, %s61
      %s76 = sphi 0, %s62
      %s80 = sphi 0, %s80
      %s82 = sphi 0, %s80
      %s83 = sphi 0, %s82
      %s97 = sphi 0, %s83
      %s103 = sphi 0, %s105
      %s106 = sphi 0, %s103
      %s107 = sphi 0, %s106
      %s123 = sphi 0, %s107
      %s131 = sphi 0, %s133
      %s134 = sphi 0, %s131
      %s135 = sphi 0, %s134
      %s151 = sphi 0, %s135
    $region4: #{_lambda_.3} parent=1 // loop_header_branch
      %16 = sbr.rel (%p14) target = $region8
    $region5: #{_lambda_.3} parent=1 // loop_body
      %s18 = ssub.s32 %s13, 1
      %s19 = ssub.s32 %s13, 2
      %s26 = sadd.s32 1, %s21
      %p27 = scmp.ge.s32.totalorder %s26, 2
      %s28 = scalar_select %p27, 0, %s26
      %s29 = sadd.s32 1, %s20
      %s30 = scalar_select %p27, %s29, %s20
      %p31 = scmp.ge.s32.totalorder %s30, 2
      %s32 = scalar_select %p31, 0, %s30
      %s33 = ssub.s32 %s20, %s32
      %p34 = scmp.eq.s32.totalorder %s33, 0
      %s36 = sadd.s32 %s35, 1
      %s37 = scalar_select %p34, %s35, %s36
      %p40 = pneg %p34
      %p41 = scmp.eq.s32.totalorder %s13, 3
      %p42 = por %p40, %p41
      %p43 = scmp.ne.s32.totalorder %s35, %s38
      %p44 = scmp.eq.s32.totalorder %s13, 0
      %p45 = por %p43, %p44
      %p46 = scmp.ne.s32.totalorder %s35, %s38
      %p47 = scmp.eq.s32.totalorder %s18, 3
      %p48 = por %p46, %p47
      %p49 = scmp.ne.s32.totalorder %s38, %s39
      %p50 = scmp.eq.s32.totalorder %s18, 0
      %p51 = por %p49, %p50
      %p52 = scmp.ne.s32.totalorder %s38, %s39
      %p53 = scmp.eq.s32.totalorder %s19, 3
      %p54 = por %p52, %p53
      %p56 = scmp.ne.s32.totalorder %s39, %s55
      %p57 = scmp.eq.s32.totalorder %s19, 0
      %p58 = por %p56, %p57
      %s60 = sadd.s32 %s59, 1
      %p63 = scmp.eq.s32.totalorder %s13, 3
      %p64 = scmp.ne.s32.totalorder %s59, %s61
      %p65 = scmp.eq.s32.totalorder %s13, 0
      %p66 = por %p64, %p65
      %p67 = scmp.ne.s32.totalorder %s59, %s61
      %p68 = scmp.eq.s32.totalorder %s18, 3
      %p69 = por %p67, %p68
      %p70 = scmp.ne.s32.totalorder %s61, %s62
      %p71 = scmp.eq.s32.totalorder %s18, 0
      %p72 = por %p70, %p71
      %p73 = scmp.ne.s32.totalorder %s61, %s62
      %p74 = scmp.eq.s32.totalorder %s19, 3
      %p75 = por %p73, %p74
      %p77 = scmp.ne.s32.totalorder %s62, %s76
      %p78 = scmp.eq.s32.totalorder %s19, 0
      %p79 = por %p77, %p78
      %s81 = sadd.s32 %s80, 1
      %p84 = scmp.eq.s32.totalorder %s13, 3
      %p85 = scmp.ne.s32.totalorder %s80, %s82
      %p86 = scmp.eq.s32.totalorder %s13, 0
      %p87 = por %p85, %p86
      %p88 = scmp.ne.s32.totalorder %s80, %s82
      %p89 = scmp.eq.s32.totalorder %s18, 3
      %p90 = por %p88, %p89
      %p91 = scmp.ne.s32.totalorder %s82, %s83
      %p92 = scmp.eq.s32.totalorder %s18, 0
      %p93 = por %p91, %p92
      %p94 = scmp.ne.s32.totalorder %s82, %s83
      %p95 = scmp.eq.s32.totalorder %s19, 3
      %p96 = por %p94, %p95
      %p98 = scmp.ne.s32.totalorder %s83, %s97
      %p99 = scmp.eq.s32.totalorder %s19, 0
      %p100 = por %p98, %p99
      %s101 = ssub.s32 %s21, %s28
      %p102 = scmp.eq.s32.totalorder %s101, 0
      %s104 = sadd.s32 %s103, 1
      %s105 = scalar_select %p102, %s103, %s104
      %p108 = pneg %p102
      %p109 = scmp.eq.s32.totalorder %s13, 3
      %p110 = por %p108, %p109
      %p111 = scmp.ne.s32.totalorder %s103, %s106
      %p112 = scmp.eq.s32.totalorder %s13, 0
      %p113 = por %p111, %p112
      %p114 = scmp.ne.s32.totalorder %s103, %s106
      %p115 = scmp.eq.s32.totalorder %s18, 3
      %p116 = por %p114, %p115
      %p117 = scmp.ne.s32.totalorder %s106, %s107
      %p118 = scmp.eq.s32.totalorder %s18, 0
      %p119 = por %p117, %p118
      %p120 = scmp.ne.s32.totalorder %s106, %s107
      %p121 = scmp.eq.s32.totalorder %s19, 3
      %p122 = por %p120, %p121
      %p124 = scmp.ne.s32.totalorder %s107, %s123
      %p125 = scmp.eq.s32.totalorder %s19, 0
      %p126 = por %p124, %p125
      %s127 = ssub.s32 %s20, %s32
      %s128 = ssub.s32 %s21, %s28
      %s129 = sor.u32 %s127, %s128
      %p130 = scmp.eq.s32.totalorder %s129, 0
      %s132 = sadd.s32 %s131, 1
      %s133 = scalar_select %p130, %s131, %s132
      %p136 = pneg %p130
      %p137 = scmp.eq.s32.totalorder %s13, 3
      %p138 = por %p136, %p137
      %p139 = scmp.ne.s32.totalorder %s131, %s134
      %p140 = scmp.eq.s32.totalorder %s13, 0
      %p141 = por %p139, %p140
      %p142 = scmp.ne.s32.totalorder %s131, %s134
      %p143 = scmp.eq.s32.totalorder %s18, 3
      %p144 = por %p142, %p143
      %p145 = scmp.ne.s32.totalorder %s134, %s135
      %p146 = scmp.eq.s32.totalorder %s18, 0
      %p147 = por %p145, %p146
      %p148 = scmp.ne.s32.totalorder %s134, %s135
      %p149 = scmp.eq.s32.totalorder %s19, 3
      %p150 = por %p148, %p149
      %p152 = scmp.ne.s32.totalorder %s135, %s151
      %p153 = scmp.eq.s32.totalorder %s19, 0
      %p154 = por %p152, %p153
      %p155 = scmp.le.s32.totalorder 1, %s13
      %p156 = scmp.lt.s32.totalorder %s13, 5
      %p157 = pnand %p155, %p156
      %p158 = pneg %p157
      // Predicated region
      $region9: #{_lambda_.3} parent=5 // pred_check
        _
      $region10: #{_lambda_.3} parent=5 // pred_check_branch
        %160 = sbr.rel (%p157) target = $region12
      $region11: #{_lambda_.3} parent=5 // pred_region
        %s161 = ssub.s32 %s13, 1
        // Predicated region
        $region13: #{_lambda_.3} parent=11 // pred_check
          %p162 = pneg %p72
        $region14: #{_lambda_.3} parent=11 // pred_check_branch
          %164 = sbr.rel (%p162) target = $region16
        $region15: #{_lambda_.3} parent=11 // pred_region
          _
        $region16: #{_lambda_.3} parent=11 // pred_fallthru
          _
        // Predicated region
        $region17: #{_lambda_.3} parent=11 // pred_check
          %p165 = pneg %p93
        $region18: #{_lambda_.3} parent=11 // pred_check_branch
          %167 = sbr.rel (%p165) target = $region20
        $region19: #{_lambda_.3} parent=11 // pred_region
          _
        $region20: #{_lambda_.3} parent=11 // pred_fallthru
          _
      $region12: #{_lambda_.3} parent=5 // pred_fallthru
        _
      %p168 = scmp.lt.s32.totalorder %s13, 4
      // Predicated region
      $region21: #{_lambda_.3} parent=5 // pred_check
        %p169 = pneg %p168
      $region22: #{_lambda_.3} parent=5 // pred_check_branch
        %171 = sbr.rel (%p169) target = $region24
      $region23: #{_lambda_.3} parent=5 // pred_region
        // Predicated region
        $region25: #{_lambda_.3} parent=23 // pred_check
          %p172 = pneg %p45
        $region26: #{_lambda_.3} parent=23 // pred_check_branch
          %174 = sbr.rel (%p172) target = $region28
        $region27: #{_lambda_.3} parent=23 // pred_region
          %s175 = smul.u32 32, %s20
          %p176 = scmp.lt.s32.totalorder %s175, 63
          %s177 = scalar_select %p176, %s175, 63
          %s178 = smul.addr %s177, 8
          %s179 = scalar_lea.vmem %s0, %s178
          %s180 = smul.u32 32, %s20
        $region28: #{_lambda_.3} parent=23 // pred_fallthru
          _
        // Predicated region
        $region29: #{_lambda_.3} parent=23 // pred_check
          %p181 = pneg %p113
        $region30: #{_lambda_.3} parent=23 // pred_check_branch
          %183 = sbr.rel (%p181) target = $region32
        $region31: #{_lambda_.3} parent=23 // pred_region
          %s184 = smul.u32 64, %s21
          %p185 = scmp.lt.s32.totalorder %s184, 127
          %s186 = scalar_select %p185, %s184, 127
          %s187 = smul.addr %s186, 4
          %s188 = scalar_lea.vmem %s3, %s187
          %s189 = smul.u32 64, %s21
        $region32: #{_lambda_.3} parent=23 // pred_fallthru
          _
      $region24: #{_lambda_.3} parent=5 // pred_fallthru
        _
      %p190 = scmp.le.s32.totalorder 1, %s13
      %p191 = scmp.lt.s32.totalorder %s13, 5
      %p192 = pnand %p190, %p191
      %p193 = pneg %p192
      // Predicated region
      $region33: #{_lambda_.3} parent=5 // pred_check
        _
      $region34: #{_lambda_.3} parent=5 // pred_check_branch
        %195 = sbr.rel (%p192) target = $region36
      $region35: #{_lambda_.3} parent=5 // pred_region
        %s196 = ssub.s32 %s13, 1
        %s197 = smul.u32 32, %s22
        %p198 = scmp.lt.s32.totalorder %s197, 63
        %s199 = scalar_select %p198, %s197, 63
        %s200 = smul.addr %s199, 8
        %s201 = scalar_lea.vmem %s0, %s200
        %p202 = pneg %p51
        %p203 = pneg %p48
        %p204 = pneg %p72
        %p205 = pneg %p69
        %p206 = pneg %p93
        %p207 = pneg %p90
        %s208 = smul.u32 64, %s23
        %p209 = scmp.lt.s32.totalorder %s208, 127
        %s210 = scalar_select %p209, %s208, 127
        %s211 = smul.addr %s210, 4
        %s212 = scalar_lea.vmem %s3, %s211
        %p213 = pneg %p119
        %p214 = pneg %p116
        %p215 = pneg %p147
        %p216 = pneg %p144
        %s217 = sand.u32 %s134, 1
        %s218 = scalar_lea.sflag [#allocation4], %s217
        %s219 = sand.u32 %s134, 1
        %s220 = smul.addr %s219, 1024
        %s221 = scalar_lea.vmem [#allocation3], %s220
        %s222 = smul.u32 32, %s22
        %p223 = scmp.lt.s32.totalorder %s222, 63
        %s224 = scalar_select %p223, %s222, 63
        %s225 = smul.addr %s224, 8
        %s226 = scalar_lea.vmem %s0, %s225
        %s227 = smul.u32 32, %s22
        %s228 = smul.u32 64, %s23
        %p229 = scmp.lt.s32.totalorder %s228, 127
        %s230 = scalar_select %p229, %s228, 127
        %s231 = smul.addr %s230, 4
        %s232 = scalar_lea.vmem %s3, %s231
        %s233 = smul.u32 64, %s23
        %s234 = smul.u32 32, %s22
        %s235 = smul.u32 4, %s23
        %p237 = scmp.eq.s32.totalorder %s23, 0
        // Predicated region
        $region37: #{_lambda_.3} parent=35 // pred_check
          %p238 = pneg %p237
        $region38: #{_lambda_.3} parent=35 // pred_check_branch
          %240 = sbr.rel (%p238) target = $region40
        $region39: #{_lambda_.3} parent=35 // pred_region
          %v241 = vld [vmem:[%s226] sm:$0xff]
          %v242 = vld [vmem:[%s226 + $0x8] sm:$0xff]
          %v243 = vld [vmem:[%s226 + $0x10] sm:$0xff]
          %v244 = vld [vmem:[%s226 + $0x18] sm:$0xff]
          %v245 = vld [vmem:[%s226 + $0x20] sm:$0xff]
          %v246 = vld [vmem:[%s226 + $0x28] sm:$0xff]
          %v247 = vld [vmem:[%s226 + $0x30] sm:$0xff]
          %v248 = vld [vmem:[%s226 + $0x38] sm:$0xff]
          %v249 = vld [vmem:[%s226 + $0x40] sm:$0xff]
          %v250 = vld [vmem:[%s226 + $0x48] sm:$0xff]
          %v251 = vld [vmem:[%s226 + $0x50] sm:$0xff]
          %v252 = vld [vmem:[%s226 + $0x58] sm:$0xff]
          %v253 = vld [vmem:[%s226 + $0x60] sm:$0xff]
          %v254 = vld [vmem:[%s226 + $0x68] sm:$0xff]
          %v255 = vld [vmem:[%s226 + $0x70] sm:$0xff]
          %v256 = vld [vmem:[%s226 + $0x78] sm:$0xff]
          %v257 = vld [vmem:[%s226 + $0x80] sm:$0xff]
          %v258 = vld [vmem:[%s226 + $0x88] sm:$0xff]
          %v259 = vld [vmem:[%s226 + $0x90] sm:$0xff]
          %v260 = vld [vmem:[%s226 + $0x98] sm:$0xff]
          %v261 = vld [vmem:[%s226 + $0xa0] sm:$0xff]
          %v262 = vld [vmem:[%s226 + $0xa8] sm:$0xff]
          %v263 = vld [vmem:[%s226 + $0xb0] sm:$0xff]
          %v264 = vld [vmem:[%s226 + $0xb8] sm:$0xff]
          %v265 = vld [vmem:[%s226 + $0xc0] sm:$0xff]
          %v266 = vld [vmem:[%s226 + $0xc8] sm:$0xff]
          %v267 = vld [vmem:[%s226 + $0xd0] sm:$0xff]
          %v268 = vld [vmem:[%s226 + $0xd8] sm:$0xff]
          %v269 = vld [vmem:[%s226 + $0xe0] sm:$0xff]
          %v270 = vld [vmem:[%s226 + $0xe8] sm:$0xff]
          %v271 = vld [vmem:[%s226 + $0xf0] sm:$0xff]
          %v272 = vld [vmem:[%s226 + $0xf8] sm:$0xff]
          %v273 = vld [vmem:[%s1] sm:$0x1]
          %v274 = vld [vmem:[%s2] sm:$0x1]
          %275 = vadd.xlane.f32.xlu0 %v241
          %v276 = vpop.xlane.xlu0 %275
          %277 = vadd.xlane.f32.xlu0 %v242
          %v278 = vpop.xlane.xlu0 %277
          %279 = vadd.xlane.f32.xlu0 %v243
          %v280 = vpop.xlane.xlu0 %279
          %281 = vadd.xlane.f32.xlu0 %v244
          %v282 = vpop.xlane.xlu0 %281
          %283 = vadd.xlane.f32.xlu0 %v245
          %v284 = vpop.xlane.xlu0 %283
          %285 = vadd.xlane.f32.xlu0 %v246
          %v286 = vpop.xlane.xlu0 %285
          %287 = vadd.xlane.f32.xlu0 %v247
          %v288 = vpop.xlane.xlu0 %287
          %289 = vadd.xlane.f32.xlu0 %v248
          %v290 = vpop.xlane.xlu0 %289
          %291 = vadd.xlane.f32.xlu0 %v249
          %v292 = vpop.xlane.xlu0 %291
          %293 = vadd.xlane.f32.xlu0 %v250
          %v294 = vpop.xlane.xlu0 %293
          %295 = vadd.xlane.f32.xlu0 %v251
          %v296 = vpop.xlane.xlu0 %295
          %297 = vadd.xlane.f32.xlu0 %v252
          %v298 = vpop.xlane.xlu0 %297
          %299 = vadd.xlane.f32.xlu0 %v253
          %v300 = vpop.xlane.xlu0 %299
          %301 = vadd.xlane.f32.xlu0 %v254
          %v302 = vpop.xlane.xlu0 %301
          %303 = vadd.xlane.f32.xlu0 %v255
          %v304 = vpop.xlane.xlu0 %303
          %305 = vadd.xlane.f32.xlu0 %v256
          %v306 = vpop.xlane.xlu0 %305
          %307 = vadd.xlane.f32.xlu0 %v257
          %v308 = vpop.xlane.xlu0 %307
          %309 = vadd.xlane.f32.xlu0 %v258
          %v310 = vpop.xlane.xlu0 %309
          %311 = vadd.xlane.f32.xlu0 %v259
          %v312 = vpop.xlane.xlu0 %311
          %313 = vadd.xlane.f32.xlu0 %v260
          %v314 = vpop.xlane.xlu0 %313
          %315 = vadd.xlane.f32.xlu0 %v261
          %v316 = vpop.xlane.xlu0 %315
          %317 = vadd.xlane.f32.xlu0 %v262
          %v318 = vpop.xlane.xlu0 %317
          %319 = vadd.xlane.f32.xlu0 %v263
          %v320 = vpop.xlane.xlu0 %319
          %321 = vadd.xlane.f32.xlu0 %v264
          %v322 = vpop.xlane.xlu0 %321
          %323 = vadd.xlane.f32.xlu0 %v265
          %v324 = vpop.xlane.xlu0 %323
          %325 = vadd.xlane.f32.xlu0 %v266
          %v326 = vpop.xlane.xlu0 %325
          %327 = vadd.xlane.f32.xlu0 %v267
          %v328 = vpop.xlane.xlu0 %327
          %329 = vadd.xlane.f32.xlu0 %v268
          %v330 = vpop.xlane.xlu0 %329
          %331 = vadd.xlane.f32.xlu0 %v269
          %v332 = vpop.xlane.xlu0 %331
          %333 = vadd.xlane.f32.xlu0 %v270
          %v334 = vpop.xlane.xlu0 %333
          %335 = vadd.xlane.f32.xlu0 %v271
          %v336 = vpop.xlane.xlu0 %335
          %337 = vadd.xlane.f32.xlu0 %v272
          %v338 = vpop.xlane.xlu0 %337
          %v339 = vrcp.pop 128.0
          %v340 = vmul.f32 %v276, %v339
          %v341 = vmul.f32 %v278, %v339
          %v342 = vmul.f32 %v280, %v339
          %v343 = vmul.f32 %v282, %v339
          %v344 = vmul.f32 %v284, %v339
          %v345 = vmul.f32 %v286, %v339
          %v346 = vmul.f32 %v288, %v339
          %v347 = vmul.f32 %v290, %v339
          %v348 = vmul.f32 %v292, %v339
          %v349 = vmul.f32 %v294, %v339
          %v350 = vmul.f32 %v296, %v339
          %v351 = vmul.f32 %v298, %v339
          %v352 = vmul.f32 %v300, %v339
          %v353 = vmul.f32 %v302, %v339
          %v354 = vmul.f32 %v304, %v339
          %v355 = vmul.f32 %v306, %v339
          %v356 = vmul.f32 %v308, %v339
          %v357 = vmul.f32 %v310, %v339
          %v358 = vmul.f32 %v312, %v339
          %v359 = vmul.f32 %v314, %v339
          %v360 = vmul.f32 %v316, %v339
          %v361 = vmul.f32 %v318, %v339
          %v362 = vmul.f32 %v320, %v339
          %v363 = vmul.f32 %v322, %v339
          %v364 = vmul.f32 %v324, %v339
          %v365 = vmul.f32 %v326, %v339
          %v366 = vmul.f32 %v328, %v339
          %v367 = vmul.f32 %v330, %v339
          %v368 = vmul.f32 %v332, %v339
          %v369 = vmul.f32 %v334, %v339
          %v370 = vmul.f32 %v336, %v339
          %v371 = vmul.f32 %v338, %v339
          %v372 = vsub.f32 %v241, %v340
          %v373 = vsub.f32 %v242, %v341
          %v374 = vsub.f32 %v243, %v342
          %v375 = vsub.f32 %v244, %v343
          %v376 = vsub.f32 %v245, %v344
          %v377 = vsub.f32 %v246, %v345
          %v378 = vsub.f32 %v247, %v346
          %v379 = vsub.f32 %v248, %v347
          %v380 = vsub.f32 %v249, %v348
          %v381 = vsub.f32 %v250, %v349
          %v382 = vsub.f32 %v251, %v350
          %v383 = vsub.f32 %v252, %v351
          %v384 = vsub.f32 %v253, %v352
          %v385 = vsub.f32 %v254, %v353
          %v386 = vsub.f32 %v255, %v354
          %v387 = vsub.f32 %v256, %v355
          %v388 = vsub.f32 %v257, %v356
          %v389 = vsub.f32 %v258, %v357
          %v390 = vsub.f32 %v259, %v358
          %v391 = vsub.f32 %v260, %v359
          %v392 = vsub.f32 %v261, %v360
          %v393 = vsub.f32 %v262, %v361
          %v394 = vsub.f32 %v263, %v362
          %v395 = vsub.f32 %v264, %v363
          %v396 = vsub.f32 %v265, %v364
          %v397 = vsub.f32 %v266, %v365
          %v398 = vsub.f32 %v267, %v366
          %v399 = vsub.f32 %v268, %v367
          %v400 = vsub.f32 %v269, %v368
          %v401 = vsub.f32 %v270, %v369
          %v402 = vsub.f32 %v271, %v370
          %v403 = vsub.f32 %v272, %v371
          %v404 = vmul.f32 %v372, %v372
          %v405 = vmul.f32 %v373, %v373
          %v406 = vmul.f32 %v374, %v374
          %v407 = vmul.f32 %v375, %v375
          %v408 = vmul.f32 %v376, %v376
          %v409 = vmul.f32 %v377, %v377
          %v410 = vmul.f32 %v378, %v378
          %v411 = vmul.f32 %v379, %v379
          %v412 = vmul.f32 %v380, %v380
          %v413 = vmul.f32 %v381, %v381
          %v414 = vmul.f32 %v382, %v382
          %v415 = vmul.f32 %v383, %v383
          %v416 = vmul.f32 %v384, %v384
          %v417 = vmul.f32 %v385, %v385
          %v418 = vmul.f32 %v386, %v386
          %v419 = vmul.f32 %v387, %v387
          %v420 = vmul.f32 %v388, %v388
          %v421 = vmul.f32 %v389, %v389
          %v422 = vmul.f32 %v390, %v390
          %v423 = vmul.f32 %v391, %v391
          %v424 = vmul.f32 %v392, %v392
          %v425 = vmul.f32 %v393, %v393
          %v426 = vmul.f32 %v394, %v394
          %v427 = vmul.f32 %v395, %v395
          %v428 = vmul.f32 %v396, %v396
          %v429 = vmul.f32 %v397, %v397
          %v430 = vmul.f32 %v398, %v398
          %v431 = vmul.f32 %v399, %v399
          %v432 = vmul.f32 %v400, %v400
          %v433 = vmul.f32 %v401, %v401
          %v434 = vmul.f32 %v402, %v402
          %v435 = vmul.f32 %v403, %v403
          %436 = vadd.xlane.f32.xlu0 %v404
          %v437 = vpop.xlane.xlu0 %436
          %438 = vadd.xlane.f32.xlu0 %v405
          %v439 = vpop.xlane.xlu0 %438
          %440 = vadd.xlane.f32.xlu0 %v406
          %v441 = vpop.xlane.xlu0 %440
          %442 = vadd.xlane.f32.xlu0 %v407
          %v443 = vpop.xlane.xlu0 %442
          %444 = vadd.xlane.f32.xlu0 %v408
          %v445 = vpop.xlane.xlu0 %444
          %446 = vadd.xlane.f32.xlu0 %v409
          %v447 = vpop.xlane.xlu0 %446
          %448 = vadd.xlane.f32.xlu0 %v410
          %v449 = vpop.xlane.xlu0 %448
          %450 = vadd.xlane.f32.xlu0 %v411
          %v451 = vpop.xlane.xlu0 %450
          %452 = vadd.xlane.f32.xlu0 %v412
          %v453 = vpop.xlane.xlu0 %452
          %454 = vadd.xlane.f32.xlu0 %v413
          %v455 = vpop.xlane.xlu0 %454
          %456 = vadd.xlane.f32.xlu0 %v414
          %v457 = vpop.xlane.xlu0 %456
          %458 = vadd.xlane.f32.xlu0 %v415
          %v459 = vpop.xlane.xlu0 %458
          %460 = vadd.xlane.f32.xlu0 %v416
          %v461 = vpop.xlane.xlu0 %460
          %462 = vadd.xlane.f32.xlu0 %v417
          %v463 = vpop.xlane.xlu0 %462
          %464 = vadd.xlane.f32.xlu0 %v418
          %v465 = vpop.xlane.xlu0 %464
          %466 = vadd.xlane.f32.xlu0 %v419
          %v467 = vpop.xlane.xlu0 %466
          %468 = vadd.xlane.f32.xlu0 %v420
          %v469 = vpop.xlane.xlu0 %468
          %470 = vadd.xlane.f32.xlu0 %v421
          %v471 = vpop.xlane.xlu0 %470
          %472 = vadd.xlane.f32.xlu0 %v422
          %v473 = vpop.xlane.xlu0 %472
          %474 = vadd.xlane.f32.xlu0 %v423
          %v475 = vpop.xlane.xlu0 %474
          %476 = vadd.xlane.f32.xlu0 %v424
          %v477 = vpop.xlane.xlu0 %476
          %478 = vadd.xlane.f32.xlu0 %v425
          %v479 = vpop.xlane.xlu0 %478
          %480 = vadd.xlane.f32.xlu0 %v426
          %v481 = vpop.xlane.xlu0 %480
          %482 = vadd.xlane.f32.xlu0 %v427
          %v483 = vpop.xlane.xlu0 %482
          %484 = vadd.xlane.f32.xlu0 %v428
          %v485 = vpop.xlane.xlu0 %484
          %486 = vadd.xlane.f32.xlu0 %v429
          %v487 = vpop.xlane.xlu0 %486
          %488 = vadd.xlane.f32.xlu0 %v430
          %v489 = vpop.xlane.xlu0 %488
          %490 = vadd.xlane.f32.xlu0 %v431
          %v491 = vpop.xlane.xlu0 %490
          %492 = vadd.xlane.f32.xlu0 %v432
          %v493 = vpop.xlane.xlu0 %492
          %494 = vadd.xlane.f32.xlu0 %v433
          %v495 = vpop.xlane.xlu0 %494
          %496 = vadd.xlane.f32.xlu0 %v434
          %v497 = vpop.xlane.xlu0 %496
          %498 = vadd.xlane.f32.xlu0 %v435
          %v499 = vpop.xlane.xlu0 %498
          %v500 = vmul.f32 %v437, %v339
          %v501 = vmul.f32 %v439, %v339
          %v502 = vmul.f32 %v441, %v339
          %v503 = vmul.f32 %v443, %v339
          %v504 = vmul.f32 %v445, %v339
          %v505 = vmul.f32 %v447, %v339
          %v506 = vmul.f32 %v449, %v339
          %v507 = vmul.f32 %v451, %v339
          %v508 = vmul.f32 %v453, %v339
          %v509 = vmul.f32 %v455, %v339
          %v510 = vmul.f32 %v457, %v339
          %v511 = vmul.f32 %v459, %v339
          %v512 = vmul.f32 %v461, %v339
          %v513 = vmul.f32 %v463, %v339
          %v514 = vmul.f32 %v465, %v339
          %v515 = vmul.f32 %v467, %v339
          %v516 = vmul.f32 %v469, %v339
          %v517 = vmul.f32 %v471, %v339
          %v518 = vmul.f32 %v473, %v339
          %v519 = vmul.f32 %v475, %v339
          %v520 = vmul.f32 %v477, %v339
          %v521 = vmul.f32 %v479, %v339
          %v522 = vmul.f32 %v481, %v339
          %v523 = vmul.f32 %v483, %v339
          %v524 = vmul.f32 %v485, %v339
          %v525 = vmul.f32 %v487, %v339
          %v526 = vmul.f32 %v489, %v339
          %v527 = vmul.f32 %v491, %v339
          %v528 = vmul.f32 %v493, %v339
          %v529 = vmul.f32 %v495, %v339
          %v530 = vmul.f32 %v497, %v339
          %v531 = vmul.f32 %v499, %v339
          %v532 = vadd.f32 %v500, 1e-05
          %v533 = vadd.f32 %v501, 1e-05
          %v534 = vadd.f32 %v502, 1e-05
          %v535 = vadd.f32 %v503, 1e-05
          %v536 = vadd.f32 %v504, 1e-05
          %v537 = vadd.f32 %v505, 1e-05
          %v538 = vadd.f32 %v506, 1e-05
          %v539 = vadd.f32 %v507, 1e-05
          %v540 = vadd.f32 %v508, 1e-05
          %v541 = vadd.f32 %v509, 1e-05
          %v542 = vadd.f32 %v510, 1e-05
          %v543 = vadd.f32 %v511, 1e-05
          %v544 = vadd.f32 %v512, 1e-05
          %v545 = vadd.f32 %v513, 1e-05
          %v546 = vadd.f32 %v514, 1e-05
          %v547 = vadd.f32 %v515, 1e-05
          %v548 = vadd.f32 %v516, 1e-05
          %v549 = vadd.f32 %v517, 1e-05
          %v550 = vadd.f32 %v518, 1e-05
          %v551 = vadd.f32 %v519, 1e-05
          %v552 = vadd.f32 %v520, 1e-05
          %v553 = vadd.f32 %v521, 1e-05
          %v554 = vadd.f32 %v522, 1e-05
          %v555 = vadd.f32 %v523, 1e-05
          %v556 = vadd.f32 %v524, 1e-05
          %v557 = vadd.f32 %v525, 1e-05
          %v558 = vadd.f32 %v526, 1e-05
          %v559 = vadd.f32 %v527, 1e-05
          %v560 = vadd.f32 %v528, 1e-05
          %v561 = vadd.f32 %v529, 1e-05
          %v562 = vadd.f32 %v530, 1e-05
          %v563 = vadd.f32 %v531, 1e-05
          %v564 = vrsqrt.pop %v532
          %v565 = vrsqrt.pop %v533
          %v566 = vrsqrt.pop %v534
          %v567 = vrsqrt.pop %v535
          %v568 = vrsqrt.pop %v536
          %v569 = vrsqrt.pop %v537
          %v570 = vrsqrt.pop %v538
          %v571 = vrsqrt.pop %v539
          %v572 = vrsqrt.pop %v540
          %v573 = vrsqrt.pop %v541
          %v574 = vrsqrt.pop %v542
          %v575 = vrsqrt.pop %v543
          %v576 = vrsqrt.pop %v544
          %v577 = vrsqrt.pop %v545
          %v578 = vrsqrt.pop %v546
          %v579 = vrsqrt.pop %v547
          %v580 = vrsqrt.pop %v548
          %v581 = vrsqrt.pop %v549
          %v582 = vrsqrt.pop %v550
          %v583 = vrsqrt.pop %v551
          %v584 = vrsqrt.pop %v552
          %v585 = vrsqrt.pop %v553
          %v586 = vrsqrt.pop %v554
          %v587 = vrsqrt.pop %v555
          %v588 = vrsqrt.pop %v556
          %v589 = vrsqrt.pop %v557
          %v590 = vrsqrt.pop %v558
          %v591 = vrsqrt.pop %v559
          %v592 = vrsqrt.pop %v560
          %v593 = vrsqrt.pop %v561
          %v594 = vrsqrt.pop %v562
          %v595 = vrsqrt.pop %v563
          %v596 = vmul.f32 %v372, %v564
          %v597 = vmul.f32 %v373, %v565
          %v598 = vmul.f32 %v374, %v566
          %v599 = vmul.f32 %v375, %v567
          %v600 = vmul.f32 %v376, %v568
          %v601 = vmul.f32 %v377, %v569
          %v602 = vmul.f32 %v378, %v570
          %v603 = vmul.f32 %v379, %v571
          %v604 = vmul.f32 %v380, %v572
          %v605 = vmul.f32 %v381, %v573
          %v606 = vmul.f32 %v382, %v574
          %v607 = vmul.f32 %v383, %v575
          %v608 = vmul.f32 %v384, %v576
          %v609 = vmul.f32 %v385, %v577
          %v610 = vmul.f32 %v386, %v578
          %v611 = vmul.f32 %v387, %v579
          %v612 = vmul.f32 %v388, %v580
          %v613 = vmul.f32 %v389, %v581
          %v614 = vmul.f32 %v390, %v582
          %v615 = vmul.f32 %v391, %v583
          %v616 = vmul.f32 %v392, %v584
          %v617 = vmul.f32 %v393, %v585
          %v618 = vmul.f32 %v394, %v586
          %v619 = vmul.f32 %v395, %v587
          %v620 = vmul.f32 %v396, %v588
          %v621 = vmul.f32 %v397, %v589
          %v622 = vmul.f32 %v398, %v590
          %v623 = vmul.f32 %v399, %v591
          %v624 = vmul.f32 %v400, %v592
          %v625 = vmul.f32 %v401, %v593
          %v626 = vmul.f32 %v402, %v594
          %v627 = vmul.f32 %v403, %v595
          %v629 = vlaneseq
          %v630 = vshrl.u32 %v629, 7
          %v631 = vsub.s32 0, %v630
          %v632 = vrot.slane %v273, %v631
          %v634 = vmul.f32 %v596, %v632
          %v635 = vmul.f32 %v597, %v632
          %v636 = vmul.f32 %v598, %v632
          %v637 = vmul.f32 %v599, %v632
          %v638 = vmul.f32 %v600, %v632
          %v639 = vmul.f32 %v601, %v632
          %v640 = vmul.f32 %v602, %v632
          %v641 = vmul.f32 %v603, %v632
          %v642 = vmul.f32 %v604, %v632
          %v643 = vmul.f32 %v605, %v632
          %v644 = vmul.f32 %v606, %v632
          %v645 = vmul.f32 %v607, %v632
          %v646 = vmul.f32 %v608, %v632
          %v647 = vmul.f32 %v609, %v632
          %v648 = vmul.f32 %v610, %v632
          %v649 = vmul.f32 %v611, %v632
          %v650 = vmul.f32 %v612, %v632
          %v651 = vmul.f32 %v613, %v632
          %v652 = vmul.f32 %v614, %v632
          %v653 = vmul.f32 %v615, %v632
          %v654 = vmul.f32 %v616, %v632
          %v655 = vmul.f32 %v617, %v632
          %v656 = vmul.f32 %v618, %v632
          %v657 = vmul.f32 %v619, %v632
          %v658 = vmul.f32 %v620, %v632
          %v659 = vmul.f32 %v621, %v632
          %v660 = vmul.f32 %v622, %v632
          %v661 = vmul.f32 %v623, %v632
          %v662 = vmul.f32 %v624, %v632
          %v663 = vmul.f32 %v625, %v632
          %v664 = vmul.f32 %v626, %v632
          %v665 = vmul.f32 %v627, %v632
          %v667 = vlaneseq
          %v668 = vshrl.u32 %v667, 7
          %v669 = vsub.s32 0, %v668
          %v670 = vrot.slane %v274, %v669
          %v672 = vadd.f32 %v634, %v670
          %v673 = vadd.f32 %v635, %v670
          %v674 = vadd.f32 %v636, %v670
          %v675 = vadd.f32 %v637, %v670
          %v676 = vadd.f32 %v638, %v670
          %v677 = vadd.f32 %v639, %v670
          %v678 = vadd.f32 %v640, %v670
          %v679 = vadd.f32 %v641, %v670
          %v680 = vadd.f32 %v642, %v670
          %v681 = vadd.f32 %v643, %v670
          %v682 = vadd.f32 %v644, %v670
          %v683 = vadd.f32 %v645, %v670
          %v684 = vadd.f32 %v646, %v670
          %v685 = vadd.f32 %v647, %v670
          %v686 = vadd.f32 %v648, %v670
          %v687 = vadd.f32 %v649, %v670
          %v688 = vadd.f32 %v650, %v670
          %v689 = vadd.f32 %v651, %v670
          %v690 = vadd.f32 %v652, %v670
          %v691 = vadd.f32 %v653, %v670
          %v692 = vadd.f32 %v654, %v670
          %v693 = vadd.f32 %v655, %v670
          %v694 = vadd.f32 %v656, %v670
          %v695 = vadd.f32 %v657, %v670
          %v696 = vadd.f32 %v658, %v670
          %v697 = vadd.f32 %v659, %v670
          %v698 = vadd.f32 %v660, %v670
          %v699 = vadd.f32 %v661, %v670
          %v700 = vadd.f32 %v662, %v670
          %v701 = vadd.f32 %v663, %v670
          %v702 = vadd.f32 %v664, %v670
          %v703 = vadd.f32 %v665, %v670
          %v704 = vpack.c.bf16 %v673, %v672
          %v705 = vpack.c.bf16 %v675, %v674
          %v706 = vpack.c.bf16 %v677, %v676
          %v707 = vpack.c.bf16 %v679, %v678
          %v708 = vpack.c.bf16 %v681, %v680
          %v709 = vpack.c.bf16 %v683, %v682
          %v710 = vpack.c.bf16 %v685, %v684
          %v711 = vpack.c.bf16 %v687, %v686
          %v712 = vpack.c.bf16 %v689, %v688
          %v713 = vpack.c.bf16 %v691, %v690
          %v714 = vpack.c.bf16 %v693, %v692
          %v715 = vpack.c.bf16 %v695, %v694
          %v716 = vpack.c.bf16 %v697, %v696
          %v717 = vpack.c.bf16 %v699, %v698
          %v718 = vpack.c.bf16 %v701, %v700
          %v719 = vpack.c.bf16 %v703, %v702
          %720 = vst [vmem:[#allocation2] sm:$0xff] %v704
          %721 = vst [vmem:[#allocation2 + $0x8] sm:$0xff] %v705
          %722 = vst [vmem:[#allocation2 + $0x10] sm:$0xff] %v706
          %723 = vst [vmem:[#allocation2 + $0x18] sm:$0xff] %v707
          %724 = vst [vmem:[#allocation2 + $0x20] sm:$0xff] %v708
          %725 = vst [vmem:[#allocation2 + $0x28] sm:$0xff] %v709
          %726 = vst [vmem:[#allocation2 + $0x30] sm:$0xff] %v710
          %727 = vst [vmem:[#allocation2 + $0x38] sm:$0xff] %v711
          %728 = vst [vmem:[#allocation2 + $0x40] sm:$0xff] %v712
          %729 = vst [vmem:[#allocation2 + $0x48] sm:$0xff] %v713
          %730 = vst [vmem:[#allocation2 + $0x50] sm:$0xff] %v714
          %731 = vst [vmem:[#allocation2 + $0x58] sm:$0xff] %v715
          %732 = vst [vmem:[#allocation2 + $0x60] sm:$0xff] %v716
          %733 = vst [vmem:[#allocation2 + $0x68] sm:$0xff] %v717
          %734 = vst [vmem:[#allocation2 + $0x70] sm:$0xff] %v718
          %735 = vst [vmem:[#allocation2 + $0x78] sm:$0xff] %v719
        $region40: #{_lambda_.3} parent=35 // pred_fallthru
          _
        %v736 = vld [vmem:[#allocation2] sm:$0xff]
        %v737 = vld [vmem:[#allocation2 + $0x8] sm:$0xff]
        %v738 = vld [vmem:[#allocation2 + $0x10] sm:$0xff]
        %v739 = vld [vmem:[#allocation2 + $0x18] sm:$0xff]
        %v740 = vld [vmem:[#allocation2 + $0x20] sm:$0xff]
        %v741 = vld [vmem:[#allocation2 + $0x28] sm:$0xff]
        %v742 = vld [vmem:[#allocation2 + $0x30] sm:$0xff]
        %v743 = vld [vmem:[#allocation2 + $0x38] sm:$0xff]
        %v744 = vld [vmem:[#allocation2 + $0x40] sm:$0xff]
        %v745 = vld [vmem:[#allocation2 + $0x48] sm:$0xff]
        %v746 = vld [vmem:[#allocation2 + $0x50] sm:$0xff]
        %v747 = vld [vmem:[#allocation2 + $0x58] sm:$0xff]
        %v748 = vld [vmem:[#allocation2 + $0x60] sm:$0xff]
        %v749 = vld [vmem:[#allocation2 + $0x68] sm:$0xff]
        %v750 = vld [vmem:[#allocation2 + $0x70] sm:$0xff]
        %v751 = vld [vmem:[#allocation2 + $0x78] sm:$0xff]
        %v752 = vld [vmem:[%s232] sm:$0xf]
        %v753 = vld [vmem:[%s232 + $0x4] sm:$0xf]
        %v754 = vld [vmem:[%s232 + $0x8] sm:$0xf]
        %v755 = vld [vmem:[%s232 + $0xc] sm:$0xf]
        %v756 = vld [vmem:[%s232 + $0x10] sm:$0xf]
        %v757 = vld [vmem:[%s232 + $0x14] sm:$0xf]
        %v758 = vld [vmem:[%s232 + $0x18] sm:$0xf]
        %v759 = vld [vmem:[%s232 + $0x1c] sm:$0xf]
        %v760 = vld [vmem:[%s232 + $0x20] sm:$0xf]
        %v761 = vld [vmem:[%s232 + $0x24] sm:$0xf]
        %v762 = vld [vmem:[%s232 + $0x28] sm:$0xf]
        %v763 = vld [vmem:[%s232 + $0x2c] sm:$0xf]
        %v764 = vld [vmem:[%s232 + $0x30] sm:$0xf]
        %v765 = vld [vmem:[%s232 + $0x34] sm:$0xf]
        %v766 = vld [vmem:[%s232 + $0x38] sm:$0xf]
        %v767 = vld [vmem:[%s232 + $0x3c] sm:$0xf]
        %v768 = vld [vmem:[%s232 + $0x40] sm:$0xf]
        %v769 = vld [vmem:[%s232 + $0x44] sm:$0xf]
        %v770 = vld [vmem:[%s232 + $0x48] sm:$0xf]
        %v771 = vld [vmem:[%s232 + $0x4c] sm:$0xf]
        %v772 = vld [vmem:[%s232 + $0x50] sm:$0xf]
        %v773 = vld [vmem:[%s232 + $0x54] sm:$0xf]
        %v774 = vld [vmem:[%s232 + $0x58] sm:$0xf]
        %v775 = vld [vmem:[%s232 + $0x5c] sm:$0xf]
        %v776 = vld [vmem:[%s232 + $0x60] sm:$0xf]
        %v777 = vld [vmem:[%s232 + $0x64] sm:$0xf]
        %v778 = vld [vmem:[%s232 + $0x68] sm:$0xf]
        %v779 = vld [vmem:[%s232 + $0x6c] sm:$0xf]
        %v780 = vld [vmem:[%s232 + $0x70] sm:$0xf]
        %v781 = vld [vmem:[%s232 + $0x74] sm:$0xf]
        %v782 = vld [vmem:[%s232 + $0x78] sm:$0xf]
        %v783 = vld [vmem:[%s232 + $0x7c] sm:$0xf]
        %v784 = vld [vmem:[%s232 + $0x80] sm:$0xf]
        %v785 = vld [vmem:[%s232 + $0x84] sm:$0xf]
        %v786 = vld [vmem:[%s232 + $0x88] sm:$0xf]
        %v787 = vld [vmem:[%s232 + $0x8c] sm:$0xf]
        %v788 = vld [vmem:[%s232 + $0x90] sm:$0xf]
        %v789 = vld [vmem:[%s232 + $0x94] sm:$0xf]
        %v790 = vld [vmem:[%s232 + $0x98] sm:$0xf]
        %v791 = vld [vmem:[%s232 + $0x9c] sm:$0xf]
        %v792 = vld [vmem:[%s232 + $0xa0] sm:$0xf]
        %v793 = vld [vmem:[%s232 + $0xa4] sm:$0xf]
        %v794 = vld [vmem:[%s232 + $0xa8] sm:$0xf]
        %v795 = vld [vmem:[%s232 + $0xac] sm:$0xf]
        %v796 = vld [vmem:[%s232 + $0xb0] sm:$0xf]
        %v797 = vld [vmem:[%s232 + $0xb4] sm:$0xf]
        %v798 = vld [vmem:[%s232 + $0xb8] sm:$0xf]
        %v799 = vld [vmem:[%s232 + $0xbc] sm:$0xf]
        %v800 = vld [vmem:[%s232 + $0xc0] sm:$0xf]
        %v801 = vld [vmem:[%s232 + $0xc4] sm:$0xf]
        %v802 = vld [vmem:[%s232 + $0xc8] sm:$0xf]
        %v803 = vld [vmem:[%s232 + $0xcc] sm:$0xf]
        %v804 = vld [vmem:[%s232 + $0xd0] sm:$0xf]
        %v805 = vld [vmem:[%s232 + $0xd4] sm:$0xf]
        %v806 = vld [vmem:[%s232 + $0xd8] sm:$0xf]
        %v807 = vld [vmem:[%s232 + $0xdc] sm:$0xf]
        %v808 = vld [vmem:[%s232 + $0xe0] sm:$0xf]
        %v809 = vld [vmem:[%s232 + $0xe4] sm:$0xf]
        %v810 = vld [vmem:[%s232 + $0xe8] sm:$0xf]
        %v811 = vld [vmem:[%s232 + $0xec] sm:$0xf]
        %v812 = vld [vmem:[%s232 + $0xf0] sm:$0xf]
        %v813 = vld [vmem:[%s232 + $0xf4] sm:$0xf]
        %v814 = vld [vmem:[%s232 + $0xf8] sm:$0xf]
        %v815 = vld [vmem:[%s232 + $0xfc] sm:$0xf]
        %v880 = vunpack.c.l.b16 %v752
        %v881 = vunpack.c.l.b16 %v753
        %v882 = vunpack.c.l.b16 %v754
        %v883 = vunpack.c.l.b16 %v755
        %v884 = vunpack.c.l.b16 %v756
        %v885 = vunpack.c.l.b16 %v757
        %v886 = vunpack.c.l.b16 %v758
        %v887 = vunpack.c.l.b16 %v759
        %v888 = vunpack.c.l.b16 %v760
        %v889 = vunpack.c.l.b16 %v761
        %v890 = vunpack.c.l.b16 %v762
        %v891 = vunpack.c.l.b16 %v763
        %v892 = vunpack.c.l.b16 %v764
        %v893 = vunpack.c.l.b16 %v765
        %v894 = vunpack.c.l.b16 %v766
        %v895 = vunpack.c.l.b16 %v767
        %v896 = vunpack.c.l.b16 %v768
        %v897 = vunpack.c.l.b16 %v769
        %v898 = vunpack.c.l.b16 %v770
        %v899 = vunpack.c.l.b16 %v771
        %v900 = vunpack.c.l.b16 %v772
        %v901 = vunpack.c.l.b16 %v773
        %v902 = vunpack.c.l.b16 %v774
        %v903 = vunpack.c.l.b16 %v775
        %v904 = vunpack.c.l.b16 %v776
        %v905 = vunpack.c.l.b16 %v777
        %v906 = vunpack.c.l.b16 %v778
        %v907 = vunpack.c.l.b16 %v779
        %v908 = vunpack.c.l.b16 %v780
        %v909 = vunpack.c.l.b16 %v781
        %v910 = vunpack.c.l.b16 %v782
        %v911 = vunpack.c.l.b16 %v783
        %v912 = vunpack.c.l.b16 %v784
        %v913 = vunpack.c.l.b16 %v785
        %v914 = vunpack.c.l.b16 %v786
        %v915 = vunpack.c.l.b16 %v787
        %v916 = vunpack.c.l.b16 %v788
        %v917 = vunpack.c.l.b16 %v789
        %v918 = vunpack.c.l.b16 %v790
        %v919 = vunpack.c.l.b16 %v791
        %v920 = vunpack.c.l.b16 %v792
        %v921 = vunpack.c.l.b16 %v793
        %v922 = vunpack.c.l.b16 %v794
        %v923 = vunpack.c.l.b16 %v795
        %v924 = vunpack.c.l.b16 %v796
        %v925 = vunpack.c.l.b16 %v797
        %v926 = vunpack.c.l.b16 %v798
        %v927 = vunpack.c.l.b16 %v799
        %v928 = vunpack.c.l.b16 %v800
        %v929 = vunpack.c.l.b16 %v801
        %v930 = vunpack.c.l.b16 %v802
        %v931 = vunpack.c.l.b16 %v803
        %v932 = vunpack.c.l.b16 %v804
        %v933 = vunpack.c.l.b16 %v805
        %v934 = vunpack.c.l.b16 %v806
        %v935 = vunpack.c.l.b16 %v807
        %v936 = vunpack.c.l.b16 %v808
        %v937 = vunpack.c.l.b16 %v809
        %v938 = vunpack.c.l.b16 %v810
        %v939 = vunpack.c.l.b16 %v811
        %v940 = vunpack.c.l.b16 %v812
        %v941 = vunpack.c.l.b16 %v813
        %v942 = vunpack.c.l.b16 %v814
        %v943 = vunpack.c.l.b16 %v815
        %v944 = vpack.c.b16 %v881, %v880
        %v945 = vpack.c.b16 %v883, %v882
        %v946 = vpack.c.b16 %v885, %v884
        %v947 = vpack.c.b16 %v887, %v886
        %v948 = vpack.c.b16 %v889, %v888
        %v949 = vpack.c.b16 %v891, %v890
        %v950 = vpack.c.b16 %v893, %v892
        %v951 = vpack.c.b16 %v895, %v894
        %v952 = vpack.c.b16 %v897, %v896
        %v953 = vpack.c.b16 %v899, %v898
        %v954 = vpack.c.b16 %v901, %v900
        %v955 = vpack.c.b16 %v903, %v902
        %v956 = vpack.c.b16 %v905, %v904
        %v957 = vpack.c.b16 %v907, %v906
        %v958 = vpack.c.b16 %v909, %v908
        %v959 = vpack.c.b16 %v911, %v910
        %v960 = vpack.c.b16 %v913, %v912
        %v961 = vpack.c.b16 %v915, %v914
        %v962 = vpack.c.b16 %v917, %v916
        %v963 = vpack.c.b16 %v919, %v918
        %v964 = vpack.c.b16 %v921, %v920
        %v965 = vpack.c.b16 %v923, %v922
        %v966 = vpack.c.b16 %v925, %v924
        %v967 = vpack.c.b16 %v927, %v926
        %v968 = vpack.c.b16 %v929, %v928
        %v969 = vpack.c.b16 %v931, %v930
        %v970 = vpack.c.b16 %v933, %v932
        %v971 = vpack.c.b16 %v935, %v934
        %v972 = vpack.c.b16 %v937, %v936
        %v973 = vpack.c.b16 %v939, %v938
        %v974 = vpack.c.b16 %v941, %v940
        %v975 = vpack.c.b16 %v943, %v942
        %1008 = vmatprep.subr.bf16.mxu0 0
        %1009 = vmatpush1.bf16.xpose.msra.mxu0 %v944
        %1010 = vmatprep.subr.bf16.mxu0 0
        %1011 = vmatpush1.bf16.xpose.msra.mxu0 %v945
        %1012 = vmatprep.subr.bf16.mxu0 0
        %1013 = vmatpush1.bf16.xpose.msra.mxu0 %v946
        %1014 = vmatprep.subr.bf16.mxu0 0
        %1015 = vmatpush1.bf16.xpose.msra.mxu0 %v947
        %1016 = vmatprep.subr.bf16.mxu0 0
        %1017 = vmatpush1.bf16.xpose.msra.mxu0 %v948
        %1018 = vmatprep.subr.bf16.mxu0 0
        %1019 = vmatpush1.bf16.xpose.msra.mxu0 %v949
        %1020 = vmatprep.subr.bf16.mxu0 0
        %1021 = vmatpush1.bf16.xpose.msra.mxu0 %v950
        %1022 = vmatprep.subr.bf16.mxu0 0
        %1023 = vmatpush1.bf16.xpose.msra.mxu0 %v951
        %1024 = vmatprep.subr.bf16.mxu0 0
        %1025 = vmatpush1.bf16.xpose.msra.mxu0 %v952
        %1026 = vmatprep.subr.bf16.mxu0 0
        %1027 = vmatpush1.bf16.xpose.msra.mxu0 %v953
        %1028 = vmatprep.subr.bf16.mxu0 0
        %1029 = vmatpush1.bf16.xpose.msra.mxu0 %v954
        %1030 = vmatprep.subr.bf16.mxu0 0
        %1031 = vmatpush1.bf16.xpose.msra.mxu0 %v955
        %1032 = vmatprep.subr.bf16.mxu0 0
        %1033 = vmatpush1.bf16.xpose.msra.mxu0 %v956
        %1034 = vmatprep.subr.bf16.mxu0 0
        %1035 = vmatpush1.bf16.xpose.msra.mxu0 %v957
        %1036 = vmatprep.subr.bf16.mxu0 0
        %1037 = vmatpush1.bf16.xpose.msra.mxu0 %v958
        %1038 = vmatprep.subr.bf16.mxu0 0
        %1039 = vmatpush1.bf16.xpose.msra.mxu0 %v959
        %1040 = vmatprep.mubr.bf16.mxu0 0
        %1041 = vmatmul.mubr.bf16.gmra.mrb[0].mxu0 %v736
        %v1042 = vpop.f32.mrb[0].mxu0
        %v1043 = vadd.f32 0.0, %v1042
        %v1044 = vpop.f32.mrb[0].mxu0
        %v1045 = vadd.f32 0.0, %v1044
        %v1046 = vpop.f32.mrb[0].mxu0
        %v1047 = vadd.f32 0.0, %v1046
        %v1048 = vpop.f32.mrb[0].mxu0
        %v1049 = vadd.f32 0.0, %v1048
        %1050 = vmatprep.mubr.bf16.mxu0 0
        %1051 = vmatmul.mubr.bf16.gmra.mrb[0].mxu0 %v737
        %v1052 = vpop.f32.mrb[0].mxu0
        %v1053 = vadd.f32 0.0, %v1052
        %v1054 = vpop.f32.mrb[0].mxu0
        %v1055 = vadd.f32 0.0, %v1054
        %v1056 = vpop.f32.mrb[0].mxu0
        %v1057 = vadd.f32 0.0, %v1056
        %v1058 = vpop.f32.mrb[0].mxu0
        %v1059 = vadd.f32 0.0, %v1058
        %1060 = vmatprep.mubr.bf16.mxu0 0
        %1061 = vmatmul.mubr.bf16.gmra.mrb[0].mxu0 %v738
        %v1062 = vpop.f32.mrb[0].mxu0
        %v1063 = vadd.f32 0.0, %v1062
        %v1064 = vpop.f32.mrb[0].mxu0
        %v1065 = vadd.f32 0.0, %v1064
        %v1066 = vpop.f32.mrb[0].mxu0
        %v1067 = vadd.f32 0.0, %v1066
        %v1068 = vpop.f32.mrb[0].mxu0
        %v1069 = vadd.f32 0.0, %v1068
        %1070 = vmatprep.mubr.bf16.mxu0 0
        %1071 = vmatmul.mubr.bf16.gmra.mrb[0].mxu0 %v739
        %v1072 = vpop.f32.mrb[0].mxu0
        %v1073 = vadd.f32 0.0, %v1072
        %v1074 = vpop.f32.mrb[0].mxu0
        %v1075 = vadd.f32 0.0, %v1074
        %v1076 = vpop.f32.mrb[0].mxu0
        %v1077 = vadd.f32 0.0, %v1076
        %v1078 = vpop.f32.mrb[0].mxu0
        %v1079 = vadd.f32 0.0, %v1078
        %1080 = vmatprep.mubr.bf16.mxu0 0
        %1081 = vmatmul.mubr.bf16.gmra.mrb[0].mxu0 %v740
        %v1082 = vpop.f32.mrb[0].mxu0
        %v1083 = vadd.f32 0.0, %v1082
        %v1084 = vpop.f32.mrb[0].mxu0
        %v1085 = vadd.f32 0.0, %v1084
        %v1086 = vpop.f32.mrb[0].mxu0
        %v1087 = vadd.f32 0.0, %v1086
        %v1088 = vpop.f32.mrb[0].mxu0
        %v1089 = vadd.f32 0.0, %v1088
        %1090 = vmatprep.mubr.bf16.mxu0 0
        %1091 = vmatmul.mubr.bf16.gmra.mrb[0].mxu0 %v741
        %v1092 = vpop.f32.mrb[0].mxu0
        %v1093 = vadd.f32 0.0, %v1092
        %v1094 = vpop.f32.mrb[0].mxu0
        %v1095 = vadd.f32 0.0, %v1094
        %v1096 = vpop.f32.mrb[0].mxu0
        %v1097 = vadd.f32 0.0, %v1096
        %v1098 = vpop.f32.mrb[0].mxu0
        %v1099 = vadd.f32 0.0, %v1098
        %1100 = vmatprep.mubr.bf16.mxu0 0
        %1101 = vmatmul.mubr.bf16.gmra.mrb[0].mxu0 %v742
        %v1102 = vpop.f32.mrb[0].mxu0
        %v1103 = vadd.f32 0.0, %v1102
        %v1104 = vpop.f32.mrb[0].mxu0
        %v1105 = vadd.f32 0.0, %v1104
        %v1106 = vpop.f32.mrb[0].mxu0
        %v1107 = vadd.f32 0.0, %v1106
        %v1108 = vpop.f32.mrb[0].mxu0
        %v1109 = vadd.f32 0.0, %v1108
        %1110 = vmatprep.mubr.bf16.mxu0 0
        %1111 = vmatmul.mubr.bf16.gmra.mrb[0].mxu0 %v743
        %v1112 = vpop.f32.mrb[0].mxu0
        %v1113 = vadd.f32 0.0, %v1112
        %v1114 = vpop.f32.mrb[0].mxu0
        %v1115 = vadd.f32 0.0, %v1114
        %v1116 = vpop.f32.mrb[0].mxu0
        %v1117 = vadd.f32 0.0, %v1116
        %v1118 = vpop.f32.mrb[0].mxu0
        %v1119 = vadd.f32 0.0, %v1118
        %1120 = vmatprep.mubr.bf16.mxu0 0
        %1121 = vmatmul.mubr.bf16.gmra.mrb[0].mxu0 %v744
        %v1122 = vpop.f32.mrb[0].mxu0
        %v1123 = vadd.f32 0.0, %v1122
        %v1124 = vpop.f32.mrb[0].mxu0
        %v1125 = vadd.f32 0.0, %v1124
        %v1126 = vpop.f32.mrb[0].mxu0
        %v1127 = vadd.f32 0.0, %v1126
        %v1128 = vpop.f32.mrb[0].mxu0
        %v1129 = vadd.f32 0.0, %v1128
        %1130 = vmatprep.mubr.bf16.mxu0 0
        %1131 = vmatmul.mubr.bf16.gmra.mrb[0].mxu0 %v745
        %v1132 = vpop.f32.mrb[0].mxu0
        %v1133 = vadd.f32 0.0, %v1132
        %v1134 = vpop.f32.mrb[0].mxu0
        %v1135 = vadd.f32 0.0, %v1134
        %v1136 = vpop.f32.mrb[0].mxu0
        %v1137 = vadd.f32 0.0, %v1136
        %v1138 = vpop.f32.mrb[0].mxu0
        %v1139 = vadd.f32 0.0, %v1138
        %1140 = vmatprep.mubr.bf16.mxu0 0
        %1141 = vmatmul.mubr.bf16.gmra.mrb[0].mxu0 %v746
        %v1142 = vpop.f32.mrb[0].mxu0
        %v1143 = vadd.f32 0.0, %v1142
        %v1144 = vpop.f32.mrb[0].mxu0
        %v1145 = vadd.f32 0.0, %v1144
        %v1146 = vpop.f32.mrb[0].mxu0
        %v1147 = vadd.f32 0.0, %v1146
        %v1148 = vpop.f32.mrb[0].mxu0
        %v1149 = vadd.f32 0.0, %v1148
        %1150 = vmatprep.mubr.bf16.mxu0 0
        %1151 = vmatmul.mubr.bf16.gmra.mrb[0].mxu0 %v747
        %v1152 = vpop.f32.mrb[0].mxu0
        %v1153 = vadd.f32 0.0, %v1152
        %v1154 = vpop.f32.mrb[0].mxu0
        %v1155 = vadd.f32 0.0, %v1154
        %v1156 = vpop.f32.mrb[0].mxu0
        %v1157 = vadd.f32 0.0, %v1156
        %v1158 = vpop.f32.mrb[0].mxu0
        %v1159 = vadd.f32 0.0, %v1158
        %1160 = vmatprep.mubr.bf16.mxu0 0
        %1161 = vmatmul.mubr.bf16.gmra.mrb[0].mxu0 %v748
        %v1162 = vpop.f32.mrb[0].mxu0
        %v1163 = vadd.f32 0.0, %v1162
        %v1164 = vpop.f32.mrb[0].mxu0
        %v1165 = vadd.f32 0.0, %v1164
        %v1166 = vpop.f32.mrb[0].mxu0
        %v1167 = vadd.f32 0.0, %v1166
        %v1168 = vpop.f32.mrb[0].mxu0
        %v1169 = vadd.f32 0.0, %v1168
        %1170 = vmatprep.mubr.bf16.mxu0 0
        %1171 = vmatmul.mubr.bf16.gmra.mrb[0].mxu0 %v749
        %v1172 = vpop.f32.mrb[0].mxu0
        %v1173 = vadd.f32 0.0, %v1172
        %v1174 = vpop.f32.mrb[0].mxu0
        %v1175 = vadd.f32 0.0, %v1174
        %v1176 = vpop.f32.mrb[0].mxu0
        %v1177 = vadd.f32 0.0, %v1176
        %v1178 = vpop.f32.mrb[0].mxu0
        %v1179 = vadd.f32 0.0, %v1178
        %1180 = vmatprep.mubr.bf16.mxu0 0
        %1181 = vmatmul.mubr.bf16.gmra.mrb[0].mxu0 %v750
        %v1182 = vpop.f32.mrb[0].mxu0
        %v1183 = vadd.f32 0.0, %v1182
        %v1184 = vpop.f32.mrb[0].mxu0
        %v1185 = vadd.f32 0.0, %v1184
        %v1186 = vpop.f32.mrb[0].mxu0
        %v1187 = vadd.f32 0.0, %v1186
        %v1188 = vpop.f32.mrb[0].mxu0
        %v1189 = vadd.f32 0.0, %v1188
        %1190 = vmatprep.mubr.bf16.mxu0 0
        %1191 = vmatmul.mubr.bf16.gmra.mrb[0].mxu0 %v751
        %v1192 = vpop.f32.mrb[0].mxu0
        %v1193 = vadd.f32 0.0, %v1192
        %v1194 = vpop.f32.mrb[0].mxu0
        %v1195 = vadd.f32 0.0, %v1194
        %v1196 = vpop.f32.mrb[0].mxu0
        %v1197 = vadd.f32 0.0, %v1196
        %v1198 = vpop.f32.mrb[0].mxu0
        %v1199 = vadd.f32 0.0, %v1198
        %1200 = vdwg.mxu0
        %1201 = vmatprep.subr.bf16.mxu0 0
        %1202 = vmatpush1.bf16.xpose.msra.mxu0 %v960
        %1203 = vmatprep.subr.bf16.mxu0 0
        %1204 = vmatpush1.bf16.xpose.msra.mxu0 %v961
        %1205 = vmatprep.subr.bf16.mxu0 0
        %1206 = vmatpush1.bf16.xpose.msra.mxu0 %v962
        %1207 = vmatprep.subr.bf16.mxu0 0
        %1208 = vmatpush1.bf16.xpose.msra.mxu0 %v963
        %1209 = vmatprep.subr.bf16.mxu0 0
        %1210 = vmatpush1.bf16.xpose.msra.mxu0 %v964
        %1211 = vmatprep.subr.bf16.mxu0 0
        %1212 = vmatpush1.bf16.xpose.msra.mxu0 %v965
        %1213 = vmatprep.subr.bf16.mxu0 0
        %1214 = vmatpush1.bf16.xpose.msra.mxu0 %v966
        %1215 = vmatprep.subr.bf16.mxu0 0
        %1216 = vmatpush1.bf16.xpose.msra.mxu0 %v967
        %1217 = vmatprep.subr.bf16.mxu0 0
        %1218 = vmatpush1.bf16.xpose.msra.mxu0 %v968
        %1219 = vmatprep.subr.bf16.mxu0 0
        %1220 = vmatpush1.bf16.xpose.msra.mxu0 %v969
        %1221 = vmatprep.subr.bf16.mxu0 0
        %1222 = vmatpush1.bf16.xpose.msra.mxu0 %v970
        %1223 = vmatprep.subr.bf16.mxu0 0
        %1224 = vmatpush1.bf16.xpose.msra.mxu0 %v971
        %1225 = vmatprep.subr.bf16.mxu0 0
        %1226 = vmatpush1.bf16.xpose.msra.mxu0 %v972
        %1227 = vmatprep.subr.bf16.mxu0 0
        %1228 = vmatpush1.bf16.xpose.msra.mxu0 %v973
        %1229 = vmatprep.subr.bf16.mxu0 0
        %1230 = vmatpush1.bf16.xpose.msra.mxu0 %v974
        %1231 = vmatprep.subr.bf16.mxu0 0
        %1232 = vmatpush1.bf16.xpose.msra.mxu0 %v975
        %1233 = vmatprep.mubr.bf16.mxu0 0
        %1234 = vmatmul.mubr.bf16.gmra.mrb[0].mxu0 %v736
        %v1235 = vpop.f32.mrb[0].mxu0
        %v1236 = vadd.f32 0.0, %v1235
        %v1237 = vpop.f32.mrb[0].mxu0
        %v1238 = vadd.f32 0.0, %v1237
        %v1239 = vpop.f32.mrb[0].mxu0
        %v1240 = vadd.f32 0.0, %v1239
        %v1241 = vpop.f32.mrb[0].mxu0
        %v1242 = vadd.f32 0.0, %v1241
        %1243 = vmatprep.mubr.bf16.mxu0 0
        %1244 = vmatmul.mubr.bf16.gmra.mrb[0].mxu0 %v737
        %v1245 = vpop.f32.mrb[0].mxu0
        %v1246 = vadd.f32 0.0, %v1245
        %v1247 = vpop.f32.mrb[0].mxu0
        %v1248 = vadd.f32 0.0, %v1247
        %v1249 = vpop.f32.mrb[0].mxu0
        %v1250 = vadd.f32 0.0, %v1249
        %v1251 = vpop.f32.mrb[0].mxu0
        %v1252 = vadd.f32 0.0, %v1251
        %1253 = vmatprep.mubr.bf16.mxu0 0
        %1254 = vmatmul.mubr.bf16.gmra.mrb[0].mxu0 %v738
        %v1255 = vpop.f32.mrb[0].mxu0
        %v1256 = vadd.f32 0.0, %v1255
        %v1257 = vpop.f32.mrb[0].mxu0
        %v1258 = vadd.f32 0.0, %v1257
        %v1259 = vpop.f32.mrb[0].mxu0
        %v1260 = vadd.f32 0.0, %v1259
        %v1261 = vpop.f32.mrb[0].mxu0
        %v1262 = vadd.f32 0.0, %v1261
        %1263 = vmatprep.mubr.bf16.mxu0 0
        %1264 = vmatmul.mubr.bf16.gmra.mrb[0].mxu0 %v739
        %v1265 = vpop.f32.mrb[0].mxu0
        %v1266 = vadd.f32 0.0, %v1265
        %v1267 = vpop.f32.mrb[0].mxu0
        %v1268 = vadd.f32 0.0, %v1267
        %v1269 = vpop.f32.mrb[0].mxu0
        %v1270 = vadd.f32 0.0, %v1269
        %v1271 = vpop.f32.mrb[0].mxu0
        %v1272 = vadd.f32 0.0, %v1271
        %1273 = vmatprep.mubr.bf16.mxu0 0
        %1274 = vmatmul.mubr.bf16.gmra.mrb[0].mxu0 %v740
        %v1275 = vpop.f32.mrb[0].mxu0
        %v1276 = vadd.f32 0.0, %v1275
        %v1277 = vpop.f32.mrb[0].mxu0
        %v1278 = vadd.f32 0.0, %v1277
        %v1279 = vpop.f32.mrb[0].mxu0
        %v1280 = vadd.f32 0.0, %v1279
        %v1281 = vpop.f32.mrb[0].mxu0
        %v1282 = vadd.f32 0.0, %v1281
        %1283 = vmatprep.mubr.bf16.mxu0 0
        %1284 = vmatmul.mubr.bf16.gmra.mrb[0].mxu0 %v741
        %v1285 = vpop.f32.mrb[0].mxu0
        %v1286 = vadd.f32 0.0, %v1285
        %v1287 = vpop.f32.mrb[0].mxu0
        %v1288 = vadd.f32 0.0, %v1287
        %v1289 = vpop.f32.mrb[0].mxu0
        %v1290 = vadd.f32 0.0, %v1289
        %v1291 = vpop.f32.mrb[0].mxu0
        %v1292 = vadd.f32 0.0, %v1291
        %1293 = vmatprep.mubr.bf16.mxu0 0
        %1294 = vmatmul.mubr.bf16.gmra.mrb[0].mxu0 %v742
        %v1295 = vpop.f32.mrb[0].mxu0
        %v1296 = vadd.f32 0.0, %v1295
        %v1297 = vpop.f32.mrb[0].mxu0
        %v1298 = vadd.f32 0.0, %v1297
        %v1299 = vpop.f32.mrb[0].mxu0
        %v1300 = vadd.f32 0.0, %v1299
        %v1301 = vpop.f32.mrb[0].mxu0
        %v1302 = vadd.f32 0.0, %v1301
        %1303 = vmatprep.mubr.bf16.mxu0 0
        %1304 = vmatmul.mubr.bf16.gmra.mrb[0].mxu0 %v743
        %v1305 = vpop.f32.mrb[0].mxu0
        %v1306 = vadd.f32 0.0, %v1305
        %v1307 = vpop.f32.mrb[0].mxu0
        %v1308 = vadd.f32 0.0, %v1307
        %v1309 = vpop.f32.mrb[0].mxu0
        %v1310 = vadd.f32 0.0, %v1309
        %v1311 = vpop.f32.mrb[0].mxu0
        %v1312 = vadd.f32 0.0, %v1311
        %1313 = vmatprep.mubr.bf16.mxu0 0
        %1314 = vmatmul.mubr.bf16.gmra.mrb[0].mxu0 %v744
        %v1315 = vpop.f32.mrb[0].mxu0
        %v1316 = vadd.f32 0.0, %v1315
        %v1317 = vpop.f32.mrb[0].mxu0
        %v1318 = vadd.f32 0.0, %v1317
        %v1319 = vpop.f32.mrb[0].mxu0
        %v1320 = vadd.f32 0.0, %v1319
        %v1321 = vpop.f32.mrb[0].mxu0
        %v1322 = vadd.f32 0.0, %v1321
        %1323 = vmatprep.mubr.bf16.mxu0 0
        %1324 = vmatmul.mubr.bf16.gmra.mrb[0].mxu0 %v745
        %v1325 = vpop.f32.mrb[0].mxu0
        %v1326 = vadd.f32 0.0, %v1325
        %v1327 = vpop.f32.mrb[0].mxu0
        %v1328 = vadd.f32 0.0, %v1327
        %v1329 = vpop.f32.mrb[0].mxu0
        %v1330 = vadd.f32 0.0, %v1329
        %v1331 = vpop.f32.mrb[0].mxu0
        %v1332 = vadd.f32 0.0, %v1331
        %1333 = vmatprep.mubr.bf16.mxu0 0
        %1334 = vmatmul.mubr.bf16.gmra.mrb[0].mxu0 %v746
        %v1335 = vpop.f32.mrb[0].mxu0
        %v1336 = vadd.f32 0.0, %v1335
        %v1337 = vpop.f32.mrb[0].mxu0
        %v1338 = vadd.f32 0.0, %v1337
        %v1339 = vpop.f32.mrb[0].mxu0
        %v1340 = vadd.f32 0.0, %v1339
        %v1341 = vpop.f32.mrb[0].mxu0
        %v1342 = vadd.f32 0.0, %v1341
        %1343 = vmatprep.mubr.bf16.mxu0 0
        %1344 = vmatmul.mubr.bf16.gmra.mrb[0].mxu0 %v747
        %v1345 = vpop.f32.mrb[0].mxu0
        %v1346 = vadd.f32 0.0, %v1345
        %v1347 = vpop.f32.mrb[0].mxu0
        %v1348 = vadd.f32 0.0, %v1347
        %v1349 = vpop.f32.mrb[0].mxu0
        %v1350 = vadd.f32 0.0, %v1349
        %v1351 = vpop.f32.mrb[0].mxu0
        %v1352 = vadd.f32 0.0, %v1351
        %1353 = vmatprep.mubr.bf16.mxu0 0
        %1354 = vmatmul.mubr.bf16.gmra.mrb[0].mxu0 %v748
        %v1355 = vpop.f32.mrb[0].mxu0
        %v1356 = vadd.f32 0.0, %v1355
        %v1357 = vpop.f32.mrb[0].mxu0
        %v1358 = vadd.f32 0.0, %v1357
        %v1359 = vpop.f32.mrb[0].mxu0
        %v1360 = vadd.f32 0.0, %v1359
        %v1361 = vpop.f32.mrb[0].mxu0
        %v1362 = vadd.f32 0.0, %v1361
        %1363 = vmatprep.mubr.bf16.mxu0 0
        %1364 = vmatmul.mubr.bf16.gmra.mrb[0].mxu0 %v749
        %v1365 = vpop.f32.mrb[0].mxu0
        %v1366 = vadd.f32 0.0, %v1365
        %v1367 = vpop.f32.mrb[0].mxu0
        %v1368 = vadd.f32 0.0, %v1367
        %v1369 = vpop.f32.mrb[0].mxu0
        %v1370 = vadd.f32 0.0, %v1369
        %v1371 = vpop.f32.mrb[0].mxu0
        %v1372 = vadd.f32 0.0, %v1371
        %1373 = vmatprep.mubr.bf16.mxu0 0
        %1374 = vmatmul.mubr.bf16.gmra.mrb[0].mxu0 %v750
        %v1375 = vpop.f32.mrb[0].mxu0
        %v1376 = vadd.f32 0.0, %v1375
        %v1377 = vpop.f32.mrb[0].mxu0
        %v1378 = vadd.f32 0.0, %v1377
        %v1379 = vpop.f32.mrb[0].mxu0
        %v1380 = vadd.f32 0.0, %v1379
        %v1381 = vpop.f32.mrb[0].mxu0
        %v1382 = vadd.f32 0.0, %v1381
        %1383 = vmatprep.mubr.bf16.mxu0 0
        %1384 = vmatmul.mubr.bf16.gmra.mrb[0].mxu0 %v751
        %v1385 = vpop.f32.mrb[0].mxu0
        %v1386 = vadd.f32 0.0, %v1385
        %v1387 = vpop.f32.mrb[0].mxu0
        %v1388 = vadd.f32 0.0, %v1387
        %v1389 = vpop.f32.mrb[0].mxu0
        %v1390 = vadd.f32 0.0, %v1389
        %v1391 = vpop.f32.mrb[0].mxu0
        %v1392 = vadd.f32 0.0, %v1391
        %1393 = vdwg.mxu0
        %1394 = vst [vmem:[%s221] sm:$0xff] %v1043
        %1395 = vst [vmem:[%s221 + $0x8] sm:$0xff] %v1045
        %1396 = vst [vmem:[%s221 + $0x10] sm:$0xff] %v1236
        %1397 = vst [vmem:[%s221 + $0x18] sm:$0xff] %v1238
        %1398 = vst [vmem:[%s221 + $0x20] sm:$0xff] %v1047
        %1399 = vst [vmem:[%s221 + $0x28] sm:$0xff] %v1049
        %1400 = vst [vmem:[%s221 + $0x30] sm:$0xff] %v1240
        %1401 = vst [vmem:[%s221 + $0x38] sm:$0xff] %v1242
        %1402 = vst [vmem:[%s221 + $0x40] sm:$0xff] %v1053
        %1403 = vst [vmem:[%s221 + $0x48] sm:$0xff] %v1055
        %1404 = vst [vmem:[%s221 + $0x50] sm:$0xff] %v1246
        %1405 = vst [vmem:[%s221 + $0x58] sm:$0xff] %v1248
        %1406 = vst [vmem:[%s221 + $0x60] sm:$0xff] %v1057
        %1407 = vst [vmem:[%s221 + $0x68] sm:$0xff] %v1059
        %1408 = vst [vmem:[%s221 + $0x70] sm:$0xff] %v1250
        %1409 = vst [vmem:[%s221 + $0x78] sm:$0xff] %v1252
        %1410 = vst [vmem:[%s221 + $0x80] sm:$0xff] %v1063
        %1411 = vst [vmem:[%s221 + $0x88] sm:$0xff] %v1065
        %1412 = vst [vmem:[%s221 + $0x90] sm:$0xff] %v1256
        %1413 = vst [vmem:[%s221 + $0x98] sm:$0xff] %v1258
        %1414 = vst [vmem:[%s221 + $0xa0] sm:$0xff] %v1067
        %1415 = vst [vmem:[%s221 + $0xa8] sm:$0xff] %v1069
        %1416 = vst [vmem:[%s221 + $0xb0] sm:$0xff] %v1260
        %1417 = vst [vmem:[%s221 + $0xb8] sm:$0xff] %v1262
        %1418 = vst [vmem:[%s221 + $0xc0] sm:$0xff] %v1073
        %1419 = vst [vmem:[%s221 + $0xc8] sm:$0xff] %v1075
        %1420 = vst [vmem:[%s221 + $0xd0] sm:$0xff] %v1266
        %1421 = vst [vmem:[%s221 + $0xd8] sm:$0xff] %v1268
        %1422 = vst [vmem:[%s221 + $0xe0] sm:$0xff] %v1077
        %1423 = vst [vmem:[%s221 + $0xe8] sm:$0xff] %v1079
        %1424 = vst [vmem:[%s221 + $0xf0] sm:$0xff] %v1270
        %1425 = vst [vmem:[%s221 + $0xf8] sm:$0xff] %v1272
        %1426 = vst [vmem:[%s221 + $0x100] sm:$0xff] %v1083
        %1427 = vst [vmem:[%s221 + $0x108] sm:$0xff] %v1085
        %1428 = vst [vmem:[%s221 + $0x110] sm:$0xff] %v1276
        %1429 = vst [vmem:[%s221 + $0x118] sm:$0xff] %v1278
        %1430 = vst [vmem:[%s221 + $0x120] sm:$0xff] %v1087
        %1431 = vst [vmem:[%s221 + $0x128] sm:$0xff] %v1089
        %1432 = vst [vmem:[%s221 + $0x130] sm:$0xff] %v1280
        %1433 = vst [vmem:[%s221 + $0x138] sm:$0xff] %v1282
        %1434 = vst [vmem:[%s221 + $0x140] sm:$0xff] %v1093
        %1435 = vst [vmem:[%s221 + $0x148] sm:$0xff] %v1095
        %1436 = vst [vmem:[%s221 + $0x150] sm:$0xff] %v1286
        %1437 = vst [vmem:[%s221 + $0x158] sm:$0xff] %v1288
        %1438 = vst [vmem:[%s221 + $0x160] sm:$0xff] %v1097
        %1439 = vst [vmem:[%s221 + $0x168] sm:$0xff] %v1099
        %1440 = vst [vmem:[%s221 + $0x170] sm:$0xff] %v1290
        %1441 = vst [vmem:[%s221 + $0x178] sm:$0xff] %v1292
        %1442 = vst [vmem:[%s221 + $0x180] sm:$0xff] %v1103
        %1443 = vst [vmem:[%s221 + $0x188] sm:$0xff] %v1105
        %1444 = vst [vmem:[%s221 + $0x190] sm:$0xff] %v1296
        %1445 = vst [vmem:[%s221 + $0x198] sm:$0xff] %v1298
        %1446 = vst [vmem:[%s221 + $0x1a0] sm:$0xff] %v1107
        %1447 = vst [vmem:[%s221 + $0x1a8] sm:$0xff] %v1109
        %1448 = vst [vmem:[%s221 + $0x1b0] sm:$0xff] %v1300
        %1449 = vst [vmem:[%s221 + $0x1b8] sm:$0xff] %v1302
        %1450 = vst [vmem:[%s221 + $0x1c0] sm:$0xff] %v1113
        %1451 = vst [vmem:[%s221 + $0x1c8] sm:$0xff] %v1115
        %1452 = vst [vmem:[%s221 + $0x1d0] sm:$0xff] %v1306
        %1453 = vst [vmem:[%s221 + $0x1d8] sm:$0xff] %v1308
        %1454 = vst [vmem:[%s221 + $0x1e0] sm:$0xff] %v1117
        %1455 = vst [vmem:[%s221 + $0x1e8] sm:$0xff] %v1119
        %1456 = vst [vmem:[%s221 + $0x1f0] sm:$0xff] %v1310
        %1457 = vst [vmem:[%s221 + $0x1f8] sm:$0xff] %v1312
        %1458 = vst [vmem:[%s221 + $0x200] sm:$0xff] %v1123
        %1459 = vst [vmem:[%s221 + $0x208] sm:$0xff] %v1125
        %1460 = vst [vmem:[%s221 + $0x210] sm:$0xff] %v1316
        %1461 = vst [vmem:[%s221 + $0x218] sm:$0xff] %v1318
        %1462 = vst [vmem:[%s221 + $0x220] sm:$0xff] %v1127
        %1463 = vst [vmem:[%s221 + $0x228] sm:$0xff] %v1129
        %1464 = vst [vmem:[%s221 + $0x230] sm:$0xff] %v1320
        %1465 = vst [vmem:[%s221 + $0x238] sm:$0xff] %v1322
        %1466 = vst [vmem:[%s221 + $0x240] sm:$0xff] %v1133
        %1467 = vst [vmem:[%s221 + $0x248] sm:$0xff] %v1135
        %1468 = vst [vmem:[%s221 + $0x250] sm:$0xff] %v1326
        %1469 = vst [vmem:[%s221 + $0x258] sm:$0xff] %v1328
        %1470 = vst [vmem:[%s221 + $0x260] sm:$0xff] %v1137
        %1471 = vst [vmem:[%s221 + $0x268] sm:$0xff] %v1139
        %1472 = vst [vmem:[%s221 + $0x270] sm:$0xff] %v1330
        %1473 = vst [vmem:[%s221 + $0x278] sm:$0xff] %v1332
        %1474 = vst [vmem:[%s221 + $0x280] sm:$0xff] %v1143
        %1475 = vst [vmem:[%s221 + $0x288] sm:$0xff] %v1145
        %1476 = vst [vmem:[%s221 + $0x290] sm:$0xff] %v1336
        %1477 = vst [vmem:[%s221 + $0x298] sm:$0xff] %v1338
        %1478 = vst [vmem:[%s221 + $0x2a0] sm:$0xff] %v1147
        %1479 = vst [vmem:[%s221 + $0x2a8] sm:$0xff] %v1149
        %1480 = vst [vmem:[%s221 + $0x2b0] sm:$0xff] %v1340
        %1481 = vst [vmem:[%s221 + $0x2b8] sm:$0xff] %v1342
        %1482 = vst [vmem:[%s221 + $0x2c0] sm:$0xff] %v1153
        %1483 = vst [vmem:[%s221 + $0x2c8] sm:$0xff] %v1155
        %1484 = vst [vmem:[%s221 + $0x2d0] sm:$0xff] %v1346
        %1485 = vst [vmem:[%s221 + $0x2d8] sm:$0xff] %v1348
        %1486 = vst [vmem:[%s221 + $0x2e0] sm:$0xff] %v1157
        %1487 = vst [vmem:[%s221 + $0x2e8] sm:$0xff] %v1159
        %1488 = vst [vmem:[%s221 + $0x2f0] sm:$0xff] %v1350
        %1489 = vst [vmem:[%s221 + $0x2f8] sm:$0xff] %v1352
        %1490 = vst [vmem:[%s221 + $0x300] sm:$0xff] %v1163
        %1491 = vst [vmem:[%s221 + $0x308] sm:$0xff] %v1165
        %1492 = vst [vmem:[%s221 + $0x310] sm:$0xff] %v1356
        %1493 = vst [vmem:[%s221 + $0x318] sm:$0xff] %v1358
        %1494 = vst [vmem:[%s221 + $0x320] sm:$0xff] %v1167
        %1495 = vst [vmem:[%s221 + $0x328] sm:$0xff] %v1169
        %1496 = vst [vmem:[%s221 + $0x330] sm:$0xff] %v1360
        %1497 = vst [vmem:[%s221 + $0x338] sm:$0xff] %v1362
        %1498 = vst [vmem:[%s221 + $0x340] sm:$0xff] %v1173
        %1499 = vst [vmem:[%s221 + $0x348] sm:$0xff] %v1175
        %1500 = vst [vmem:[%s221 + $0x350] sm:$0xff] %v1366
        %1501 = vst [vmem:[%s221 + $0x358] sm:$0xff] %v1368
        %1502 = vst [vmem:[%s221 + $0x360] sm:$0xff] %v1177
        %1503 = vst [vmem:[%s221 + $0x368] sm:$0xff] %v1179
        %1504 = vst [vmem:[%s221 + $0x370] sm:$0xff] %v1370
        %1505 = vst [vmem:[%s221 + $0x378] sm:$0xff] %v1372
        %1506 = vst [vmem:[%s221 + $0x380] sm:$0xff] %v1183
        %1507 = vst [vmem:[%s221 + $0x388] sm:$0xff] %v1185
        %1508 = vst [vmem:[%s221 + $0x390] sm:$0xff] %v1376
        %1509 = vst [vmem:[%s221 + $0x398] sm:$0xff] %v1378
        %1510 = vst [vmem:[%s221 + $0x3a0] sm:$0xff] %v1187
        %1511 = vst [vmem:[%s221 + $0x3a8] sm:$0xff] %v1189
        %1512 = vst [vmem:[%s221 + $0x3b0] sm:$0xff] %v1380
        %1513 = vst [vmem:[%s221 + $0x3b8] sm:$0xff] %v1382
        %1514 = vst [vmem:[%s221 + $0x3c0] sm:$0xff] %v1193
        %1515 = vst [vmem:[%s221 + $0x3c8] sm:$0xff] %v1195
        %1516 = vst [vmem:[%s221 + $0x3d0] sm:$0xff] %v1386
        %1517 = vst [vmem:[%s221 + $0x3d8] sm:$0xff] %v1388
        %1518 = vst [vmem:[%s221 + $0x3e0] sm:$0xff] %v1197
        %1519 = vst [vmem:[%s221 + $0x3e8] sm:$0xff] %v1199
        %1520 = vst [vmem:[%s221 + $0x3f0] sm:$0xff] %v1390
        %1521 = vst [vmem:[%s221 + $0x3f8] sm:$0xff] %v1392
        %s1522 = sand.u32 %s134, 1
        %s1523 = scalar_lea.sflag [#allocation4], %s1522
        %s1524 = sand.u32 %s134, 1
        %s1525 = smul.addr %s1524, 1024
        %s1526 = scalar_lea.vmem [#allocation3], %s1525
        // Predicated region
        $region41: #{_lambda_.3} parent=35 // pred_check
          %p1527 = pneg %p144
        $region42: #{_lambda_.3} parent=35 // pred_check_branch
          %1529 = sbr.rel (%p1527) target = $region44
        $region43: #{_lambda_.3} parent=35 // pred_region
          %s1530 = smul.u32 32, %s22
          %s1531 = smul.u32 4, %s23
          %s1533 = ssub.s32 16384, 16384
          %1534 = vsyncadd %s1523, %s1533
          %s1535 = smul.addr %s1530, 8
          %s1536 = sadd.s32 %s1531, %s1535
          %s1537 = smul.addr %s1536, 128
          %s1538 = scalar_lea.hbm %s4, %s1537
          %s1539 = sshll.u32 %s1526, 4
          %s1540 = int_to_ptr.vmem [resolvable:$true] %s1539
          %1545 = dma.vmem_to_hbm [thread:$0]  %s1540, 16384, %s1538, %s1523, 512, 1024, 32
        $region44: #{_lambda_.3} parent=35 // pred_fallthru
          _
      $region36: #{_lambda_.3} parent=5 // pred_fallthru
        _
      %p1546 = scmp.le.s32.totalorder 2, %s13
      // Predicated region
      $region45: #{_lambda_.3} parent=5 // pred_check
        %p1547 = pneg %p1546
      $region46: #{_lambda_.3} parent=5 // pred_check_branch
        %1549 = sbr.rel (%p1547) target = $region48
      $region47: #{_lambda_.3} parent=5 // pred_region
        %s1550 = ssub.s32 %s13, 2
        // Predicated region
        $region49: #{_lambda_.3} parent=47 // pred_check
          %p1551 = pneg %p150
        $region50: #{_lambda_.3} parent=47 // pred_check_branch
          %1553 = sbr.rel (%p1551) target = $region52
        $region51: #{_lambda_.3} parent=47 // pred_region
          %s1554 = sand.u32 %s135, 1
          %s1555 = scalar_lea.sflag [#allocation4], %s1554
          %s1556 = sand.u32 %s135, 1
          %s1557 = smul.addr %s1556, 1024
          %s1558 = scalar_lea.vmem [#allocation3], %s1557
          %1559 = dma.done %s1555, 16384
        $region52: #{_lambda_.3} parent=47 // pred_fallthru
          _
      $region48: #{_lambda_.3} parent=5 // pred_fallthru
        _
    $region6: #{_lambda_.3} parent=1 // loop_footer
      %s17 = sadd.s32 1, %s13
    $region7: #{_lambda_.3} parent=1 // loop_footer_branch
      %12 = sbr.rel target = $region3
    $region8: #{_lambda_.3} parent=1 // loop_exit
      _
    %1560 = vsyncpa [#allocation4], 1
    %s1561 = scalar_lea.sflag [#allocation4], 1
    %1562 = vsyncpa %s1561, 1

// kernel: _lambda_.2
$region0: #{_lambda_.2}
  #allocation0 [shape = 'u32[]', space=smem, size = 0x4, offset = 0x4, fixed_abs, tag = 'smem constant byte address 0x4 - core index']
  #allocation1 [shape = 'u32[144,128]{1,0:T(1,128)}', space=vmem, size = 0x12000, scoped, tag = 'internal scratch']
  %s0 = inlined_call_operand.vmem [shape: f32[4,128,128], index: 0, kind: input, shape index: {}]
  %s1 = inlined_call_operand.vmem [shape: f32[2,1,128], index: 1, kind: input, shape index: {}]
  %s2 = inlined_call_operand.vmem [shape: f32[2,1,128], index: 2, kind: input, shape index: {}]
  %s3 = inlined_call_operand.vmem [shape: bf16[2,4,128,32], index: 3, kind: input, shape index: {}]
  %s4 = inlined_call_operand.vmem [shape: f32[2,4,1,32], index: 4, kind: input, shape index: {}]
  %s5 = inlined_call_operand.vmem [shape: bf16[2,4,128,32], index: 5, kind: input, shape index: {}]
  %s6 = inlined_call_operand.vmem [shape: f32[2,4,1,32], index: 6, kind: input, shape index: {}]
  %s7 = inlined_call_operand.vmem [shape: bf16[2,4,128,32], index: 7, kind: input, shape index: {}]
  %s8 = inlined_call_operand.vmem [shape: f32[2,4,1,32], index: 8, kind: input, shape index: {}]
  %s9 = inlined_call_operand.vmem [shape: bf16[2,4,32,128], index: 9, kind: input, shape index: {}]
  %s10 = inlined_call_operand.vmem [shape: f32[2,1,128], index: 10, kind: input, shape index: {}]
  %s11 = inlined_call_operand.vmem [shape: f32[2,1,128], index: 11, kind: input, shape index: {}]
  %s12 = inlined_call_operand.vmem [shape: f32[2,1,128], index: 12, kind: input, shape index: {}]
  %s13 = inlined_call_operand.vmem [shape: bf16[2,128,512], index: 13, kind: input, shape index: {}]
  %s14 = inlined_call_operand.vmem [shape: f32[2,1,512], index: 14, kind: input, shape index: {}]
  %s15 = inlined_call_operand.vmem [shape: bf16[2,512,128], index: 15, kind: input, shape index: {}]
  %s16 = inlined_call_operand.vmem [shape: f32[2,1,128], index: 16, kind: input, shape index: {}]
  %s17 = inlined_call_operand.vmem [shape: f32[4,128,128], index: 17, kind: output, shape index: {}]
  %s18 = sld [smem:[#allocation0]]
  $region105: #{_lambda_.2} parent=0
    _
  %s20 = ssub.s32 1, %s18
  %s21 = scalar_select 0, %s20, %s18
  loop: start=0, step=1, limit=10
  $region2: #{_lambda_.2} parent=0 // loop_pre_header
    _
  $region3: #{_lambda_.2} parent=0 // loop_header
    %s23 = sphi 0, %s27
    %p24 = scmp.ge.s32.totalorder %s23, 10
    %s30 = sphi 0, %s42
    %s31 = sphi 0, %s38
    %s32 = sphi 0, %s30
    %s33 = sphi 0, %s31
    %s34 = sphi 0, %s32
    %s35 = sphi 0, %s33
    %s45 = sphi 0, %s47
    %s48 = sphi 0, %s45
    %s49 = sphi 0, %s48
    %s65 = sphi 0, %s49
    %s71 = sphi 0, %s73
    %s74 = sphi 0, %s71
    %s75 = sphi 0, %s74
    %s91 = sphi 0, %s75
    %s97 = sphi 0, %s99
    %s100 = sphi 0, %s97
    %s101 = sphi 0, %s100
    %s117 = sphi 0, %s101
    %s123 = sphi 0, %s125
    %s126 = sphi 0, %s123
    %s127 = sphi 0, %s126
    %s143 = sphi 0, %s127
    %s149 = sphi 0, %s151
    %s152 = sphi 0, %s149
    %s153 = sphi 0, %s152
    %s169 = sphi 0, %s153
    %s175 = sphi 0, %s177
    %s178 = sphi 0, %s175
    %s179 = sphi 0, %s178
    %s195 = sphi 0, %s179
    %s201 = sphi 0, %s203
    %s204 = sphi 0, %s201
    %s205 = sphi 0, %s204
    %s221 = sphi 0, %s205
    %s227 = sphi 0, %s229
    %s230 = sphi 0, %s227
    %s231 = sphi 0, %s230
    %s247 = sphi 0, %s231
    %s253 = sphi 0, %s255
    %s256 = sphi 0, %s253
    %s257 = sphi 0, %s256
    %s273 = sphi 0, %s257
    %s279 = sphi 0, %s281
    %s282 = sphi 0, %s279
    %s283 = sphi 0, %s282
    %s299 = sphi 0, %s283
    %s305 = sphi 0, %s307
    %s308 = sphi 0, %s305
    %s309 = sphi 0, %s308
    %s325 = sphi 0, %s309
    %s331 = sphi 0, %s333
    %s334 = sphi 0, %s331
    %s335 = sphi 0, %s334
    %s351 = sphi 0, %s335
    %s357 = sphi 0, %s359
    %s360 = sphi 0, %s357
    %s361 = sphi 0, %s360
    %s377 = sphi 0, %s361
    %s383 = sphi 0, %s385
    %s386 = sphi 0, %s383
    %s387 = sphi 0, %s386
    %s403 = sphi 0, %s387
    %s409 = sphi 0, %s411
    %s412 = sphi 0, %s409
    %s413 = sphi 0, %s412
    %s429 = sphi 0, %s413
    %s435 = sphi 0, %s437
    %s438 = sphi 0, %s435
    %s439 = sphi 0, %s438
    %s455 = sphi 0, %s439
    %s461 = sphi 0, %s463
    %s464 = sphi 0, %s461
    %s465 = sphi 0, %s464
    %s481 = sphi 0, %s465
    %s487 = sphi 0, %s489
    %s490 = sphi 0, %s487
    %s491 = sphi 0, %s490
    %s507 = sphi 0, %s491
  $region4: #{_lambda_.2} parent=0 // loop_header_branch
    %26 = sbr.rel (%p24) target = $region8
  $region5: #{_lambda_.2} parent=0 // loop_body
    %s28 = ssub.s32 %s23, 1
    %s29 = ssub.s32 %s23, 2
    %s36 = sadd.s32 1, %s31
    %p37 = scmp.ge.s32.totalorder %s36, 2
    %s38 = scalar_select %p37, 0, %s36
    %s39 = sadd.s32 1, %s30
    %s40 = scalar_select %p37, %s39, %s30
    %p41 = scmp.ge.s32.totalorder %s40, 4
    %s42 = scalar_select %p41, 0, %s40
    %s43 = ssub.s32 %s30, %s42
    %p44 = scmp.eq.s32.totalorder %s43, 0
    %s46 = sadd.s32 %s45, 1
    %s47 = scalar_select %p44, %s45, %s46
    %p50 = pneg %p44
    %p51 = scmp.eq.s32.totalorder %s23, 7
    %p52 = por %p50, %p51
    %p53 = scmp.ne.s32.totalorder %s45, %s48
    %p54 = scmp.eq.s32.totalorder %s23, 0
    %p55 = por %p53, %p54
    %p56 = scmp.ne.s32.totalorder %s45, %s48
    %p57 = scmp.eq.s32.totalorder %s28, 7
    %p58 = por %p56, %p57
    %p59 = scmp.ne.s32.totalorder %s48, %s49
    %p60 = scmp.eq.s32.totalorder %s28, 0
    %p61 = por %p59, %p60
    %p62 = scmp.ne.s32.totalorder %s48, %s49
    %p63 = scmp.eq.s32.totalorder %s29, 7
    %p64 = por %p62, %p63
    %p66 = scmp.ne.s32.totalorder %s49, %s65
    %p67 = scmp.eq.s32.totalorder %s29, 0
    %p68 = por %p66, %p67
    %s69 = ssub.s32 %s31, %s38
    %p70 = scmp.eq.s32.totalorder %s69, 0
    %s72 = sadd.s32 %s71, 1
    %s73 = scalar_select %p70, %s71, %s72
    %p76 = pneg %p70
    %p77 = scmp.eq.s32.totalorder %s23, 7
    %p78 = por %p76, %p77
    %p79 = scmp.ne.s32.totalorder %s71, %s74
    %p80 = scmp.eq.s32.totalorder %s23, 0
    %p81 = por %p79, %p80
    %p82 = scmp.ne.s32.totalorder %s71, %s74
    %p83 = scmp.eq.s32.totalorder %s28, 7
    %p84 = por %p82, %p83
    %p85 = scmp.ne.s32.totalorder %s74, %s75
    %p86 = scmp.eq.s32.totalorder %s28, 0
    %p87 = por %p85, %p86
    %p88 = scmp.ne.s32.totalorder %s74, %s75
    %p89 = scmp.eq.s32.totalorder %s29, 7
    %p90 = por %p88, %p89
    %p92 = scmp.ne.s32.totalorder %s75, %s91
    %p93 = scmp.eq.s32.totalorder %s29, 0
    %p94 = por %p92, %p93
    %s95 = ssub.s32 %s31, %s38
    %p96 = scmp.eq.s32.totalorder %s95, 0
    %s98 = sadd.s32 %s97, 1
    %s99 = scalar_select %p96, %s97, %s98
    %p102 = pneg %p96
    %p103 = scmp.eq.s32.totalorder %s23, 7
    %p104 = por %p102, %p103
    %p105 = scmp.ne.s32.totalorder %s97, %s100
    %p106 = scmp.eq.s32.totalorder %s23, 0
    %p107 = por %p105, %p106
    %p108 = scmp.ne.s32.totalorder %s97, %s100
    %p109 = scmp.eq.s32.totalorder %s28, 7
    %p110 = por %p108, %p109
    %p111 = scmp.ne.s32.totalorder %s100, %s101
    %p112 = scmp.eq.s32.totalorder %s28, 0
    %p113 = por %p111, %p112
    %p114 = scmp.ne.s32.totalorder %s100, %s101
    %p115 = scmp.eq.s32.totalorder %s29, 7
    %p116 = por %p114, %p115
    %p118 = scmp.ne.s32.totalorder %s101, %s117
    %p119 = scmp.eq.s32.totalorder %s29, 0
    %p120 = por %p118, %p119
    %s121 = ssub.s32 %s31, %s38
    %p122 = scmp.eq.s32.totalorder %s121, 0
    %s124 = sadd.s32 %s123, 1
    %s125 = scalar_select %p122, %s123, %s124
    %p128 = pneg %p122
    %p129 = scmp.eq.s32.totalorder %s23, 7
    %p130 = por %p128, %p129
    %p131 = scmp.ne.s32.totalorder %s123, %s126
    %p132 = scmp.eq.s32.totalorder %s23, 0
    %p133 = por %p131, %p132
    %p134 = scmp.ne.s32.totalorder %s123, %s126
    %p135 = scmp.eq.s32.totalorder %s28, 7
    %p136 = por %p134, %p135
    %p137 = scmp.ne.s32.totalorder %s126, %s127
    %p138 = scmp.eq.s32.totalorder %s28, 0
    %p139 = por %p137, %p138
    %p140 = scmp.ne.s32.totalorder %s126, %s127
    %p141 = scmp.eq.s32.totalorder %s29, 7
    %p142 = por %p140, %p141
    %p144 = scmp.ne.s32.totalorder %s127, %s143
    %p145 = scmp.eq.s32.totalorder %s29, 0
    %p146 = por %p144, %p145
    %s147 = ssub.s32 %s31, %s38
    %p148 = scmp.eq.s32.totalorder %s147, 0
    %s150 = sadd.s32 %s149, 1
    %s151 = scalar_select %p148, %s149, %s150
    %p154 = pneg %p148
    %p155 = scmp.eq.s32.totalorder %s23, 7
    %p156 = por %p154, %p155
    %p157 = scmp.ne.s32.totalorder %s149, %s152
    %p158 = scmp.eq.s32.totalorder %s23, 0
    %p159 = por %p157, %p158
    %p160 = scmp.ne.s32.totalorder %s149, %s152
    %p161 = scmp.eq.s32.totalorder %s28, 7
    %p162 = por %p160, %p161
    %p163 = scmp.ne.s32.totalorder %s152, %s153
    %p164 = scmp.eq.s32.totalorder %s28, 0
    %p165 = por %p163, %p164
    %p166 = scmp.ne.s32.totalorder %s152, %s153
    %p167 = scmp.eq.s32.totalorder %s29, 7
    %p168 = por %p166, %p167
    %p170 = scmp.ne.s32.totalorder %s153, %s169
    %p171 = scmp.eq.s32.totalorder %s29, 0
    %p172 = por %p170, %p171
    %s173 = ssub.s32 %s31, %s38
    %p174 = scmp.eq.s32.totalorder %s173, 0
    %s176 = sadd.s32 %s175, 1
    %s177 = scalar_select %p174, %s175, %s176
    %p180 = pneg %p174
    %p181 = scmp.eq.s32.totalorder %s23, 7
    %p182 = por %p180, %p181
    %p183 = scmp.ne.s32.totalorder %s175, %s178
    %p184 = scmp.eq.s32.totalorder %s23, 0
    %p185 = por %p183, %p184
    %p186 = scmp.ne.s32.totalorder %s175, %s178
    %p187 = scmp.eq.s32.totalorder %s28, 7
    %p188 = por %p186, %p187
    %p189 = scmp.ne.s32.totalorder %s178, %s179
    %p190 = scmp.eq.s32.totalorder %s28, 0
    %p191 = por %p189, %p190
    %p192 = scmp.ne.s32.totalorder %s178, %s179
    %p193 = scmp.eq.s32.totalorder %s29, 7
    %p194 = por %p192, %p193
    %p196 = scmp.ne.s32.totalorder %s179, %s195
    %p197 = scmp.eq.s32.totalorder %s29, 0
    %p198 = por %p196, %p197
    %s199 = ssub.s32 %s31, %s38
    %p200 = scmp.eq.s32.totalorder %s199, 0
    %s202 = sadd.s32 %s201, 1
    %s203 = scalar_select %p200, %s201, %s202
    %p206 = pneg %p200
    %p207 = scmp.eq.s32.totalorder %s23, 7
    %p208 = por %p206, %p207
    %p209 = scmp.ne.s32.totalorder %s201, %s204
    %p210 = scmp.eq.s32.totalorder %s23, 0
    %p211 = por %p209, %p210
    %p212 = scmp.ne.s32.totalorder %s201, %s204
    %p213 = scmp.eq.s32.totalorder %s28, 7
    %p214 = por %p212, %p213
    %p215 = scmp.ne.s32.totalorder %s204, %s205
    %p216 = scmp.eq.s32.totalorder %s28, 0
    %p217 = por %p215, %p216
    %p218 = scmp.ne.s32.totalorder %s204, %s205
    %p219 = scmp.eq.s32.totalorder %s29, 7
    %p220 = por %p218, %p219
    %p222 = scmp.ne.s32.totalorder %s205, %s221
    %p223 = scmp.eq.s32.totalorder %s29, 0
    %p224 = por %p222, %p223
    %s225 = ssub.s32 %s31, %s38
    %p226 = scmp.eq.s32.totalorder %s225, 0
    %s228 = sadd.s32 %s227, 1
    %s229 = scalar_select %p226, %s227, %s228
    %p232 = pneg %p226
    %p233 = scmp.eq.s32.totalorder %s23, 7
    %p234 = por %p232, %p233
    %p235 = scmp.ne.s32.totalorder %s227, %s230
    %p236 = scmp.eq.s32.totalorder %s23, 0
    %p237 = por %p235, %p236
    %p238 = scmp.ne.s32.totalorder %s227, %s230
    %p239 = scmp.eq.s32.totalorder %s28, 7
    %p240 = por %p238, %p239
    %p241 = scmp.ne.s32.totalorder %s230, %s231
    %p242 = scmp.eq.s32.totalorder %s28, 0
    %p243 = por %p241, %p242
    %p244 = scmp.ne.s32.totalorder %s230, %s231
    %p245 = scmp.eq.s32.totalorder %s29, 7
    %p246 = por %p244, %p245
    %p248 = scmp.ne.s32.totalorder %s231, %s247
    %p249 = scmp.eq.s32.totalorder %s29, 0
    %p250 = por %p248, %p249
    %s251 = ssub.s32 %s31, %s38
    %p252 = scmp.eq.s32.totalorder %s251, 0
    %s254 = sadd.s32 %s253, 1
    %s255 = scalar_select %p252, %s253, %s254
    %p258 = pneg %p252
    %p259 = scmp.eq.s32.totalorder %s23, 7
    %p260 = por %p258, %p259
    %p261 = scmp.ne.s32.totalorder %s253, %s256
    %p262 = scmp.eq.s32.totalorder %s23, 0
    %p263 = por %p261, %p262
    %p264 = scmp.ne.s32.totalorder %s253, %s256
    %p265 = scmp.eq.s32.totalorder %s28, 7
    %p266 = por %p264, %p265
    %p267 = scmp.ne.s32.totalorder %s256, %s257
    %p268 = scmp.eq.s32.totalorder %s28, 0
    %p269 = por %p267, %p268
    %p270 = scmp.ne.s32.totalorder %s256, %s257
    %p271 = scmp.eq.s32.totalorder %s29, 7
    %p272 = por %p270, %p271
    %p274 = scmp.ne.s32.totalorder %s257, %s273
    %p275 = scmp.eq.s32.totalorder %s29, 0
    %p276 = por %p274, %p275
    %s277 = ssub.s32 %s31, %s38
    %p278 = scmp.eq.s32.totalorder %s277, 0
    %s280 = sadd.s32 %s279, 1
    %s281 = scalar_select %p278, %s279, %s280
    %p284 = pneg %p278
    %p285 = scmp.eq.s32.totalorder %s23, 7
    %p286 = por %p284, %p285
    %p287 = scmp.ne.s32.totalorder %s279, %s282
    %p288 = scmp.eq.s32.totalorder %s23, 0
    %p289 = por %p287, %p288
    %p290 = scmp.ne.s32.totalorder %s279, %s282
    %p291 = scmp.eq.s32.totalorder %s28, 7
    %p292 = por %p290, %p291
    %p293 = scmp.ne.s32.totalorder %s282, %s283
    %p294 = scmp.eq.s32.totalorder %s28, 0
    %p295 = por %p293, %p294
    %p296 = scmp.ne.s32.totalorder %s282, %s283
    %p297 = scmp.eq.s32.totalorder %s29, 7
    %p298 = por %p296, %p297
    %p300 = scmp.ne.s32.totalorder %s283, %s299
    %p301 = scmp.eq.s32.totalorder %s29, 0
    %p302 = por %p300, %p301
    %s303 = ssub.s32 %s31, %s38
    %p304 = scmp.eq.s32.totalorder %s303, 0
    %s306 = sadd.s32 %s305, 1
    %s307 = scalar_select %p304, %s305, %s306
    %p310 = pneg %p304
    %p311 = scmp.eq.s32.totalorder %s23, 7
    %p312 = por %p310, %p311
    %p313 = scmp.ne.s32.totalorder %s305, %s308
    %p314 = scmp.eq.s32.totalorder %s23, 0
    %p315 = por %p313, %p314
    %p316 = scmp.ne.s32.totalorder %s305, %s308
    %p317 = scmp.eq.s32.totalorder %s28, 7
    %p318 = por %p316, %p317
    %p319 = scmp.ne.s32.totalorder %s308, %s309
    %p320 = scmp.eq.s32.totalorder %s28, 0
    %p321 = por %p319, %p320
    %p322 = scmp.ne.s32.totalorder %s308, %s309
    %p323 = scmp.eq.s32.totalorder %s29, 7
    %p324 = por %p322, %p323
    %p326 = scmp.ne.s32.totalorder %s309, %s325
    %p327 = scmp.eq.s32.totalorder %s29, 0
    %p328 = por %p326, %p327
    %s329 = ssub.s32 %s31, %s38
    %p330 = scmp.eq.s32.totalorder %s329, 0
    %s332 = sadd.s32 %s331, 1
    %s333 = scalar_select %p330, %s331, %s332
    %p336 = pneg %p330
    %p337 = scmp.eq.s32.totalorder %s23, 7
    %p338 = por %p336, %p337
    %p339 = scmp.ne.s32.totalorder %s331, %s334
    %p340 = scmp.eq.s32.totalorder %s23, 0
    %p341 = por %p339, %p340
    %p342 = scmp.ne.s32.totalorder %s331, %s334
    %p343 = scmp.eq.s32.totalorder %s28, 7
    %p344 = por %p342, %p343
    %p345 = scmp.ne.s32.totalorder %s334, %s335
    %p346 = scmp.eq.s32.totalorder %s28, 0
    %p347 = por %p345, %p346
    %p348 = scmp.ne.s32.totalorder %s334, %s335
    %p349 = scmp.eq.s32.totalorder %s29, 7
    %p350 = por %p348, %p349
    %p352 = scmp.ne.s32.totalorder %s335, %s351
    %p353 = scmp.eq.s32.totalorder %s29, 0
    %p354 = por %p352, %p353
    %s355 = ssub.s32 %s31, %s38
    %p356 = scmp.eq.s32.totalorder %s355, 0
    %s358 = sadd.s32 %s357, 1
    %s359 = scalar_select %p356, %s357, %s358
    %p362 = pneg %p356
    %p363 = scmp.eq.s32.totalorder %s23, 7
    %p364 = por %p362, %p363
    %p365 = scmp.ne.s32.totalorder %s357, %s360
    %p366 = scmp.eq.s32.totalorder %s23, 0
    %p367 = por %p365, %p366
    %p368 = scmp.ne.s32.totalorder %s357, %s360
    %p369 = scmp.eq.s32.totalorder %s28, 7
    %p370 = por %p368, %p369
    %p371 = scmp.ne.s32.totalorder %s360, %s361
    %p372 = scmp.eq.s32.totalorder %s28, 0
    %p373 = por %p371, %p372
    %p374 = scmp.ne.s32.totalorder %s360, %s361
    %p375 = scmp.eq.s32.totalorder %s29, 7
    %p376 = por %p374, %p375
    %p378 = scmp.ne.s32.totalorder %s361, %s377
    %p379 = scmp.eq.s32.totalorder %s29, 0
    %p380 = por %p378, %p379
    %s381 = ssub.s32 %s31, %s38
    %p382 = scmp.eq.s32.totalorder %s381, 0
    %s384 = sadd.s32 %s383, 1
    %s385 = scalar_select %p382, %s383, %s384
    %p388 = pneg %p382
    %p389 = scmp.eq.s32.totalorder %s23, 7
    %p390 = por %p388, %p389
    %p391 = scmp.ne.s32.totalorder %s383, %s386
    %p392 = scmp.eq.s32.totalorder %s23, 0
    %p393 = por %p391, %p392
    %p394 = scmp.ne.s32.totalorder %s383, %s386
    %p395 = scmp.eq.s32.totalorder %s28, 7
    %p396 = por %p394, %p395
    %p397 = scmp.ne.s32.totalorder %s386, %s387
    %p398 = scmp.eq.s32.totalorder %s28, 0
    %p399 = por %p397, %p398
    %p400 = scmp.ne.s32.totalorder %s386, %s387
    %p401 = scmp.eq.s32.totalorder %s29, 7
    %p402 = por %p400, %p401
    %p404 = scmp.ne.s32.totalorder %s387, %s403
    %p405 = scmp.eq.s32.totalorder %s29, 0
    %p406 = por %p404, %p405
    %s407 = ssub.s32 %s31, %s38
    %p408 = scmp.eq.s32.totalorder %s407, 0
    %s410 = sadd.s32 %s409, 1
    %s411 = scalar_select %p408, %s409, %s410
    %p414 = pneg %p408
    %p415 = scmp.eq.s32.totalorder %s23, 7
    %p416 = por %p414, %p415
    %p417 = scmp.ne.s32.totalorder %s409, %s412
    %p418 = scmp.eq.s32.totalorder %s23, 0
    %p419 = por %p417, %p418
    %p420 = scmp.ne.s32.totalorder %s409, %s412
    %p421 = scmp.eq.s32.totalorder %s28, 7
    %p422 = por %p420, %p421
    %p423 = scmp.ne.s32.totalorder %s412, %s413
    %p424 = scmp.eq.s32.totalorder %s28, 0
    %p425 = por %p423, %p424
    %p426 = scmp.ne.s32.totalorder %s412, %s413
    %p427 = scmp.eq.s32.totalorder %s29, 7
    %p428 = por %p426, %p427
    %p430 = scmp.ne.s32.totalorder %s413, %s429
    %p431 = scmp.eq.s32.totalorder %s29, 0
    %p432 = por %p430, %p431
    %s433 = ssub.s32 %s31, %s38
    %p434 = scmp.eq.s32.totalorder %s433, 0
    %s436 = sadd.s32 %s435, 1
    %s437 = scalar_select %p434, %s435, %s436
    %p440 = pneg %p434
    %p441 = scmp.eq.s32.totalorder %s23, 7
    %p442 = por %p440, %p441
    %p443 = scmp.ne.s32.totalorder %s435, %s438
    %p444 = scmp.eq.s32.totalorder %s23, 0
    %p445 = por %p443, %p444
    %p446 = scmp.ne.s32.totalorder %s435, %s438
    %p447 = scmp.eq.s32.totalorder %s28, 7
    %p448 = por %p446, %p447
    %p449 = scmp.ne.s32.totalorder %s438, %s439
    %p450 = scmp.eq.s32.totalorder %s28, 0
    %p451 = por %p449, %p450
    %p452 = scmp.ne.s32.totalorder %s438, %s439
    %p453 = scmp.eq.s32.totalorder %s29, 7
    %p454 = por %p452, %p453
    %p456 = scmp.ne.s32.totalorder %s439, %s455
    %p457 = scmp.eq.s32.totalorder %s29, 0
    %p458 = por %p456, %p457
    %s459 = ssub.s32 %s31, %s38
    %p460 = scmp.eq.s32.totalorder %s459, 0
    %s462 = sadd.s32 %s461, 1
    %s463 = scalar_select %p460, %s461, %s462
    %p466 = pneg %p460
    %p467 = scmp.eq.s32.totalorder %s23, 7
    %p468 = por %p466, %p467
    %p469 = scmp.ne.s32.totalorder %s461, %s464
    %p470 = scmp.eq.s32.totalorder %s23, 0
    %p471 = por %p469, %p470
    %p472 = scmp.ne.s32.totalorder %s461, %s464
    %p473 = scmp.eq.s32.totalorder %s28, 7
    %p474 = por %p472, %p473
    %p475 = scmp.ne.s32.totalorder %s464, %s465
    %p476 = scmp.eq.s32.totalorder %s28, 0
    %p477 = por %p475, %p476
    %p478 = scmp.ne.s32.totalorder %s464, %s465
    %p479 = scmp.eq.s32.totalorder %s29, 7
    %p480 = por %p478, %p479
    %p482 = scmp.ne.s32.totalorder %s465, %s481
    %p483 = scmp.eq.s32.totalorder %s29, 0
    %p484 = por %p482, %p483
    %s485 = ssub.s32 %s30, %s42
    %p486 = scmp.eq.s32.totalorder %s485, 0
    %s488 = sadd.s32 %s487, 1
    %s489 = scalar_select %p486, %s487, %s488
    %p492 = pneg %p486
    %p493 = scmp.eq.s32.totalorder %s23, 7
    %p494 = por %p492, %p493
    %p495 = scmp.ne.s32.totalorder %s487, %s490
    %p496 = scmp.eq.s32.totalorder %s23, 0
    %p497 = por %p495, %p496
    %p498 = scmp.ne.s32.totalorder %s487, %s490
    %p499 = scmp.eq.s32.totalorder %s28, 7
    %p500 = por %p498, %p499
    %p501 = scmp.ne.s32.totalorder %s490, %s491
    %p502 = scmp.eq.s32.totalorder %s28, 0
    %p503 = por %p501, %p502
    %p504 = scmp.ne.s32.totalorder %s490, %s491
    %p505 = scmp.eq.s32.totalorder %s29, 7
    %p506 = por %p504, %p505
    %p508 = scmp.ne.s32.totalorder %s491, %s507
    %p509 = scmp.eq.s32.totalorder %s29, 0
    %p510 = por %p508, %p509
    %p511 = scmp.le.s32.totalorder 1, %s23
    %p512 = scmp.lt.s32.totalorder %s23, 9
    %p513 = pnand %p511, %p512
    %p514 = pneg %p513
    // Predicated region
    $region9: #{_lambda_.2} parent=5 // pred_check
      _
    $region10: #{_lambda_.2} parent=5 // pred_check_branch
      %516 = sbr.rel (%p513) target = $region12
    $region11: #{_lambda_.2} parent=5 // pred_region
      %s517 = ssub.s32 %s23, 1
    $region12: #{_lambda_.2} parent=5 // pred_fallthru
      _
    %p518 = scmp.lt.s32.totalorder %s23, 8
    // Predicated region
    $region13: #{_lambda_.2} parent=5 // pred_check
      %p519 = pneg %p518
    $region14: #{_lambda_.2} parent=5 // pred_check_branch
      %521 = sbr.rel (%p519) target = $region16
    $region15: #{_lambda_.2} parent=5 // pred_region
      // Predicated region
      $region17: #{_lambda_.2} parent=15 // pred_check
        %p522 = pneg %p55
      $region18: #{_lambda_.2} parent=15 // pred_check_branch
        %524 = sbr.rel (%p522) target = $region20
      $region19: #{_lambda_.2} parent=15 // pred_region
        %p525 = scmp.lt.s32.totalorder %s30, 3
        %s526 = scalar_select %p525, %s30, 3
        %s527 = smul.addr %s526, 16
        %s528 = smul.addr %s527, 8
        %s529 = scalar_lea.vmem %s0, %s528
      $region20: #{_lambda_.2} parent=15 // pred_fallthru
        _
      // Predicated region
      $region21: #{_lambda_.2} parent=15 // pred_check
        %p530 = pneg %p81
      $region22: #{_lambda_.2} parent=15 // pred_check_branch
        %532 = sbr.rel (%p530) target = $region24
      $region23: #{_lambda_.2} parent=15 // pred_region
        %p533 = scmp.lt.s32.totalorder %s31, 1
        %s534 = scalar_select %p533, %s31, 1
        %s535 = scalar_lea.vmem %s1, %s534
      $region24: #{_lambda_.2} parent=15 // pred_fallthru
        _
      // Predicated region
      $region25: #{_lambda_.2} parent=15 // pred_check
        %p536 = pneg %p107
      $region26: #{_lambda_.2} parent=15 // pred_check_branch
        %538 = sbr.rel (%p536) target = $region28
      $region27: #{_lambda_.2} parent=15 // pred_region
        %p539 = scmp.lt.s32.totalorder %s31, 1
        %s540 = scalar_select %p539, %s31, 1
        %s541 = scalar_lea.vmem %s2, %s540
      $region28: #{_lambda_.2} parent=15 // pred_fallthru
        _
      // Predicated region
      $region29: #{_lambda_.2} parent=15 // pred_check
        %p542 = pneg %p133
      $region30: #{_lambda_.2} parent=15 // pred_check_branch
        %544 = sbr.rel (%p542) target = $region32
      $region31: #{_lambda_.2} parent=15 // pred_region
        %p545 = scmp.lt.s32.totalorder %s31, 1
        %s546 = scalar_select %p545, %s31, 1
        %s547 = smul.addr %s546, 64
        %s548 = smul.addr %s547, 4
        %s549 = scalar_lea.vmem %s3, %s548
      $region32: #{_lambda_.2} parent=15 // pred_fallthru
        _
      // Predicated region
      $region33: #{_lambda_.2} parent=15 // pred_check
        %p550 = pneg %p159
      $region34: #{_lambda_.2} parent=15 // pred_check_branch
        %552 = sbr.rel (%p550) target = $region36
      $region35: #{_lambda_.2} parent=15 // pred_region
        %p553 = scmp.lt.s32.totalorder %s31, 1
        %s554 = scalar_select %p553, %s31, 1
        %s555 = smul.addr %s554, 4
        %s556 = scalar_lea.vmem %s4, %s555
      $region36: #{_lambda_.2} parent=15 // pred_fallthru
        _
      // Predicated region
      $region37: #{_lambda_.2} parent=15 // pred_check
        %p557 = pneg %p185
      $region38: #{_lambda_.2} parent=15 // pred_check_branch
        %559 = sbr.rel (%p557) target = $region40
      $region39: #{_lambda_.2} parent=15 // pred_region
        %p560 = scmp.lt.s32.totalorder %s31, 1
        %s561 = scalar_select %p560, %s31, 1
        %s562 = smul.addr %s561, 64
        %s563 = smul.addr %s562, 4
        %s564 = scalar_lea.vmem %s5, %s563
      $region40: #{_lambda_.2} parent=15 // pred_fallthru
        _
      // Predicated region
      $region41: #{_lambda_.2} parent=15 // pred_check
        %p565 = pneg %p211
      $region42: #{_lambda_.2} parent=15 // pred_check_branch
        %567 = sbr.rel (%p565) target = $region44
      $region43: #{_lambda_.2} parent=15 // pred_region
        %p568 = scmp.lt.s32.totalorder %s31, 1
        %s569 = scalar_select %p568, %s31, 1
        %s570 = smul.addr %s569, 4
        %s571 = scalar_lea.vmem %s6, %s570
      $region44: #{_lambda_.2} parent=15 // pred_fallthru
        _
      // Predicated region
      $region45: #{_lambda_.2} parent=15 // pred_check
        %p572 = pneg %p237
      $region46: #{_lambda_.2} parent=15 // pred_check_branch
        %574 = sbr.rel (%p572) target = $region48
      $region47: #{_lambda_.2} parent=15 // pred_region
        %p575 = scmp.lt.s32.totalorder %s31, 1
        %s576 = scalar_select %p575, %s31, 1
        %s577 = smul.addr %s576, 64
        %s578 = smul.addr %s577, 4
        %s579 = scalar_lea.vmem %s7, %s578
      $region48: #{_lambda_.2} parent=15 // pred_fallthru
        _
      // Predicated region
      $region49: #{_lambda_.2} parent=15 // pred_check
        %p580 = pneg %p263
      $region50: #{_lambda_.2} parent=15 // pred_check_branch
        %582 = sbr.rel (%p580) target = $region52
      $region51: #{_lambda_.2} parent=15 // pred_region
        %p583 = scmp.lt.s32.totalorder %s31, 1
        %s584 = scalar_select %p583, %s31, 1
        %s585 = smul.addr %s584, 4
        %s586 = scalar_lea.vmem %s8, %s585
      $region52: #{_lambda_.2} parent=15 // pred_fallthru
        _
      // Predicated region
      $region53: #{_lambda_.2} parent=15 // pred_check
        %p587 = pneg %p289
      $region54: #{_lambda_.2} parent=15 // pred_check_branch
        %589 = sbr.rel (%p587) target = $region56
      $region55: #{_lambda_.2} parent=15 // pred_region
        %p590 = scmp.lt.s32.totalorder %s31, 1
        %s591 = scalar_select %p590, %s31, 1
        %s592 = smul.addr %s591, 16
        %s593 = smul.addr %s592, 4
        %s594 = scalar_lea.vmem %s9, %s593
      $region56: #{_lambda_.2} parent=15 // pred_fallthru
        _
      // Predicated region
      $region57: #{_lambda_.2} parent=15 // pred_check
        %p595 = pneg %p315
      $region58: #{_lambda_.2} parent=15 // pred_check_branch
        %597 = sbr.rel (%p595) target = $region60
      $region59: #{_lambda_.2} parent=15 // pred_region
        %p598 = scmp.lt.s32.totalorder %s31, 1
        %s599 = scalar_select %p598, %s31, 1
        %s600 = scalar_lea.vmem %s10, %s599
      $region60: #{_lambda_.2} parent=15 // pred_fallthru
        _
      // Predicated region
      $region61: #{_lambda_.2} parent=15 // pred_check
        %p601 = pneg %p341
      $region62: #{_lambda_.2} parent=15 // pred_check_branch
        %603 = sbr.rel (%p601) target = $region64
      $region63: #{_lambda_.2} parent=15 // pred_region
        %p604 = scmp.lt.s32.totalorder %s31, 1
        %s605 = scalar_select %p604, %s31, 1
        %s606 = scalar_lea.vmem %s11, %s605
      $region64: #{_lambda_.2} parent=15 // pred_fallthru
        _
      // Predicated region
      $region65: #{_lambda_.2} parent=15 // pred_check
        %p607 = pneg %p367
      $region66: #{_lambda_.2} parent=15 // pred_check_branch
        %609 = sbr.rel (%p607) target = $region68
      $region67: #{_lambda_.2} parent=15 // pred_region
        %p610 = scmp.lt.s32.totalorder %s31, 1
        %s611 = scalar_select %p610, %s31, 1
        %s612 = scalar_lea.vmem %s12, %s611
      $region68: #{_lambda_.2} parent=15 // pred_fallthru
        _
      // Predicated region
      $region69: #{_lambda_.2} parent=15 // pred_check
        %p613 = pneg %p393
      $region70: #{_lambda_.2} parent=15 // pred_check_branch
        %615 = sbr.rel (%p613) target = $region72
      $region71: #{_lambda_.2} parent=15 // pred_region
        %p616 = scmp.lt.s32.totalorder %s31, 1
        %s617 = scalar_select %p616, %s31, 1
        %s618 = smul.addr %s617, 64
        %s619 = smul.addr %s618, 4
        %s620 = scalar_lea.vmem %s13, %s619
      $region72: #{_lambda_.2} parent=15 // pred_fallthru
        _
      // Predicated region
      $region73: #{_lambda_.2} parent=15 // pred_check
        %p621 = pneg %p419
      $region74: #{_lambda_.2} parent=15 // pred_check_branch
        %623 = sbr.rel (%p621) target = $region76
      $region75: #{_lambda_.2} parent=15 // pred_region
        %p624 = scmp.lt.s32.totalorder %s31, 1
        %s625 = scalar_select %p624, %s31, 1
        %s626 = smul.addr %s625, 4
        %s627 = scalar_lea.vmem %s14, %s626
      $region76: #{_lambda_.2} parent=15 // pred_fallthru
        _
      // Predicated region
      $region77: #{_lambda_.2} parent=15 // pred_check
        %p628 = pneg %p445
      $region78: #{_lambda_.2} parent=15 // pred_check_branch
        %630 = sbr.rel (%p628) target = $region80
      $region79: #{_lambda_.2} parent=15 // pred_region
        %p631 = scmp.lt.s32.totalorder %s31, 1
        %s632 = scalar_select %p631, %s31, 1
        %s633 = smul.addr %s632, 64
        %s634 = smul.addr %s633, 4
        %s635 = scalar_lea.vmem %s15, %s634
      $region80: #{_lambda_.2} parent=15 // pred_fallthru
        _
      // Predicated region
      $region81: #{_lambda_.2} parent=15 // pred_check
        %p636 = pneg %p471
      $region82: #{_lambda_.2} parent=15 // pred_check_branch
        %638 = sbr.rel (%p636) target = $region84
      $region83: #{_lambda_.2} parent=15 // pred_region
        %p639 = scmp.lt.s32.totalorder %s31, 1
        %s640 = scalar_select %p639, %s31, 1
        %s641 = scalar_lea.vmem %s16, %s640
      $region84: #{_lambda_.2} parent=15 // pred_fallthru
        _
    $region16: #{_lambda_.2} parent=5 // pred_fallthru
      _
    %p642 = scmp.le.s32.totalorder 1, %s23
    %p643 = scmp.lt.s32.totalorder %s23, 9
    %p644 = pnand %p642, %p643
    %p645 = pneg %p644
    // Predicated region
    $region85: #{_lambda_.2} parent=5 // pred_check
      _
    $region86: #{_lambda_.2} parent=5 // pred_check_branch
      %647 = sbr.rel (%p644) target = $region88
    $region87: #{_lambda_.2} parent=5 // pred_region
      %s648 = ssub.s32 %s23, 1
      %p649 = scmp.lt.s32.totalorder %s32, 3
      %s650 = scalar_select %p649, %s32, 3
      %s651 = smul.addr %s650, 16
      %s652 = smul.addr %s651, 8
      %s653 = scalar_lea.vmem %s0, %s652
      %p654 = pneg %p61
      %p655 = pneg %p58
      %p656 = scmp.lt.s32.totalorder %s33, 1
      %s657 = scalar_select %p656, %s33, 1
      %s658 = scalar_lea.vmem %s1, %s657
      %p659 = pneg %p87
      %p660 = pneg %p84
      %p661 = scmp.lt.s32.totalorder %s33, 1
      %s662 = scalar_select %p661, %s33, 1
      %s663 = scalar_lea.vmem %s2, %s662
      %p664 = pneg %p113
      %p665 = pneg %p110
      %p666 = scmp.lt.s32.totalorder %s33, 1
      %s667 = scalar_select %p666, %s33, 1
      %s668 = smul.addr %s667, 64
      %s669 = smul.addr %s668, 4
      %s670 = scalar_lea.vmem %s3, %s669
      %p671 = pneg %p139
      %p672 = pneg %p136
      %p673 = scmp.lt.s32.totalorder %s33, 1
      %s674 = scalar_select %p673, %s33, 1
      %s675 = smul.addr %s674, 4
      %s676 = scalar_lea.vmem %s4, %s675
      %p677 = pneg %p165
      %p678 = pneg %p162
      %p679 = scmp.lt.s32.totalorder %s33, 1
      %s680 = scalar_select %p679, %s33, 1
      %s681 = smul.addr %s680, 64
      %s682 = smul.addr %s681, 4
      %s683 = scalar_lea.vmem %s5, %s682
      %p684 = pneg %p191
      %p685 = pneg %p188
      %p686 = scmp.lt.s32.totalorder %s33, 1
      %s687 = scalar_select %p686, %s33, 1
      %s688 = smul.addr %s687, 4
      %s689 = scalar_lea.vmem %s6, %s688
      %p690 = pneg %p217
      %p691 = pneg %p214
      %p692 = scmp.lt.s32.totalorder %s33, 1
      %s693 = scalar_select %p692, %s33, 1
      %s694 = smul.addr %s693, 64
      %s695 = smul.addr %s694, 4
      %s696 = scalar_lea.vmem %s7, %s695
      %p697 = pneg %p243
      %p698 = pneg %p240
      %p699 = scmp.lt.s32.totalorder %s33, 1
      %s700 = scalar_select %p699, %s33, 1
      %s701 = smul.addr %s700, 4
      %s702 = scalar_lea.vmem %s8, %s701
      %p703 = pneg %p269
      %p704 = pneg %p266
      %p705 = scmp.lt.s32.totalorder %s33, 1
      %s706 = scalar_select %p705, %s33, 1
      %s707 = smul.addr %s706, 16
      %s708 = smul.addr %s707, 4
      %s709 = scalar_lea.vmem %s9, %s708
      %p710 = pneg %p295
      %p711 = pneg %p292
      %p712 = scmp.lt.s32.totalorder %s33, 1
      %s713 = scalar_select %p712, %s33, 1
      %s714 = scalar_lea.vmem %s10, %s713
      %p715 = pneg %p321
      %p716 = pneg %p318
      %p717 = scmp.lt.s32.totalorder %s33, 1
      %s718 = scalar_select %p717, %s33, 1
      %s719 = scalar_lea.vmem %s11, %s718
      %p720 = pneg %p347
      %p721 = pneg %p344
      %p722 = scmp.lt.s32.totalorder %s33, 1
      %s723 = scalar_select %p722, %s33, 1
      %s724 = scalar_lea.vmem %s12, %s723
      %p725 = pneg %p373
      %p726 = pneg %p370
      %p727 = scmp.lt.s32.totalorder %s33, 1
      %s728 = scalar_select %p727, %s33, 1
      %s729 = smul.addr %s728, 64
      %s730 = smul.addr %s729, 4
      %s731 = scalar_lea.vmem %s13, %s730
      %p732 = pneg %p399
      %p733 = pneg %p396
      %p734 = scmp.lt.s32.totalorder %s33, 1
      %s735 = scalar_select %p734, %s33, 1
      %s736 = smul.addr %s735, 4
      %s737 = scalar_lea.vmem %s14, %s736
      %p738 = pneg %p425
      %p739 = pneg %p422
      %p740 = scmp.lt.s32.totalorder %s33, 1
      %s741 = scalar_select %p740, %s33, 1
      %s742 = smul.addr %s741, 64
      %s743 = smul.addr %s742, 4
      %s744 = scalar_lea.vmem %s15, %s743
      %p745 = pneg %p451
      %p746 = pneg %p448
      %p747 = scmp.lt.s32.totalorder %s33, 1
      %s748 = scalar_select %p747, %s33, 1
      %s749 = scalar_lea.vmem %s16, %s748
      %p750 = pneg %p477
      %p751 = pneg %p474
      %p752 = pneg %p503
      %p753 = pneg %p500
      %p754 = scmp.lt.s32.totalorder %s32, 3
      %s755 = scalar_select %p754, %s32, 3
      %s756 = smul.addr %s755, 16
      %s757 = smul.addr %s756, 8
      %s758 = scalar_lea.vmem %s17, %s757
      %p759 = scmp.lt.s32.totalorder %s32, 3
      %s760 = scalar_select %p759, %s32, 3
      %s761 = smul.addr %s760, 16
      %s762 = smul.addr %s761, 8
      %s763 = scalar_lea.vmem %s0, %s762
      %p764 = scmp.lt.s32.totalorder %s33, 1
      %s765 = scalar_select %p764, %s33, 1
      %s766 = scalar_lea.vmem %s1, %s765
      %p767 = scmp.lt.s32.totalorder %s33, 1
      %s768 = scalar_select %p767, %s33, 1
      %s769 = scalar_lea.vmem %s2, %s768
      %p770 = scmp.lt.s32.totalorder %s33, 1
      %s771 = scalar_select %p770, %s33, 1
      %s772 = smul.addr %s771, 64
      %s773 = smul.addr %s772, 4
      %s774 = scalar_lea.vmem %s3, %s773
      %p775 = scmp.lt.s32.totalorder %s33, 1
      %s776 = scalar_select %p775, %s33, 1
      %s777 = smul.addr %s776, 4
      %s778 = scalar_lea.vmem %s4, %s777
      %p779 = scmp.lt.s32.totalorder %s33, 1
      %s780 = scalar_select %p779, %s33, 1
      %s781 = smul.addr %s780, 64
      %s782 = smul.addr %s781, 4
      %s783 = scalar_lea.vmem %s5, %s782
      %p784 = scmp.lt.s32.totalorder %s33, 1
      %s785 = scalar_select %p784, %s33, 1
      %s786 = smul.addr %s785, 4
      %s787 = scalar_lea.vmem %s6, %s786
      %p788 = scmp.lt.s32.totalorder %s33, 1
      %s789 = scalar_select %p788, %s33, 1
      %s790 = smul.addr %s789, 64
      %s791 = smul.addr %s790, 4
      %s792 = scalar_lea.vmem %s7, %s791
      %p793 = scmp.lt.s32.totalorder %s33, 1
      %s794 = scalar_select %p793, %s33, 1
      %s795 = smul.addr %s794, 4
      %s796 = scalar_lea.vmem %s8, %s795
      %p797 = scmp.lt.s32.totalorder %s33, 1
      %s798 = scalar_select %p797, %s33, 1
      %s799 = smul.addr %s798, 16
      %s800 = smul.addr %s799, 4
      %s801 = scalar_lea.vmem %s9, %s800
      %p802 = scmp.lt.s32.totalorder %s33, 1
      %s803 = scalar_select %p802, %s33, 1
      %s804 = scalar_lea.vmem %s10, %s803
      %p805 = scmp.lt.s32.totalorder %s33, 1
      %s806 = scalar_select %p805, %s33, 1
      %s807 = scalar_lea.vmem %s11, %s806
      %p808 = scmp.lt.s32.totalorder %s33, 1
      %s809 = scalar_select %p808, %s33, 1
      %s810 = scalar_lea.vmem %s12, %s809
      %p811 = scmp.lt.s32.totalorder %s33, 1
      %s812 = scalar_select %p811, %s33, 1
      %s813 = smul.addr %s812, 64
      %s814 = smul.addr %s813, 4
      %s815 = scalar_lea.vmem %s13, %s814
      %p816 = scmp.lt.s32.totalorder %s33, 1
      %s817 = scalar_select %p816, %s33, 1
      %s818 = smul.addr %s817, 4
      %s819 = scalar_lea.vmem %s14, %s818
      %p820 = scmp.lt.s32.totalorder %s33, 1
      %s821 = scalar_select %p820, %s33, 1
      %s822 = smul.addr %s821, 64
      %s823 = smul.addr %s822, 4
      %s824 = scalar_lea.vmem %s15, %s823
      %p825 = scmp.lt.s32.totalorder %s33, 1
      %s826 = scalar_select %p825, %s33, 1
      %s827 = scalar_lea.vmem %s16, %s826
      %p828 = scmp.lt.s32.totalorder %s32, 3
      %s829 = scalar_select %p828, %s32, 3
      %s830 = smul.addr %s829, 16
      %s831 = smul.addr %s830, 8
      %s832 = scalar_lea.vmem %s17, %s831
      %p834 = scmp.eq.s32.totalorder %s33, 0
      // Predicated region
      $region89: #{_lambda_.2} parent=87 // pred_check
        %p835 = pneg %p834
      $region90: #{_lambda_.2} parent=87 // pred_check_branch
        %837 = sbr.rel (%p835) target = $region92
      $region91: #{_lambda_.2} parent=87 // pred_region
        %v838 = vld [vmem:[%s763] sm:$0xff]
        %v839 = vld [vmem:[%s763 + $0x8] sm:$0xff]
        %v840 = vld [vmem:[%s763 + $0x10] sm:$0xff]
        %v841 = vld [vmem:[%s763 + $0x18] sm:$0xff]
        %v842 = vld [vmem:[%s763 + $0x20] sm:$0xff]
        %v843 = vld [vmem:[%s763 + $0x28] sm:$0xff]
        %v844 = vld [vmem:[%s763 + $0x30] sm:$0xff]
        %v845 = vld [vmem:[%s763 + $0x38] sm:$0xff]
        %v846 = vld [vmem:[%s763 + $0x40] sm:$0xff]
        %v847 = vld [vmem:[%s763 + $0x48] sm:$0xff]
        %v848 = vld [vmem:[%s763 + $0x50] sm:$0xff]
        %v849 = vld [vmem:[%s763 + $0x58] sm:$0xff]
        %v850 = vld [vmem:[%s763 + $0x60] sm:$0xff]
        %v851 = vld [vmem:[%s763 + $0x68] sm:$0xff]
        %v852 = vld [vmem:[%s763 + $0x70] sm:$0xff]
        %v853 = vld [vmem:[%s763 + $0x78] sm:$0xff]
        %854 = vst [vmem:[%s832] sm:$0xff] %v838
        %855 = vst [vmem:[%s832 + $0x8] sm:$0xff] %v839
        %856 = vst [vmem:[%s832 + $0x10] sm:$0xff] %v840
        %857 = vst [vmem:[%s832 + $0x18] sm:$0xff] %v841
        %858 = vst [vmem:[%s832 + $0x20] sm:$0xff] %v842
        %859 = vst [vmem:[%s832 + $0x28] sm:$0xff] %v843
        %860 = vst [vmem:[%s832 + $0x30] sm:$0xff] %v844
        %861 = vst [vmem:[%s832 + $0x38] sm:$0xff] %v845
        %862 = vst [vmem:[%s832 + $0x40] sm:$0xff] %v846
        %863 = vst [vmem:[%s832 + $0x48] sm:$0xff] %v847
        %864 = vst [vmem:[%s832 + $0x50] sm:$0xff] %v848
        %865 = vst [vmem:[%s832 + $0x58] sm:$0xff] %v849
        %866 = vst [vmem:[%s832 + $0x60] sm:$0xff] %v850
        %867 = vst [vmem:[%s832 + $0x68] sm:$0xff] %v851
        %868 = vst [vmem:[%s832 + $0x70] sm:$0xff] %v852
        %869 = vst [vmem:[%s832 + $0x78] sm:$0xff] %v853
      $region92: #{_lambda_.2} parent=87 // pred_fallthru
        _
      %v870 = vld [vmem:[%s832] sm:$0xff]
      %v871 = vld [vmem:[%s832 + $0x8] sm:$0xff]
      %v872 = vld [vmem:[%s832 + $0x10] sm:$0xff]
      %v873 = vld [vmem:[%s832 + $0x18] sm:$0xff]
      %v874 = vld [vmem:[%s832 + $0x20] sm:$0xff]
      %v875 = vld [vmem:[%s832 + $0x28] sm:$0xff]
      %v876 = vld [vmem:[%s832 + $0x30] sm:$0xff]
      %v877 = vld [vmem:[%s832 + $0x38] sm:$0xff]
      %v878 = vld [vmem:[%s832 + $0x40] sm:$0xff]
      %v879 = vld [vmem:[%s832 + $0x48] sm:$0xff]
      %v880 = vld [vmem:[%s832 + $0x50] sm:$0xff]
      %v881 = vld [vmem:[%s832 + $0x58] sm:$0xff]
      %v882 = vld [vmem:[%s832 + $0x60] sm:$0xff]
      %v883 = vld [vmem:[%s832 + $0x68] sm:$0xff]
      %v884 = vld [vmem:[%s832 + $0x70] sm:$0xff]
      %v885 = vld [vmem:[%s832 + $0x78] sm:$0xff]
      %v886 = vld [vmem:[%s766] sm:$0x1]
      %v887 = vld [vmem:[%s769] sm:$0x1]
      %888 = vadd.xlane.f32.xlu0 %v870
      %v889 = vpop.xlane.xlu0 %888
      %890 = vadd.xlane.f32.xlu0 %v871
      %v891 = vpop.xlane.xlu0 %890
      %892 = vadd.xlane.f32.xlu0 %v872
      %v893 = vpop.xlane.xlu0 %892
      %894 = vadd.xlane.f32.xlu0 %v873
      %v895 = vpop.xlane.xlu0 %894
      %896 = vadd.xlane.f32.xlu0 %v874
      %v897 = vpop.xlane.xlu0 %896
      %898 = vadd.xlane.f32.xlu0 %v875
      %v899 = vpop.xlane.xlu0 %898
      %900 = vadd.xlane.f32.xlu0 %v876
      %v901 = vpop.xlane.xlu0 %900
      %902 = vadd.xlane.f32.xlu0 %v877
      %v903 = vpop.xlane.xlu0 %902
      %904 = vadd.xlane.f32.xlu0 %v878
      %v905 = vpop.xlane.xlu0 %904
      %906 = vadd.xlane.f32.xlu0 %v879
      %v907 = vpop.xlane.xlu0 %906
      %908 = vadd.xlane.f32.xlu0 %v880
      %v909 = vpop.xlane.xlu0 %908
      %910 = vadd.xlane.f32.xlu0 %v881
      %v911 = vpop.xlane.xlu0 %910
      %912 = vadd.xlane.f32.xlu0 %v882
      %v913 = vpop.xlane.xlu0 %912
      %914 = vadd.xlane.f32.xlu0 %v883
      %v915 = vpop.xlane.xlu0 %914
      %916 = vadd.xlane.f32.xlu0 %v884
      %v917 = vpop.xlane.xlu0 %916
      %918 = vadd.xlane.f32.xlu0 %v885
      %v919 = vpop.xlane.xlu0 %918
      %v920 = vrcp.pop 128.0
      %v921 = vmul.f32 %v889, %v920
      %v922 = vmul.f32 %v891, %v920
      %v923 = vmul.f32 %v893, %v920
      %v924 = vmul.f32 %v895, %v920
      %v925 = vmul.f32 %v897, %v920
      %v926 = vmul.f32 %v899, %v920
      %v927 = vmul.f32 %v901, %v920
      %v928 = vmul.f32 %v903, %v920
      %v929 = vmul.f32 %v905, %v920
      %v930 = vmul.f32 %v907, %v920
      %v931 = vmul.f32 %v909, %v920
      %v932 = vmul.f32 %v911, %v920
      %v933 = vmul.f32 %v913, %v920
      %v934 = vmul.f32 %v915, %v920
      %v935 = vmul.f32 %v917, %v920
      %v936 = vmul.f32 %v919, %v920
      %v937 = vsub.f32 %v870, %v921
      %v938 = vsub.f32 %v871, %v922
      %v939 = vsub.f32 %v872, %v923
      %v940 = vsub.f32 %v873, %v924
      %v941 = vsub.f32 %v874, %v925
      %v942 = vsub.f32 %v875, %v926
      %v943 = vsub.f32 %v876, %v927
      %v944 = vsub.f32 %v877, %v928
      %v945 = vsub.f32 %v878, %v929
      %v946 = vsub.f32 %v879, %v930
      %v947 = vsub.f32 %v880, %v931
      %v948 = vsub.f32 %v881, %v932
      %v949 = vsub.f32 %v882, %v933
      %v950 = vsub.f32 %v883, %v934
      %v951 = vsub.f32 %v884, %v935
      %v952 = vsub.f32 %v885, %v936
      %v953 = vmul.f32 %v937, %v937
      %v954 = vmul.f32 %v938, %v938
      %v955 = vmul.f32 %v939, %v939
      %v956 = vmul.f32 %v940, %v940
      %v957 = vmul.f32 %v941, %v941
      %v958 = vmul.f32 %v942, %v942
      %v959 = vmul.f32 %v943, %v943
      %v960 = vmul.f32 %v944, %v944
      %v961 = vmul.f32 %v945, %v945
      %v962 = vmul.f32 %v946, %v946
      %v963 = vmul.f32 %v947, %v947
      %v964 = vmul.f32 %v948, %v948
      %v965 = vmul.f32 %v949, %v949
      %v966 = vmul.f32 %v950, %v950
      %v967 = vmul.f32 %v951, %v951
      %v968 = vmul.f32 %v952, %v952
      %969 = vadd.xlane.f32.xlu0 %v953
      %v970 = vpop.xlane.xlu0 %969
      %971 = vadd.xlane.f32.xlu0 %v954
      %v972 = vpop.xlane.xlu0 %971
      %973 = vadd.xlane.f32.xlu0 %v955
      %v974 = vpop.xlane.xlu0 %973
      %975 = vadd.xlane.f32.xlu0 %v956
      %v976 = vpop.xlane.xlu0 %975
      %977 = vadd.xlane.f32.xlu0 %v957
      %v978 = vpop.xlane.xlu0 %977
      %979 = vadd.xlane.f32.xlu0 %v958
      %v980 = vpop.xlane.xlu0 %979
      %981 = vadd.xlane.f32.xlu0 %v959
      %v982 = vpop.xlane.xlu0 %981
      %983 = vadd.xlane.f32.xlu0 %v960
      %v984 = vpop.xlane.xlu0 %983
      %985 = vadd.xlane.f32.xlu0 %v961
      %v986 = vpop.xlane.xlu0 %985
      %987 = vadd.xlane.f32.xlu0 %v962
      %v988 = vpop.xlane.xlu0 %987
      %989 = vadd.xlane.f32.xlu0 %v963
      %v990 = vpop.xlane.xlu0 %989
      %991 = vadd.xlane.f32.xlu0 %v964
      %v992 = vpop.xlane.xlu0 %991
      %993 = vadd.xlane.f32.xlu0 %v965
      %v994 = vpop.xlane.xlu0 %993
      %995 = vadd.xlane.f32.xlu0 %v966
      %v996 = vpop.xlane.xlu0 %995
      %997 = vadd.xlane.f32.xlu0 %v967
      %v998 = vpop.xlane.xlu0 %997
      %999 = vadd.xlane.f32.xlu0 %v968
      %v1000 = vpop.xlane.xlu0 %999
      %v1001 = vmul.f32 %v970, %v920
      %v1002 = vmul.f32 %v972, %v920
      %v1003 = vmul.f32 %v974, %v920
      %v1004 = vmul.f32 %v976, %v920
      %v1005 = vmul.f32 %v978, %v920
      %v1006 = vmul.f32 %v980, %v920
      %v1007 = vmul.f32 %v982, %v920
      %v1008 = vmul.f32 %v984, %v920
      %v1009 = vmul.f32 %v986, %v920
      %v1010 = vmul.f32 %v988, %v920
      %v1011 = vmul.f32 %v990, %v920
      %v1012 = vmul.f32 %v992, %v920
      %v1013 = vmul.f32 %v994, %v920
      %v1014 = vmul.f32 %v996, %v920
      %v1015 = vmul.f32 %v998, %v920
      %v1016 = vmul.f32 %v1000, %v920
      %v1017 = vadd.f32 %v1001, 1e-05
      %v1018 = vadd.f32 %v1002, 1e-05
      %v1019 = vadd.f32 %v1003, 1e-05
      %v1020 = vadd.f32 %v1004, 1e-05
      %v1021 = vadd.f32 %v1005, 1e-05
      %v1022 = vadd.f32 %v1006, 1e-05
      %v1023 = vadd.f32 %v1007, 1e-05
      %v1024 = vadd.f32 %v1008, 1e-05
      %v1025 = vadd.f32 %v1009, 1e-05
      %v1026 = vadd.f32 %v1010, 1e-05
      %v1027 = vadd.f32 %v1011, 1e-05
      %v1028 = vadd.f32 %v1012, 1e-05
      %v1029 = vadd.f32 %v1013, 1e-05
      %v1030 = vadd.f32 %v1014, 1e-05
      %v1031 = vadd.f32 %v1015, 1e-05
      %v1032 = vadd.f32 %v1016, 1e-05
      %v1033 = vrsqrt.pop %v1017
      %v1034 = vrsqrt.pop %v1018
      %v1035 = vrsqrt.pop %v1019
      %v1036 = vrsqrt.pop %v1020
      %v1037 = vrsqrt.pop %v1021
      %v1038 = vrsqrt.pop %v1022
      %v1039 = vrsqrt.pop %v1023
      %v1040 = vrsqrt.pop %v1024
      %v1041 = vrsqrt.pop %v1025
      %v1042 = vrsqrt.pop %v1026
      %v1043 = vrsqrt.pop %v1027
      %v1044 = vrsqrt.pop %v1028
      %v1045 = vrsqrt.pop %v1029
      %v1046 = vrsqrt.pop %v1030
      %v1047 = vrsqrt.pop %v1031
      %v1048 = vrsqrt.pop %v1032
      %v1049 = vmul.f32 %v937, %v1033
      %v1050 = vmul.f32 %v938, %v1034
      %v1051 = vmul.f32 %v939, %v1035
      %v1052 = vmul.f32 %v940, %v1036
      %v1053 = vmul.f32 %v941, %v1037
      %v1054 = vmul.f32 %v942, %v1038
      %v1055 = vmul.f32 %v943, %v1039
      %v1056 = vmul.f32 %v944, %v1040
      %v1057 = vmul.f32 %v945, %v1041
      %v1058 = vmul.f32 %v946, %v1042
      %v1059 = vmul.f32 %v947, %v1043
      %v1060 = vmul.f32 %v948, %v1044
      %v1061 = vmul.f32 %v949, %v1045
      %v1062 = vmul.f32 %v950, %v1046
      %v1063 = vmul.f32 %v951, %v1047
      %v1064 = vmul.f32 %v952, %v1048
      %v1066 = vlaneseq
      %v1067 = vshrl.u32 %v1066, 7
      %v1068 = vsub.s32 0, %v1067
      %v1069 = vrot.slane %v886, %v1068
      %v1071 = vmul.f32 %v1049, %v1069
      %v1072 = vmul.f32 %v1050, %v1069
      %v1073 = vmul.f32 %v1051, %v1069
      %v1074 = vmul.f32 %v1052, %v1069
      %v1075 = vmul.f32 %v1053, %v1069
      %v1076 = vmul.f32 %v1054, %v1069
      %v1077 = vmul.f32 %v1055, %v1069
      %v1078 = vmul.f32 %v1056, %v1069
      %v1079 = vmul.f32 %v1057, %v1069
      %v1080 = vmul.f32 %v1058, %v1069
      %v1081 = vmul.f32 %v1059, %v1069
      %v1082 = vmul.f32 %v1060, %v1069
      %v1083 = vmul.f32 %v1061, %v1069
      %v1084 = vmul.f32 %v1062, %v1069
      %v1085 = vmul.f32 %v1063, %v1069
      %v1086 = vmul.f32 %v1064, %v1069
      %v1088 = vlaneseq
      %v1089 = vshrl.u32 %v1088, 7
      %v1090 = vsub.s32 0, %v1089
      %v1091 = vrot.slane %v887, %v1090
      %v1093 = vadd.f32 %v1071, %v1091
      %v1094 = vadd.f32 %v1072, %v1091
      %v1095 = vadd.f32 %v1073, %v1091
      %v1096 = vadd.f32 %v1074, %v1091
      %v1097 = vadd.f32 %v1075, %v1091
      %v1098 = vadd.f32 %v1076, %v1091
      %v1099 = vadd.f32 %v1077, %v1091
      %v1100 = vadd.f32 %v1078, %v1091
      %v1101 = vadd.f32 %v1079, %v1091
      %v1102 = vadd.f32 %v1080, %v1091
      %v1103 = vadd.f32 %v1081, %v1091
      %v1104 = vadd.f32 %v1082, %v1091
      %v1105 = vadd.f32 %v1083, %v1091
      %v1106 = vadd.f32 %v1084, %v1091
      %v1107 = vadd.f32 %v1085, %v1091
      %v1108 = vadd.f32 %v1086, %v1091
      %v1109 = vpack.c.bf16 %v1094, %v1093
      %v1110 = vpack.c.bf16 %v1096, %v1095
      %v1111 = vpack.c.bf16 %v1098, %v1097
      %v1112 = vpack.c.bf16 %v1100, %v1099
      %v1113 = vpack.c.bf16 %v1102, %v1101
      %v1114 = vpack.c.bf16 %v1104, %v1103
      %v1115 = vpack.c.bf16 %v1106, %v1105
      %v1116 = vpack.c.bf16 %v1108, %v1107
      %v1117 = vlaneseq
      %v1118 = vshrl.u32 %v1117, 7
      %v1119 = vadd.s32 %v1118, 8
      %v1120 = vadd.s32 %v1118, 16
      %v1121 = vadd.s32 %v1118, 24
      %v1122 = vadd.s32 %v1118, 32
      %v1123 = vadd.s32 %v1118, 40
      %v1124 = vadd.s32 %v1118, 48
      %v1125 = vadd.s32 %v1118, 56
      %v1126 = vlaneseq
      %v1127 = vand.u32 %v1126, 127
      %vm1128 = vcmp.le.s32.totalorder %v1127, %v1118
      %vm1129 = vcmp.le.s32.totalorder %v1127, %v1119
      %vm1130 = vcmp.le.s32.totalorder %v1127, %v1120
      %vm1131 = vcmp.le.s32.totalorder %v1127, %v1121
      %vm1132 = vcmp.le.s32.totalorder %v1127, %v1122
      %vm1133 = vcmp.le.s32.totalorder %v1127, %v1123
      %vm1134 = vcmp.le.s32.totalorder %v1127, %v1124
      %vm1135 = vcmp.le.s32.totalorder %v1127, %v1125
      %v1136 = vsel %vm1128, 0.0, -1e+30
      %v1137 = vsel %vm1129, 0.0, -1e+30
      %v1138 = vsel %vm1130, 0.0, -1e+30
      %v1139 = vsel %vm1131, 0.0, -1e+30
      %v1140 = vsel %vm1132, 0.0, -1e+30
      %v1141 = vsel %vm1133, 0.0, -1e+30
      %v1142 = vsel %vm1134, 0.0, -1e+30
      %v1143 = vsel %vm1135, 0.0, -1e+30
      %v1144 = vadd.s32 %v1118, 64
      %v1145 = vadd.s32 %v1119, 64
      %v1146 = vadd.s32 %v1120, 64
      %v1147 = vadd.s32 %v1121, 64
      %v1148 = vadd.s32 %v1122, 64
      %v1149 = vadd.s32 %v1123, 64
      %v1150 = vadd.s32 %v1124, 64
      %v1151 = vadd.s32 %v1125, 64
      %vm1152 = vcmp.le.s32.totalorder %v1127, %v1144
      %vm1153 = vcmp.le.s32.totalorder %v1127, %v1145
      %vm1154 = vcmp.le.s32.totalorder %v1127, %v1146
      %vm1155 = vcmp.le.s32.totalorder %v1127, %v1147
      %vm1156 = vcmp.le.s32.totalorder %v1127, %v1148
      %vm1157 = vcmp.le.s32.totalorder %v1127, %v1149
      %vm1158 = vcmp.le.s32.totalorder %v1127, %v1150
      %vm1159 = vcmp.le.s32.totalorder %v1127, %v1151
      %v1160 = vsel %vm1152, 0.0, -1e+30
      %v1161 = vsel %vm1153, 0.0, -1e+30
      %v1162 = vsel %vm1154, 0.0, -1e+30
      %v1163 = vsel %vm1155, 0.0, -1e+30
      %v1164 = vsel %vm1156, 0.0, -1e+30
      %v1165 = vsel %vm1157, 0.0, -1e+30
      %v1166 = vsel %vm1158, 0.0, -1e+30
      %v1167 = vsel %vm1159, 0.0, -1e+30
      %v1168 = vld [vmem:[%s774] sm:$0xf]
      %v1169 = vld [vmem:[%s774 + $0x4] sm:$0xf]
      %v1170 = vld [vmem:[%s774 + $0x8] sm:$0xf]
      %v1171 = vld [vmem:[%s774 + $0xc] sm:$0xf]
      %v1172 = vld [vmem:[%s774 + $0x10] sm:$0xf]
      %v1173 = vld [vmem:[%s774 + $0x14] sm:$0xf]
      %v1174 = vld [vmem:[%s774 + $0x18] sm:$0xf]
      %v1175 = vld [vmem:[%s774 + $0x1c] sm:$0xf]
      %v1176 = vld [vmem:[%s774 + $0x20] sm:$0xf]
      %v1177 = vld [vmem:[%s774 + $0x24] sm:$0xf]
      %v1178 = vld [vmem:[%s774 + $0x28] sm:$0xf]
      %v1179 = vld [vmem:[%s774 + $0x2c] sm:$0xf]
      %v1180 = vld [vmem:[%s774 + $0x30] sm:$0xf]
      %v1181 = vld [vmem:[%s774 + $0x34] sm:$0xf]
      %v1182 = vld [vmem:[%s774 + $0x38] sm:$0xf]
      %v1183 = vld [vmem:[%s774 + $0x3c] sm:$0xf]
      %v1184 = vld [vmem:[%s778] sm:$0x1]
      %v1186 = vlaneseq
      %v1187 = vshrl.u32 %v1186, 7
      %v1188 = vsub.s32 0, %v1187
      %v1189 = vrot.slane %v1184, %v1188
      %v1207 = vunpack.c.l.b16 %v1168
      %v1208 = vunpack.c.l.b16 %v1169
      %v1209 = vunpack.c.l.b16 %v1170
      %v1210 = vunpack.c.l.b16 %v1171
      %v1211 = vunpack.c.l.b16 %v1172
      %v1212 = vunpack.c.l.b16 %v1173
      %v1213 = vunpack.c.l.b16 %v1174
      %v1214 = vunpack.c.l.b16 %v1175
      %v1215 = vunpack.c.l.b16 %v1176
      %v1216 = vunpack.c.l.b16 %v1177
      %v1217 = vunpack.c.l.b16 %v1178
      %v1218 = vunpack.c.l.b16 %v1179
      %v1219 = vunpack.c.l.b16 %v1180
      %v1220 = vunpack.c.l.b16 %v1181
      %v1221 = vunpack.c.l.b16 %v1182
      %v1222 = vunpack.c.l.b16 %v1183
      %v1223 = vpack.c.b16 %v1208, %v1207
      %v1224 = vpack.c.b16 %v1210, %v1209
      %v1225 = vpack.c.b16 %v1212, %v1211
      %v1226 = vpack.c.b16 %v1214, %v1213
      %v1227 = vpack.c.b16 %v1216, %v1215
      %v1228 = vpack.c.b16 %v1218, %v1217
      %v1229 = vpack.c.b16 %v1220, %v1219
      %v1230 = vpack.c.b16 %v1222, %v1221
      %1239 = vmatprep.subr.bf16.mxu0 0
      %1240 = vmatpush1.bf16.msra.mxu0 %v1223
      %1241 = vmatprep.subr.bf16.mxu0 0
      %1242 = vmatpush1.bf16.msra.mxu0 %v1224
      %1243 = vmatprep.subr.bf16.mxu0 0
      %1244 = vmatpush1.bf16.msra.mxu0 %v1225
      %1245 = vmatprep.subr.bf16.mxu0 0
      %1246 = vmatpush1.bf16.msra.mxu0 %v1226
      %1247 = vmatprep.subr.bf16.mxu0 0
      %1248 = vmatpush1.bf16.msra.mxu0 %v1227
      %1249 = vmatprep.subr.bf16.mxu0 0
      %1250 = vmatpush1.bf16.msra.mxu0 %v1228
      %1251 = vmatprep.subr.bf16.mxu0 0
      %1252 = vmatpush1.bf16.msra.mxu0 %v1229
      %1253 = vmatprep.subr.bf16.mxu0 0
      %1254 = vmatpush1.bf16.msra.mxu0 %v1230
      %1255 = vmatprep.subr.bf16.mxu0 0
      %1256 = vmatpush1.bf16.msra.mxu0 0
      %1257 = vmatprep.subr.bf16.mxu0 0
      %1258 = vmatpush1.bf16.msra.mxu0 0
      %1259 = vmatprep.subr.bf16.mxu0 0
      %1260 = vmatpush1.bf16.msra.mxu0 0
      %1261 = vmatprep.subr.bf16.mxu0 0
      %1262 = vmatpush1.bf16.msra.mxu0 0
      %1263 = vmatprep.subr.bf16.mxu0 0
      %1264 = vmatpush1.bf16.msra.mxu0 0
      %1265 = vmatprep.subr.bf16.mxu0 0
      %1266 = vmatpush1.bf16.msra.mxu0 0
      %1267 = vmatprep.subr.bf16.mxu0 0
      %1268 = vmatpush1.bf16.msra.mxu0 0
      %1269 = vmatprep.subr.bf16.mxu0 0
      %1270 = vmatpush1.bf16.msra.mxu0 0
      %1271 = vmatprep.mubr.bf16.mxu0 0
      %1272 = vmatmul.mubr.bf16.gmra.mrb[0].mxu0 %v1109
      %v1273 = vpop.f32.mrb[0].mxu0
      %v1274 = vadd.f32 %v1189, %v1273
      %v1275 = vpop.f32.mrb[0].mxu0
      %v1276 = vpop.f32.mrb[0].mxu0
      %v1277 = vadd.f32 %v1189, %v1276
      %v1278 = vpop.f32.mrb[0].mxu0
      %1279 = vmatprep.mubr.bf16.mxu0 0
      %1280 = vmatmul.mubr.bf16.gmra.mrb[0].mxu0 %v1110
      %v1281 = vpop.f32.mrb[0].mxu0
      %v1282 = vadd.f32 %v1189, %v1281
      %v1283 = vpop.f32.mrb[0].mxu0
      %v1284 = vpop.f32.mrb[0].mxu0
      %v1285 = vadd.f32 %v1189, %v1284
      %v1286 = vpop.f32.mrb[0].mxu0
      %1287 = vmatprep.mubr.bf16.mxu0 0
      %1288 = vmatmul.mubr.bf16.gmra.mrb[0].mxu0 %v1111
      %v1289 = vpop.f32.mrb[0].mxu0
      %v1290 = vadd.f32 %v1189, %v1289
      %v1291 = vpop.f32.mrb[0].mxu0
      %v1292 = vpop.f32.mrb[0].mxu0
      %v1293 = vadd.f32 %v1189, %v1292
      %v1294 = vpop.f32.mrb[0].mxu0
      %1295 = vmatprep.mubr.bf16.mxu0 0
      %1296 = vmatmul.mubr.bf16.gmra.mrb[0].mxu0 %v1112
      %v1297 = vpop.f32.mrb[0].mxu0
      %v1298 = vadd.f32 %v1189, %v1297
      %v1299 = vpop.f32.mrb[0].mxu0
      %v1300 = vpop.f32.mrb[0].mxu0
      %v1301 = vadd.f32 %v1189, %v1300
      %v1302 = vpop.f32.mrb[0].mxu0
      %1303 = vmatprep.mubr.bf16.mxu0 0
      %1304 = vmatmul.mubr.bf16.gmra.mrb[0].mxu0 %v1113
      %v1305 = vpop.f32.mrb[0].mxu0
      %v1306 = vadd.f32 %v1189, %v1305
      %v1307 = vpop.f32.mrb[0].mxu0
      %v1308 = vpop.f32.mrb[0].mxu0
      %v1309 = vadd.f32 %v1189, %v1308
      %v1310 = vpop.f32.mrb[0].mxu0
      %1311 = vmatprep.mubr.bf16.mxu0 0
      %1312 = vmatmul.mubr.bf16.gmra.mrb[0].mxu0 %v1114
      %v1313 = vpop.f32.mrb[0].mxu0
      %v1314 = vadd.f32 %v1189, %v1313
      %v1315 = vpop.f32.mrb[0].mxu0
      %v1316 = vpop.f32.mrb[0].mxu0
      %v1317 = vadd.f32 %v1189, %v1316
      %v1318 = vpop.f32.mrb[0].mxu0
      %1319 = vmatprep.mubr.bf16.mxu0 0
      %1320 = vmatmul.mubr.bf16.gmra.mrb[0].mxu0 %v1115
      %v1321 = vpop.f32.mrb[0].mxu0
      %v1322 = vadd.f32 %v1189, %v1321
      %v1323 = vpop.f32.mrb[0].mxu0
      %v1324 = vpop.f32.mrb[0].mxu0
      %v1325 = vadd.f32 %v1189, %v1324
      %v1326 = vpop.f32.mrb[0].mxu0
      %1327 = vmatprep.mubr.bf16.mxu0 0
      %1328 = vmatmul.mubr.bf16.gmra.mrb[0].mxu0 %v1116
      %v1329 = vpop.f32.mrb[0].mxu0
      %v1330 = vadd.f32 %v1189, %v1329
      %v1331 = vpop.f32.mrb[0].mxu0
      %v1332 = vpop.f32.mrb[0].mxu0
      %v1333 = vadd.f32 %v1189, %v1332
      %v1334 = vpop.f32.mrb[0].mxu0
      %1335 = vdwg.mxu0
      %v1336 = vpack.c.bf16 %v1277, %v1274
      %v1337 = vpack.c.bf16 %v1285, %v1282
      %v1338 = vpack.c.bf16 %v1293, %v1290
      %v1339 = vpack.c.bf16 %v1301, %v1298
      %v1340 = vpack.c.bf16 %v1309, %v1306
      %v1341 = vpack.c.bf16 %v1317, %v1314
      %v1342 = vpack.c.bf16 %v1325, %v1322
      %v1343 = vpack.c.bf16 %v1333, %v1330
      %v1344 = vld [vmem:[%s783] sm:$0xf]
      %v1345 = vld [vmem:[%s783 + $0x4] sm:$0xf]
      %v1346 = vld [vmem:[%s783 + $0x8] sm:$0xf]
      %v1347 = vld [vmem:[%s783 + $0xc] sm:$0xf]
      %v1348 = vld [vmem:[%s783 + $0x10] sm:$0xf]
      %v1349 = vld [vmem:[%s783 + $0x14] sm:$0xf]
      %v1350 = vld [vmem:[%s783 + $0x18] sm:$0xf]
      %v1351 = vld [vmem:[%s783 + $0x1c] sm:$0xf]
      %v1352 = vld [vmem:[%s783 + $0x20] sm:$0xf]
      %v1353 = vld [vmem:[%s783 + $0x24] sm:$0xf]
      %v1354 = vld [vmem:[%s783 + $0x28] sm:$0xf]
      %v1355 = vld [vmem:[%s783 + $0x2c] sm:$0xf]
      %v1356 = vld [vmem:[%s783 + $0x30] sm:$0xf]
      %v1357 = vld [vmem:[%s783 + $0x34] sm:$0xf]
      %v1358 = vld [vmem:[%s783 + $0x38] sm:$0xf]
      %v1359 = vld [vmem:[%s783 + $0x3c] sm:$0xf]
      %v1360 = vld [vmem:[%s787] sm:$0x1]
      %v1362 = vlaneseq
      %v1363 = vshrl.u32 %v1362, 7
      %v1364 = vsub.s32 0, %v1363
      %v1365 = vrot.slane %v1360, %v1364
      %v1383 = vunpack.c.l.b16 %v1344
      %v1384 = vunpack.c.l.b16 %v1345
      %v1385 = vunpack.c.l.b16 %v1346
      %v1386 = vunpack.c.l.b16 %v1347
      %v1387 = vunpack.c.l.b16 %v1348
      %v1388 = vunpack.c.l.b16 %v1349
      %v1389 = vunpack.c.l.b16 %v1350
      %v1390 = vunpack.c.l.b16 %v1351
      %v1391 = vunpack.c.l.b16 %v1352
      %v1392 = vunpack.c.l.b16 %v1353
      %v1393 = vunpack.c.l.b16 %v1354
      %v1394 = vunpack.c.l.b16 %v1355
      %v1395 = vunpack.c.l.b16 %v1356
      %v1396 = vunpack.c.l.b16 %v1357
      %v1397 = vunpack.c.l.b16 %v1358
      %v1398 = vunpack.c.l.b16 %v1359
      %v1399 = vpack.c.b16 %v1384, %v1383
      %v1400 = vpack.c.b16 %v1386, %v1385
      %v1401 = vpack.c.b16 %v1388, %v1387
      %v1402 = vpack.c.b16 %v1390, %v1389
      %v1403 = vpack.c.b16 %v1392, %v1391
      %v1404 = vpack.c.b16 %v1394, %v1393
      %v1405 = vpack.c.b16 %v1396, %v1395
      %v1406 = vpack.c.b16 %v1398, %v1397
      %1415 = vmatprep.subr.bf16.mxu0 0
      %1416 = vmatpush1.bf16.msra.mxu0 %v1399
      %1417 = vmatprep.subr.bf16.mxu0 0
      %1418 = vmatpush1.bf16.msra.mxu0 %v1400
      %1419 = vmatprep.subr.bf16.mxu0 0
      %1420 = vmatpush1.bf16.msra.mxu0 %v1401
      %1421 = vmatprep.subr.bf16.mxu0 0
      %1422 = vmatpush1.bf16.msra.mxu0 %v1402
      %1423 = vmatprep.subr.bf16.mxu0 0
      %1424 = vmatpush1.bf16.msra.mxu0 %v1403
      %1425 = vmatprep.subr.bf16.mxu0 0
      %1426 = vmatpush1.bf16.msra.mxu0 %v1404
      %1427 = vmatprep.subr.bf16.mxu0 0
      %1428 = vmatpush1.bf16.msra.mxu0 %v1405
      %1429 = vmatprep.subr.bf16.mxu0 0
      %1430 = vmatpush1.bf16.msra.mxu0 %v1406
      %1431 = vmatprep.subr.bf16.mxu0 0
      %1432 = vmatpush1.bf16.msra.mxu0 0
      %1433 = vmatprep.subr.bf16.mxu0 0
      %1434 = vmatpush1.bf16.msra.mxu0 0
      %1435 = vmatprep.subr.bf16.mxu0 0
      %1436 = vmatpush1.bf16.msra.mxu0 0
      %1437 = vmatprep.subr.bf16.mxu0 0
      %1438 = vmatpush1.bf16.msra.mxu0 0
      %1439 = vmatprep.subr.bf16.mxu0 0
      %1440 = vmatpush1.bf16.msra.mxu0 0
      %1441 = vmatprep.subr.bf16.mxu0 0
      %1442 = vmatpush1.bf16.msra.mxu0 0
      %1443 = vmatprep.subr.bf16.mxu0 0
      %1444 = vmatpush1.bf16.msra.mxu0 0
      %1445 = vmatprep.subr.bf16.mxu0 0
      %1446 = vmatpush1.bf16.msra.mxu0 0
      %1447 = vmatprep.mubr.bf16.mxu0 0
      %1448 = vmatmul.mubr.bf16.gmra.mrb[0].mxu0 %v1109
      %v1449 = vpop.f32.mrb[0].mxu0
      %v1450 = vadd.f32 %v1365, %v1449
      %v1451 = vpop.f32.mrb[0].mxu0
      %v1452 = vpop.f32.mrb[0].mxu0
      %v1453 = vadd.f32 %v1365, %v1452
      %v1454 = vpop.f32.mrb[0].mxu0
      %1455 = vmatprep.mubr.bf16.mxu0 0
      %1456 = vmatmul.mubr.bf16.gmra.mrb[0].mxu0 %v1110
      %v1457 = vpop.f32.mrb[0].mxu0
      %v1458 = vadd.f32 %v1365, %v1457
      %v1459 = vpop.f32.mrb[0].mxu0
      %v1460 = vpop.f32.mrb[0].mxu0
      %v1461 = vadd.f32 %v1365, %v1460
      %v1462 = vpop.f32.mrb[0].mxu0
      %1463 = vmatprep.mubr.bf16.mxu0 0
      %1464 = vmatmul.mubr.bf16.gmra.mrb[0].mxu0 %v1111
      %v1465 = vpop.f32.mrb[0].mxu0
      %v1466 = vadd.f32 %v1365, %v1465
      %v1467 = vpop.f32.mrb[0].mxu0
      %v1468 = vpop.f32.mrb[0].mxu0
      %v1469 = vadd.f32 %v1365, %v1468
      %v1470 = vpop.f32.mrb[0].mxu0
      %1471 = vmatprep.mubr.bf16.mxu0 0
      %1472 = vmatmul.mubr.bf16.gmra.mrb[0].mxu0 %v1112
      %v1473 = vpop.f32.mrb[0].mxu0
      %v1474 = vadd.f32 %v1365, %v1473
      %v1475 = vpop.f32.mrb[0].mxu0
      %v1476 = vpop.f32.mrb[0].mxu0
      %v1477 = vadd.f32 %v1365, %v1476
      %v1478 = vpop.f32.mrb[0].mxu0
      %1479 = vmatprep.mubr.bf16.mxu0 0
      %1480 = vmatmul.mubr.bf16.gmra.mrb[0].mxu0 %v1113
      %v1481 = vpop.f32.mrb[0].mxu0
      %v1482 = vadd.f32 %v1365, %v1481
      %v1483 = vpop.f32.mrb[0].mxu0
      %v1484 = vpop.f32.mrb[0].mxu0
      %v1485 = vadd.f32 %v1365, %v1484
      %v1486 = vpop.f32.mrb[0].mxu0
      %1487 = vmatprep.mubr.bf16.mxu0 0
      %1488 = vmatmul.mubr.bf16.gmra.mrb[0].mxu0 %v1114
      %v1489 = vpop.f32.mrb[0].mxu0
      %v1490 = vadd.f32 %v1365, %v1489
      %v1491 = vpop.f32.mrb[0].mxu0
      %v1492 = vpop.f32.mrb[0].mxu0
      %v1493 = vadd.f32 %v1365, %v1492
      %v1494 = vpop.f32.mrb[0].mxu0
      %1495 = vmatprep.mubr.bf16.mxu0 0
      %1496 = vmatmul.mubr.bf16.gmra.mrb[0].mxu0 %v1115
      %v1497 = vpop.f32.mrb[0].mxu0
      %v1498 = vadd.f32 %v1365, %v1497
      %v1499 = vpop.f32.mrb[0].mxu0
      %v1500 = vpop.f32.mrb[0].mxu0
      %v1501 = vadd.f32 %v1365, %v1500
      %v1502 = vpop.f32.mrb[0].mxu0
      %1503 = vmatprep.mubr.bf16.mxu0 0
      %1504 = vmatmul.mubr.bf16.gmra.mrb[0].mxu0 %v1116
      %v1505 = vpop.f32.mrb[0].mxu0
      %v1506 = vadd.f32 %v1365, %v1505
      %v1507 = vpop.f32.mrb[0].mxu0
      %v1508 = vpop.f32.mrb[0].mxu0
      %v1509 = vadd.f32 %v1365, %v1508
      %v1510 = vpop.f32.mrb[0].mxu0
      %1511 = vdwg.mxu0
      %v1512 = vpack.c.bf16 %v1453, %v1450
      %v1513 = vpack.c.bf16 %v1461, %v1458
      %v1514 = vpack.c.bf16 %v1469, %v1466
      %v1515 = vpack.c.bf16 %v1477, %v1474
      %v1516 = vpack.c.bf16 %v1485, %v1482
      %v1517 = vpack.c.bf16 %v1493, %v1490
      %v1518 = vpack.c.bf16 %v1501, %v1498
      %v1519 = vpack.c.bf16 %v1509, %v1506
      %v1520 = vld [vmem:[%s792] sm:$0xf]
      %v1521 = vld [vmem:[%s792 + $0x4] sm:$0xf]
      %v1522 = vld [vmem:[%s792 + $0x8] sm:$0xf]
      %v1523 = vld [vmem:[%s792 + $0xc] sm:$0xf]
      %v1524 = vld [vmem:[%s792 + $0x10] sm:$0xf]
      %v1525 = vld [vmem:[%s792 + $0x14] sm:$0xf]
      %v1526 = vld [vmem:[%s792 + $0x18] sm:$0xf]
      %v1527 = vld [vmem:[%s792 + $0x1c] sm:$0xf]
      %v1528 = vld [vmem:[%s792 + $0x20] sm:$0xf]
      %v1529 = vld [vmem:[%s792 + $0x24] sm:$0xf]
      %v1530 = vld [vmem:[%s792 + $0x28] sm:$0xf]
      %v1531 = vld [vmem:[%s792 + $0x2c] sm:$0xf]
      %v1532 = vld [vmem:[%s792 + $0x30] sm:$0xf]
      %v1533 = vld [vmem:[%s792 + $0x34] sm:$0xf]
      %v1534 = vld [vmem:[%s792 + $0x38] sm:$0xf]
      %v1535 = vld [vmem:[%s792 + $0x3c] sm:$0xf]
      %v1536 = vld [vmem:[%s796] sm:$0x1]
      %v1538 = vlaneseq
      %v1539 = vshrl.u32 %v1538, 7
      %v1540 = vsub.s32 0, %v1539
      %v1541 = vrot.slane %v1536, %v1540
      %v1559 = vunpack.c.l.b16 %v1520
      %v1560 = vunpack.c.l.b16 %v1521
      %v1561 = vunpack.c.l.b16 %v1522
      %v1562 = vunpack.c.l.b16 %v1523
      %v1563 = vunpack.c.l.b16 %v1524
      %v1564 = vunpack.c.l.b16 %v1525
      %v1565 = vunpack.c.l.b16 %v1526
      %v1566 = vunpack.c.l.b16 %v1527
      %v1567 = vunpack.c.l.b16 %v1528
      %v1568 = vunpack.c.l.b16 %v1529
      %v1569 = vunpack.c.l.b16 %v1530
      %v1570 = vunpack.c.l.b16 %v1531
      %v1571 = vunpack.c.l.b16 %v1532
      %v1572 = vunpack.c.l.b16 %v1533
      %v1573 = vunpack.c.l.b16 %v1534
      %v1574 = vunpack.c.l.b16 %v1535
      %v1575 = vpack.c.b16 %v1560, %v1559
      %v1576 = vpack.c.b16 %v1562, %v1561
      %v1577 = vpack.c.b16 %v1564, %v1563
      %v1578 = vpack.c.b16 %v1566, %v1565
      %v1579 = vpack.c.b16 %v1568, %v1567
      %v1580 = vpack.c.b16 %v1570, %v1569
      %v1581 = vpack.c.b16 %v1572, %v1571
      %v1582 = vpack.c.b16 %v1574, %v1573
      %1591 = vmatprep.subr.bf16.mxu0 0
      %1592 = vmatpush1.bf16.msra.mxu0 %v1575
      %1593 = vmatprep.subr.bf16.mxu0 0
      %1594 = vmatpush1.bf16.msra.mxu0 %v1576
      %1595 = vmatprep.subr.bf16.mxu0 0
      %1596 = vmatpush1.bf16.msra.mxu0 %v1577
      %1597 = vmatprep.subr.bf16.mxu0 0
      %1598 = vmatpush1.bf16.msra.mxu0 %v1578
      %1599 = vmatprep.subr.bf16.mxu0 0
      %1600 = vmatpush1.bf16.msra.mxu0 %v1579
      %1601 = vmatprep.subr.bf16.mxu0 0
      %1602 = vmatpush1.bf16.msra.mxu0 %v1580
      %1603 = vmatprep.subr.bf16.mxu0 0
      %1604 = vmatpush1.bf16.msra.mxu0 %v1581
      %1605 = vmatprep.subr.bf16.mxu0 0
      %1606 = vmatpush1.bf16.msra.mxu0 %v1582
      %1607 = vmatprep.subr.bf16.mxu0 0
      %1608 = vmatpush1.bf16.msra.mxu0 0
      %1609 = vmatprep.subr.bf16.mxu0 0
      %1610 = vmatpush1.bf16.msra.mxu0 0
      %1611 = vmatprep.subr.bf16.mxu0 0
      %1612 = vmatpush1.bf16.msra.mxu0 0
      %1613 = vmatprep.subr.bf16.mxu0 0
      %1614 = vmatpush1.bf16.msra.mxu0 0
      %1615 = vmatprep.subr.bf16.mxu0 0
      %1616 = vmatpush1.bf16.msra.mxu0 0
      %1617 = vmatprep.subr.bf16.mxu0 0
      %1618 = vmatpush1.bf16.msra.mxu0 0
      %1619 = vmatprep.subr.bf16.mxu0 0
      %1620 = vmatpush1.bf16.msra.mxu0 0
      %1621 = vmatprep.subr.bf16.mxu0 0
      %1622 = vmatpush1.bf16.msra.mxu0 0
      %1623 = vmatprep.mubr.bf16.mxu0 0
      %1624 = vmatmul.mubr.bf16.gmra.mrb[0].mxu0 %v1109
      %v1625 = vpop.f32.mrb[0].mxu0
      %v1626 = vadd.f32 %v1541, %v1625
      %v1627 = vpop.f32.mrb[0].mxu0
      %v1628 = vpop.f32.mrb[0].mxu0
      %v1629 = vadd.f32 %v1541, %v1628
      %v1630 = vpop.f32.mrb[0].mxu0
      %1631 = vmatprep.mubr.bf16.mxu0 0
      %1632 = vmatmul.mubr.bf16.gmra.mrb[0].mxu0 %v1110
      %v1633 = vpop.f32.mrb[0].mxu0
      %v1634 = vadd.f32 %v1541, %v1633
      %v1635 = vpop.f32.mrb[0].mxu0
      %v1636 = vpop.f32.mrb[0].mxu0
      %v1637 = vadd.f32 %v1541, %v1636
      %v1638 = vpop.f32.mrb[0].mxu0
      %1639 = vmatprep.mubr.bf16.mxu0 0
      %1640 = vmatmul.mubr.bf16.gmra.mrb[0].mxu0 %v1111
      %v1641 = vpop.f32.mrb[0].mxu0
      %v1642 = vadd.f32 %v1541, %v1641
      %v1643 = vpop.f32.mrb[0].mxu0
      %v1644 = vpop.f32.mrb[0].mxu0
      %v1645 = vadd.f32 %v1541, %v1644
      %v1646 = vpop.f32.mrb[0].mxu0
      %1647 = vmatprep.mubr.bf16.mxu0 0
      %1648 = vmatmul.mubr.bf16.gmra.mrb[0].mxu0 %v1112
      %v1649 = vpop.f32.mrb[0].mxu0
      %v1650 = vadd.f32 %v1541, %v1649
      %v1651 = vpop.f32.mrb[0].mxu0
      %v1652 = vpop.f32.mrb[0].mxu0
      %v1653 = vadd.f32 %v1541, %v1652
      %v1654 = vpop.f32.mrb[0].mxu0
      %1655 = vmatprep.mubr.bf16.mxu0 0
      %1656 = vmatmul.mubr.bf16.gmra.mrb[0].mxu0 %v1113
      %v1657 = vpop.f32.mrb[0].mxu0
      %v1658 = vadd.f32 %v1541, %v1657
      %v1659 = vpop.f32.mrb[0].mxu0
      %v1660 = vpop.f32.mrb[0].mxu0
      %v1661 = vadd.f32 %v1541, %v1660
      %v1662 = vpop.f32.mrb[0].mxu0
      %1663 = vmatprep.mubr.bf16.mxu0 0
      %1664 = vmatmul.mubr.bf16.gmra.mrb[0].mxu0 %v1114
      %v1665 = vpop.f32.mrb[0].mxu0
      %v1666 = vadd.f32 %v1541, %v1665
      %v1667 = vpop.f32.mrb[0].mxu0
      %v1668 = vpop.f32.mrb[0].mxu0
      %v1669 = vadd.f32 %v1541, %v1668
      %v1670 = vpop.f32.mrb[0].mxu0
      %1671 = vmatprep.mubr.bf16.mxu0 0
      %1672 = vmatmul.mubr.bf16.gmra.mrb[0].mxu0 %v1115
      %v1673 = vpop.f32.mrb[0].mxu0
      %v1674 = vadd.f32 %v1541, %v1673
      %v1675 = vpop.f32.mrb[0].mxu0
      %v1676 = vpop.f32.mrb[0].mxu0
      %v1677 = vadd.f32 %v1541, %v1676
      %v1678 = vpop.f32.mrb[0].mxu0
      %1679 = vmatprep.mubr.bf16.mxu0 0
      %1680 = vmatmul.mubr.bf16.gmra.mrb[0].mxu0 %v1116
      %v1681 = vpop.f32.mrb[0].mxu0
      %v1682 = vadd.f32 %v1541, %v1681
      %v1683 = vpop.f32.mrb[0].mxu0
      %v1684 = vpop.f32.mrb[0].mxu0
      %v1685 = vadd.f32 %v1541, %v1684
      %v1686 = vpop.f32.mrb[0].mxu0
      %1687 = vdwg.mxu0
      %v1688 = vpack.c.bf16 %v1629, %v1626
      %v1689 = vpack.c.bf16 %v1637, %v1634
      %v1690 = vpack.c.bf16 %v1645, %v1642
      %v1691 = vpack.c.bf16 %v1653, %v1650
      %v1692 = vpack.c.bf16 %v1661, %v1658
      %v1693 = vpack.c.bf16 %v1669, %v1666
      %v1694 = vpack.c.bf16 %v1677, %v1674
      %v1695 = vpack.c.bf16 %v1685, %v1682
      %vm1696 = vcmask 261120
      %v1698 = vsel %vm1696, %v1336, 0
      %v1701 = vsel %vm1696, %v1337, 0
      %v1704 = vsel %vm1696, %v1338, 0
      %v1707 = vsel %vm1696, %v1339, 0
      %v1710 = vsel %vm1696, %v1512, 0
      %v1713 = vsel %vm1696, %v1513, 0
      %v1716 = vsel %vm1696, %v1514, 0
      %v1719 = vsel %vm1696, %v1515, 0
      %1721 = vmatprep.subr.bf16.mxu0 0
      %1722 = vmatpush1.bf16.xpose.msra.mxu0 %v1710
      %1723 = vmatprep.subr.bf16.mxu0 0
      %1724 = vmatpush1.bf16.xpose.msra.mxu0 %v1713
      %1725 = vmatprep.subr.bf16.mxu0 0
      %1726 = vmatpush1.bf16.xpose.msra.mxu0 %v1716
      %1727 = vmatprep.subr.bf16.mxu0 0
      %1728 = vmatpush1.bf16.xpose.msra.mxu0 %v1719
      %1729 = vmatprep.subr.bf16.mxu0 0
      %1730 = vmatpush1.bf16.xpose.msra.mxu0 0
      %1731 = vmatprep.subr.bf16.mxu0 0
      %1732 = vmatpush1.bf16.xpose.msra.mxu0 0
      %1733 = vmatprep.subr.bf16.mxu0 0
      %1734 = vmatpush1.bf16.xpose.msra.mxu0 0
      %1735 = vmatprep.subr.bf16.mxu0 0
      %1736 = vmatpush1.bf16.xpose.msra.mxu0 0
      %1737 = vmatprep.subr.bf16.mxu0 0
      %1738 = vmatpush1.bf16.xpose.msra.mxu0 0
      %1739 = vmatprep.subr.bf16.mxu0 0
      %1740 = vmatpush1.bf16.xpose.msra.mxu0 0
      %1741 = vmatprep.subr.bf16.mxu0 0
      %1742 = vmatpush1.bf16.xpose.msra.mxu0 0
      %1743 = vmatprep.subr.bf16.mxu0 0
      %1744 = vmatpush1.bf16.xpose.msra.mxu0 0
      %1745 = vmatprep.subr.bf16.mxu0 0
      %1746 = vmatpush1.bf16.xpose.msra.mxu0 0
      %1747 = vmatprep.subr.bf16.mxu0 0
      %1748 = vmatpush1.bf16.xpose.msra.mxu0 0
      %1749 = vmatprep.subr.bf16.mxu0 0
      %1750 = vmatpush1.bf16.xpose.msra.mxu0 0
      %1751 = vmatprep.subr.bf16.mxu0 0
      %1752 = vmatpush1.bf16.xpose.msra.mxu0 0
      %1753 = vmatprep.mubr.bf16.mxu0 0
      %1754 = vmatmul.mubr.bf16.gmra.mrb[0].mxu0 %v1698
      %v1755 = vpop.f32.mrb[0].mxu0
      %v1756 = vadd.f32 %v1136, %v1755
      %v1757 = vpop.f32.mrb[0].mxu0
      %v1758 = vpop.f32.mrb[0].mxu0
      %v1759 = vadd.f32 %v1137, %v1758
      %v1760 = vpop.f32.mrb[0].mxu0
      %1761 = vmatprep.mubr.bf16.mxu0 0
      %1762 = vmatmul.mubr.bf16.gmra.mrb[0].mxu0 %v1701
      %v1763 = vpop.f32.mrb[0].mxu0
      %v1764 = vadd.f32 %v1138, %v1763
      %v1765 = vpop.f32.mrb[0].mxu0
      %v1766 = vpop.f32.mrb[0].mxu0
      %v1767 = vadd.f32 %v1139, %v1766
      %v1768 = vpop.f32.mrb[0].mxu0
      %1769 = vmatprep.mubr.bf16.mxu0 0
      %1770 = vmatmul.mubr.bf16.gmra.mrb[0].mxu0 %v1704
      %v1771 = vpop.f32.mrb[0].mxu0
      %v1772 = vadd.f32 %v1140, %v1771
      %v1773 = vpop.f32.mrb[0].mxu0
      %v1774 = vpop.f32.mrb[0].mxu0
      %v1775 = vadd.f32 %v1141, %v1774
      %v1776 = vpop.f32.mrb[0].mxu0
      %1777 = vmatprep.mubr.bf16.mxu0 0
      %1778 = vmatmul.mubr.bf16.gmra.mrb[0].mxu0 %v1707
      %v1779 = vpop.f32.mrb[0].mxu0
      %v1780 = vadd.f32 %v1142, %v1779
      %v1781 = vpop.f32.mrb[0].mxu0
      %v1782 = vpop.f32.mrb[0].mxu0
      %v1783 = vadd.f32 %v1143, %v1782
      %v1784 = vpop.f32.mrb[0].mxu0
      %1785 = vdwg.mxu0
      %vm1786 = vcmask 523264
      %v1787 = vsel %vm1786, %v1756, -inf
      %1788 = vmax.xlane.f32.xlu0 %v1787
      %v1789 = vpop.xlane.xlu0 %1788
      %v1790 = vsel %vm1786, %v1759, -inf
      %1791 = vmax.xlane.f32.xlu0 %v1790
      %v1792 = vpop.xlane.xlu0 %1791
      %v1793 = vsel %vm1786, %v1764, -inf
      %1794 = vmax.xlane.f32.xlu0 %v1793
      %v1795 = vpop.xlane.xlu0 %1794
      %v1796 = vsel %vm1786, %v1767, -inf
      %1797 = vmax.xlane.f32.xlu0 %v1796
      %v1798 = vpop.xlane.xlu0 %1797
      %v1799 = vsel %vm1786, %v1772, -inf
      %1800 = vmax.xlane.f32.xlu0 %v1799
      %v1801 = vpop.xlane.xlu0 %1800
      %v1802 = vsel %vm1786, %v1775, -inf
      %1803 = vmax.xlane.f32.xlu0 %v1802
      %v1804 = vpop.xlane.xlu0 %1803
      %v1805 = vsel %vm1786, %v1780, -inf
      %1806 = vmax.xlane.f32.xlu0 %v1805
      %v1807 = vpop.xlane.xlu0 %1806
      %v1808 = vsel %vm1786, %v1783, -inf
      %1809 = vmax.xlane.f32.xlu0 %v1808
      %v1810 = vpop.xlane.xlu0 %1809
      %v1811 = vsub.f32 %v1756, %v1789
      %v1812 = vsub.f32 %v1759, %v1792
      %v1813 = vsub.f32 %v1764, %v1795
      %v1814 = vsub.f32 %v1767, %v1798
      %v1815 = vsub.f32 %v1772, %v1801
      %v1816 = vsub.f32 %v1775, %v1804
      %v1817 = vsub.f32 %v1780, %v1807
      %v1818 = vsub.f32 %v1783, %v1810
      %v1819 = vmul.f32 %v1811, 1.442695
      %v1820 = vpow.pop %v1819
      %v1821 = vmul.f32 %v1812, 1.442695
      %v1822 = vpow.pop %v1821
      %v1823 = vmul.f32 %v1813, 1.442695
      %v1824 = vpow.pop %v1823
      %v1825 = vmul.f32 %v1814, 1.442695
      %v1826 = vpow.pop %v1825
      %v1827 = vmul.f32 %v1815, 1.442695
      %v1828 = vpow.pop %v1827
      %v1829 = vmul.f32 %v1816, 1.442695
      %v1830 = vpow.pop %v1829
      %v1831 = vmul.f32 %v1817, 1.442695
      %v1832 = vpow.pop %v1831
      %v1833 = vmul.f32 %v1818, 1.442695
      %v1834 = vpow.pop %v1833
      %v1835 = vsel %vm1786, %v1820, 0.0
      %1836 = vadd.xlane.f32.xlu0 %v1835
      %v1837 = vpop.xlane.xlu0 %1836
      %v1838 = vsel %vm1786, %v1822, 0.0
      %1839 = vadd.xlane.f32.xlu0 %v1838
      %v1840 = vpop.xlane.xlu0 %1839
      %v1841 = vsel %vm1786, %v1824, 0.0
      %1842 = vadd.xlane.f32.xlu0 %v1841
      %v1843 = vpop.xlane.xlu0 %1842
      %v1844 = vsel %vm1786, %v1826, 0.0
      %1845 = vadd.xlane.f32.xlu0 %v1844
      %v1846 = vpop.xlane.xlu0 %1845
      %v1847 = vsel %vm1786, %v1828, 0.0
      %1848 = vadd.xlane.f32.xlu0 %v1847
      %v1849 = vpop.xlane.xlu0 %1848
      %v1850 = vsel %vm1786, %v1830, 0.0
      %1851 = vadd.xlane.f32.xlu0 %v1850
      %v1852 = vpop.xlane.xlu0 %1851
      %v1853 = vsel %vm1786, %v1832, 0.0
      %1854 = vadd.xlane.f32.xlu0 %v1853
      %v1855 = vpop.xlane.xlu0 %1854
      %v1856 = vsel %vm1786, %v1834, 0.0
      %1857 = vadd.xlane.f32.xlu0 %v1856
      %v1858 = vpop.xlane.xlu0 %1857
      %v1859 = vrcp.pop %v1837
      %v1860 = vrcp.pop %v1840
      %v1861 = vrcp.pop %v1843
      %v1862 = vrcp.pop %v1846
      %v1863 = vrcp.pop %v1849
      %v1864 = vrcp.pop %v1852
      %v1865 = vrcp.pop %v1855
      %v1866 = vrcp.pop %v1858
      %v1867 = vmul.f32 %v1820, %v1859
      %v1868 = vmul.f32 %v1822, %v1860
      %v1869 = vmul.f32 %v1824, %v1861
      %v1870 = vmul.f32 %v1826, %v1862
      %v1871 = vmul.f32 %v1828, %v1863
      %v1872 = vmul.f32 %v1830, %v1864
      %v1873 = vmul.f32 %v1832, %v1865
      %v1874 = vmul.f32 %v1834, %v1866
      %v1875 = vpack.c.bf16 %v1868, %v1867
      %v1876 = vpack.c.bf16 %v1870, %v1869
      %v1877 = vpack.c.bf16 %v1872, %v1871
      %v1878 = vpack.c.bf16 %v1874, %v1873
      %v1880 = vsel %vm1786, %v1875, 0
      %v1883 = vsel %vm1786, %v1876, 0
      %v1886 = vsel %vm1786, %v1877, 0
      %v1889 = vsel %vm1786, %v1878, 0
      %1891 = vmatprep.subr.bf16.mxu0 0
      %1892 = vmatpush1.bf16.msra.mxu0 %v1688
      %1893 = vmatprep.subr.bf16.mxu0 0
      %1894 = vmatpush1.bf16.msra.mxu0 %v1689
      %1895 = vmatprep.subr.bf16.mxu0 0
      %1896 = vmatpush1.bf16.msra.mxu0 %v1690
      %1897 = vmatprep.subr.bf16.mxu0 0
      %1898 = vmatpush1.bf16.msra.mxu0 %v1691
      %1899 = vmatprep.subr.bf16.mxu0 0
      %1900 = vmatpush1.bf16.msra.mxu0 0
      %1901 = vmatprep.subr.bf16.mxu0 0
      %1902 = vmatpush1.bf16.msra.mxu0 0
      %1903 = vmatprep.subr.bf16.mxu0 0
      %1904 = vmatpush1.bf16.msra.mxu0 0
      %1905 = vmatprep.subr.bf16.mxu0 0
      %1906 = vmatpush1.bf16.msra.mxu0 0
      %1907 = vmatprep.subr.bf16.mxu0 0
      %1908 = vmatpush1.bf16.msra.mxu0 0
      %1909 = vmatprep.subr.bf16.mxu0 0
      %1910 = vmatpush1.bf16.msra.mxu0 0
      %1911 = vmatprep.subr.bf16.mxu0 0
      %1912 = vmatpush1.bf16.msra.mxu0 0
      %1913 = vmatprep.subr.bf16.mxu0 0
      %1914 = vmatpush1.bf16.msra.mxu0 0
      %1915 = vmatprep.subr.bf16.mxu0 0
      %1916 = vmatpush1.bf16.msra.mxu0 0
      %1917 = vmatprep.subr.bf16.mxu0 0
      %1918 = vmatpush1.bf16.msra.mxu0 0
      %1919 = vmatprep.subr.bf16.mxu0 0
      %1920 = vmatpush1.bf16.msra.mxu0 0
      %1921 = vmatprep.subr.bf16.mxu0 0
      %1922 = vmatpush1.bf16.msra.mxu0 0
      %1923 = vmatprep.mubr.bf16.mxu0 0
      %1924 = vmatmul.mubr.bf16.gmra.mrb[0].mxu0 %v1880
      %v1925 = vpop.f32.mrb[0].mxu0
      %v1926 = vadd.f32 0.0, %v1925
      %v1927 = vpop.f32.mrb[0].mxu0
      %v1928 = vpop.f32.mrb[0].mxu0
      %v1929 = vadd.f32 0.0, %v1928
      %v1930 = vpop.f32.mrb[0].mxu0
      %1931 = vmatprep.mubr.bf16.mxu0 0
      %1932 = vmatmul.mubr.bf16.gmra.mrb[0].mxu0 %v1883
      %v1933 = vpop.f32.mrb[0].mxu0
      %v1934 = vadd.f32 0.0, %v1933
      %v1935 = vpop.f32.mrb[0].mxu0
      %v1936 = vpop.f32.mrb[0].mxu0
      %v1937 = vadd.f32 0.0, %v1936
      %v1938 = vpop.f32.mrb[0].mxu0
      %1939 = vmatprep.mubr.bf16.mxu0 0
      %1940 = vmatmul.mubr.bf16.gmra.mrb[0].mxu0 %v1886
      %v1941 = vpop.f32.mrb[0].mxu0
      %v1942 = vadd.f32 0.0, %v1941
      %v1943 = vpop.f32.mrb[0].mxu0
      %v1944 = vpop.f32.mrb[0].mxu0
      %v1945 = vadd.f32 0.0, %v1944
      %v1946 = vpop.f32.mrb[0].mxu0
      %1947 = vmatprep.mubr.bf16.mxu0 0
      %1948 = vmatmul.mubr.bf16.gmra.mrb[0].mxu0 %v1889
      %v1949 = vpop.f32.mrb[0].mxu0
      %v1950 = vadd.f32 0.0, %v1949
      %v1951 = vpop.f32.mrb[0].mxu0
      %v1952 = vpop.f32.mrb[0].mxu0
      %v1953 = vadd.f32 0.0, %v1952
      %v1954 = vpop.f32.mrb[0].mxu0
      %1955 = vdwg.mxu0
      %v1957 = vsel %vm1696, %v1340, 0
      %v1960 = vsel %vm1696, %v1341, 0
      %v1963 = vsel %vm1696, %v1342, 0
      %v1966 = vsel %vm1696, %v1343, 0
      %v1969 = vsel %vm1696, %v1516, 0
      %v1972 = vsel %vm1696, %v1517, 0
      %v1975 = vsel %vm1696, %v1518, 0
      %v1978 = vsel %vm1696, %v1519, 0
      %1980 = vmatprep.subr.bf16.mxu0 0
      %1981 = vmatpush1.bf16.xpose.msra.mxu0 %v1710
      %1982 = vmatprep.subr.bf16.mxu0 0
      %1983 = vmatpush1.bf16.xpose.msra.mxu0 %v1713
      %1984 = vmatprep.subr.bf16.mxu0 0
      %1985 = vmatpush1.bf16.xpose.msra.mxu0 %v1716
      %1986 = vmatprep.subr.bf16.mxu0 0
      %1987 = vmatpush1.bf16.xpose.msra.mxu0 %v1719
      %1988 = vmatprep.subr.bf16.mxu0 0
      %1989 = vmatpush1.bf16.xpose.msra.mxu0 %v1969
      %1990 = vmatprep.subr.bf16.mxu0 0
      %1991 = vmatpush1.bf16.xpose.msra.mxu0 %v1972
      %1992 = vmatprep.subr.bf16.mxu0 0
      %1993 = vmatpush1.bf16.xpose.msra.mxu0 %v1975
      %1994 = vmatprep.subr.bf16.mxu0 0
      %1995 = vmatpush1.bf16.xpose.msra.mxu0 %v1978
      %1996 = vmatprep.subr.bf16.mxu0 0
      %1997 = vmatpush1.bf16.xpose.msra.mxu0 0
      %1998 = vmatprep.subr.bf16.mxu0 0
      %1999 = vmatpush1.bf16.xpose.msra.mxu0 0
      %2000 = vmatprep.subr.bf16.mxu0 0
      %2001 = vmatpush1.bf16.xpose.msra.mxu0 0
      %2002 = vmatprep.subr.bf16.mxu0 0
      %2003 = vmatpush1.bf16.xpose.msra.mxu0 0
      %2004 = vmatprep.subr.bf16.mxu0 0
      %2005 = vmatpush1.bf16.xpose.msra.mxu0 0
      %2006 = vmatprep.subr.bf16.mxu0 0
      %2007 = vmatpush1.bf16.xpose.msra.mxu0 0
      %2008 = vmatprep.subr.bf16.mxu0 0
      %2009 = vmatpush1.bf16.xpose.msra.mxu0 0
      %2010 = vmatprep.subr.bf16.mxu0 0
      %2011 = vmatpush1.bf16.xpose.msra.mxu0 0
      %2012 = vmatprep.mubr.bf16.mxu0 0
      %2013 = vmatmul.mubr.bf16.gmra.mrb[0].mxu0 %v1957
      %v2014 = vpop.f32.mrb[0].mxu0
      %v2015 = vadd.f32 %v1160, %v2014
      %v2016 = vpop.f32.mrb[0].mxu0
      %v2017 = vpop.f32.mrb[0].mxu0
      %v2018 = vadd.f32 %v1161, %v2017
      %v2019 = vpop.f32.mrb[0].mxu0
      %2020 = vmatprep.mubr.bf16.mxu0 0
      %2021 = vmatmul.mubr.bf16.gmra.mrb[0].mxu0 %v1960
      %v2022 = vpop.f32.mrb[0].mxu0
      %v2023 = vadd.f32 %v1162, %v2022
      %v2024 = vpop.f32.mrb[0].mxu0
      %v2025 = vpop.f32.mrb[0].mxu0
      %v2026 = vadd.f32 %v1163, %v2025
      %v2027 = vpop.f32.mrb[0].mxu0
      %2028 = vmatprep.mubr.bf16.mxu0 0
      %2029 = vmatmul.mubr.bf16.gmra.mrb[0].mxu0 %v1963
      %v2030 = vpop.f32.mrb[0].mxu0
      %v2031 = vadd.f32 %v1164, %v2030
      %v2032 = vpop.f32.mrb[0].mxu0
      %v2033 = vpop.f32.mrb[0].mxu0
      %v2034 = vadd.f32 %v1165, %v2033
      %v2035 = vpop.f32.mrb[0].mxu0
      %2036 = vmatprep.mubr.bf16.mxu0 0
      %2037 = vmatmul.mubr.bf16.gmra.mrb[0].mxu0 %v1966
      %v2038 = vpop.f32.mrb[0].mxu0
      %v2039 = vadd.f32 %v1166, %v2038
      %v2040 = vpop.f32.mrb[0].mxu0
      %v2041 = vpop.f32.mrb[0].mxu0
      %v2042 = vadd.f32 %v1167, %v2041
      %v2043 = vpop.f32.mrb[0].mxu0
      %2044 = vdwg.mxu0
      %2045 = vmax.xlane.f32.xlu0 %v2015
      %v2046 = vpop.xlane.xlu0 %2045
      %2047 = vmax.xlane.f32.xlu0 %v2018
      %v2048 = vpop.xlane.xlu0 %2047
      %2049 = vmax.xlane.f32.xlu0 %v2023
      %v2050 = vpop.xlane.xlu0 %2049
      %2051 = vmax.xlane.f32.xlu0 %v2026
      %v2052 = vpop.xlane.xlu0 %2051
      %2053 = vmax.xlane.f32.xlu0 %v2031
      %v2054 = vpop.xlane.xlu0 %2053
      %2055 = vmax.xlane.f32.xlu0 %v2034
      %v2056 = vpop.xlane.xlu0 %2055
      %2057 = vmax.xlane.f32.xlu0 %v2039
      %v2058 = vpop.xlane.xlu0 %2057
      %2059 = vmax.xlane.f32.xlu0 %v2042
      %v2060 = vpop.xlane.xlu0 %2059
      %v2061 = vsub.f32 %v2015, %v2046
      %v2062 = vsub.f32 %v2018, %v2048
      %v2063 = vsub.f32 %v2023, %v2050
      %v2064 = vsub.f32 %v2026, %v2052
      %v2065 = vsub.f32 %v2031, %v2054
      %v2066 = vsub.f32 %v2034, %v2056
      %v2067 = vsub.f32 %v2039, %v2058
      %v2068 = vsub.f32 %v2042, %v2060
      %v2069 = vmul.f32 %v2061, 1.442695
      %v2070 = vpow.pop %v2069
      %v2071 = vmul.f32 %v2062, 1.442695
      %v2072 = vpow.pop %v2071
      %v2073 = vmul.f32 %v2063, 1.442695
      %v2074 = vpow.pop %v2073
      %v2075 = vmul.f32 %v2064, 1.442695
      %v2076 = vpow.pop %v2075
      %v2077 = vmul.f32 %v2065, 1.442695
      %v2078 = vpow.pop %v2077
      %v2079 = vmul.f32 %v2066, 1.442695
      %v2080 = vpow.pop %v2079
      %v2081 = vmul.f32 %v2067, 1.442695
      %v2082 = vpow.pop %v2081
      %v2083 = vmul.f32 %v2068, 1.442695
      %v2084 = vpow.pop %v2083
      %2085 = vadd.xlane.f32.xlu0 %v2070
      %v2086 = vpop.xlane.xlu0 %2085
      %2087 = vadd.xlane.f32.xlu0 %v2072
      %v2088 = vpop.xlane.xlu0 %2087
      %2089 = vadd.xlane.f32.xlu0 %v2074
      %v2090 = vpop.xlane.xlu0 %2089
      %2091 = vadd.xlane.f32.xlu0 %v2076
      %v2092 = vpop.xlane.xlu0 %2091
      %2093 = vadd.xlane.f32.xlu0 %v2078
      %v2094 = vpop.xlane.xlu0 %2093
      %2095 = vadd.xlane.f32.xlu0 %v2080
      %v2096 = vpop.xlane.xlu0 %2095
      %2097 = vadd.xlane.f32.xlu0 %v2082
      %v2098 = vpop.xlane.xlu0 %2097
      %2099 = vadd.xlane.f32.xlu0 %v2084
      %v2100 = vpop.xlane.xlu0 %2099
      %v2101 = vrcp.pop %v2086
      %v2102 = vrcp.pop %v2088
      %v2103 = vrcp.pop %v2090
      %v2104 = vrcp.pop %v2092
      %v2105 = vrcp.pop %v2094
      %v2106 = vrcp.pop %v2096
      %v2107 = vrcp.pop %v2098
      %v2108 = vrcp.pop %v2100
      %v2109 = vmul.f32 %v2070, %v2101
      %v2110 = vmul.f32 %v2072, %v2102
      %v2111 = vmul.f32 %v2074, %v2103
      %v2112 = vmul.f32 %v2076, %v2104
      %v2113 = vmul.f32 %v2078, %v2105
      %v2114 = vmul.f32 %v2080, %v2106
      %v2115 = vmul.f32 %v2082, %v2107
      %v2116 = vmul.f32 %v2084, %v2108
      %v2117 = vpack.c.bf16 %v2110, %v2109
      %v2118 = vpack.c.bf16 %v2112, %v2111
      %v2119 = vpack.c.bf16 %v2114, %v2113
      %v2120 = vpack.c.bf16 %v2116, %v2115
      %2121 = vmatprep.subr.bf16.mxu0 0
      %2122 = vmatpush1.bf16.msra.mxu0 %v1688
      %2123 = vmatprep.subr.bf16.mxu0 0
      %2124 = vmatpush1.bf16.msra.mxu0 %v1689
      %2125 = vmatprep.subr.bf16.mxu0 0
      %2126 = vmatpush1.bf16.msra.mxu0 %v1690
      %2127 = vmatprep.subr.bf16.mxu0 0
      %2128 = vmatpush1.bf16.msra.mxu0 %v1691
      %2129 = vmatprep.subr.bf16.mxu0 0
      %2130 = vmatpush1.bf16.msra.mxu0 %v1692
      %2131 = vmatprep.subr.bf16.mxu0 0
      %2132 = vmatpush1.bf16.msra.mxu0 %v1693
      %2133 = vmatprep.subr.bf16.mxu0 0
      %2134 = vmatpush1.bf16.msra.mxu0 %v1694
      %2135 = vmatprep.subr.bf16.mxu0 0
      %2136 = vmatpush1.bf16.msra.mxu0 %v1695
      %2137 = vmatprep.subr.bf16.mxu0 0
      %2138 = vmatpush1.bf16.msra.mxu0 0
      %2139 = vmatprep.subr.bf16.mxu0 0
      %2140 = vmatpush1.bf16.msra.mxu0 0
      %2141 = vmatprep.subr.bf16.mxu0 0
      %2142 = vmatpush1.bf16.msra.mxu0 0
      %2143 = vmatprep.subr.bf16.mxu0 0
      %2144 = vmatpush1.bf16.msra.mxu0 0
      %2145 = vmatprep.subr.bf16.mxu0 0
      %2146 = vmatpush1.bf16.msra.mxu0 0
      %2147 = vmatprep.subr.bf16.mxu0 0
      %2148 = vmatpush1.bf16.msra.mxu0 0
      %2149 = vmatprep.subr.bf16.mxu0 0
      %2150 = vmatpush1.bf16.msra.mxu0 0
      %2151 = vmatprep.subr.bf16.mxu0 0
      %2152 = vmatpush1.bf16.msra.mxu0 0
      %2153 = vmatprep.mubr.bf16.mxu0 0
      %2154 = vmatmul.mubr.bf16.gmra.mrb[0].mxu0 %v2117
      %v2155 = vpop.f32.mrb[0].mxu0
      %v2156 = vadd.f32 0.0, %v2155
      %v2157 = vpop.f32.mrb[0].mxu0
      %v2158 = vpop.f32.mrb[0].mxu0
      %v2159 = vadd.f32 0.0, %v2158
      %v2160 = vpop.f32.mrb[0].mxu0
      %2161 = vmatprep.mubr.bf16.mxu0 0
      %2162 = vmatmul.mubr.bf16.gmra.mrb[0].mxu0 %v2118
      %v2163 = vpop.f32.mrb[0].mxu0
      %v2164 = vadd.f32 0.0, %v2163
      %v2165 = vpop.f32.mrb[0].mxu0
      %v2166 = vpop.f32.mrb[0].mxu0
      %v2167 = vadd.f32 0.0, %v2166
      %v2168 = vpop.f32.mrb[0].mxu0
      %2169 = vmatprep.mubr.bf16.mxu0 0
      %2170 = vmatmul.mubr.bf16.gmra.mrb[0].mxu0 %v2119
      %v2171 = vpop.f32.mrb[0].mxu0
      %v2172 = vadd.f32 0.0, %v2171
      %v2173 = vpop.f32.mrb[0].mxu0
      %v2174 = vpop.f32.mrb[0].mxu0
      %v2175 = vadd.f32 0.0, %v2174
      %v2176 = vpop.f32.mrb[0].mxu0
      %2177 = vmatprep.mubr.bf16.mxu0 0
      %2178 = vmatmul.mubr.bf16.gmra.mrb[0].mxu0 %v2120
      %v2179 = vpop.f32.mrb[0].mxu0
      %v2180 = vadd.f32 0.0, %v2179
      %v2181 = vpop.f32.mrb[0].mxu0
      %v2182 = vpop.f32.mrb[0].mxu0
      %v2183 = vadd.f32 0.0, %v2182
      %v2184 = vpop.f32.mrb[0].mxu0
      %2185 = vdwg.mxu0
      %v2186 = vpack.c.bf16 %v1929, %v1926
      %v2187 = vpack.c.bf16 %v1937, %v1934
      %v2188 = vpack.c.bf16 %v1945, %v1942
      %v2189 = vpack.c.bf16 %v1953, %v1950
      %v2190 = vpack.c.bf16 %v2159, %v2156
      %v2191 = vpack.c.bf16 %v2167, %v2164
      %v2192 = vpack.c.bf16 %v2175, %v2172
      %v2193 = vpack.c.bf16 %v2183, %v2180
      %v2194 = vld [vmem:[%s801] sm:$0xf]
      %v2195 = vld [vmem:[%s801 + $0x4] sm:$0xf]
      %v2196 = vld [vmem:[%s801 + $0x8] sm:$0xf]
      %v2197 = vld [vmem:[%s801 + $0xc] sm:$0xf]
      %s2198 = scalar_lea.vmem %s774, 64
      %v2199 = vld [vmem:[%s2198] sm:$0xf]
      %v2200 = vld [vmem:[%s2198 + $0x4] sm:$0xf]
      %v2201 = vld [vmem:[%s2198 + $0x8] sm:$0xf]
      %v2202 = vld [vmem:[%s2198 + $0xc] sm:$0xf]
      %v2203 = vld [vmem:[%s2198 + $0x10] sm:$0xf]
      %v2204 = vld [vmem:[%s2198 + $0x14] sm:$0xf]
      %v2205 = vld [vmem:[%s2198 + $0x18] sm:$0xf]
      %v2206 = vld [vmem:[%s2198 + $0x1c] sm:$0xf]
      %v2207 = vld [vmem:[%s2198 + $0x20] sm:$0xf]
      %v2208 = vld [vmem:[%s2198 + $0x24] sm:$0xf]
      %v2209 = vld [vmem:[%s2198 + $0x28] sm:$0xf]
      %v2210 = vld [vmem:[%s2198 + $0x2c] sm:$0xf]
      %v2211 = vld [vmem:[%s2198 + $0x30] sm:$0xf]
      %v2212 = vld [vmem:[%s2198 + $0x34] sm:$0xf]
      %v2213 = vld [vmem:[%s2198 + $0x38] sm:$0xf]
      %v2214 = vld [vmem:[%s2198 + $0x3c] sm:$0xf]
      %s2215 = scalar_lea.vmem %s778, 1
      %v2216 = vld [vmem:[%s2215] sm:$0x1]
      %v2218 = vlaneseq
      %v2219 = vshrl.u32 %v2218, 7
      %v2220 = vsub.s32 0, %v2219
      %v2221 = vrot.slane %v2216, %v2220
      %v2239 = vunpack.c.l.b16 %v2199
      %v2240 = vunpack.c.l.b16 %v2200
      %v2241 = vunpack.c.l.b16 %v2201
      %v2242 = vunpack.c.l.b16 %v2202
      %v2243 = vunpack.c.l.b16 %v2203
      %v2244 = vunpack.c.l.b16 %v2204
      %v2245 = vunpack.c.l.b16 %v2205
      %v2246 = vunpack.c.l.b16 %v2206
      %v2247 = vunpack.c.l.b16 %v2207
      %v2248 = vunpack.c.l.b16 %v2208
      %v2249 = vunpack.c.l.b16 %v2209
      %v2250 = vunpack.c.l.b16 %v2210
      %v2251 = vunpack.c.l.b16 %v2211
      %v2252 = vunpack.c.l.b16 %v2212
      %v2253 = vunpack.c.l.b16 %v2213
      %v2254 = vunpack.c.l.b16 %v2214
      %v2255 = vpack.c.b16 %v2240, %v2239
      %v2256 = vpack.c.b16 %v2242, %v2241
      %v2257 = vpack.c.b16 %v2244, %v2243
      %v2258 = vpack.c.b16 %v2246, %v2245
      %v2259 = vpack.c.b16 %v2248, %v2247
      %v2260 = vpack.c.b16 %v2250, %v2249
      %v2261 = vpack.c.b16 %v2252, %v2251
      %v2262 = vpack.c.b16 %v2254, %v2253
      %2271 = vmatprep.subr.bf16.mxu0 0
      %2272 = vmatpush1.bf16.msra.mxu0 %v2255
      %2273 = vmatprep.subr.bf16.mxu0 0
      %2274 = vmatpush1.bf16.msra.mxu0 %v2256
      %2275 = vmatprep.subr.bf16.mxu0 0
      %2276 = vmatpush1.bf16.msra.mxu0 %v2257
      %2277 = vmatprep.subr.bf16.mxu0 0
      %2278 = vmatpush1.bf16.msra.mxu0 %v2258
      %2279 = vmatprep.subr.bf16.mxu0 0
      %2280 = vmatpush1.bf16.msra.mxu0 %v2259
      %2281 = vmatprep.subr.bf16.mxu0 0
      %2282 = vmatpush1.bf16.msra.mxu0 %v2260
      %2283 = vmatprep.subr.bf16.mxu0 0
      %2284 = vmatpush1.bf16.msra.mxu0 %v2261
      %2285 = vmatprep.subr.bf16.mxu0 0
      %2286 = vmatpush1.bf16.msra.mxu0 %v2262
      %2287 = vmatprep.subr.bf16.mxu0 0
      %2288 = vmatpush1.bf16.msra.mxu0 0
      %2289 = vmatprep.subr.bf16.mxu0 0
      %2290 = vmatpush1.bf16.msra.mxu0 0
      %2291 = vmatprep.subr.bf16.mxu0 0
      %2292 = vmatpush1.bf16.msra.mxu0 0
      %2293 = vmatprep.subr.bf16.mxu0 0
      %2294 = vmatpush1.bf16.msra.mxu0 0
      %2295 = vmatprep.subr.bf16.mxu0 0
      %2296 = vmatpush1.bf16.msra.mxu0 0
      %2297 = vmatprep.subr.bf16.mxu0 0
      %2298 = vmatpush1.bf16.msra.mxu0 0
      %2299 = vmatprep.subr.bf16.mxu0 0
      %2300 = vmatpush1.bf16.msra.mxu0 0
      %2301 = vmatprep.subr.bf16.mxu0 0
      %2302 = vmatpush1.bf16.msra.mxu0 0
      %2303 = vmatprep.mubr.bf16.mxu0 0
      %2304 = vmatmul.mubr.bf16.gmra.mrb[0].mxu0 %v1109
      %v2305 = vpop.f32.mrb[0].mxu0
      %v2306 = vadd.f32 %v2221, %v2305
      %v2307 = vpop.f32.mrb[0].mxu0
      %v2308 = vpop.f32.mrb[0].mxu0
      %v2309 = vadd.f32 %v2221, %v2308
      %v2310 = vpop.f32.mrb[0].mxu0
      %2311 = vmatprep.mubr.bf16.mxu0 0
      %2312 = vmatmul.mubr.bf16.gmra.mrb[0].mxu0 %v1110
      %v2313 = vpop.f32.mrb[0].mxu0
      %v2314 = vadd.f32 %v2221, %v2313
      %v2315 = vpop.f32.mrb[0].mxu0
      %v2316 = vpop.f32.mrb[0].mxu0
      %v2317 = vadd.f32 %v2221, %v2316
      %v2318 = vpop.f32.mrb[0].mxu0
      %2319 = vmatprep.mubr.bf16.mxu0 0
      %2320 = vmatmul.mubr.bf16.gmra.mrb[0].mxu0 %v1111
      %v2321 = vpop.f32.mrb[0].mxu0
      %v2322 = vadd.f32 %v2221, %v2321
      %v2323 = vpop.f32.mrb[0].mxu0
      %v2324 = vpop.f32.mrb[0].mxu0
      %v2325 = vadd.f32 %v2221, %v2324
      %v2326 = vpop.f32.mrb[0].mxu0
      %2327 = vmatprep.mubr.bf16.mxu0 0
      %2328 = vmatmul.mubr.bf16.gmra.mrb[0].mxu0 %v1112
      %v2329 = vpop.f32.mrb[0].mxu0
      %v2330 = vadd.f32 %v2221, %v2329
      %v2331 = vpop.f32.mrb[0].mxu0
      %v2332 = vpop.f32.mrb[0].mxu0
      %v2333 = vadd.f32 %v2221, %v2332
      %v2334 = vpop.f32.mrb[0].mxu0
      %2335 = vmatprep.mubr.bf16.mxu0 0
      %2336 = vmatmul.mubr.bf16.gmra.mrb[0].mxu0 %v1113
      %v2337 = vpop.f32.mrb[0].mxu0
      %v2338 = vadd.f32 %v2221, %v2337
      %v2339 = vpop.f32.mrb[0].mxu0
      %v2340 = vpop.f32.mrb[0].mxu0
      %v2341 = vadd.f32 %v2221, %v2340
      %v2342 = vpop.f32.mrb[0].mxu0
      %2343 = vmatprep.mubr.bf16.mxu0 0
      %2344 = vmatmul.mubr.bf16.gmra.mrb[0].mxu0 %v1114
      %v2345 = vpop.f32.mrb[0].mxu0
      %v2346 = vadd.f32 %v2221, %v2345
      %v2347 = vpop.f32.mrb[0].mxu0
      %v2348 = vpop.f32.mrb[0].mxu0
      %v2349 = vadd.f32 %v2221, %v2348
      %v2350 = vpop.f32.mrb[0].mxu0
      %2351 = vmatprep.mubr.bf16.mxu0 0
      %2352 = vmatmul.mubr.bf16.gmra.mrb[0].mxu0 %v1115
      %v2353 = vpop.f32.mrb[0].mxu0
      %v2354 = vadd.f32 %v2221, %v2353
      %v2355 = vpop.f32.mrb[0].mxu0
      %v2356 = vpop.f32.mrb[0].mxu0
      %v2357 = vadd.f32 %v2221, %v2356
      %v2358 = vpop.f32.mrb[0].mxu0
      %2359 = vmatprep.mubr.bf16.mxu0 0
      %2360 = vmatmul.mubr.bf16.gmra.mrb[0].mxu0 %v1116
      %v2361 = vpop.f32.mrb[0].mxu0
      %v2362 = vadd.f32 %v2221, %v2361
      %v2363 = vpop.f32.mrb[0].mxu0
      %v2364 = vpop.f32.mrb[0].mxu0
      %v2365 = vadd.f32 %v2221, %v2364
      %v2366 = vpop.f32.mrb[0].mxu0
      %2367 = vdwg.mxu0
      %v2368 = vpack.c.bf16 %v2309, %v2306
      %v2369 = vpack.c.bf16 %v2317, %v2314
      %v2370 = vpack.c.bf16 %v2325, %v2322
      %v2371 = vpack.c.bf16 %v2333, %v2330
      %v2372 = vpack.c.bf16 %v2341, %v2338
      %v2373 = vpack.c.bf16 %v2349, %v2346
      %v2374 = vpack.c.bf16 %v2357, %v2354
      %v2375 = vpack.c.bf16 %v2365, %v2362
      %s2376 = scalar_lea.vmem %s783, 64
      %v2377 = vld [vmem:[%s2376] sm:$0xf]
      %v2378 = vld [vmem:[%s2376 + $0x4] sm:$0xf]
      %v2379 = vld [vmem:[%s2376 + $0x8] sm:$0xf]
      %v2380 = vld [vmem:[%s2376 + $0xc] sm:$0xf]
      %v2381 = vld [vmem:[%s2376 + $0x10] sm:$0xf]
      %v2382 = vld [vmem:[%s2376 + $0x14] sm:$0xf]
      %v2383 = vld [vmem:[%s2376 + $0x18] sm:$0xf]
      %v2384 = vld [vmem:[%s2376 + $0x1c] sm:$0xf]
      %v2385 = vld [vmem:[%s2376 + $0x20] sm:$0xf]
      %v2386 = vld [vmem:[%s2376 + $0x24] sm:$0xf]
      %v2387 = vld [vmem:[%s2376 + $0x28] sm:$0xf]
      %v2388 = vld [vmem:[%s2376 + $0x2c] sm:$0xf]
      %v2389 = vld [vmem:[%s2376 + $0x30] sm:$0xf]
      %v2390 = vld [vmem:[%s2376 + $0x34] sm:$0xf]
      %v2391 = vld [vmem:[%s2376 + $0x38] sm:$0xf]
      %v2392 = vld [vmem:[%s2376 + $0x3c] sm:$0xf]
      %s2393 = scalar_lea.vmem %s787, 1
      %v2394 = vld [vmem:[%s2393] sm:$0x1]
      %v2396 = vlaneseq
      %v2397 = vshrl.u32 %v2396, 7
      %v2398 = vsub.s32 0, %v2397
      %v2399 = vrot.slane %v2394, %v2398
      %v2417 = vunpack.c.l.b16 %v2377
      %v2418 = vunpack.c.l.b16 %v2378
      %v2419 = vunpack.c.l.b16 %v2379
      %v2420 = vunpack.c.l.b16 %v2380
      %v2421 = vunpack.c.l.b16 %v2381
      %v2422 = vunpack.c.l.b16 %v2382
      %v2423 = vunpack.c.l.b16 %v2383
      %v2424 = vunpack.c.l.b16 %v2384
      %v2425 = vunpack.c.l.b16 %v2385
      %v2426 = vunpack.c.l.b16 %v2386
      %v2427 = vunpack.c.l.b16 %v2387
      %v2428 = vunpack.c.l.b16 %v2388
      %v2429 = vunpack.c.l.b16 %v2389
      %v2430 = vunpack.c.l.b16 %v2390
      %v2431 = vunpack.c.l.b16 %v2391
      %v2432 = vunpack.c.l.b16 %v2392
      %v2433 = vpack.c.b16 %v2418, %v2417
      %v2434 = vpack.c.b16 %v2420, %v2419
      %v2435 = vpack.c.b16 %v2422, %v2421
      %v2436 = vpack.c.b16 %v2424, %v2423
      %v2437 = vpack.c.b16 %v2426, %v2425
      %v2438 = vpack.c.b16 %v2428, %v2427
      %v2439 = vpack.c.b16 %v2430, %v2429
      %v2440 = vpack.c.b16 %v2432, %v2431
      %2449 = vmatprep.subr.bf16.mxu0 0
      %2450 = vmatpush1.bf16.msra.mxu0 %v2433
      %2451 = vmatprep.subr.bf16.mxu0 0
      %2452 = vmatpush1.bf16.msra.mxu0 %v2434
      %2453 = vmatprep.subr.bf16.mxu0 0
      %2454 = vmatpush1.bf16.msra.mxu0 %v2435
      %2455 = vmatprep.subr.bf16.mxu0 0
      %2456 = vmatpush1.bf16.msra.mxu0 %v2436
      %2457 = vmatprep.subr.bf16.mxu0 0
      %2458 = vmatpush1.bf16.msra.mxu0 %v2437
      %2459 = vmatprep.subr.bf16.mxu0 0
      %2460 = vmatpush1.bf16.msra.mxu0 %v2438
      %2461 = vmatprep.subr.bf16.mxu0 0
      %2462 = vmatpush1.bf16.msra.mxu0 %v2439
      %2463 = vmatprep.subr.bf16.mxu0 0
      %2464 = vmatpush1.bf16.msra.mxu0 %v2440
      %2465 = vmatprep.subr.bf16.mxu0 0
      %2466 = vmatpush1.bf16.msra.mxu0 0
      %2467 = vmatprep.subr.bf16.mxu0 0
      %2468 = vmatpush1.bf16.msra.mxu0 0
      %2469 = vmatprep.subr.bf16.mxu0 0
      %2470 = vmatpush1.bf16.msra.mxu0 0
      %2471 = vmatprep.subr.bf16.mxu0 0
      %2472 = vmatpush1.bf16.msra.mxu0 0
      %2473 = vmatprep.subr.bf16.mxu0 0
      %2474 = vmatpush1.bf16.msra.mxu0 0
      %2475 = vmatprep.subr.bf16.mxu0 0
      %2476 = vmatpush1.bf16.msra.mxu0 0
      %2477 = vmatprep.subr.bf16.mxu0 0
      %2478 = vmatpush1.bf16.msra.mxu0 0
      %2479 = vmatprep.subr.bf16.mxu0 0
      %2480 = vmatpush1.bf16.msra.mxu0 0
      %2481 = vmatprep.mubr.bf16.mxu0 0
      %2482 = vmatmul.mubr.bf16.gmra.mrb[0].mxu0 %v1109
      %v2483 = vpop.f32.mrb[0].mxu0
      %v2484 = vadd.f32 %v2399, %v2483
      %v2485 = vpop.f32.mrb[0].mxu0
      %v2486 = vpop.f32.mrb[0].mxu0
      %v2487 = vadd.f32 %v2399, %v2486
      %v2488 = vpop.f32.mrb[0].mxu0
      %2489 = vmatprep.mubr.bf16.mxu0 0
      %2490 = vmatmul.mubr.bf16.gmra.mrb[0].mxu0 %v1110
      %v2491 = vpop.f32.mrb[0].mxu0
      %v2492 = vadd.f32 %v2399, %v2491
      %v2493 = vpop.f32.mrb[0].mxu0
      %v2494 = vpop.f32.mrb[0].mxu0
      %v2495 = vadd.f32 %v2399, %v2494
      %v2496 = vpop.f32.mrb[0].mxu0
      %2497 = vmatprep.mubr.bf16.mxu0 0
      %2498 = vmatmul.mubr.bf16.gmra.mrb[0].mxu0 %v1111
      %v2499 = vpop.f32.mrb[0].mxu0
      %v2500 = vadd.f32 %v2399, %v2499
      %v2501 = vpop.f32.mrb[0].mxu0
      %v2502 = vpop.f32.mrb[0].mxu0
      %v2503 = vadd.f32 %v2399, %v2502
      %v2504 = vpop.f32.mrb[0].mxu0
      %2505 = vmatprep.mubr.bf16.mxu0 0
      %2506 = vmatmul.mubr.bf16.gmra.mrb[0].mxu0 %v1112
      %v2507 = vpop.f32.mrb[0].mxu0
      %v2508 = vadd.f32 %v2399, %v2507
      %v2509 = vpop.f32.mrb[0].mxu0
      %v2510 = vpop.f32.mrb[0].mxu0
      %v2511 = vadd.f32 %v2399, %v2510
      %v2512 = vpop.f32.mrb[0].mxu0
      %2513 = vmatprep.mubr.bf16.mxu0 0
      %2514 = vmatmul.mubr.bf16.gmra.mrb[0].mxu0 %v1113
      %v2515 = vpop.f32.mrb[0].mxu0
      %v2516 = vadd.f32 %v2399, %v2515
      %v2517 = vpop.f32.mrb[0].mxu0
      %v2518 = vpop.f32.mrb[0].mxu0
      %v2519 = vadd.f32 %v2399, %v2518
      %v2520 = vpop.f32.mrb[0].mxu0
      %2521 = vmatprep.mubr.bf16.mxu0 0
      %2522 = vmatmul.mubr.bf16.gmra.mrb[0].mxu0 %v1114
      %v2523 = vpop.f32.mrb[0].mxu0
      %v2524 = vadd.f32 %v2399, %v2523
      %v2525 = vpop.f32.mrb[0].mxu0
      %v2526 = vpop.f32.mrb[0].mxu0
      %v2527 = vadd.f32 %v2399, %v2526
      %v2528 = vpop.f32.mrb[0].mxu0
      %2529 = vmatprep.mubr.bf16.mxu0 0
      %2530 = vmatmul.mubr.bf16.gmra.mrb[0].mxu0 %v1115
      %v2531 = vpop.f32.mrb[0].mxu0
      %v2532 = vadd.f32 %v2399, %v2531
      %v2533 = vpop.f32.mrb[0].mxu0
      %v2534 = vpop.f32.mrb[0].mxu0
      %v2535 = vadd.f32 %v2399, %v2534
      %v2536 = vpop.f32.mrb[0].mxu0
      %2537 = vmatprep.mubr.bf16.mxu0 0
      %2538 = vmatmul.mubr.bf16.gmra.mrb[0].mxu0 %v1116
      %v2539 = vpop.f32.mrb[0].mxu0
      %v2540 = vadd.f32 %v2399, %v2539
      %v2541 = vpop.f32.mrb[0].mxu0
      %v2542 = vpop.f32.mrb[0].mxu0
      %v2543 = vadd.f32 %v2399, %v2542
      %v2544 = vpop.f32.mrb[0].mxu0
      %2545 = vdwg.mxu0
      %v2546 = vpack.c.bf16 %v2487, %v2484
      %v2547 = vpack.c.bf16 %v2495, %v2492
      %v2548 = vpack.c.bf16 %v2503, %v2500
      %v2549 = vpack.c.bf16 %v2511, %v2508
      %v2550 = vpack.c.bf16 %v2519, %v2516
      %v2551 = vpack.c.bf16 %v2527, %v2524
      %v2552 = vpack.c.bf16 %v2535, %v2532
      %v2553 = vpack.c.bf16 %v2543, %v2540
      %s2554 = scalar_lea.vmem %s792, 64
      %v2555 = vld [vmem:[%s2554] sm:$0xf]
      %v2556 = vld [vmem:[%s2554 + $0x4] sm:$0xf]
      %v2557 = vld [vmem:[%s2554 + $0x8] sm:$0xf]
      %v2558 = vld [vmem:[%s2554 + $0xc] sm:$0xf]
      %v2559 = vld [vmem:[%s2554 + $0x10] sm:$0xf]
      %v2560 = vld [vmem:[%s2554 + $0x14] sm:$0xf]
      %v2561 = vld [vmem:[%s2554 + $0x18] sm:$0xf]
      %v2562 = vld [vmem:[%s2554 + $0x1c] sm:$0xf]
      %v2563 = vld [vmem:[%s2554 + $0x20] sm:$0xf]
      %v2564 = vld [vmem:[%s2554 + $0x24] sm:$0xf]
      %v2565 = vld [vmem:[%s2554 + $0x28] sm:$0xf]
      %v2566 = vld [vmem:[%s2554 + $0x2c] sm:$0xf]
      %v2567 = vld [vmem:[%s2554 + $0x30] sm:$0xf]
      %v2568 = vld [vmem:[%s2554 + $0x34] sm:$0xf]
      %v2569 = vld [vmem:[%s2554 + $0x38] sm:$0xf]
      %v2570 = vld [vmem:[%s2554 + $0x3c] sm:$0xf]
      %s2571 = scalar_lea.vmem %s796, 1
      %v2572 = vld [vmem:[%s2571] sm:$0x1]
      %v2574 = vlaneseq
      %v2575 = vshrl.u32 %v2574, 7
      %v2576 = vsub.s32 0, %v2575
      %v2577 = vrot.slane %v2572, %v2576
      %v2595 = vunpack.c.l.b16 %v2555
      %v2596 = vunpack.c.l.b16 %v2556
      %v2597 = vunpack.c.l.b16 %v2557
      %v2598 = vunpack.c.l.b16 %v2558
      %v2599 = vunpack.c.l.b16 %v2559
      %v2600 = vunpack.c.l.b16 %v2560
      %v2601 = vunpack.c.l.b16 %v2561
      %v2602 = vunpack.c.l.b16 %v2562
      %v2603 = vunpack.c.l.b16 %v2563
      %v2604 = vunpack.c.l.b16 %v2564
      %v2605 = vunpack.c.l.b16 %v2565
      %v2606 = vunpack.c.l.b16 %v2566
      %v2607 = vunpack.c.l.b16 %v2567
      %v2608 = vunpack.c.l.b16 %v2568
      %v2609 = vunpack.c.l.b16 %v2569
      %v2610 = vunpack.c.l.b16 %v2570
      %v2611 = vpack.c.b16 %v2596, %v2595
      %v2612 = vpack.c.b16 %v2598, %v2597
      %v2613 = vpack.c.b16 %v2600, %v2599
      %v2614 = vpack.c.b16 %v2602, %v2601
      %v2615 = vpack.c.b16 %v2604, %v2603
      %v2616 = vpack.c.b16 %v2606, %v2605
      %v2617 = vpack.c.b16 %v2608, %v2607
      %v2618 = vpack.c.b16 %v2610, %v2609
      %2627 = vmatprep.subr.bf16.mxu0 0
      %2628 = vmatpush1.bf16.msra.mxu0 %v2611
      %2629 = vmatprep.subr.bf16.mxu0 0
      %2630 = vmatpush1.bf16.msra.mxu0 %v2612
      %2631 = vmatprep.subr.bf16.mxu0 0
      %2632 = vmatpush1.bf16.msra.mxu0 %v2613
      %2633 = vmatprep.subr.bf16.mxu0 0
      %2634 = vmatpush1.bf16.msra.mxu0 %v2614
      %2635 = vmatprep.subr.bf16.mxu0 0
      %2636 = vmatpush1.bf16.msra.mxu0 %v2615
      %2637 = vmatprep.subr.bf16.mxu0 0
      %2638 = vmatpush1.bf16.msra.mxu0 %v2616
      %2639 = vmatprep.subr.bf16.mxu0 0
      %2640 = vmatpush1.bf16.msra.mxu0 %v2617
      %2641 = vmatprep.subr.bf16.mxu0 0
      %2642 = vmatpush1.bf16.msra.mxu0 %v2618
      %2643 = vmatprep.subr.bf16.mxu0 0
      %2644 = vmatpush1.bf16.msra.mxu0 0
      %2645 = vmatprep.subr.bf16.mxu0 0
      %2646 = vmatpush1.bf16.msra.mxu0 0
      %2647 = vmatprep.subr.bf16.mxu0 0
      %2648 = vmatpush1.bf16.msra.mxu0 0
      %2649 = vmatprep.subr.bf16.mxu0 0
      %2650 = vmatpush1.bf16.msra.mxu0 0
      %2651 = vmatprep.subr.bf16.mxu0 0
      %2652 = vmatpush1.bf16.msra.mxu0 0
      %2653 = vmatprep.subr.bf16.mxu0 0
      %2654 = vmatpush1.bf16.msra.mxu0 0
      %2655 = vmatprep.subr.bf16.mxu0 0
      %2656 = vmatpush1.bf16.msra.mxu0 0
      %2657 = vmatprep.subr.bf16.mxu0 0
      %2658 = vmatpush1.bf16.msra.mxu0 0
      %2659 = vmatprep.mubr.bf16.mxu0 0
      %2660 = vmatmul.mubr.bf16.gmra.mrb[0].mxu0 %v1109
      %v2661 = vpop.f32.mrb[0].mxu0
      %v2662 = vadd.f32 %v2577, %v2661
      %v2663 = vpop.f32.mrb[0].mxu0
      %v2664 = vpop.f32.mrb[0].mxu0
      %v2665 = vadd.f32 %v2577, %v2664
      %v2666 = vpop.f32.mrb[0].mxu0
      %2667 = vmatprep.mubr.bf16.mxu0 0
      %2668 = vmatmul.mubr.bf16.gmra.mrb[0].mxu0 %v1110
      %v2669 = vpop.f32.mrb[0].mxu0
      %v2670 = vadd.f32 %v2577, %v2669
      %v2671 = vpop.f32.mrb[0].mxu0
      %v2672 = vpop.f32.mrb[0].mxu0
      %v2673 = vadd.f32 %v2577, %v2672
      %v2674 = vpop.f32.mrb[0].mxu0
      %2675 = vmatprep.mubr.bf16.mxu0 0
      %2676 = vmatmul.mubr.bf16.gmra.mrb[0].mxu0 %v1111
      %v2677 = vpop.f32.mrb[0].mxu0
      %v2678 = vadd.f32 %v2577, %v2677
      %v2679 = vpop.f32.mrb[0].mxu0
      %v2680 = vpop.f32.mrb[0].mxu0
      %v2681 = vadd.f32 %v2577, %v2680
      %v2682 = vpop.f32.mrb[0].mxu0
      %2683 = vmatprep.mubr.bf16.mxu0 0
      %2684 = vmatmul.mubr.bf16.gmra.mrb[0].mxu0 %v1112
      %v2685 = vpop.f32.mrb[0].mxu0
      %v2686 = vadd.f32 %v2577, %v2685
      %v2687 = vpop.f32.mrb[0].mxu0
      %v2688 = vpop.f32.mrb[0].mxu0
      %v2689 = vadd.f32 %v2577, %v2688
      %v2690 = vpop.f32.mrb[0].mxu0
      %2691 = vmatprep.mubr.bf16.mxu0 0
      %2692 = vmatmul.mubr.bf16.gmra.mrb[0].mxu0 %v1113
      %v2693 = vpop.f32.mrb[0].mxu0
      %v2694 = vadd.f32 %v2577, %v2693
      %v2695 = vpop.f32.mrb[0].mxu0
      %v2696 = vpop.f32.mrb[0].mxu0
      %v2697 = vadd.f32 %v2577, %v2696
      %v2698 = vpop.f32.mrb[0].mxu0
      %2699 = vmatprep.mubr.bf16.mxu0 0
      %2700 = vmatmul.mubr.bf16.gmra.mrb[0].mxu0 %v1114
      %v2701 = vpop.f32.mrb[0].mxu0
      %v2702 = vadd.f32 %v2577, %v2701
      %v2703 = vpop.f32.mrb[0].mxu0
      %v2704 = vpop.f32.mrb[0].mxu0
      %v2705 = vadd.f32 %v2577, %v2704
      %v2706 = vpop.f32.mrb[0].mxu0
      %2707 = vmatprep.mubr.bf16.mxu0 0
      %2708 = vmatmul.mubr.bf16.gmra.mrb[0].mxu0 %v1115
      %v2709 = vpop.f32.mrb[0].mxu0
      %v2710 = vadd.f32 %v2577, %v2709
      %v2711 = vpop.f32.mrb[0].mxu0
      %v2712 = vpop.f32.mrb[0].mxu0
      %v2713 = vadd.f32 %v2577, %v2712
      %v2714 = vpop.f32.mrb[0].mxu0
      %2715 = vmatprep.mubr.bf16.mxu0 0
      %2716 = vmatmul.mubr.bf16.gmra.mrb[0].mxu0 %v1116
      %v2717 = vpop.f32.mrb[0].mxu0
      %v2718 = vadd.f32 %v2577, %v2717
      %v2719 = vpop.f32.mrb[0].mxu0
      %v2720 = vpop.f32.mrb[0].mxu0
      %v2721 = vadd.f32 %v2577, %v2720
      %v2722 = vpop.f32.mrb[0].mxu0
      %2723 = vdwg.mxu0
      %v2724 = vpack.c.bf16 %v2665, %v2662
      %v2725 = vpack.c.bf16 %v2673, %v2670
      %v2726 = vpack.c.bf16 %v2681, %v2678
      %v2727 = vpack.c.bf16 %v2689, %v2686
      %v2728 = vpack.c.bf16 %v2697, %v2694
      %v2729 = vpack.c.bf16 %v2705, %v2702
      %v2730 = vpack.c.bf16 %v2713, %v2710
      %v2731 = vpack.c.bf16 %v2721, %v2718
      %v2733 = vsel %vm1696, %v2368, 0
      %v2736 = vsel %vm1696, %v2369, 0
      %v2739 = vsel %vm1696, %v2370, 0
      %v2742 = vsel %vm1696, %v2371, 0
      %v2745 = vsel %vm1696, %v2546, 0
      %v2748 = vsel %vm1696, %v2547, 0
      %v2751 = vsel %vm1696, %v2548, 0
      %v2754 = vsel %vm1696, %v2549, 0
      %2756 = vmatprep.subr.bf16.mxu0 0
      %2757 = vmatpush1.bf16.xpose.msra.mxu0 %v2745
      %2758 = vmatprep.subr.bf16.mxu0 0
      %2759 = vmatpush1.bf16.xpose.msra.mxu0 %v2748
      %2760 = vmatprep.subr.bf16.mxu0 0
      %2761 = vmatpush1.bf16.xpose.msra.mxu0 %v2751
      %2762 = vmatprep.subr.bf16.mxu0 0
      %2763 = vmatpush1.bf16.xpose.msra.mxu0 %v2754
      %2764 = vmatprep.subr.bf16.mxu0 0
      %2765 = vmatpush1.bf16.xpose.msra.mxu0 0
      %2766 = vmatprep.subr.bf16.mxu0 0
      %2767 = vmatpush1.bf16.xpose.msra.mxu0 0
      %2768 = vmatprep.subr.bf16.mxu0 0
      %2769 = vmatpush1.bf16.xpose.msra.mxu0 0
      %2770 = vmatprep.subr.bf16.mxu0 0
      %2771 = vmatpush1.bf16.xpose.msra.mxu0 0
      %2772 = vmatprep.subr.bf16.mxu0 0
      %2773 = vmatpush1.bf16.xpose.msra.mxu0 0
      %2774 = vmatprep.subr.bf16.mxu0 0
      %2775 = vmatpush1.bf16.xpose.msra.mxu0 0
      %2776 = vmatprep.subr.bf16.mxu0 0
      %2777 = vmatpush1.bf16.xpose.msra.mxu0 0
      %2778 = vmatprep.subr.bf16.mxu0 0
      %2779 = vmatpush1.bf16.xpose.msra.mxu0 0
      %2780 = vmatprep.subr.bf16.mxu0 0
      %2781 = vmatpush1.bf16.xpose.msra.mxu0 0
      %2782 = vmatprep.subr.bf16.mxu0 0
      %2783 = vmatpush1.bf16.xpose.msra.mxu0 0
      %2784 = vmatprep.subr.bf16.mxu0 0
      %2785 = vmatpush1.bf16.xpose.msra.mxu0 0
      %2786 = vmatprep.subr.bf16.mxu0 0
      %2787 = vmatpush1.bf16.xpose.msra.mxu0 0
      %2788 = vmatprep.mubr.bf16.mxu0 0
      %2789 = vmatmul.mubr.bf16.gmra.mrb[0].mxu0 %v2733
      %v2790 = vpop.f32.mrb[0].mxu0
      %v2791 = vadd.f32 %v1136, %v2790
      %v2792 = vpop.f32.mrb[0].mxu0
      %v2793 = vpop.f32.mrb[0].mxu0
      %v2794 = vadd.f32 %v1137, %v2793
      %v2795 = vpop.f32.mrb[0].mxu0
      %2796 = vmatprep.mubr.bf16.mxu0 0
      %2797 = vmatmul.mubr.bf16.gmra.mrb[0].mxu0 %v2736
      %v2798 = vpop.f32.mrb[0].mxu0
      %v2799 = vadd.f32 %v1138, %v2798
      %v2800 = vpop.f32.mrb[0].mxu0
      %v2801 = vpop.f32.mrb[0].mxu0
      %v2802 = vadd.f32 %v1139, %v2801
      %v2803 = vpop.f32.mrb[0].mxu0
      %2804 = vmatprep.mubr.bf16.mxu0 0
      %2805 = vmatmul.mubr.bf16.gmra.mrb[0].mxu0 %v2739
      %v2806 = vpop.f32.mrb[0].mxu0
      %v2807 = vadd.f32 %v1140, %v2806
      %v2808 = vpop.f32.mrb[0].mxu0
      %v2809 = vpop.f32.mrb[0].mxu0
      %v2810 = vadd.f32 %v1141, %v2809
      %v2811 = vpop.f32.mrb[0].mxu0
      %2812 = vmatprep.mubr.bf16.mxu0 0
      %2813 = vmatmul.mubr.bf16.gmra.mrb[0].mxu0 %v2742
      %v2814 = vpop.f32.mrb[0].mxu0
      %v2815 = vadd.f32 %v1142, %v2814
      %v2816 = vpop.f32.mrb[0].mxu0
      %v2817 = vpop.f32.mrb[0].mxu0
      %v2818 = vadd.f32 %v1143, %v2817
      %v2819 = vpop.f32.mrb[0].mxu0
      %2820 = vdwg.mxu0
      %v2821 = vsel %vm1786, %v2791, -inf
      %2822 = vmax.xlane.f32.xlu0 %v2821
      %v2823 = vpop.xlane.xlu0 %2822
      %v2824 = vsel %vm1786, %v2794, -inf
      %2825 = vmax.xlane.f32.xlu0 %v2824
      %v2826 = vpop.xlane.xlu0 %2825
      %v2827 = vsel %vm1786, %v2799, -inf
      %2828 = vmax.xlane.f32.xlu0 %v2827
      %v2829 = vpop.xlane.xlu0 %2828
      %v2830 = vsel %vm1786, %v2802, -inf
      %2831 = vmax.xlane.f32.xlu0 %v2830
      %v2832 = vpop.xlane.xlu0 %2831
      %v2833 = vsel %vm1786, %v2807, -inf
      %2834 = vmax.xlane.f32.xlu0 %v2833
      %v2835 = vpop.xlane.xlu0 %2834
      %v2836 = vsel %vm1786, %v2810, -inf
      %2837 = vmax.xlane.f32.xlu0 %v2836
      %v2838 = vpop.xlane.xlu0 %2837
      %v2839 = vsel %vm1786, %v2815, -inf
      %2840 = vmax.xlane.f32.xlu0 %v2839
      %v2841 = vpop.xlane.xlu0 %2840
      %v2842 = vsel %vm1786, %v2818, -inf
      %2843 = vmax.xlane.f32.xlu0 %v2842
      %v2844 = vpop.xlane.xlu0 %2843
      %v2845 = vsub.f32 %v2791, %v2823
      %v2846 = vsub.f32 %v2794, %v2826
      %v2847 = vsub.f32 %v2799, %v2829
      %v2848 = vsub.f32 %v2802, %v2832
      %v2849 = vsub.f32 %v2807, %v2835
      %v2850 = vsub.f32 %v2810, %v2838
      %v2851 = vsub.f32 %v2815, %v2841
      %v2852 = vsub.f32 %v2818, %v2844
      %v2853 = vmul.f32 %v2845, 1.442695
      %v2854 = vpow.pop %v2853
      %v2855 = vmul.f32 %v2846, 1.442695
      %v2856 = vpow.pop %v2855
      %v2857 = vmul.f32 %v2847, 1.442695
      %v2858 = vpow.pop %v2857
      %v2859 = vmul.f32 %v2848, 1.442695
      %v2860 = vpow.pop %v2859
      %v2861 = vmul.f32 %v2849, 1.442695
      %v2862 = vpow.pop %v2861
      %v2863 = vmul.f32 %v2850, 1.442695
      %v2864 = vpow.pop %v2863
      %v2865 = vmul.f32 %v2851, 1.442695
      %v2866 = vpow.pop %v2865
      %v2867 = vmul.f32 %v2852, 1.442695
      %v2868 = vpow.pop %v2867
      %v2869 = vsel %vm1786, %v2854, 0.0
      %2870 = vadd.xlane.f32.xlu0 %v2869
      %v2871 = vpop.xlane.xlu0 %2870
      %v2872 = vsel %vm1786, %v2856, 0.0
      %2873 = vadd.xlane.f32.xlu0 %v2872
      %v2874 = vpop.xlane.xlu0 %2873
      %v2875 = vsel %vm1786, %v2858, 0.0
      %2876 = vadd.xlane.f32.xlu0 %v2875
      %v2877 = vpop.xlane.xlu0 %2876
      %v2878 = vsel %vm1786, %v2860, 0.0
      %2879 = vadd.xlane.f32.xlu0 %v2878
      %v2880 = vpop.xlane.xlu0 %2879
      %v2881 = vsel %vm1786, %v2862, 0.0
      %2882 = vadd.xlane.f32.xlu0 %v2881
      %v2883 = vpop.xlane.xlu0 %2882
      %v2884 = vsel %vm1786, %v2864, 0.0
      %2885 = vadd.xlane.f32.xlu0 %v2884
      %v2886 = vpop.xlane.xlu0 %2885
      %v2887 = vsel %vm1786, %v2866, 0.0
      %2888 = vadd.xlane.f32.xlu0 %v2887
      %v2889 = vpop.xlane.xlu0 %2888
      %v2890 = vsel %vm1786, %v2868, 0.0
      %2891 = vadd.xlane.f32.xlu0 %v2890
      %v2892 = vpop.xlane.xlu0 %2891
      %v2893 = vrcp.pop %v2871
      %v2894 = vrcp.pop %v2874
      %v2895 = vrcp.pop %v2877
      %v2896 = vrcp.pop %v2880
      %v2897 = vrcp.pop %v2883
      %v2898 = vrcp.pop %v2886
      %v2899 = vrcp.pop %v2889
      %v2900 = vrcp.pop %v2892
      %v2901 = vmul.f32 %v2854, %v2893
      %v2902 = vmul.f32 %v2856, %v2894
      %v2903 = vmul.f32 %v2858, %v2895
      %v2904 = vmul.f32 %v2860, %v2896
      %v2905 = vmul.f32 %v2862, %v2897
      %v2906 = vmul.f32 %v2864, %v2898
      %v2907 = vmul.f32 %v2866, %v2899
      %v2908 = vmul.f32 %v2868, %v2900
      %v2909 = vpack.c.bf16 %v2902, %v2901
      %v2910 = vpack.c.bf16 %v2904, %v2903
      %v2911 = vpack.c.bf16 %v2906, %v2905
      %v2912 = vpack.c.bf16 %v2908, %v2907
      %v2914 = vsel %vm1786, %v2909, 0
      %v2917 = vsel %vm1786, %v2910, 0
      %v2920 = vsel %vm1786, %v2911, 0
      %v2923 = vsel %vm1786, %v2912, 0
      %2925 = vmatprep.subr.bf16.mxu0 0
      %2926 = vmatpush1.bf16.msra.mxu0 %v2724
      %2927 = vmatprep.subr.bf16.mxu0 0
      %2928 = vmatpush1.bf16.msra.mxu0 %v2725
      %2929 = vmatprep.subr.bf16.mxu0 0
      %2930 = vmatpush1.bf16.msra.mxu0 %v2726
      %2931 = vmatprep.subr.bf16.mxu0 0
      %2932 = vmatpush1.bf16.msra.mxu0 %v2727
      %2933 = vmatprep.subr.bf16.mxu0 0
      %2934 = vmatpush1.bf16.msra.mxu0 0
      %2935 = vmatprep.subr.bf16.mxu0 0
      %2936 = vmatpush1.bf16.msra.mxu0 0
      %2937 = vmatprep.subr.bf16.mxu0 0
      %2938 = vmatpush1.bf16.msra.mxu0 0
      %2939 = vmatprep.subr.bf16.mxu0 0
      %2940 = vmatpush1.bf16.msra.mxu0 0
      %2941 = vmatprep.subr.bf16.mxu0 0
      %2942 = vmatpush1.bf16.msra.mxu0 0
      %2943 = vmatprep.subr.bf16.mxu0 0
      %2944 = vmatpush1.bf16.msra.mxu0 0
      %2945 = vmatprep.subr.bf16.mxu0 0
      %2946 = vmatpush1.bf16.msra.mxu0 0
      %2947 = vmatprep.subr.bf16.mxu0 0
      %2948 = vmatpush1.bf16.msra.mxu0 0
      %2949 = vmatprep.subr.bf16.mxu0 0
      %2950 = vmatpush1.bf16.msra.mxu0 0
      %2951 = vmatprep.subr.bf16.mxu0 0
      %2952 = vmatpush1.bf16.msra.mxu0 0
      %2953 = vmatprep.subr.bf16.mxu0 0
      %2954 = vmatpush1.bf16.msra.mxu0 0
      %2955 = vmatprep.subr.bf16.mxu0 0
      %2956 = vmatpush1.bf16.msra.mxu0 0
      %2957 = vmatprep.mubr.bf16.mxu0 0
      %2958 = vmatmul.mubr.bf16.gmra.mrb[0].mxu0 %v2914
      %v2959 = vpop.f32.mrb[0].mxu0
      %v2960 = vadd.f32 0.0, %v2959
      %v2961 = vpop.f32.mrb[0].mxu0
      %v2962 = vpop.f32.mrb[0].mxu0
      %v2963 = vadd.f32 0.0, %v2962
      %v2964 = vpop.f32.mrb[0].mxu0
      %2965 = vmatprep.mubr.bf16.mxu0 0
      %2966 = vmatmul.mubr.bf16.gmra.mrb[0].mxu0 %v2917
      %v2967 = vpop.f32.mrb[0].mxu0
      %v2968 = vadd.f32 0.0, %v2967
      %v2969 = vpop.f32.mrb[0].mxu0
      %v2970 = vpop.f32.mrb[0].mxu0
      %v2971 = vadd.f32 0.0, %v2970
      %v2972 = vpop.f32.mrb[0].mxu0
      %2973 = vmatprep.mubr.bf16.mxu0 0
      %2974 = vmatmul.mubr.bf16.gmra.mrb[0].mxu0 %v2920
      %v2975 = vpop.f32.mrb[0].mxu0
      %v2976 = vadd.f32 0.0, %v2975
      %v2977 = vpop.f32.mrb[0].mxu0
      %v2978 = vpop.f32.mrb[0].mxu0
      %v2979 = vadd.f32 0.0, %v2978
      %v2980 = vpop.f32.mrb[0].mxu0
      %2981 = vmatprep.mubr.bf16.mxu0 0
      %2982 = vmatmul.mubr.bf16.gmra.mrb[0].mxu0 %v2923
      %v2983 = vpop.f32.mrb[0].mxu0
      %v2984 = vadd.f32 0.0, %v2983
      %v2985 = vpop.f32.mrb[0].mxu0
      %v2986 = vpop.f32.mrb[0].mxu0
      %v2987 = vadd.f32 0.0, %v2986
      %v2988 = vpop.f32.mrb[0].mxu0
      %2989 = vdwg.mxu0
      %v2991 = vsel %vm1696, %v2372, 0
      %v2994 = vsel %vm1696, %v2373, 0
      %v2997 = vsel %vm1696, %v2374, 0
      %v3000 = vsel %vm1696, %v2375, 0
      %v3003 = vsel %vm1696, %v2550, 0
      %v3006 = vsel %vm1696, %v2551, 0
      %v3009 = vsel %vm1696, %v2552, 0
      %v3012 = vsel %vm1696, %v2553, 0
      %3014 = vmatprep.subr.bf16.mxu0 0
      %3015 = vmatpush1.bf16.xpose.msra.mxu0 %v2745
      %3016 = vmatprep.subr.bf16.mxu0 0
      %3017 = vmatpush1.bf16.xpose.msra.mxu0 %v2748
      %3018 = vmatprep.subr.bf16.mxu0 0
      %3019 = vmatpush1.bf16.xpose.msra.mxu0 %v2751
      %3020 = vmatprep.subr.bf16.mxu0 0
      %3021 = vmatpush1.bf16.xpose.msra.mxu0 %v2754
      %3022 = vmatprep.subr.bf16.mxu0 0
      %3023 = vmatpush1.bf16.xpose.msra.mxu0 %v3003
      %3024 = vmatprep.subr.bf16.mxu0 0
      %3025 = vmatpush1.bf16.xpose.msra.mxu0 %v3006
      %3026 = vmatprep.subr.bf16.mxu0 0
      %3027 = vmatpush1.bf16.xpose.msra.mxu0 %v3009
      %3028 = vmatprep.subr.bf16.mxu0 0
      %3029 = vmatpush1.bf16.xpose.msra.mxu0 %v3012
      %3030 = vmatprep.subr.bf16.mxu0 0
      %3031 = vmatpush1.bf16.xpose.msra.mxu0 0
      %3032 = vmatprep.subr.bf16.mxu0 0
      %3033 = vmatpush1.bf16.xpose.msra.mxu0 0
      %3034 = vmatprep.subr.bf16.mxu0 0
      %3035 = vmatpush1.bf16.xpose.msra.mxu0 0
      %3036 = vmatprep.subr.bf16.mxu0 0
      %3037 = vmatpush1.bf16.xpose.msra.mxu0 0
      %3038 = vmatprep.subr.bf16.mxu0 0
      %3039 = vmatpush1.bf16.xpose.msra.mxu0 0
      %3040 = vmatprep.subr.bf16.mxu0 0
      %3041 = vmatpush1.bf16.xpose.msra.mxu0 0
      %3042 = vmatprep.subr.bf16.mxu0 0
      %3043 = vmatpush1.bf16.xpose.msra.mxu0 0
      %3044 = vmatprep.subr.bf16.mxu0 0
      %3045 = vmatpush1.bf16.xpose.msra.mxu0 0
      %3046 = vmatprep.mubr.bf16.mxu0 0
      %3047 = vmatmul.mubr.bf16.gmra.mrb[0].mxu0 %v2991
      %v3048 = vpop.f32.mrb[0].mxu0
      %v3049 = vadd.f32 %v1160, %v3048
      %v3050 = vpop.f32.mrb[0].mxu0
      %v3051 = vpop.f32.mrb[0].mxu0
      %v3052 = vadd.f32 %v1161, %v3051
      %v3053 = vpop.f32.mrb[0].mxu0
      %3054 = vmatprep.mubr.bf16.mxu0 0
      %3055 = vmatmul.mubr.bf16.gmra.mrb[0].mxu0 %v2994
      %v3056 = vpop.f32.mrb[0].mxu0
      %v3057 = vadd.f32 %v1162, %v3056
      %v3058 = vpop.f32.mrb[0].mxu0
      %v3059 = vpop.f32.mrb[0].mxu0
      %v3060 = vadd.f32 %v1163, %v3059
      %v3061 = vpop.f32.mrb[0].mxu0
      %3062 = vmatprep.mubr.bf16.mxu0 0
      %3063 = vmatmul.mubr.bf16.gmra.mrb[0].mxu0 %v2997
      %v3064 = vpop.f32.mrb[0].mxu0
      %v3065 = vadd.f32 %v1164, %v3064
      %v3066 = vpop.f32.mrb[0].mxu0
      %v3067 = vpop.f32.mrb[0].mxu0
      %v3068 = vadd.f32 %v1165, %v3067
      %v3069 = vpop.f32.mrb[0].mxu0
      %3070 = vmatprep.mubr.bf16.mxu0 0
      %3071 = vmatmul.mubr.bf16.gmra.mrb[0].mxu0 %v3000
      %v3072 = vpop.f32.mrb[0].mxu0
      %v3073 = vadd.f32 %v1166, %v3072
      %v3074 = vpop.f32.mrb[0].mxu0
      %v3075 = vpop.f32.mrb[0].mxu0
      %v3076 = vadd.f32 %v1167, %v3075
      %v3077 = vpop.f32.mrb[0].mxu0
      %3078 = vdwg.mxu0
      %3079 = vmax.xlane.f32.xlu0 %v3049
      %v3080 = vpop.xlane.xlu0 %3079
      %3081 = vmax.xlane.f32.xlu0 %v3052
      %v3082 = vpop.xlane.xlu0 %3081
      %3083 = vmax.xlane.f32.xlu0 %v3057
      %v3084 = vpop.xlane.xlu0 %3083
      %3085 = vmax.xlane.f32.xlu0 %v3060
      %v3086 = vpop.xlane.xlu0 %3085
      %3087 = vmax.xlane.f32.xlu0 %v3065
      %v3088 = vpop.xlane.xlu0 %3087
      %3089 = vmax.xlane.f32.xlu0 %v3068
      %v3090 = vpop.xlane.xlu0 %3089
      %3091 = vmax.xlane.f32.xlu0 %v3073
      %v3092 = vpop.xlane.xlu0 %3091
      %3093 = vmax.xlane.f32.xlu0 %v3076
      %v3094 = vpop.xlane.xlu0 %3093
      %v3095 = vsub.f32 %v3049, %v3080
      %v3096 = vsub.f32 %v3052, %v3082
      %v3097 = vsub.f32 %v3057, %v3084
      %v3098 = vsub.f32 %v3060, %v3086
      %v3099 = vsub.f32 %v3065, %v3088
      %v3100 = vsub.f32 %v3068, %v3090
      %v3101 = vsub.f32 %v3073, %v3092
      %v3102 = vsub.f32 %v3076, %v3094
      %v3103 = vmul.f32 %v3095, 1.442695
      %v3104 = vpow.pop %v3103
      %v3105 = vmul.f32 %v3096, 1.442695
      %v3106 = vpow.pop %v3105
      %v3107 = vmul.f32 %v3097, 1.442695
      %v3108 = vpow.pop %v3107
      %v3109 = vmul.f32 %v3098, 1.442695
      %v3110 = vpow.pop %v3109
      %v3111 = vmul.f32 %v3099, 1.442695
      %v3112 = vpow.pop %v3111
      %v3113 = vmul.f32 %v3100, 1.442695
      %v3114 = vpow.pop %v3113
      %v3115 = vmul.f32 %v3101, 1.442695
      %v3116 = vpow.pop %v3115
      %v3117 = vmul.f32 %v3102, 1.442695
      %v3118 = vpow.pop %v3117
      %3119 = vadd.xlane.f32.xlu0 %v3104
      %v3120 = vpop.xlane.xlu0 %3119
      %3121 = vadd.xlane.f32.xlu0 %v3106
      %v3122 = vpop.xlane.xlu0 %3121
      %3123 = vadd.xlane.f32.xlu0 %v3108
      %v3124 = vpop.xlane.xlu0 %3123
      %3125 = vadd.xlane.f32.xlu0 %v3110
      %v3126 = vpop.xlane.xlu0 %3125
      %3127 = vadd.xlane.f32.xlu0 %v3112
      %v3128 = vpop.xlane.xlu0 %3127
      %3129 = vadd.xlane.f32.xlu0 %v3114
      %v3130 = vpop.xlane.xlu0 %3129
      %3131 = vadd.xlane.f32.xlu0 %v3116
      %v3132 = vpop.xlane.xlu0 %3131
      %3133 = vadd.xlane.f32.xlu0 %v3118
      %v3134 = vpop.xlane.xlu0 %3133
      %v3135 = vrcp.pop %v3120
      %v3136 = vrcp.pop %v3122
      %v3137 = vrcp.pop %v3124
      %v3138 = vrcp.pop %v3126
      %v3139 = vrcp.pop %v3128
      %v3140 = vrcp.pop %v3130
      %v3141 = vrcp.pop %v3132
      %v3142 = vrcp.pop %v3134
      %v3143 = vmul.f32 %v3104, %v3135
      %v3144 = vmul.f32 %v3106, %v3136
      %v3145 = vmul.f32 %v3108, %v3137
      %v3146 = vmul.f32 %v3110, %v3138
      %v3147 = vmul.f32 %v3112, %v3139
      %v3148 = vmul.f32 %v3114, %v3140
      %v3149 = vmul.f32 %v3116, %v3141
      %v3150 = vmul.f32 %v3118, %v3142
      %v3151 = vpack.c.bf16 %v3144, %v3143
      %v3152 = vpack.c.bf16 %v3146, %v3145
      %v3153 = vpack.c.bf16 %v3148, %v3147
      %v3154 = vpack.c.bf16 %v3150, %v3149
      %3155 = vmatprep.subr.bf16.mxu0 0
      %3156 = vmatpush1.bf16.msra.mxu0 %v2724
      %3157 = vmatprep.subr.bf16.mxu0 0
      %3158 = vmatpush1.bf16.msra.mxu0 %v2725
      %3159 = vmatprep.subr.bf16.mxu0 0
      %3160 = vmatpush1.bf16.msra.mxu0 %v2726
      %3161 = vmatprep.subr.bf16.mxu0 0
      %3162 = vmatpush1.bf16.msra.mxu0 %v2727
      %3163 = vmatprep.subr.bf16.mxu0 0
      %3164 = vmatpush1.bf16.msra.mxu0 %v2728
      %3165 = vmatprep.subr.bf16.mxu0 0
      %3166 = vmatpush1.bf16.msra.mxu0 %v2729
      %3167 = vmatprep.subr.bf16.mxu0 0
      %3168 = vmatpush1.bf16.msra.mxu0 %v2730
      %3169 = vmatprep.subr.bf16.mxu0 0
      %3170 = vmatpush1.bf16.msra.mxu0 %v2731
      %3171 = vmatprep.subr.bf16.mxu0 0
      %3172 = vmatpush1.bf16.msra.mxu0 0
      %3173 = vmatprep.subr.bf16.mxu0 0
      %3174 = vmatpush1.bf16.msra.mxu0 0
      %3175 = vmatprep.subr.bf16.mxu0 0
      %3176 = vmatpush1.bf16.msra.mxu0 0
      %3177 = vmatprep.subr.bf16.mxu0 0
      %3178 = vmatpush1.bf16.msra.mxu0 0
      %3179 = vmatprep.subr.bf16.mxu0 0
      %3180 = vmatpush1.bf16.msra.mxu0 0
      %3181 = vmatprep.subr.bf16.mxu0 0
      %3182 = vmatpush1.bf16.msra.mxu0 0
      %3183 = vmatprep.subr.bf16.mxu0 0
      %3184 = vmatpush1.bf16.msra.mxu0 0
      %3185 = vmatprep.subr.bf16.mxu0 0
      %3186 = vmatpush1.bf16.msra.mxu0 0
      %3187 = vmatprep.mubr.bf16.mxu0 0
      %3188 = vmatmul.mubr.bf16.gmra.mrb[0].mxu0 %v3151
      %v3189 = vpop.f32.mrb[0].mxu0
      %v3190 = vadd.f32 0.0, %v3189
      %v3191 = vpop.f32.mrb[0].mxu0
      %v3192 = vpop.f32.mrb[0].mxu0
      %v3193 = vadd.f32 0.0, %v3192
      %v3194 = vpop.f32.mrb[0].mxu0
      %3195 = vmatprep.mubr.bf16.mxu0 0
      %3196 = vmatmul.mubr.bf16.gmra.mrb[0].mxu0 %v3152
      %v3197 = vpop.f32.mrb[0].mxu0
      %v3198 = vadd.f32 0.0, %v3197
      %v3199 = vpop.f32.mrb[0].mxu0
      %v3200 = vpop.f32.mrb[0].mxu0
      %v3201 = vadd.f32 0.0, %v3200
      %v3202 = vpop.f32.mrb[0].mxu0
      %3203 = vmatprep.mubr.bf16.mxu0 0
      %3204 = vmatmul.mubr.bf16.gmra.mrb[0].mxu0 %v3153
      %v3205 = vpop.f32.mrb[0].mxu0
      %v3206 = vadd.f32 0.0, %v3205
      %v3207 = vpop.f32.mrb[0].mxu0
      %v3208 = vpop.f32.mrb[0].mxu0
      %v3209 = vadd.f32 0.0, %v3208
      %v3210 = vpop.f32.mrb[0].mxu0
      %3211 = vmatprep.mubr.bf16.mxu0 0
      %3212 = vmatmul.mubr.bf16.gmra.mrb[0].mxu0 %v3154
      %v3213 = vpop.f32.mrb[0].mxu0
      %v3214 = vadd.f32 0.0, %v3213
      %v3215 = vpop.f32.mrb[0].mxu0
      %v3216 = vpop.f32.mrb[0].mxu0
      %v3217 = vadd.f32 0.0, %v3216
      %v3218 = vpop.f32.mrb[0].mxu0
      %3219 = vdwg.mxu0
      %v3220 = vpack.c.bf16 %v2963, %v2960
      %v3221 = vpack.c.bf16 %v2971, %v2968
      %v3222 = vpack.c.bf16 %v2979, %v2976
      %v3223 = vpack.c.bf16 %v2987, %v2984
      %v3224 = vpack.c.bf16 %v3193, %v3190
      %v3225 = vpack.c.bf16 %v3201, %v3198
      %v3226 = vpack.c.bf16 %v3209, %v3206
      %v3227 = vpack.c.bf16 %v3217, %v3214
      %s3228 = scalar_lea.vmem %s801, 16
      %v3229 = vld [vmem:[%s3228] sm:$0xf]
      %v3230 = vld [vmem:[%s3228 + $0x4] sm:$0xf]
      %v3231 = vld [vmem:[%s3228 + $0x8] sm:$0xf]
      %v3232 = vld [vmem:[%s3228 + $0xc] sm:$0xf]
      %v3237 = vunpack.c.l.b16 %v3229
      %v3238 = vunpack.c.l.b16 %v3230
      %v3239 = vunpack.c.l.b16 %v3231
      %v3240 = vunpack.c.l.b16 %v3232
      %v3241 = vpack.c.b16 %v3238, %v3237
      %v3242 = vpack.c.b16 %v3240, %v3239
      %v3246 = vsel %vm1696, %v3220, 0
      %v3249 = vsel %vm1696, %v3221, 0
      %v3252 = vsel %vm1696, %v3222, 0
      %v3255 = vsel %vm1696, %v3223, 0
      %v3258 = vsel %vm1696, %v3224, 0
      %v3261 = vsel %vm1696, %v3225, 0
      %v3264 = vsel %vm1696, %v3226, 0
      %v3267 = vsel %vm1696, %v3227, 0
      %3269 = vmatprep.subr.bf16.mxu0 0
      %3270 = vmatpush1.bf16.msra.mxu0 %v3241
      %3271 = vmatprep.subr.bf16.mxu0 0
      %3272 = vmatpush1.bf16.msra.mxu0 %v3242
      %3273 = vmatprep.subr.bf16.mxu0 0
      %3274 = vmatpush1.bf16.msra.mxu0 0
      %3275 = vmatprep.subr.bf16.mxu0 0
      %3276 = vmatpush1.bf16.msra.mxu0 0
      %3277 = vmatprep.subr.bf16.mxu0 0
      %3278 = vmatpush1.bf16.msra.mxu0 0
      %3279 = vmatprep.subr.bf16.mxu0 0
      %3280 = vmatpush1.bf16.msra.mxu0 0
      %3281 = vmatprep.subr.bf16.mxu0 0
      %3282 = vmatpush1.bf16.msra.mxu0 0
      %3283 = vmatprep.subr.bf16.mxu0 0
      %3284 = vmatpush1.bf16.msra.mxu0 0
      %3285 = vmatprep.subr.bf16.mxu0 0
      %3286 = vmatpush1.bf16.msra.mxu0 0
      %3287 = vmatprep.subr.bf16.mxu0 0
      %3288 = vmatpush1.bf16.msra.mxu0 0
      %3289 = vmatprep.subr.bf16.mxu0 0
      %3290 = vmatpush1.bf16.msra.mxu0 0
      %3291 = vmatprep.subr.bf16.mxu0 0
      %3292 = vmatpush1.bf16.msra.mxu0 0
      %3293 = vmatprep.subr.bf16.mxu0 0
      %3294 = vmatpush1.bf16.msra.mxu0 0
      %3295 = vmatprep.subr.bf16.mxu0 0
      %3296 = vmatpush1.bf16.msra.mxu0 0
      %3297 = vmatprep.subr.bf16.mxu0 0
      %3298 = vmatpush1.bf16.msra.mxu0 0
      %3299 = vmatprep.subr.bf16.mxu0 0
      %3300 = vmatpush1.bf16.msra.mxu0 0
      %3301 = vmatprep.mubr.bf16.mxu0 0
      %3302 = vmatmul.mubr.bf16.gmra.mrb[0].mxu0 %v3246
      %v3303 = vpop.f32.mrb[0].mxu0
      %v3304 = vadd.f32 0.0, %v3303
      %v3305 = vpop.f32.mrb[0].mxu0
      %v3306 = vpop.f32.mrb[0].mxu0
      %v3307 = vadd.f32 0.0, %v3306
      %v3308 = vpop.f32.mrb[0].mxu0
      %3309 = vmatprep.mubr.bf16.mxu0 0
      %3310 = vmatmul.mubr.bf16.gmra.mrb[0].mxu0 %v3249
      %v3311 = vpop.f32.mrb[0].mxu0
      %v3312 = vadd.f32 0.0, %v3311
      %v3313 = vpop.f32.mrb[0].mxu0
      %v3314 = vpop.f32.mrb[0].mxu0
      %v3315 = vadd.f32 0.0, %v3314
      %v3316 = vpop.f32.mrb[0].mxu0
      %3317 = vmatprep.mubr.bf16.mxu0 0
      %3318 = vmatmul.mubr.bf16.gmra.mrb[0].mxu0 %v3252
      %v3319 = vpop.f32.mrb[0].mxu0
      %v3320 = vadd.f32 0.0, %v3319
      %v3321 = vpop.f32.mrb[0].mxu0
      %v3322 = vpop.f32.mrb[0].mxu0
      %v3323 = vadd.f32 0.0, %v3322
      %v3324 = vpop.f32.mrb[0].mxu0
      %3325 = vmatprep.mubr.bf16.mxu0 0
      %3326 = vmatmul.mubr.bf16.gmra.mrb[0].mxu0 %v3255
      %v3327 = vpop.f32.mrb[0].mxu0
      %v3328 = vadd.f32 0.0, %v3327
      %v3329 = vpop.f32.mrb[0].mxu0
      %v3330 = vpop.f32.mrb[0].mxu0
      %v3331 = vadd.f32 0.0, %v3330
      %v3332 = vpop.f32.mrb[0].mxu0
      %3333 = vmatprep.mubr.bf16.mxu0 0
      %3334 = vmatmul.mubr.bf16.gmra.mrb[0].mxu0 %v3258
      %v3335 = vpop.f32.mrb[0].mxu0
      %v3336 = vadd.f32 0.0, %v3335
      %v3337 = vpop.f32.mrb[0].mxu0
      %v3338 = vpop.f32.mrb[0].mxu0
      %v3339 = vadd.f32 0.0, %v3338
      %v3340 = vpop.f32.mrb[0].mxu0
      %3341 = vmatprep.mubr.bf16.mxu0 0
      %3342 = vmatmul.mubr.bf16.gmra.mrb[0].mxu0 %v3261
      %v3343 = vpop.f32.mrb[0].mxu0
      %v3344 = vadd.f32 0.0, %v3343
      %v3345 = vpop.f32.mrb[0].mxu0
      %v3346 = vpop.f32.mrb[0].mxu0
      %v3347 = vadd.f32 0.0, %v3346
      %v3348 = vpop.f32.mrb[0].mxu0
      %3349 = vmatprep.mubr.bf16.mxu0 0
      %3350 = vmatmul.mubr.bf16.gmra.mrb[0].mxu0 %v3264
      %v3351 = vpop.f32.mrb[0].mxu0
      %v3352 = vadd.f32 0.0, %v3351
      %v3353 = vpop.f32.mrb[0].mxu0
      %v3354 = vpop.f32.mrb[0].mxu0
      %v3355 = vadd.f32 0.0, %v3354
      %v3356 = vpop.f32.mrb[0].mxu0
      %3357 = vmatprep.mubr.bf16.mxu0 0
      %3358 = vmatmul.mubr.bf16.gmra.mrb[0].mxu0 %v3267
      %v3359 = vpop.f32.mrb[0].mxu0
      %v3360 = vadd.f32 0.0, %v3359
      %v3361 = vpop.f32.mrb[0].mxu0
      %v3362 = vpop.f32.mrb[0].mxu0
      %v3363 = vadd.f32 0.0, %v3362
      %v3364 = vpop.f32.mrb[0].mxu0
      %3365 = vdwg.mxu0
      %v3370 = vunpack.c.l.b16 %v2194
      %v3371 = vunpack.c.l.b16 %v2195
      %v3372 = vunpack.c.l.b16 %v2196
      %v3373 = vunpack.c.l.b16 %v2197
      %v3374 = vpack.c.b16 %v3371, %v3370
      %v3375 = vpack.c.b16 %v3373, %v3372
      %v3379 = vsel %vm1696, %v2186, 0
      %v3382 = vsel %vm1696, %v2187, 0
      %v3385 = vsel %vm1696, %v2188, 0
      %v3388 = vsel %vm1696, %v2189, 0
      %v3391 = vsel %vm1696, %v2190, 0
      %v3394 = vsel %vm1696, %v2191, 0
      %v3397 = vsel %vm1696, %v2192, 0
      %v3400 = vsel %vm1696, %v2193, 0
      %3402 = vmatprep.subr.bf16.mxu0 0
      %3403 = vmatpush1.bf16.msra.mxu0 %v3374
      %3404 = vmatprep.subr.bf16.mxu0 0
      %3405 = vmatpush1.bf16.msra.mxu0 %v3375
      %3406 = vmatprep.subr.bf16.mxu0 0
      %3407 = vmatpush1.bf16.msra.mxu0 0
      %3408 = vmatprep.subr.bf16.mxu0 0
      %3409 = vmatpush1.bf16.msra.mxu0 0
      %3410 = vmatprep.subr.bf16.mxu0 0
      %3411 = vmatpush1.bf16.msra.mxu0 0
      %3412 = vmatprep.subr.bf16.mxu0 0
      %3413 = vmatpush1.bf16.msra.mxu0 0
      %3414 = vmatprep.subr.bf16.mxu0 0
      %3415 = vmatpush1.bf16.msra.mxu0 0
      %3416 = vmatprep.subr.bf16.mxu0 0
      %3417 = vmatpush1.bf16.msra.mxu0 0
      %3418 = vmatprep.subr.bf16.mxu0 0
      %3419 = vmatpush1.bf16.msra.mxu0 0
      %3420 = vmatprep.subr.bf16.mxu0 0
      %3421 = vmatpush1.bf16.msra.mxu0 0
      %3422 = vmatprep.subr.bf16.mxu0 0
      %3423 = vmatpush1.bf16.msra.mxu0 0
      %3424 = vmatprep.subr.bf16.mxu0 0
      %3425 = vmatpush1.bf16.msra.mxu0 0
      %3426 = vmatprep.subr.bf16.mxu0 0
      %3427 = vmatpush1.bf16.msra.mxu0 0
      %3428 = vmatprep.subr.bf16.mxu0 0
      %3429 = vmatpush1.bf16.msra.mxu0 0
      %3430 = vmatprep.subr.bf16.mxu0 0
      %3431 = vmatpush1.bf16.msra.mxu0 0
      %3432 = vmatprep.subr.bf16.mxu0 0
      %3433 = vmatpush1.bf16.msra.mxu0 0
      %3434 = vmatprep.mubr.bf16.mxu0 0
      %3435 = vmatmul.mubr.bf16.gmra.mrb[0].mxu0 %v3379
      %v3436 = vpop.f32.mrb[0].mxu0
      %v3437 = vadd.f32 %v3304, %v3436
      %v3438 = vpop.f32.mrb[0].mxu0
      %v3439 = vpop.f32.mrb[0].mxu0
      %v3440 = vadd.f32 %v3307, %v3439
      %v3441 = vpop.f32.mrb[0].mxu0
      %3442 = vmatprep.mubr.bf16.mxu0 0
      %3443 = vmatmul.mubr.bf16.gmra.mrb[0].mxu0 %v3382
      %v3444 = vpop.f32.mrb[0].mxu0
      %v3445 = vadd.f32 %v3312, %v3444
      %v3446 = vpop.f32.mrb[0].mxu0
      %v3447 = vpop.f32.mrb[0].mxu0
      %v3448 = vadd.f32 %v3315, %v3447
      %v3449 = vpop.f32.mrb[0].mxu0
      %3450 = vmatprep.mubr.bf16.mxu0 0
      %3451 = vmatmul.mubr.bf16.gmra.mrb[0].mxu0 %v3385
      %v3452 = vpop.f32.mrb[0].mxu0
      %v3453 = vadd.f32 %v3320, %v3452
      %v3454 = vpop.f32.mrb[0].mxu0
      %v3455 = vpop.f32.mrb[0].mxu0
      %v3456 = vadd.f32 %v3323, %v3455
      %v3457 = vpop.f32.mrb[0].mxu0
      %3458 = vmatprep.mubr.bf16.mxu0 0
      %3459 = vmatmul.mubr.bf16.gmra.mrb[0].mxu0 %v3388
      %v3460 = vpop.f32.mrb[0].mxu0
      %v3461 = vadd.f32 %v3328, %v3460
      %v3462 = vpop.f32.mrb[0].mxu0
      %v3463 = vpop.f32.mrb[0].mxu0
      %v3464 = vadd.f32 %v3331, %v3463
      %v3465 = vpop.f32.mrb[0].mxu0
      %3466 = vmatprep.mubr.bf16.mxu0 0
      %3467 = vmatmul.mubr.bf16.gmra.mrb[0].mxu0 %v3391
      %v3468 = vpop.f32.mrb[0].mxu0
      %v3469 = vadd.f32 %v3336, %v3468
      %v3470 = vpop.f32.mrb[0].mxu0
      %v3471 = vpop.f32.mrb[0].mxu0
      %v3472 = vadd.f32 %v3339, %v3471
      %v3473 = vpop.f32.mrb[0].mxu0
      %3474 = vmatprep.mubr.bf16.mxu0 0
      %3475 = vmatmul.mubr.bf16.gmra.mrb[0].mxu0 %v3394
      %v3476 = vpop.f32.mrb[0].mxu0
      %v3477 = vadd.f32 %v3344, %v3476
      %v3478 = vpop.f32.mrb[0].mxu0
      %v3479 = vpop.f32.mrb[0].mxu0
      %v3480 = vadd.f32 %v3347, %v3479
      %v3481 = vpop.f32.mrb[0].mxu0
      %3482 = vmatprep.mubr.bf16.mxu0 0
      %3483 = vmatmul.mubr.bf16.gmra.mrb[0].mxu0 %v3397
      %v3484 = vpop.f32.mrb[0].mxu0
      %v3485 = vadd.f32 %v3352, %v3484
      %v3486 = vpop.f32.mrb[0].mxu0
      %v3487 = vpop.f32.mrb[0].mxu0
      %v3488 = vadd.f32 %v3355, %v3487
      %v3489 = vpop.f32.mrb[0].mxu0
      %3490 = vmatprep.mubr.bf16.mxu0 0
      %3491 = vmatmul.mubr.bf16.gmra.mrb[0].mxu0 %v3400
      %v3492 = vpop.f32.mrb[0].mxu0
      %v3493 = vadd.f32 %v3360, %v3492
      %v3494 = vpop.f32.mrb[0].mxu0
      %v3495 = vpop.f32.mrb[0].mxu0
      %v3496 = vadd.f32 %v3363, %v3495
      %v3497 = vpop.f32.mrb[0].mxu0
      %3498 = vdwg.mxu0
      %s3499 = scalar_lea.vmem %s774, 128
      %v3500 = vld [vmem:[%s3499] sm:$0xf]
      %v3501 = vld [vmem:[%s3499 + $0x4] sm:$0xf]
      %v3502 = vld [vmem:[%s3499 + $0x8] sm:$0xf]
      %v3503 = vld [vmem:[%s3499 + $0xc] sm:$0xf]
      %v3504 = vld [vmem:[%s3499 + $0x10] sm:$0xf]
      %v3505 = vld [vmem:[%s3499 + $0x14] sm:$0xf]
      %v3506 = vld [vmem:[%s3499 + $0x18] sm:$0xf]
      %v3507 = vld [vmem:[%s3499 + $0x1c] sm:$0xf]
      %v3508 = vld [vmem:[%s3499 + $0x20] sm:$0xf]
      %v3509 = vld [vmem:[%s3499 + $0x24] sm:$0xf]
      %v3510 = vld [vmem:[%s3499 + $0x28] sm:$0xf]
      %v3511 = vld [vmem:[%s3499 + $0x2c] sm:$0xf]
      %v3512 = vld [vmem:[%s3499 + $0x30] sm:$0xf]
      %v3513 = vld [vmem:[%s3499 + $0x34] sm:$0xf]
      %v3514 = vld [vmem:[%s3499 + $0x38] sm:$0xf]
      %v3515 = vld [vmem:[%s3499 + $0x3c] sm:$0xf]
      %s3516 = scalar_lea.vmem %s778, 2
      %v3517 = vld [vmem:[%s3516] sm:$0x1]
      %v3519 = vlaneseq
      %v3520 = vshrl.u32 %v3519, 7
      %v3521 = vsub.s32 0, %v3520
      %v3522 = vrot.slane %v3517, %v3521
      %v3540 = vunpack.c.l.b16 %v3500
      %v3541 = vunpack.c.l.b16 %v3501
      %v3542 = vunpack.c.l.b16 %v3502
      %v3543 = vunpack.c.l.b16 %v3503
      %v3544 = vunpack.c.l.b16 %v3504
      %v3545 = vunpack.c.l.b16 %v3505
      %v3546 = vunpack.c.l.b16 %v3506
      %v3547 = vunpack.c.l.b16 %v3507
      %v3548 = vunpack.c.l.b16 %v3508
      %v3549 = vunpack.c.l.b16 %v3509
      %v3550 = vunpack.c.l.b16 %v3510
      %v3551 = vunpack.c.l.b16 %v3511
      %v3552 = vunpack.c.l.b16 %v3512
      %v3553 = vunpack.c.l.b16 %v3513
      %v3554 = vunpack.c.l.b16 %v3514
      %v3555 = vunpack.c.l.b16 %v3515
      %v3556 = vpack.c.b16 %v3541, %v3540
      %v3557 = vpack.c.b16 %v3543, %v3542
      %v3558 = vpack.c.b16 %v3545, %v3544
      %v3559 = vpack.c.b16 %v3547, %v3546
      %v3560 = vpack.c.b16 %v3549, %v3548
      %v3561 = vpack.c.b16 %v3551, %v3550
      %v3562 = vpack.c.b16 %v3553, %v3552
      %v3563 = vpack.c.b16 %v3555, %v3554
      %3572 = vmatprep.subr.bf16.mxu0 0
      %3573 = vmatpush1.bf16.msra.mxu0 %v3556
      %3574 = vmatprep.subr.bf16.mxu0 0
      %3575 = vmatpush1.bf16.msra.mxu0 %v3557
      %3576 = vmatprep.subr.bf16.mxu0 0
      %3577 = vmatpush1.bf16.msra.mxu0 %v3558
      %3578 = vmatprep.subr.bf16.mxu0 0
      %3579 = vmatpush1.bf16.msra.mxu0 %v3559
      %3580 = vmatprep.subr.bf16.mxu0 0
      %3581 = vmatpush1.bf16.msra.mxu0 %v3560
      %3582 = vmatprep.subr.bf16.mxu0 0
      %3583 = vmatpush1.bf16.msra.mxu0 %v3561
      %3584 = vmatprep.subr.bf16.mxu0 0
      %3585 = vmatpush1.bf16.msra.mxu0 %v3562
      %3586 = vmatprep.subr.bf16.mxu0 0
      %3587 = vmatpush1.bf16.msra.mxu0 %v3563
      %3588 = vmatprep.subr.bf16.mxu0 0
      %3589 = vmatpush1.bf16.msra.mxu0 0
      %3590 = vmatprep.subr.bf16.mxu0 0
      %3591 = vmatpush1.bf16.msra.mxu0 0
      %3592 = vmatprep.subr.bf16.mxu0 0
      %3593 = vmatpush1.bf16.msra.mxu0 0
      %3594 = vmatprep.subr.bf16.mxu0 0
      %3595 = vmatpush1.bf16.msra.mxu0 0
      %3596 = vmatprep.subr.bf16.mxu0 0
      %3597 = vmatpush1.bf16.msra.mxu0 0
      %3598 = vmatprep.subr.bf16.mxu0 0
      %3599 = vmatpush1.bf16.msra.mxu0 0
      %3600 = vmatprep.subr.bf16.mxu0 0
      %3601 = vmatpush1.bf16.msra.mxu0 0
      %3602 = vmatprep.subr.bf16.mxu0 0
      %3603 = vmatpush1.bf16.msra.mxu0 0
      %3604 = vmatprep.mubr.bf16.mxu0 0
      %3605 = vmatmul.mubr.bf16.gmra.mrb[0].mxu0 %v1109
      %v3606 = vpop.f32.mrb[0].mxu0
      %v3607 = vadd.f32 %v3522, %v3606
      %v3608 = vpop.f32.mrb[0].mxu0
      %v3609 = vpop.f32.mrb[0].mxu0
      %v3610 = vadd.f32 %v3522, %v3609
      %v3611 = vpop.f32.mrb[0].mxu0
      %3612 = vmatprep.mubr.bf16.mxu0 0
      %3613 = vmatmul.mubr.bf16.gmra.mrb[0].mxu0 %v1110
      %v3614 = vpop.f32.mrb[0].mxu0
      %v3615 = vadd.f32 %v3522, %v3614
      %v3616 = vpop.f32.mrb[0].mxu0
      %v3617 = vpop.f32.mrb[0].mxu0
      %v3618 = vadd.f32 %v3522, %v3617
      %v3619 = vpop.f32.mrb[0].mxu0
      %3620 = vmatprep.mubr.bf16.mxu0 0
      %3621 = vmatmul.mubr.bf16.gmra.mrb[0].mxu0 %v1111
      %v3622 = vpop.f32.mrb[0].mxu0
      %v3623 = vadd.f32 %v3522, %v3622
      %v3624 = vpop.f32.mrb[0].mxu0
      %v3625 = vpop.f32.mrb[0].mxu0
      %v3626 = vadd.f32 %v3522, %v3625
      %v3627 = vpop.f32.mrb[0].mxu0
      %3628 = vmatprep.mubr.bf16.mxu0 0
      %3629 = vmatmul.mubr.bf16.gmra.mrb[0].mxu0 %v1112
      %v3630 = vpop.f32.mrb[0].mxu0
      %v3631 = vadd.f32 %v3522, %v3630
      %v3632 = vpop.f32.mrb[0].mxu0
      %v3633 = vpop.f32.mrb[0].mxu0
      %v3634 = vadd.f32 %v3522, %v3633
      %v3635 = vpop.f32.mrb[0].mxu0
      %3636 = vmatprep.mubr.bf16.mxu0 0
      %3637 = vmatmul.mubr.bf16.gmra.mrb[0].mxu0 %v1113
      %v3638 = vpop.f32.mrb[0].mxu0
      %v3639 = vadd.f32 %v3522, %v3638
      %v3640 = vpop.f32.mrb[0].mxu0
      %v3641 = vpop.f32.mrb[0].mxu0
      %v3642 = vadd.f32 %v3522, %v3641
      %v3643 = vpop.f32.mrb[0].mxu0
      %3644 = vmatprep.mubr.bf16.mxu0 0
      %3645 = vmatmul.mubr.bf16.gmra.mrb[0].mxu0 %v1114
      %v3646 = vpop.f32.mrb[0].mxu0
      %v3647 = vadd.f32 %v3522, %v3646
      %v3648 = vpop.f32.mrb[0].mxu0
      %v3649 = vpop.f32.mrb[0].mxu0
      %v3650 = vadd.f32 %v3522, %v3649
      %v3651 = vpop.f32.mrb[0].mxu0
      %3652 = vmatprep.mubr.bf16.mxu0 0
      %3653 = vmatmul.mubr.bf16.gmra.mrb[0].mxu0 %v1115
      %v3654 = vpop.f32.mrb[0].mxu0
      %v3655 = vadd.f32 %v3522, %v3654
      %v3656 = vpop.f32.mrb[0].mxu0
      %v3657 = vpop.f32.mrb[0].mxu0
      %v3658 = vadd.f32 %v3522, %v3657
      %v3659 = vpop.f32.mrb[0].mxu0
      %3660 = vmatprep.mubr.bf16.mxu0 0
      %3661 = vmatmul.mubr.bf16.gmra.mrb[0].mxu0 %v1116
      %v3662 = vpop.f32.mrb[0].mxu0
      %v3663 = vadd.f32 %v3522, %v3662
      %v3664 = vpop.f32.mrb[0].mxu0
      %v3665 = vpop.f32.mrb[0].mxu0
      %v3666 = vadd.f32 %v3522, %v3665
      %v3667 = vpop.f32.mrb[0].mxu0
      %3668 = vdwg.mxu0
      %v3669 = vpack.c.bf16 %v3610, %v3607
      %v3670 = vpack.c.bf16 %v3618, %v3615
      %v3671 = vpack.c.bf16 %v3626, %v3623
      %v3672 = vpack.c.bf16 %v3634, %v3631
      %v3673 = vpack.c.bf16 %v3642, %v3639
      %v3674 = vpack.c.bf16 %v3650, %v3647
      %v3675 = vpack.c.bf16 %v3658, %v3655
      %v3676 = vpack.c.bf16 %v3666, %v3663
      %s3677 = scalar_lea.vmem %s783, 128
      %v3678 = vld [vmem:[%s3677] sm:$0xf]
      %v3679 = vld [vmem:[%s3677 + $0x4] sm:$0xf]
      %v3680 = vld [vmem:[%s3677 + $0x8] sm:$0xf]
      %v3681 = vld [vmem:[%s3677 + $0xc] sm:$0xf]
      %v3682 = vld [vmem:[%s3677 + $0x10] sm:$0xf]
      %v3683 = vld [vmem:[%s3677 + $0x14] sm:$0xf]
      %v3684 = vld [vmem:[%s3677 + $0x18] sm:$0xf]
      %v3685 = vld [vmem:[%s3677 + $0x1c] sm:$0xf]
      %v3686 = vld [vmem:[%s3677 + $0x20] sm:$0xf]
      %v3687 = vld [vmem:[%s3677 + $0x24] sm:$0xf]
      %v3688 = vld [vmem:[%s3677 + $0x28] sm:$0xf]
      %v3689 = vld [vmem:[%s3677 + $0x2c] sm:$0xf]
      %v3690 = vld [vmem:[%s3677 + $0x30] sm:$0xf]
      %v3691 = vld [vmem:[%s3677 + $0x34] sm:$0xf]
      %v3692 = vld [vmem:[%s3677 + $0x38] sm:$0xf]
      %v3693 = vld [vmem:[%s3677 + $0x3c] sm:$0xf]
      %s3694 = scalar_lea.vmem %s787, 2
      %v3695 = vld [vmem:[%s3694] sm:$0x1]
      %v3697 = vlaneseq
      %v3698 = vshrl.u32 %v3697, 7
      %v3699 = vsub.s32 0, %v3698
      %v3700 = vrot.slane %v3695, %v3699
      %v3718 = vunpack.c.l.b16 %v3678
      %v3719 = vunpack.c.l.b16 %v3679
      %v3720 = vunpack.c.l.b16 %v3680
      %v3721 = vunpack.c.l.b16 %v3681
      %v3722 = vunpack.c.l.b16 %v3682
      %v3723 = vunpack.c.l.b16 %v3683
      %v3724 = vunpack.c.l.b16 %v3684
      %v3725 = vunpack.c.l.b16 %v3685
      %v3726 = vunpack.c.l.b16 %v3686
      %v3727 = vunpack.c.l.b16 %v3687
      %v3728 = vunpack.c.l.b16 %v3688
      %v3729 = vunpack.c.l.b16 %v3689
      %v3730 = vunpack.c.l.b16 %v3690
      %v3731 = vunpack.c.l.b16 %v3691
      %v3732 = vunpack.c.l.b16 %v3692
      %v3733 = vunpack.c.l.b16 %v3693
      %v3734 = vpack.c.b16 %v3719, %v3718
      %v3735 = vpack.c.b16 %v3721, %v3720
      %v3736 = vpack.c.b16 %v3723, %v3722
      %v3737 = vpack.c.b16 %v3725, %v3724
      %v3738 = vpack.c.b16 %v3727, %v3726
      %v3739 = vpack.c.b16 %v3729, %v3728
      %v3740 = vpack.c.b16 %v3731, %v3730
      %v3741 = vpack.c.b16 %v3733, %v3732
      %3750 = vmatprep.subr.bf16.mxu0 0
      %3751 = vmatpush1.bf16.msra.mxu0 %v3734
      %3752 = vmatprep.subr.bf16.mxu0 0
      %3753 = vmatpush1.bf16.msra.mxu0 %v3735
      %3754 = vmatprep.subr.bf16.mxu0 0
      %3755 = vmatpush1.bf16.msra.mxu0 %v3736
      %3756 = vmatprep.subr.bf16.mxu0 0
      %3757 = vmatpush1.bf16.msra.mxu0 %v3737
      %3758 = vmatprep.subr.bf16.mxu0 0
      %3759 = vmatpush1.bf16.msra.mxu0 %v3738
      %3760 = vmatprep.subr.bf16.mxu0 0
      %3761 = vmatpush1.bf16.msra.mxu0 %v3739
      %3762 = vmatprep.subr.bf16.mxu0 0
      %3763 = vmatpush1.bf16.msra.mxu0 %v3740
      %3764 = vmatprep.subr.bf16.mxu0 0
      %3765 = vmatpush1.bf16.msra.mxu0 %v3741
      %3766 = vmatprep.subr.bf16.mxu0 0
      %3767 = vmatpush1.bf16.msra.mxu0 0
      %3768 = vmatprep.subr.bf16.mxu0 0
      %3769 = vmatpush1.bf16.msra.mxu0 0
      %3770 = vmatprep.subr.bf16.mxu0 0
      %3771 = vmatpush1.bf16.msra.mxu0 0
      %3772 = vmatprep.subr.bf16.mxu0 0
      %3773 = vmatpush1.bf16.msra.mxu0 0
      %3774 = vmatprep.subr.bf16.mxu0 0
      %3775 = vmatpush1.bf16.msra.mxu0 0
      %3776 = vmatprep.subr.bf16.mxu0 0
      %3777 = vmatpush1.bf16.msra.mxu0 0
      %3778 = vmatprep.subr.bf16.mxu0 0
      %3779 = vmatpush1.bf16.msra.mxu0 0
      %3780 = vmatprep.subr.bf16.mxu0 0
      %3781 = vmatpush1.bf16.msra.mxu0 0
      %3782 = vmatprep.mubr.bf16.mxu0 0
      %3783 = vmatmul.mubr.bf16.gmra.mrb[0].mxu0 %v1109
      %v3784 = vpop.f32.mrb[0].mxu0
      %v3785 = vadd.f32 %v3700, %v3784
      %v3786 = vpop.f32.mrb[0].mxu0
      %v3787 = vpop.f32.mrb[0].mxu0
      %v3788 = vadd.f32 %v3700, %v3787
      %v3789 = vpop.f32.mrb[0].mxu0
      %3790 = vmatprep.mubr.bf16.mxu0 0
      %3791 = vmatmul.mubr.bf16.gmra.mrb[0].mxu0 %v1110
      %v3792 = vpop.f32.mrb[0].mxu0
      %v3793 = vadd.f32 %v3700, %v3792
      %v3794 = vpop.f32.mrb[0].mxu0
      %v3795 = vpop.f32.mrb[0].mxu0
      %v3796 = vadd.f32 %v3700, %v3795
      %v3797 = vpop.f32.mrb[0].mxu0
      %3798 = vmatprep.mubr.bf16.mxu0 0
      %3799 = vmatmul.mubr.bf16.gmra.mrb[0].mxu0 %v1111
      %v3800 = vpop.f32.mrb[0].mxu0
      %v3801 = vadd.f32 %v3700, %v3800
      %v3802 = vpop.f32.mrb[0].mxu0
      %v3803 = vpop.f32.mrb[0].mxu0
      %v3804 = vadd.f32 %v3700, %v3803
      %v3805 = vpop.f32.mrb[0].mxu0
      %3806 = vmatprep.mubr.bf16.mxu0 0
      %3807 = vmatmul.mubr.bf16.gmra.mrb[0].mxu0 %v1112
      %v3808 = vpop.f32.mrb[0].mxu0
      %v3809 = vadd.f32 %v3700, %v3808
      %v3810 = vpop.f32.mrb[0].mxu0
      %v3811 = vpop.f32.mrb[0].mxu0
      %v3812 = vadd.f32 %v3700, %v3811
      %v3813 = vpop.f32.mrb[0].mxu0
      %3814 = vmatprep.mubr.bf16.mxu0 0
      %3815 = vmatmul.mubr.bf16.gmra.mrb[0].mxu0 %v1113
      %v3816 = vpop.f32.mrb[0].mxu0
      %v3817 = vadd.f32 %v3700, %v3816
      %v3818 = vpop.f32.mrb[0].mxu0
      %v3819 = vpop.f32.mrb[0].mxu0
      %v3820 = vadd.f32 %v3700, %v3819
      %v3821 = vpop.f32.mrb[0].mxu0
      %3822 = vmatprep.mubr.bf16.mxu0 0
      %3823 = vmatmul.mubr.bf16.gmra.mrb[0].mxu0 %v1114
      %v3824 = vpop.f32.mrb[0].mxu0
      %v3825 = vadd.f32 %v3700, %v3824
      %v3826 = vpop.f32.mrb[0].mxu0
      %v3827 = vpop.f32.mrb[0].mxu0
      %v3828 = vadd.f32 %v3700, %v3827
      %v3829 = vpop.f32.mrb[0].mxu0
      %3830 = vmatprep.mubr.bf16.mxu0 0
      %3831 = vmatmul.mubr.bf16.gmra.mrb[0].mxu0 %v1115
      %v3832 = vpop.f32.mrb[0].mxu0
      %v3833 = vadd.f32 %v3700, %v3832
      %v3834 = vpop.f32.mrb[0].mxu0
      %v3835 = vpop.f32.mrb[0].mxu0
      %v3836 = vadd.f32 %v3700, %v3835
      %v3837 = vpop.f32.mrb[0].mxu0
      %3838 = vmatprep.mubr.bf16.mxu0 0
      %3839 = vmatmul.mubr.bf16.gmra.mrb[0].mxu0 %v1116
      %v3840 = vpop.f32.mrb[0].mxu0
      %v3841 = vadd.f32 %v3700, %v3840
      %v3842 = vpop.f32.mrb[0].mxu0
      %v3843 = vpop.f32.mrb[0].mxu0
      %v3844 = vadd.f32 %v3700, %v3843
      %v3845 = vpop.f32.mrb[0].mxu0
      %3846 = vdwg.mxu0
      %v3847 = vpack.c.bf16 %v3788, %v3785
      %v3848 = vpack.c.bf16 %v3796, %v3793
      %v3849 = vpack.c.bf16 %v3804, %v3801
      %v3850 = vpack.c.bf16 %v3812, %v3809
      %v3851 = vpack.c.bf16 %v3820, %v3817
      %v3852 = vpack.c.bf16 %v3828, %v3825
      %v3853 = vpack.c.bf16 %v3836, %v3833
      %v3854 = vpack.c.bf16 %v3844, %v3841
      %s3855 = scalar_lea.vmem %s792, 128
      %v3856 = vld [vmem:[%s3855] sm:$0xf]
      %v3857 = vld [vmem:[%s3855 + $0x4] sm:$0xf]
      %v3858 = vld [vmem:[%s3855 + $0x8] sm:$0xf]
      %v3859 = vld [vmem:[%s3855 + $0xc] sm:$0xf]
      %v3860 = vld [vmem:[%s3855 + $0x10] sm:$0xf]
      %v3861 = vld [vmem:[%s3855 + $0x14] sm:$0xf]
      %v3862 = vld [vmem:[%s3855 + $0x18] sm:$0xf]
      %v3863 = vld [vmem:[%s3855 + $0x1c] sm:$0xf]
      %v3864 = vld [vmem:[%s3855 + $0x20] sm:$0xf]
      %v3865 = vld [vmem:[%s3855 + $0x24] sm:$0xf]
      %v3866 = vld [vmem:[%s3855 + $0x28] sm:$0xf]
      %v3867 = vld [vmem:[%s3855 + $0x2c] sm:$0xf]
      %v3868 = vld [vmem:[%s3855 + $0x30] sm:$0xf]
      %v3869 = vld [vmem:[%s3855 + $0x34] sm:$0xf]
      %v3870 = vld [vmem:[%s3855 + $0x38] sm:$0xf]
      %v3871 = vld [vmem:[%s3855 + $0x3c] sm:$0xf]
      %s3872 = scalar_lea.vmem %s796, 2
      %v3873 = vld [vmem:[%s3872] sm:$0x1]
      %v3875 = vlaneseq
      %v3876 = vshrl.u32 %v3875, 7
      %v3877 = vsub.s32 0, %v3876
      %v3878 = vrot.slane %v3873, %v3877
      %v3896 = vunpack.c.l.b16 %v3856
      %v3897 = vunpack.c.l.b16 %v3857
      %v3898 = vunpack.c.l.b16 %v3858
      %v3899 = vunpack.c.l.b16 %v3859
      %v3900 = vunpack.c.l.b16 %v3860
      %v3901 = vunpack.c.l.b16 %v3861
      %v3902 = vunpack.c.l.b16 %v3862
      %v3903 = vunpack.c.l.b16 %v3863
      %v3904 = vunpack.c.l.b16 %v3864
      %v3905 = vunpack.c.l.b16 %v3865
      %v3906 = vunpack.c.l.b16 %v3866
      %v3907 = vunpack.c.l.b16 %v3867
      %v3908 = vunpack.c.l.b16 %v3868
      %v3909 = vunpack.c.l.b16 %v3869
      %v3910 = vunpack.c.l.b16 %v3870
      %v3911 = vunpack.c.l.b16 %v3871
      %v3912 = vpack.c.b16 %v3897, %v3896
      %v3913 = vpack.c.b16 %v3899, %v3898
      %v3914 = vpack.c.b16 %v3901, %v3900
      %v3915 = vpack.c.b16 %v3903, %v3902
      %v3916 = vpack.c.b16 %v3905, %v3904
      %v3917 = vpack.c.b16 %v3907, %v3906
      %v3918 = vpack.c.b16 %v3909, %v3908
      %v3919 = vpack.c.b16 %v3911, %v3910
      %3928 = vmatprep.subr.bf16.mxu0 0
      %3929 = vmatpush1.bf16.msra.mxu0 %v3912
      %3930 = vmatprep.subr.bf16.mxu0 0
      %3931 = vmatpush1.bf16.msra.mxu0 %v3913
      %3932 = vmatprep.subr.bf16.mxu0 0
      %3933 = vmatpush1.bf16.msra.mxu0 %v3914
      %3934 = vmatprep.subr.bf16.mxu0 0
      %3935 = vmatpush1.bf16.msra.mxu0 %v3915
      %3936 = vmatprep.subr.bf16.mxu0 0
      %3937 = vmatpush1.bf16.msra.mxu0 %v3916
      %3938 = vmatprep.subr.bf16.mxu0 0
      %3939 = vmatpush1.bf16.msra.mxu0 %v3917
      %3940 = vmatprep.subr.bf16.mxu0 0
      %3941 = vmatpush1.bf16.msra.mxu0 %v3918
      %3942 = vmatprep.subr.bf16.mxu0 0
      %3943 = vmatpush1.bf16.msra.mxu0 %v3919
      %3944 = vmatprep.subr.bf16.mxu0 0
      %3945 = vmatpush1.bf16.msra.mxu0 0
      %3946 = vmatprep.subr.bf16.mxu0 0
      %3947 = vmatpush1.bf16.msra.mxu0 0
      %3948 = vmatprep.subr.bf16.mxu0 0
      %3949 = vmatpush1.bf16.msra.mxu0 0
      %3950 = vmatprep.subr.bf16.mxu0 0
      %3951 = vmatpush1.bf16.msra.mxu0 0
      %3952 = vmatprep.subr.bf16.mxu0 0
      %3953 = vmatpush1.bf16.msra.mxu0 0
      %3954 = vmatprep.subr.bf16.mxu0 0
      %3955 = vmatpush1.bf16.msra.mxu0 0
      %3956 = vmatprep.subr.bf16.mxu0 0
      %3957 = vmatpush1.bf16.msra.mxu0 0
      %3958 = vmatprep.subr.bf16.mxu0 0
      %3959 = vmatpush1.bf16.msra.mxu0 0
      %3960 = vmatprep.mubr.bf16.mxu0 0
      %3961 = vmatmul.mubr.bf16.gmra.mrb[0].mxu0 %v1109
      %v3962 = vpop.f32.mrb[0].mxu0
      %v3963 = vadd.f32 %v3878, %v3962
      %v3964 = vpop.f32.mrb[0].mxu0
      %v3965 = vpop.f32.mrb[0].mxu0
      %v3966 = vadd.f32 %v3878, %v3965
      %v3967 = vpop.f32.mrb[0].mxu0
      %3968 = vmatprep.mubr.bf16.mxu0 0
      %3969 = vmatmul.mubr.bf16.gmra.mrb[0].mxu0 %v1110
      %v3970 = vpop.f32.mrb[0].mxu0
      %v3971 = vadd.f32 %v3878, %v3970
      %v3972 = vpop.f32.mrb[0].mxu0
      %v3973 = vpop.f32.mrb[0].mxu0
      %v3974 = vadd.f32 %v3878, %v3973
      %v3975 = vpop.f32.mrb[0].mxu0
      %3976 = vmatprep.mubr.bf16.mxu0 0
      %3977 = vmatmul.mubr.bf16.gmra.mrb[0].mxu0 %v1111
      %v3978 = vpop.f32.mrb[0].mxu0
      %v3979 = vadd.f32 %v3878, %v3978
      %v3980 = vpop.f32.mrb[0].mxu0
      %v3981 = vpop.f32.mrb[0].mxu0
      %v3982 = vadd.f32 %v3878, %v3981
      %v3983 = vpop.f32.mrb[0].mxu0
      %3984 = vmatprep.mubr.bf16.mxu0 0
      %3985 = vmatmul.mubr.bf16.gmra.mrb[0].mxu0 %v1112
      %v3986 = vpop.f32.mrb[0].mxu0
      %v3987 = vadd.f32 %v3878, %v3986
      %v3988 = vpop.f32.mrb[0].mxu0
      %v3989 = vpop.f32.mrb[0].mxu0
      %v3990 = vadd.f32 %v3878, %v3989
      %v3991 = vpop.f32.mrb[0].mxu0
      %3992 = vmatprep.mubr.bf16.mxu0 0
      %3993 = vmatmul.mubr.bf16.gmra.mrb[0].mxu0 %v1113
      %v3994 = vpop.f32.mrb[0].mxu0
      %v3995 = vadd.f32 %v3878, %v3994
      %v3996 = vpop.f32.mrb[0].mxu0
      %v3997 = vpop.f32.mrb[0].mxu0
      %v3998 = vadd.f32 %v3878, %v3997
      %v3999 = vpop.f32.mrb[0].mxu0
      %4000 = vmatprep.mubr.bf16.mxu0 0
      %4001 = vmatmul.mubr.bf16.gmra.mrb[0].mxu0 %v1114
      %v4002 = vpop.f32.mrb[0].mxu0
      %v4003 = vadd.f32 %v3878, %v4002
      %v4004 = vpop.f32.mrb[0].mxu0
      %v4005 = vpop.f32.mrb[0].mxu0
      %v4006 = vadd.f32 %v3878, %v4005
      %v4007 = vpop.f32.mrb[0].mxu0
      %4008 = vmatprep.mubr.bf16.mxu0 0
      %4009 = vmatmul.mubr.bf16.gmra.mrb[0].mxu0 %v1115
      %v4010 = vpop.f32.mrb[0].mxu0
      %v4011 = vadd.f32 %v3878, %v4010
      %v4012 = vpop.f32.mrb[0].mxu0
      %v4013 = vpop.f32.mrb[0].mxu0
      %v4014 = vadd.f32 %v3878, %v4013
      %v4015 = vpop.f32.mrb[0].mxu0
      %4016 = vmatprep.mubr.bf16.mxu0 0
      %4017 = vmatmul.mubr.bf16.gmra.mrb[0].mxu0 %v1116
      %v4018 = vpop.f32.mrb[0].mxu0
      %v4019 = vadd.f32 %v3878, %v4018
      %v4020 = vpop.f32.mrb[0].mxu0
      %v4021 = vpop.f32.mrb[0].mxu0
      %v4022 = vadd.f32 %v3878, %v4021
      %v4023 = vpop.f32.mrb[0].mxu0
      %4024 = vdwg.mxu0
      %v4025 = vpack.c.bf16 %v3966, %v3963
      %v4026 = vpack.c.bf16 %v3974, %v3971
      %v4027 = vpack.c.bf16 %v3982, %v3979
      %v4028 = vpack.c.bf16 %v3990, %v3987
      %v4029 = vpack.c.bf16 %v3998, %v3995
      %v4030 = vpack.c.bf16 %v4006, %v4003
      %v4031 = vpack.c.bf16 %v4014, %v4011
      %v4032 = vpack.c.bf16 %v4022, %v4019
      %v4034 = vsel %vm1696, %v3669, 0
      %v4037 = vsel %vm1696, %v3670, 0
      %v4040 = vsel %vm1696, %v3671, 0
      %v4043 = vsel %vm1696, %v3672, 0
      %v4046 = vsel %vm1696, %v3847, 0
      %v4049 = vsel %vm1696, %v3848, 0
      %v4052 = vsel %vm1696, %v3849, 0
      %v4055 = vsel %vm1696, %v3850, 0
      %4057 = vmatprep.subr.bf16.mxu0 0
      %4058 = vmatpush1.bf16.xpose.msra.mxu0 %v4046
      %4059 = vmatprep.subr.bf16.mxu0 0
      %4060 = vmatpush1.bf16.xpose.msra.mxu0 %v4049
      %4061 = vmatprep.subr.bf16.mxu0 0
      %4062 = vmatpush1.bf16.xpose.msra.mxu0 %v4052
      %4063 = vmatprep.subr.bf16.mxu0 0
      %4064 = vmatpush1.bf16.xpose.msra.mxu0 %v4055
      %4065 = vmatprep.subr.bf16.mxu0 0
      %4066 = vmatpush1.bf16.xpose.msra.mxu0 0
      %4067 = vmatprep.subr.bf16.mxu0 0
      %4068 = vmatpush1.bf16.xpose.msra.mxu0 0
      %4069 = vmatprep.subr.bf16.mxu0 0
      %4070 = vmatpush1.bf16.xpose.msra.mxu0 0
      %4071 = vmatprep.subr.bf16.mxu0 0
      %4072 = vmatpush1.bf16.xpose.msra.mxu0 0
      %4073 = vmatprep.subr.bf16.mxu0 0
      %4074 = vmatpush1.bf16.xpose.msra.mxu0 0
      %4075 = vmatprep.subr.bf16.mxu0 0
      %4076 = vmatpush1.bf16.xpose.msra.mxu0 0
      %4077 = vmatprep.subr.bf16.mxu0 0
      %4078 = vmatpush1.bf16.xpose.msra.mxu0 0
      %4079 = vmatprep.subr.bf16.mxu0 0
      %4080 = vmatpush1.bf16.xpose.msra.mxu0 0
      %4081 = vmatprep.subr.bf16.mxu0 0
      %4082 = vmatpush1.bf16.xpose.msra.mxu0 0
      %4083 = vmatprep.subr.bf16.mxu0 0
      %4084 = vmatpush1.bf16.xpose.msra.mxu0 0
      %4085 = vmatprep.subr.bf16.mxu0 0
      %4086 = vmatpush1.bf16.xpose.msra.mxu0 0
      %4087 = vmatprep.subr.bf16.mxu0 0
      %4088 = vmatpush1.bf16.xpose.msra.mxu0 0
      %4089 = vmatprep.mubr.bf16.mxu0 0
      %4090 = vmatmul.mubr.bf16.gmra.mrb[0].mxu0 %v4034
      %v4091 = vpop.f32.mrb[0].mxu0
      %v4092 = vadd.f32 %v1136, %v4091
      %v4093 = vpop.f32.mrb[0].mxu0
      %v4094 = vpop.f32.mrb[0].mxu0
      %v4095 = vadd.f32 %v1137, %v4094
      %v4096 = vpop.f32.mrb[0].mxu0
      %4097 = vmatprep.mubr.bf16.mxu0 0
      %4098 = vmatmul.mubr.bf16.gmra.mrb[0].mxu0 %v4037
      %v4099 = vpop.f32.mrb[0].mxu0
      %v4100 = vadd.f32 %v1138, %v4099
      %v4101 = vpop.f32.mrb[0].mxu0
      %v4102 = vpop.f32.mrb[0].mxu0
      %v4103 = vadd.f32 %v1139, %v4102
      %v4104 = vpop.f32.mrb[0].mxu0
      %4105 = vmatprep.mubr.bf16.mxu0 0
      %4106 = vmatmul.mubr.bf16.gmra.mrb[0].mxu0 %v4040
      %v4107 = vpop.f32.mrb[0].mxu0
      %v4108 = vadd.f32 %v1140, %v4107
      %v4109 = vpop.f32.mrb[0].mxu0
      %v4110 = vpop.f32.mrb[0].mxu0
      %v4111 = vadd.f32 %v1141, %v4110
      %v4112 = vpop.f32.mrb[0].mxu0
      %4113 = vmatprep.mubr.bf16.mxu0 0
      %4114 = vmatmul.mubr.bf16.gmra.mrb[0].mxu0 %v4043
      %v4115 = vpop.f32.mrb[0].mxu0
      %v4116 = vadd.f32 %v1142, %v4115
      %v4117 = vpop.f32.mrb[0].mxu0
      %v4118 = vpop.f32.mrb[0].mxu0
      %v4119 = vadd.f32 %v1143, %v4118
      %v4120 = vpop.f32.mrb[0].mxu0
      %4121 = vdwg.mxu0
      %v4122 = vsel %vm1786, %v4092, -inf
      %4123 = vmax.xlane.f32.xlu0 %v4122
      %v4124 = vpop.xlane.xlu0 %4123
      %v4125 = vsel %vm1786, %v4095, -inf
      %4126 = vmax.xlane.f32.xlu0 %v4125
      %v4127 = vpop.xlane.xlu0 %4126
      %v4128 = vsel %vm1786, %v4100, -inf
      %4129 = vmax.xlane.f32.xlu0 %v4128
      %v4130 = vpop.xlane.xlu0 %4129
      %v4131 = vsel %vm1786, %v4103, -inf
      %4132 = vmax.xlane.f32.xlu0 %v4131
      %v4133 = vpop.xlane.xlu0 %4132
      %v4134 = vsel %vm1786, %v4108, -inf
      %4135 = vmax.xlane.f32.xlu0 %v4134
      %v4136 = vpop.xlane.xlu0 %4135
      %v4137 = vsel %vm1786, %v4111, -inf
      %4138 = vmax.xlane.f32.xlu0 %v4137
      %v4139 = vpop.xlane.xlu0 %4138
      %v4140 = vsel %vm1786, %v4116, -inf
      %4141 = vmax.xlane.f32.xlu0 %v4140
      %v4142 = vpop.xlane.xlu0 %4141
      %v4143 = vsel %vm1786, %v4119, -inf
      %4144 = vmax.xlane.f32.xlu0 %v4143
      %v4145 = vpop.xlane.xlu0 %4144
      %v4146 = vsub.f32 %v4092, %v4124
      %v4147 = vsub.f32 %v4095, %v4127
      %v4148 = vsub.f32 %v4100, %v4130
      %v4149 = vsub.f32 %v4103, %v4133
      %v4150 = vsub.f32 %v4108, %v4136
      %v4151 = vsub.f32 %v4111, %v4139
      %v4152 = vsub.f32 %v4116, %v4142
      %v4153 = vsub.f32 %v4119, %v4145
      %v4154 = vmul.f32 %v4146, 1.442695
      %v4155 = vpow.pop %v4154
      %v4156 = vmul.f32 %v4147, 1.442695
      %v4157 = vpow.pop %v4156
      %v4158 = vmul.f32 %v4148, 1.442695
      %v4159 = vpow.pop %v4158
      %v4160 = vmul.f32 %v4149, 1.442695
      %v4161 = vpow.pop %v4160
      %v4162 = vmul.f32 %v4150, 1.442695
      %v4163 = vpow.pop %v4162
      %v4164 = vmul.f32 %v4151, 1.442695
      %v4165 = vpow.pop %v4164
      %v4166 = vmul.f32 %v4152, 1.442695
      %v4167 = vpow.pop %v4166
      %v4168 = vmul.f32 %v4153, 1.442695
      %v4169 = vpow.pop %v4168
      %v4170 = vsel %vm1786, %v4155, 0.0
      %4171 = vadd.xlane.f32.xlu0 %v4170
      %v4172 = vpop.xlane.xlu0 %4171
      %v4173 = vsel %vm1786, %v4157, 0.0
      %4174 = vadd.xlane.f32.xlu0 %v4173
      %v4175 = vpop.xlane.xlu0 %4174
      %v4176 = vsel %vm1786, %v4159, 0.0
      %4177 = vadd.xlane.f32.xlu0 %v4176
      %v4178 = vpop.xlane.xlu0 %4177
      %v4179 = vsel %vm1786, %v4161, 0.0
      %4180 = vadd.xlane.f32.xlu0 %v4179
      %v4181 = vpop.xlane.xlu0 %4180
      %v4182 = vsel %vm1786, %v4163, 0.0
      %4183 = vadd.xlane.f32.xlu0 %v4182
      %v4184 = vpop.xlane.xlu0 %4183
      %v4185 = vsel %vm1786, %v4165, 0.0
      %4186 = vadd.xlane.f32.xlu0 %v4185
      %v4187 = vpop.xlane.xlu0 %4186
      %v4188 = vsel %vm1786, %v4167, 0.0
      %4189 = vadd.xlane.f32.xlu0 %v4188
      %v4190 = vpop.xlane.xlu0 %4189
      %v4191 = vsel %vm1786, %v4169, 0.0
      %4192 = vadd.xlane.f32.xlu0 %v4191
      %v4193 = vpop.xlane.xlu0 %4192
      %v4194 = vrcp.pop %v4172
      %v4195 = vrcp.pop %v4175
      %v4196 = vrcp.pop %v4178
      %v4197 = vrcp.pop %v4181
      %v4198 = vrcp.pop %v4184
      %v4199 = vrcp.pop %v4187
      %v4200 = vrcp.pop %v4190
      %v4201 = vrcp.pop %v4193
      %v4202 = vmul.f32 %v4155, %v4194
      %v4203 = vmul.f32 %v4157, %v4195
      %v4204 = vmul.f32 %v4159, %v4196
      %v4205 = vmul.f32 %v4161, %v4197
      %v4206 = vmul.f32 %v4163, %v4198
      %v4207 = vmul.f32 %v4165, %v4199
      %v4208 = vmul.f32 %v4167, %v4200
      %v4209 = vmul.f32 %v4169, %v4201
      %v4210 = vpack.c.bf16 %v4203, %v4202
      %v4211 = vpack.c.bf16 %v4205, %v4204
      %v4212 = vpack.c.bf16 %v4207, %v4206
      %v4213 = vpack.c.bf16 %v4209, %v4208
      %v4215 = vsel %vm1786, %v4210, 0
      %v4218 = vsel %vm1786, %v4211, 0
      %v4221 = vsel %vm1786, %v4212, 0
      %v4224 = vsel %vm1786, %v4213, 0
      %4226 = vmatprep.subr.bf16.mxu0 0
      %4227 = vmatpush1.bf16.msra.mxu0 %v4025
      %4228 = vmatprep.subr.bf16.mxu0 0
      %4229 = vmatpush1.bf16.msra.mxu0 %v4026
      %4230 = vmatprep.subr.bf16.mxu0 0
      %4231 = vmatpush1.bf16.msra.mxu0 %v4027
      %4232 = vmatprep.subr.bf16.mxu0 0
      %4233 = vmatpush1.bf16.msra.mxu0 %v4028
      %4234 = vmatprep.subr.bf16.mxu0 0
      %4235 = vmatpush1.bf16.msra.mxu0 0
      %4236 = vmatprep.subr.bf16.mxu0 0
      %4237 = vmatpush1.bf16.msra.mxu0 0
      %4238 = vmatprep.subr.bf16.mxu0 0
      %4239 = vmatpush1.bf16.msra.mxu0 0
      %4240 = vmatprep.subr.bf16.mxu0 0
      %4241 = vmatpush1.bf16.msra.mxu0 0
      %4242 = vmatprep.subr.bf16.mxu0 0
      %4243 = vmatpush1.bf16.msra.mxu0 0
      %4244 = vmatprep.subr.bf16.mxu0 0
      %4245 = vmatpush1.bf16.msra.mxu0 0
      %4246 = vmatprep.subr.bf16.mxu0 0
      %4247 = vmatpush1.bf16.msra.mxu0 0
      %4248 = vmatprep.subr.bf16.mxu0 0
      %4249 = vmatpush1.bf16.msra.mxu0 0
      %4250 = vmatprep.subr.bf16.mxu0 0
      %4251 = vmatpush1.bf16.msra.mxu0 0
      %4252 = vmatprep.subr.bf16.mxu0 0
      %4253 = vmatpush1.bf16.msra.mxu0 0
      %4254 = vmatprep.subr.bf16.mxu0 0
      %4255 = vmatpush1.bf16.msra.mxu0 0
      %4256 = vmatprep.subr.bf16.mxu0 0
      %4257 = vmatpush1.bf16.msra.mxu0 0
      %4258 = vmatprep.mubr.bf16.mxu0 0
      %4259 = vmatmul.mubr.bf16.gmra.mrb[0].mxu0 %v4215
      %v4260 = vpop.f32.mrb[0].mxu0
      %v4261 = vadd.f32 0.0, %v4260
      %v4262 = vpop.f32.mrb[0].mxu0
      %v4263 = vpop.f32.mrb[0].mxu0
      %v4264 = vadd.f32 0.0, %v4263
      %v4265 = vpop.f32.mrb[0].mxu0
      %4266 = vmatprep.mubr.bf16.mxu0 0
      %4267 = vmatmul.mubr.bf16.gmra.mrb[0].mxu0 %v4218
      %v4268 = vpop.f32.mrb[0].mxu0
      %v4269 = vadd.f32 0.0, %v4268
      %v4270 = vpop.f32.mrb[0].mxu0
      %v4271 = vpop.f32.mrb[0].mxu0
      %v4272 = vadd.f32 0.0, %v4271
      %v4273 = vpop.f32.mrb[0].mxu0
      %4274 = vmatprep.mubr.bf16.mxu0 0
      %4275 = vmatmul.mubr.bf16.gmra.mrb[0].mxu0 %v4221
      %v4276 = vpop.f32.mrb[0].mxu0
      %v4277 = vadd.f32 0.0, %v4276
      %v4278 = vpop.f32.mrb[0].mxu0
      %v4279 = vpop.f32.mrb[0].mxu0
      %v4280 = vadd.f32 0.0, %v4279
      %v4281 = vpop.f32.mrb[0].mxu0
      %4282 = vmatprep.mubr.bf16.mxu0 0
      %4283 = vmatmul.mubr.bf16.gmra.mrb[0].mxu0 %v4224
      %v4284 = vpop.f32.mrb[0].mxu0
      %v4285 = vadd.f32 0.0, %v4284
      %v4286 = vpop.f32.mrb[0].mxu0
      %v4287 = vpop.f32.mrb[0].mxu0
      %v4288 = vadd.f32 0.0, %v4287
      %v4289 = vpop.f32.mrb[0].mxu0
      %4290 = vdwg.mxu0
      %v4292 = vsel %vm1696, %v3673, 0
      %v4295 = vsel %vm1696, %v3674, 0
      %v4298 = vsel %vm1696, %v3675, 0
      %v4301 = vsel %vm1696, %v3676, 0
      %v4304 = vsel %vm1696, %v3851, 0
      %v4307 = vsel %vm1696, %v3852, 0
      %v4310 = vsel %vm1696, %v3853, 0
      %v4313 = vsel %vm1696, %v3854, 0
      %4315 = vmatprep.subr.bf16.mxu0 0
      %4316 = vmatpush1.bf16.xpose.msra.mxu0 %v4046
      %4317 = vmatprep.subr.bf16.mxu0 0
      %4318 = vmatpush1.bf16.xpose.msra.mxu0 %v4049
      %4319 = vmatprep.subr.bf16.mxu0 0
      %4320 = vmatpush1.bf16.xpose.msra.mxu0 %v4052
      %4321 = vmatprep.subr.bf16.mxu0 0
      %4322 = vmatpush1.bf16.xpose.msra.mxu0 %v4055
      %4323 = vmatprep.subr.bf16.mxu0 0
      %4324 = vmatpush1.bf16.xpose.msra.mxu0 %v4304
      %4325 = vmatprep.subr.bf16.mxu0 0
      %4326 = vmatpush1.bf16.xpose.msra.mxu0 %v4307
      %4327 = vmatprep.subr.bf16.mxu0 0
      %4328 = vmatpush1.bf16.xpose.msra.mxu0 %v4310
      %4329 = vmatprep.subr.bf16.mxu0 0
      %4330 = vmatpush1.bf16.xpose.msra.mxu0 %v4313
      %4331 = vmatprep.subr.bf16.mxu0 0
      %4332 = vmatpush1.bf16.xpose.msra.mxu0 0
      %4333 = vmatprep.subr.bf16.mxu0 0
      %4334 = vmatpush1.bf16.xpose.msra.mxu0 0
      %4335 = vmatprep.subr.bf16.mxu0 0
      %4336 = vmatpush1.bf16.xpose.msra.mxu0 0
      %4337 = vmatprep.subr.bf16.mxu0 0
      %4338 = vmatpush1.bf16.xpose.msra.mxu0 0
      %4339 = vmatprep.subr.bf16.mxu0 0
      %4340 = vmatpush1.bf16.xpose.msra.mxu0 0
      %4341 = vmatprep.subr.bf16.mxu0 0
      %4342 = vmatpush1.bf16.xpose.msra.mxu0 0
      %4343 = vmatprep.subr.bf16.mxu0 0
      %4344 = vmatpush1.bf16.xpose.msra.mxu0 0
      %4345 = vmatprep.subr.bf16.mxu0 0
      %4346 = vmatpush1.bf16.xpose.msra.mxu0 0
      %4347 = vmatprep.mubr.bf16.mxu0 0
      %4348 = vmatmul.mubr.bf16.gmra.mrb[0].mxu0 %v4292
      %v4349 = vpop.f32.mrb[0].mxu0
      %v4350 = vadd.f32 %v1160, %v4349
      %v4351 = vpop.f32.mrb[0].mxu0
      %v4352 = vpop.f32.mrb[0].mxu0
      %v4353 = vadd.f32 %v1161, %v4352
      %v4354 = vpop.f32.mrb[0].mxu0
      %4355 = vmatprep.mubr.bf16.mxu0 0
      %4356 = vmatmul.mubr.bf16.gmra.mrb[0].mxu0 %v4295
      %v4357 = vpop.f32.mrb[0].mxu0
      %v4358 = vadd.f32 %v1162, %v4357
      %v4359 = vpop.f32.mrb[0].mxu0
      %v4360 = vpop.f32.mrb[0].mxu0
      %v4361 = vadd.f32 %v1163, %v4360
      %v4362 = vpop.f32.mrb[0].mxu0
      %4363 = vmatprep.mubr.bf16.mxu0 0
      %4364 = vmatmul.mubr.bf16.gmra.mrb[0].mxu0 %v4298
      %v4365 = vpop.f32.mrb[0].mxu0
      %v4366 = vadd.f32 %v1164, %v4365
      %v4367 = vpop.f32.mrb[0].mxu0
      %v4368 = vpop.f32.mrb[0].mxu0
      %v4369 = vadd.f32 %v1165, %v4368
      %v4370 = vpop.f32.mrb[0].mxu0
      %4371 = vmatprep.mubr.bf16.mxu0 0
      %4372 = vmatmul.mubr.bf16.gmra.mrb[0].mxu0 %v4301
      %v4373 = vpop.f32.mrb[0].mxu0
      %v4374 = vadd.f32 %v1166, %v4373
      %v4375 = vpop.f32.mrb[0].mxu0
      %v4376 = vpop.f32.mrb[0].mxu0
      %v4377 = vadd.f32 %v1167, %v4376
      %v4378 = vpop.f32.mrb[0].mxu0
      %4379 = vdwg.mxu0
      %4380 = vmax.xlane.f32.xlu0 %v4350
      %v4381 = vpop.xlane.xlu0 %4380
      %4382 = vmax.xlane.f32.xlu0 %v4353
      %v4383 = vpop.xlane.xlu0 %4382
      %4384 = vmax.xlane.f32.xlu0 %v4358
      %v4385 = vpop.xlane.xlu0 %4384
      %4386 = vmax.xlane.f32.xlu0 %v4361
      %v4387 = vpop.xlane.xlu0 %4386
      %4388 = vmax.xlane.f32.xlu0 %v4366
      %v4389 = vpop.xlane.xlu0 %4388
      %4390 = vmax.xlane.f32.xlu0 %v4369
      %v4391 = vpop.xlane.xlu0 %4390
      %4392 = vmax.xlane.f32.xlu0 %v4374
      %v4393 = vpop.xlane.xlu0 %4392
      %4394 = vmax.xlane.f32.xlu0 %v4377
      %v4395 = vpop.xlane.xlu0 %4394
      %v4396 = vsub.f32 %v4350, %v4381
      %v4397 = vsub.f32 %v4353, %v4383
      %v4398 = vsub.f32 %v4358, %v4385
      %v4399 = vsub.f32 %v4361, %v4387
      %v4400 = vsub.f32 %v4366, %v4389
      %v4401 = vsub.f32 %v4369, %v4391
      %v4402 = vsub.f32 %v4374, %v4393
      %v4403 = vsub.f32 %v4377, %v4395
      %v4404 = vmul.f32 %v4396, 1.442695
      %v4405 = vpow.pop %v4404
      %v4406 = vmul.f32 %v4397, 1.442695
      %v4407 = vpow.pop %v4406
      %v4408 = vmul.f32 %v4398, 1.442695
      %v4409 = vpow.pop %v4408
      %v4410 = vmul.f32 %v4399, 1.442695
      %v4411 = vpow.pop %v4410
      %v4412 = vmul.f32 %v4400, 1.442695
      %v4413 = vpow.pop %v4412
      %v4414 = vmul.f32 %v4401, 1.442695
      %v4415 = vpow.pop %v4414
      %v4416 = vmul.f32 %v4402, 1.442695
      %v4417 = vpow.pop %v4416
      %v4418 = vmul.f32 %v4403, 1.442695
      %v4419 = vpow.pop %v4418
      %4420 = vadd.xlane.f32.xlu0 %v4405
      %v4421 = vpop.xlane.xlu0 %4420
      %4422 = vadd.xlane.f32.xlu0 %v4407
      %v4423 = vpop.xlane.xlu0 %4422
      %4424 = vadd.xlane.f32.xlu0 %v4409
      %v4425 = vpop.xlane.xlu0 %4424
      %4426 = vadd.xlane.f32.xlu0 %v4411
      %v4427 = vpop.xlane.xlu0 %4426
      %4428 = vadd.xlane.f32.xlu0 %v4413
      %v4429 = vpop.xlane.xlu0 %4428
      %4430 = vadd.xlane.f32.xlu0 %v4415
      %v4431 = vpop.xlane.xlu0 %4430
      %4432 = vadd.xlane.f32.xlu0 %v4417
      %v4433 = vpop.xlane.xlu0 %4432
      %4434 = vadd.xlane.f32.xlu0 %v4419
      %v4435 = vpop.xlane.xlu0 %4434
      %v4436 = vrcp.pop %v4421
      %v4437 = vrcp.pop %v4423
      %v4438 = vrcp.pop %v4425
      %v4439 = vrcp.pop %v4427
      %v4440 = vrcp.pop %v4429
      %v4441 = vrcp.pop %v4431
      %v4442 = vrcp.pop %v4433
      %v4443 = vrcp.pop %v4435
      %v4444 = vmul.f32 %v4405, %v4436
      %v4445 = vmul.f32 %v4407, %v4437
      %v4446 = vmul.f32 %v4409, %v4438
      %v4447 = vmul.f32 %v4411, %v4439
      %v4448 = vmul.f32 %v4413, %v4440
      %v4449 = vmul.f32 %v4415, %v4441
      %v4450 = vmul.f32 %v4417, %v4442
      %v4451 = vmul.f32 %v4419, %v4443
      %v4452 = vpack.c.bf16 %v4445, %v4444
      %v4453 = vpack.c.bf16 %v4447, %v4446
      %v4454 = vpack.c.bf16 %v4449, %v4448
      %v4455 = vpack.c.bf16 %v4451, %v4450
      %4456 = vmatprep.subr.bf16.mxu0 0
      %4457 = vmatpush1.bf16.msra.mxu0 %v4025
      %4458 = vmatprep.subr.bf16.mxu0 0
      %4459 = vmatpush1.bf16.msra.mxu0 %v4026
      %4460 = vmatprep.subr.bf16.mxu0 0
      %4461 = vmatpush1.bf16.msra.mxu0 %v4027
      %4462 = vmatprep.subr.bf16.mxu0 0
      %4463 = vmatpush1.bf16.msra.mxu0 %v4028
      %4464 = vmatprep.subr.bf16.mxu0 0
      %4465 = vmatpush1.bf16.msra.mxu0 %v4029
      %4466 = vmatprep.subr.bf16.mxu0 0
      %4467 = vmatpush1.bf16.msra.mxu0 %v4030
      %4468 = vmatprep.subr.bf16.mxu0 0
      %4469 = vmatpush1.bf16.msra.mxu0 %v4031
      %4470 = vmatprep.subr.bf16.mxu0 0
      %4471 = vmatpush1.bf16.msra.mxu0 %v4032
      %4472 = vmatprep.subr.bf16.mxu0 0
      %4473 = vmatpush1.bf16.msra.mxu0 0
      %4474 = vmatprep.subr.bf16.mxu0 0
      %4475 = vmatpush1.bf16.msra.mxu0 0
      %4476 = vmatprep.subr.bf16.mxu0 0
      %4477 = vmatpush1.bf16.msra.mxu0 0
      %4478 = vmatprep.subr.bf16.mxu0 0
      %4479 = vmatpush1.bf16.msra.mxu0 0
      %4480 = vmatprep.subr.bf16.mxu0 0
      %4481 = vmatpush1.bf16.msra.mxu0 0
      %4482 = vmatprep.subr.bf16.mxu0 0
      %4483 = vmatpush1.bf16.msra.mxu0 0
      %4484 = vmatprep.subr.bf16.mxu0 0
      %4485 = vmatpush1.bf16.msra.mxu0 0
      %4486 = vmatprep.subr.bf16.mxu0 0
      %4487 = vmatpush1.bf16.msra.mxu0 0
      %4488 = vmatprep.mubr.bf16.mxu0 0
      %4489 = vmatmul.mubr.bf16.gmra.mrb[0].mxu0 %v4452
      %v4490 = vpop.f32.mrb[0].mxu0
      %v4491 = vadd.f32 0.0, %v4490
      %v4492 = vpop.f32.mrb[0].mxu0
      %v4493 = vpop.f32.mrb[0].mxu0
      %v4494 = vadd.f32 0.0, %v4493
      %v4495 = vpop.f32.mrb[0].mxu0
      %4496 = vmatprep.mubr.bf16.mxu0 0
      %4497 = vmatmul.mubr.bf16.gmra.mrb[0].mxu0 %v4453
      %v4498 = vpop.f32.mrb[0].mxu0
      %v4499 = vadd.f32 0.0, %v4498
      %v4500 = vpop.f32.mrb[0].mxu0
      %v4501 = vpop.f32.mrb[0].mxu0
      %v4502 = vadd.f32 0.0, %v4501
      %v4503 = vpop.f32.mrb[0].mxu0
      %4504 = vmatprep.mubr.bf16.mxu0 0
      %4505 = vmatmul.mubr.bf16.gmra.mrb[0].mxu0 %v4454
      %v4506 = vpop.f32.mrb[0].mxu0
      %v4507 = vadd.f32 0.0, %v4506
      %v4508 = vpop.f32.mrb[0].mxu0
      %v4509 = vpop.f32.mrb[0].mxu0
      %v4510 = vadd.f32 0.0, %v4509
      %v4511 = vpop.f32.mrb[0].mxu0
      %4512 = vmatprep.mubr.bf16.mxu0 0
      %4513 = vmatmul.mubr.bf16.gmra.mrb[0].mxu0 %v4455
      %v4514 = vpop.f32.mrb[0].mxu0
      %v4515 = vadd.f32 0.0, %v4514
      %v4516 = vpop.f32.mrb[0].mxu0
      %v4517 = vpop.f32.mrb[0].mxu0
      %v4518 = vadd.f32 0.0, %v4517
      %v4519 = vpop.f32.mrb[0].mxu0
      %4520 = vdwg.mxu0
      %v4521 = vpack.c.bf16 %v4264, %v4261
      %v4522 = vpack.c.bf16 %v4272, %v4269
      %v4523 = vpack.c.bf16 %v4280, %v4277
      %v4524 = vpack.c.bf16 %v4288, %v4285
      %v4525 = vpack.c.bf16 %v4494, %v4491
      %v4526 = vpack.c.bf16 %v4502, %v4499
      %v4527 = vpack.c.bf16 %v4510, %v4507
      %v4528 = vpack.c.bf16 %v4518, %v4515
      %s4529 = scalar_lea.vmem %s801, 32
      %v4530 = vld [vmem:[%s4529] sm:$0xf]
      %v4531 = vld [vmem:[%s4529 + $0x4] sm:$0xf]
      %v4532 = vld [vmem:[%s4529 + $0x8] sm:$0xf]
      %v4533 = vld [vmem:[%s4529 + $0xc] sm:$0xf]
      %v4538 = vunpack.c.l.b16 %v4530
      %v4539 = vunpack.c.l.b16 %v4531
      %v4540 = vunpack.c.l.b16 %v4532
      %v4541 = vunpack.c.l.b16 %v4533
      %v4542 = vpack.c.b16 %v4539, %v4538
      %v4543 = vpack.c.b16 %v4541, %v4540
      %v4547 = vsel %vm1696, %v4521, 0
      %v4550 = vsel %vm1696, %v4522, 0
      %v4553 = vsel %vm1696, %v4523, 0
      %v4556 = vsel %vm1696, %v4524, 0
      %v4559 = vsel %vm1696, %v4525, 0
      %v4562 = vsel %vm1696, %v4526, 0
      %v4565 = vsel %vm1696, %v4527, 0
      %v4568 = vsel %vm1696, %v4528, 0
      %4570 = vmatprep.subr.bf16.mxu0 0
      %4571 = vmatpush1.bf16.msra.mxu0 %v4542
      %4572 = vmatprep.subr.bf16.mxu0 0
      %4573 = vmatpush1.bf16.msra.mxu0 %v4543
      %4574 = vmatprep.subr.bf16.mxu0 0
      %4575 = vmatpush1.bf16.msra.mxu0 0
      %4576 = vmatprep.subr.bf16.mxu0 0
      %4577 = vmatpush1.bf16.msra.mxu0 0
      %4578 = vmatprep.subr.bf16.mxu0 0
      %4579 = vmatpush1.bf16.msra.mxu0 0
      %4580 = vmatprep.subr.bf16.mxu0 0
      %4581 = vmatpush1.bf16.msra.mxu0 0
      %4582 = vmatprep.subr.bf16.mxu0 0
      %4583 = vmatpush1.bf16.msra.mxu0 0
      %4584 = vmatprep.subr.bf16.mxu0 0
      %4585 = vmatpush1.bf16.msra.mxu0 0
      %4586 = vmatprep.subr.bf16.mxu0 0
      %4587 = vmatpush1.bf16.msra.mxu0 0
      %4588 = vmatprep.subr.bf16.mxu0 0
      %4589 = vmatpush1.bf16.msra.mxu0 0
      %4590 = vmatprep.subr.bf16.mxu0 0
      %4591 = vmatpush1.bf16.msra.mxu0 0
      %4592 = vmatprep.subr.bf16.mxu0 0
      %4593 = vmatpush1.bf16.msra.mxu0 0
      %4594 = vmatprep.subr.bf16.mxu0 0
      %4595 = vmatpush1.bf16.msra.mxu0 0
      %4596 = vmatprep.subr.bf16.mxu0 0
      %4597 = vmatpush1.bf16.msra.mxu0 0
      %4598 = vmatprep.subr.bf16.mxu0 0
      %4599 = vmatpush1.bf16.msra.mxu0 0
      %4600 = vmatprep.subr.bf16.mxu0 0
      %4601 = vmatpush1.bf16.msra.mxu0 0
      %4602 = vmatprep.mubr.bf16.mxu0 0
      %4603 = vmatmul.mubr.bf16.gmra.mrb[0].mxu0 %v4547
      %v4604 = vpop.f32.mrb[0].mxu0
      %v4605 = vadd.f32 0.0, %v4604
      %v4606 = vpop.f32.mrb[0].mxu0
      %v4607 = vpop.f32.mrb[0].mxu0
      %v4608 = vadd.f32 0.0, %v4607
      %v4609 = vpop.f32.mrb[0].mxu0
      %4610 = vmatprep.mubr.bf16.mxu0 0
      %4611 = vmatmul.mubr.bf16.gmra.mrb[0].mxu0 %v4550
      %v4612 = vpop.f32.mrb[0].mxu0
      %v4613 = vadd.f32 0.0, %v4612
      %v4614 = vpop.f32.mrb[0].mxu0
      %v4615 = vpop.f32.mrb[0].mxu0
      %v4616 = vadd.f32 0.0, %v4615
      %v4617 = vpop.f32.mrb[0].mxu0
      %4618 = vmatprep.mubr.bf16.mxu0 0
      %4619 = vmatmul.mubr.bf16.gmra.mrb[0].mxu0 %v4553
      %v4620 = vpop.f32.mrb[0].mxu0
      %v4621 = vadd.f32 0.0, %v4620
      %v4622 = vpop.f32.mrb[0].mxu0
      %v4623 = vpop.f32.mrb[0].mxu0
      %v4624 = vadd.f32 0.0, %v4623
      %v4625 = vpop.f32.mrb[0].mxu0
      %4626 = vmatprep.mubr.bf16.mxu0 0
      %4627 = vmatmul.mubr.bf16.gmra.mrb[0].mxu0 %v4556
      %v4628 = vpop.f32.mrb[0].mxu0
      %v4629 = vadd.f32 0.0, %v4628
      %v4630 = vpop.f32.mrb[0].mxu0
      %v4631 = vpop.f32.mrb[0].mxu0
      %v4632 = vadd.f32 0.0, %v4631
      %v4633 = vpop.f32.mrb[0].mxu0
      %4634 = vmatprep.mubr.bf16.mxu0 0
      %4635 = vmatmul.mubr.bf16.gmra.mrb[0].mxu0 %v4559
      %v4636 = vpop.f32.mrb[0].mxu0
      %v4637 = vadd.f32 0.0, %v4636
      %v4638 = vpop.f32.mrb[0].mxu0
      %v4639 = vpop.f32.mrb[0].mxu0
      %v4640 = vadd.f32 0.0, %v4639
      %v4641 = vpop.f32.mrb[0].mxu0
      %4642 = vmatprep.mubr.bf16.mxu0 0
      %4643 = vmatmul.mubr.bf16.gmra.mrb[0].mxu0 %v4562
      %v4644 = vpop.f32.mrb[0].mxu0
      %v4645 = vadd.f32 0.0, %v4644
      %v4646 = vpop.f32.mrb[0].mxu0
      %v4647 = vpop.f32.mrb[0].mxu0
      %v4648 = vadd.f32 0.0, %v4647
      %v4649 = vpop.f32.mrb[0].mxu0
      %4650 = vmatprep.mubr.bf16.mxu0 0
      %4651 = vmatmul.mubr.bf16.gmra.mrb[0].mxu0 %v4565
      %v4652 = vpop.f32.mrb[0].mxu0
      %v4653 = vadd.f32 0.0, %v4652
      %v4654 = vpop.f32.mrb[0].mxu0
      %v4655 = vpop.f32.mrb[0].mxu0
      %v4656 = vadd.f32 0.0, %v4655
      %v4657 = vpop.f32.mrb[0].mxu0
      %4658 = vmatprep.mubr.bf16.mxu0 0
      %4659 = vmatmul.mubr.bf16.gmra.mrb[0].mxu0 %v4568
      %v4660 = vpop.f32.mrb[0].mxu0
      %v4661 = vadd.f32 0.0, %v4660
      %v4662 = vpop.f32.mrb[0].mxu0
      %v4663 = vpop.f32.mrb[0].mxu0
      %v4664 = vadd.f32 0.0, %v4663
      %v4665 = vpop.f32.mrb[0].mxu0
      %4666 = vdwg.mxu0
      %v4667 = vadd.f32 %v3437, %v4605
      %v4668 = vadd.f32 %v3440, %v4608
      %v4669 = vadd.f32 %v3445, %v4613
      %v4670 = vadd.f32 %v3448, %v4616
      %v4671 = vadd.f32 %v3453, %v4621
      %v4672 = vadd.f32 %v3456, %v4624
      %v4673 = vadd.f32 %v3461, %v4629
      %v4674 = vadd.f32 %v3464, %v4632
      %v4675 = vadd.f32 %v3469, %v4637
      %v4676 = vadd.f32 %v3472, %v4640
      %v4677 = vadd.f32 %v3477, %v4645
      %v4678 = vadd.f32 %v3480, %v4648
      %v4679 = vadd.f32 %v3485, %v4653
      %v4680 = vadd.f32 %v3488, %v4656
      %v4681 = vadd.f32 %v3493, %v4661
      %v4682 = vadd.f32 %v3496, %v4664
      %s4683 = scalar_lea.vmem %s774, 192
      %v4684 = vld [vmem:[%s4683] sm:$0xf]
      %v4685 = vld [vmem:[%s4683 + $0x4] sm:$0xf]
      %v4686 = vld [vmem:[%s4683 + $0x8] sm:$0xf]
      %v4687 = vld [vmem:[%s4683 + $0xc] sm:$0xf]
      %v4688 = vld [vmem:[%s4683 + $0x10] sm:$0xf]
      %v4689 = vld [vmem:[%s4683 + $0x14] sm:$0xf]
      %v4690 = vld [vmem:[%s4683 + $0x18] sm:$0xf]
      %v4691 = vld [vmem:[%s4683 + $0x1c] sm:$0xf]
      %v4692 = vld [vmem:[%s4683 + $0x20] sm:$0xf]
      %v4693 = vld [vmem:[%s4683 + $0x24] sm:$0xf]
      %v4694 = vld [vmem:[%s4683 + $0x28] sm:$0xf]
      %v4695 = vld [vmem:[%s4683 + $0x2c] sm:$0xf]
      %v4696 = vld [vmem:[%s4683 + $0x30] sm:$0xf]
      %v4697 = vld [vmem:[%s4683 + $0x34] sm:$0xf]
      %v4698 = vld [vmem:[%s4683 + $0x38] sm:$0xf]
      %v4699 = vld [vmem:[%s4683 + $0x3c] sm:$0xf]
      %s4700 = scalar_lea.vmem %s778, 3
      %v4701 = vld [vmem:[%s4700] sm:$0x1]
      %v4703 = vlaneseq
      %v4704 = vshrl.u32 %v4703, 7
      %v4705 = vsub.s32 0, %v4704
      %v4706 = vrot.slane %v4701, %v4705
      %v4724 = vunpack.c.l.b16 %v4684
      %v4725 = vunpack.c.l.b16 %v4685
      %v4726 = vunpack.c.l.b16 %v4686
      %v4727 = vunpack.c.l.b16 %v4687
      %v4728 = vunpack.c.l.b16 %v4688
      %v4729 = vunpack.c.l.b16 %v4689
      %v4730 = vunpack.c.l.b16 %v4690
      %v4731 = vunpack.c.l.b16 %v4691
      %v4732 = vunpack.c.l.b16 %v4692
      %v4733 = vunpack.c.l.b16 %v4693
      %v4734 = vunpack.c.l.b16 %v4694
      %v4735 = vunpack.c.l.b16 %v4695
      %v4736 = vunpack.c.l.b16 %v4696
      %v4737 = vunpack.c.l.b16 %v4697
      %v4738 = vunpack.c.l.b16 %v4698
      %v4739 = vunpack.c.l.b16 %v4699
      %v4740 = vpack.c.b16 %v4725, %v4724
      %v4741 = vpack.c.b16 %v4727, %v4726
      %v4742 = vpack.c.b16 %v4729, %v4728
      %v4743 = vpack.c.b16 %v4731, %v4730
      %v4744 = vpack.c.b16 %v4733, %v4732
      %v4745 = vpack.c.b16 %v4735, %v4734
      %v4746 = vpack.c.b16 %v4737, %v4736
      %v4747 = vpack.c.b16 %v4739, %v4738
      %4756 = vmatprep.subr.bf16.mxu0 0
      %4757 = vmatpush1.bf16.msra.mxu0 %v4740
      %4758 = vmatprep.subr.bf16.mxu0 0
      %4759 = vmatpush1.bf16.msra.mxu0 %v4741
      %4760 = vmatprep.subr.bf16.mxu0 0
      %4761 = vmatpush1.bf16.msra.mxu0 %v4742
      %4762 = vmatprep.subr.bf16.mxu0 0
      %4763 = vmatpush1.bf16.msra.mxu0 %v4743
      %4764 = vmatprep.subr.bf16.mxu0 0
      %4765 = vmatpush1.bf16.msra.mxu0 %v4744
      %4766 = vmatprep.subr.bf16.mxu0 0
      %4767 = vmatpush1.bf16.msra.mxu0 %v4745
      %4768 = vmatprep.subr.bf16.mxu0 0
      %4769 = vmatpush1.bf16.msra.mxu0 %v4746
      %4770 = vmatprep.subr.bf16.mxu0 0
      %4771 = vmatpush1.bf16.msra.mxu0 %v4747
      %4772 = vmatprep.subr.bf16.mxu0 0
      %4773 = vmatpush1.bf16.msra.mxu0 0
      %4774 = vmatprep.subr.bf16.mxu0 0
      %4775 = vmatpush1.bf16.msra.mxu0 0
      %4776 = vmatprep.subr.bf16.mxu0 0
      %4777 = vmatpush1.bf16.msra.mxu0 0
      %4778 = vmatprep.subr.bf16.mxu0 0
      %4779 = vmatpush1.bf16.msra.mxu0 0
      %4780 = vmatprep.subr.bf16.mxu0 0
      %4781 = vmatpush1.bf16.msra.mxu0 0
      %4782 = vmatprep.subr.bf16.mxu0 0
      %4783 = vmatpush1.bf16.msra.mxu0 0
      %4784 = vmatprep.subr.bf16.mxu0 0
      %4785 = vmatpush1.bf16.msra.mxu0 0
      %4786 = vmatprep.subr.bf16.mxu0 0
      %4787 = vmatpush1.bf16.msra.mxu0 0
      %4788 = vmatprep.mubr.bf16.mxu0 0
      %4789 = vmatmul.mubr.bf16.gmra.mrb[0].mxu0 %v1109
      %v4790 = vpop.f32.mrb[0].mxu0
      %v4791 = vadd.f32 %v4706, %v4790
      %v4792 = vpop.f32.mrb[0].mxu0
      %v4793 = vpop.f32.mrb[0].mxu0
      %v4794 = vadd.f32 %v4706, %v4793
      %v4795 = vpop.f32.mrb[0].mxu0
      %4796 = vmatprep.mubr.bf16.mxu0 0
      %4797 = vmatmul.mubr.bf16.gmra.mrb[0].mxu0 %v1110
      %v4798 = vpop.f32.mrb[0].mxu0
      %v4799 = vadd.f32 %v4706, %v4798
      %v4800 = vpop.f32.mrb[0].mxu0
      %v4801 = vpop.f32.mrb[0].mxu0
      %v4802 = vadd.f32 %v4706, %v4801
      %v4803 = vpop.f32.mrb[0].mxu0
      %4804 = vmatprep.mubr.bf16.mxu0 0
      %4805 = vmatmul.mubr.bf16.gmra.mrb[0].mxu0 %v1111
      %v4806 = vpop.f32.mrb[0].mxu0
      %v4807 = vadd.f32 %v4706, %v4806
      %v4808 = vpop.f32.mrb[0].mxu0
      %v4809 = vpop.f32.mrb[0].mxu0
      %v4810 = vadd.f32 %v4706, %v4809
      %v4811 = vpop.f32.mrb[0].mxu0
      %4812 = vmatprep.mubr.bf16.mxu0 0
      %4813 = vmatmul.mubr.bf16.gmra.mrb[0].mxu0 %v1112
      %v4814 = vpop.f32.mrb[0].mxu0
      %v4815 = vadd.f32 %v4706, %v4814
      %v4816 = vpop.f32.mrb[0].mxu0
      %v4817 = vpop.f32.mrb[0].mxu0
      %v4818 = vadd.f32 %v4706, %v4817
      %v4819 = vpop.f32.mrb[0].mxu0
      %4820 = vmatprep.mubr.bf16.mxu0 0
      %4821 = vmatmul.mubr.bf16.gmra.mrb[0].mxu0 %v1113
      %v4822 = vpop.f32.mrb[0].mxu0
      %v4823 = vadd.f32 %v4706, %v4822
      %v4824 = vpop.f32.mrb[0].mxu0
      %v4825 = vpop.f32.mrb[0].mxu0
      %v4826 = vadd.f32 %v4706, %v4825
      %v4827 = vpop.f32.mrb[0].mxu0
      %4828 = vmatprep.mubr.bf16.mxu0 0
      %4829 = vmatmul.mubr.bf16.gmra.mrb[0].mxu0 %v1114
      %v4830 = vpop.f32.mrb[0].mxu0
      %v4831 = vadd.f32 %v4706, %v4830
      %v4832 = vpop.f32.mrb[0].mxu0
      %v4833 = vpop.f32.mrb[0].mxu0
      %v4834 = vadd.f32 %v4706, %v4833
      %v4835 = vpop.f32.mrb[0].mxu0
      %4836 = vmatprep.mubr.bf16.mxu0 0
      %4837 = vmatmul.mubr.bf16.gmra.mrb[0].mxu0 %v1115
      %v4838 = vpop.f32.mrb[0].mxu0
      %v4839 = vadd.f32 %v4706, %v4838
      %v4840 = vpop.f32.mrb[0].mxu0
      %v4841 = vpop.f32.mrb[0].mxu0
      %v4842 = vadd.f32 %v4706, %v4841
      %v4843 = vpop.f32.mrb[0].mxu0
      %4844 = vmatprep.mubr.bf16.mxu0 0
      %4845 = vmatmul.mubr.bf16.gmra.mrb[0].mxu0 %v1116
      %v4846 = vpop.f32.mrb[0].mxu0
      %v4847 = vadd.f32 %v4706, %v4846
      %v4848 = vpop.f32.mrb[0].mxu0
      %v4849 = vpop.f32.mrb[0].mxu0
      %v4850 = vadd.f32 %v4706, %v4849
      %v4851 = vpop.f32.mrb[0].mxu0
      %4852 = vdwg.mxu0
      %v4853 = vpack.c.bf16 %v4794, %v4791
      %v4854 = vpack.c.bf16 %v4802, %v4799
      %v4855 = vpack.c.bf16 %v4810, %v4807
      %v4856 = vpack.c.bf16 %v4818, %v4815
      %v4857 = vpack.c.bf16 %v4826, %v4823
      %v4858 = vpack.c.bf16 %v4834, %v4831
      %v4859 = vpack.c.bf16 %v4842, %v4839
      %v4860 = vpack.c.bf16 %v4850, %v4847
      %s4861 = scalar_lea.vmem %s783, 192
      %v4862 = vld [vmem:[%s4861] sm:$0xf]
      %v4863 = vld [vmem:[%s4861 + $0x4] sm:$0xf]
      %v4864 = vld [vmem:[%s4861 + $0x8] sm:$0xf]
      %v4865 = vld [vmem:[%s4861 + $0xc] sm:$0xf]
      %v4866 = vld [vmem:[%s4861 + $0x10] sm:$0xf]
      %v4867 = vld [vmem:[%s4861 + $0x14] sm:$0xf]
      %v4868 = vld [vmem:[%s4861 + $0x18] sm:$0xf]
      %v4869 = vld [vmem:[%s4861 + $0x1c] sm:$0xf]
      %v4870 = vld [vmem:[%s4861 + $0x20] sm:$0xf]
      %v4871 = vld [vmem:[%s4861 + $0x24] sm:$0xf]
      %v4872 = vld [vmem:[%s4861 + $0x28] sm:$0xf]
      %v4873 = vld [vmem:[%s4861 + $0x2c] sm:$0xf]
      %v4874 = vld [vmem:[%s4861 + $0x30] sm:$0xf]
      %v4875 = vld [vmem:[%s4861 + $0x34] sm:$0xf]
      %v4876 = vld [vmem:[%s4861 + $0x38] sm:$0xf]
      %v4877 = vld [vmem:[%s4861 + $0x3c] sm:$0xf]
      %s4878 = scalar_lea.vmem %s787, 3
      %v4879 = vld [vmem:[%s4878] sm:$0x1]
      %v4881 = vlaneseq
      %v4882 = vshrl.u32 %v4881, 7
      %v4883 = vsub.s32 0, %v4882
      %v4884 = vrot.slane %v4879, %v4883
      %v4902 = vunpack.c.l.b16 %v4862
      %v4903 = vunpack.c.l.b16 %v4863
      %v4904 = vunpack.c.l.b16 %v4864
      %v4905 = vunpack.c.l.b16 %v4865
      %v4906 = vunpack.c.l.b16 %v4866
      %v4907 = vunpack.c.l.b16 %v4867
      %v4908 = vunpack.c.l.b16 %v4868
      %v4909 = vunpack.c.l.b16 %v4869
      %v4910 = vunpack.c.l.b16 %v4870
      %v4911 = vunpack.c.l.b16 %v4871
      %v4912 = vunpack.c.l.b16 %v4872
      %v4913 = vunpack.c.l.b16 %v4873
      %v4914 = vunpack.c.l.b16 %v4874
      %v4915 = vunpack.c.l.b16 %v4875
      %v4916 = vunpack.c.l.b16 %v4876
      %v4917 = vunpack.c.l.b16 %v4877
      %v4918 = vpack.c.b16 %v4903, %v4902
      %v4919 = vpack.c.b16 %v4905, %v4904
      %v4920 = vpack.c.b16 %v4907, %v4906
      %v4921 = vpack.c.b16 %v4909, %v4908
      %v4922 = vpack.c.b16 %v4911, %v4910
      %v4923 = vpack.c.b16 %v4913, %v4912
      %v4924 = vpack.c.b16 %v4915, %v4914
      %v4925 = vpack.c.b16 %v4917, %v4916
      %4934 = vmatprep.subr.bf16.mxu0 0
      %4935 = vmatpush1.bf16.msra.mxu0 %v4918
      %4936 = vmatprep.subr.bf16.mxu0 0
      %4937 = vmatpush1.bf16.msra.mxu0 %v4919
      %4938 = vmatprep.subr.bf16.mxu0 0
      %4939 = vmatpush1.bf16.msra.mxu0 %v4920
      %4940 = vmatprep.subr.bf16.mxu0 0
      %4941 = vmatpush1.bf16.msra.mxu0 %v4921
      %4942 = vmatprep.subr.bf16.mxu0 0
      %4943 = vmatpush1.bf16.msra.mxu0 %v4922
      %4944 = vmatprep.subr.bf16.mxu0 0
      %4945 = vmatpush1.bf16.msra.mxu0 %v4923
      %4946 = vmatprep.subr.bf16.mxu0 0
      %4947 = vmatpush1.bf16.msra.mxu0 %v4924
      %4948 = vmatprep.subr.bf16.mxu0 0
      %4949 = vmatpush1.bf16.msra.mxu0 %v4925
      %4950 = vmatprep.subr.bf16.mxu0 0
      %4951 = vmatpush1.bf16.msra.mxu0 0
      %4952 = vmatprep.subr.bf16.mxu0 0
      %4953 = vmatpush1.bf16.msra.mxu0 0
      %4954 = vmatprep.subr.bf16.mxu0 0
      %4955 = vmatpush1.bf16.msra.mxu0 0
      %4956 = vmatprep.subr.bf16.mxu0 0
      %4957 = vmatpush1.bf16.msra.mxu0 0
      %4958 = vmatprep.subr.bf16.mxu0 0
      %4959 = vmatpush1.bf16.msra.mxu0 0
      %4960 = vmatprep.subr.bf16.mxu0 0
      %4961 = vmatpush1.bf16.msra.mxu0 0
      %4962 = vmatprep.subr.bf16.mxu0 0
      %4963 = vmatpush1.bf16.msra.mxu0 0
      %4964 = vmatprep.subr.bf16.mxu0 0
      %4965 = vmatpush1.bf16.msra.mxu0 0
      %4966 = vmatprep.mubr.bf16.mxu0 0
      %4967 = vmatmul.mubr.bf16.gmra.mrb[0].mxu0 %v1109
      %v4968 = vpop.f32.mrb[0].mxu0
      %v4969 = vadd.f32 %v4884, %v4968
      %v4970 = vpop.f32.mrb[0].mxu0
      %v4971 = vpop.f32.mrb[0].mxu0
      %v4972 = vadd.f32 %v4884, %v4971
      %v4973 = vpop.f32.mrb[0].mxu0
      %4974 = vmatprep.mubr.bf16.mxu0 0
      %4975 = vmatmul.mubr.bf16.gmra.mrb[0].mxu0 %v1110
      %v4976 = vpop.f32.mrb[0].mxu0
      %v4977 = vadd.f32 %v4884, %v4976
      %v4978 = vpop.f32.mrb[0].mxu0
      %v4979 = vpop.f32.mrb[0].mxu0
      %v4980 = vadd.f32 %v4884, %v4979
      %v4981 = vpop.f32.mrb[0].mxu0
      %4982 = vmatprep.mubr.bf16.mxu0 0
      %4983 = vmatmul.mubr.bf16.gmra.mrb[0].mxu0 %v1111
      %v4984 = vpop.f32.mrb[0].mxu0
      %v4985 = vadd.f32 %v4884, %v4984
      %v4986 = vpop.f32.mrb[0].mxu0
      %v4987 = vpop.f32.mrb[0].mxu0
      %v4988 = vadd.f32 %v4884, %v4987
      %v4989 = vpop.f32.mrb[0].mxu0
      %4990 = vmatprep.mubr.bf16.mxu0 0
      %4991 = vmatmul.mubr.bf16.gmra.mrb[0].mxu0 %v1112
      %v4992 = vpop.f32.mrb[0].mxu0
      %v4993 = vadd.f32 %v4884, %v4992
      %v4994 = vpop.f32.mrb[0].mxu0
      %v4995 = vpop.f32.mrb[0].mxu0
      %v4996 = vadd.f32 %v4884, %v4995
      %v4997 = vpop.f32.mrb[0].mxu0
      %4998 = vmatprep.mubr.bf16.mxu0 0
      %4999 = vmatmul.mubr.bf16.gmra.mrb[0].mxu0 %v1113
      %v5000 = vpop.f32.mrb[0].mxu0
      %v5001 = vadd.f32 %v4884, %v5000
      %v5002 = vpop.f32.mrb[0].mxu0
      %v5003 = vpop.f32.mrb[0].mxu0
      %v5004 = vadd.f32 %v4884, %v5003
      %v5005 = vpop.f32.mrb[0].mxu0
      %5006 = vmatprep.mubr.bf16.mxu0 0
      %5007 = vmatmul.mubr.bf16.gmra.mrb[0].mxu0 %v1114
      %v5008 = vpop.f32.mrb[0].mxu0
      %v5009 = vadd.f32 %v4884, %v5008
      %v5010 = vpop.f32.mrb[0].mxu0
      %v5011 = vpop.f32.mrb[0].mxu0
      %v5012 = vadd.f32 %v4884, %v5011
      %v5013 = vpop.f32.mrb[0].mxu0
      %5014 = vmatprep.mubr.bf16.mxu0 0
      %5015 = vmatmul.mubr.bf16.gmra.mrb[0].mxu0 %v1115
      %v5016 = vpop.f32.mrb[0].mxu0
      %v5017 = vadd.f32 %v4884, %v5016
      %v5018 = vpop.f32.mrb[0].mxu0
      %v5019 = vpop.f32.mrb[0].mxu0
      %v5020 = vadd.f32 %v4884, %v5019
      %v5021 = vpop.f32.mrb[0].mxu0
      %5022 = vmatprep.mubr.bf16.mxu0 0
      %5023 = vmatmul.mubr.bf16.gmra.mrb[0].mxu0 %v1116
      %v5024 = vpop.f32.mrb[0].mxu0
      %v5025 = vadd.f32 %v4884, %v5024
      %v5026 = vpop.f32.mrb[0].mxu0
      %v5027 = vpop.f32.mrb[0].mxu0
      %v5028 = vadd.f32 %v4884, %v5027
      %v5029 = vpop.f32.mrb[0].mxu0
      %5030 = vdwg.mxu0
      %v5031 = vpack.c.bf16 %v4972, %v4969
      %v5032 = vpack.c.bf16 %v4980, %v4977
      %v5033 = vpack.c.bf16 %v4988, %v4985
      %v5034 = vpack.c.bf16 %v4996, %v4993
      %v5035 = vpack.c.bf16 %v5004, %v5001
      %v5036 = vpack.c.bf16 %v5012, %v5009
      %v5037 = vpack.c.bf16 %v5020, %v5017
      %v5038 = vpack.c.bf16 %v5028, %v5025
      %s5039 = scalar_lea.vmem %s792, 192
      %v5040 = vld [vmem:[%s5039] sm:$0xf]
      %v5041 = vld [vmem:[%s5039 + $0x4] sm:$0xf]
      %v5042 = vld [vmem:[%s5039 + $0x8] sm:$0xf]
      %v5043 = vld [vmem:[%s5039 + $0xc] sm:$0xf]
      %v5044 = vld [vmem:[%s5039 + $0x10] sm:$0xf]
      %v5045 = vld [vmem:[%s5039 + $0x14] sm:$0xf]
      %v5046 = vld [vmem:[%s5039 + $0x18] sm:$0xf]
      %v5047 = vld [vmem:[%s5039 + $0x1c] sm:$0xf]
      %v5048 = vld [vmem:[%s5039 + $0x20] sm:$0xf]
      %v5049 = vld [vmem:[%s5039 + $0x24] sm:$0xf]
      %v5050 = vld [vmem:[%s5039 + $0x28] sm:$0xf]
      %v5051 = vld [vmem:[%s5039 + $0x2c] sm:$0xf]
      %v5052 = vld [vmem:[%s5039 + $0x30] sm:$0xf]
      %v5053 = vld [vmem:[%s5039 + $0x34] sm:$0xf]
      %v5054 = vld [vmem:[%s5039 + $0x38] sm:$0xf]
      %v5055 = vld [vmem:[%s5039 + $0x3c] sm:$0xf]
      %s5056 = scalar_lea.vmem %s796, 3
      %v5057 = vld [vmem:[%s5056] sm:$0x1]
      %v5059 = vlaneseq
      %v5060 = vshrl.u32 %v5059, 7
      %v5061 = vsub.s32 0, %v5060
      %v5062 = vrot.slane %v5057, %v5061
      %v5080 = vunpack.c.l.b16 %v5040
      %v5081 = vunpack.c.l.b16 %v5041
      %v5082 = vunpack.c.l.b16 %v5042
      %v5083 = vunpack.c.l.b16 %v5043
      %v5084 = vunpack.c.l.b16 %v5044
      %v5085 = vunpack.c.l.b16 %v5045
      %v5086 = vunpack.c.l.b16 %v5046
      %v5087 = vunpack.c.l.b16 %v5047
      %v5088 = vunpack.c.l.b16 %v5048
      %v5089 = vunpack.c.l.b16 %v5049
      %v5090 = vunpack.c.l.b16 %v5050
      %v5091 = vunpack.c.l.b16 %v5051
      %v5092 = vunpack.c.l.b16 %v5052
      %v5093 = vunpack.c.l.b16 %v5053
      %v5094 = vunpack.c.l.b16 %v5054
      %v5095 = vunpack.c.l.b16 %v5055
      %v5096 = vpack.c.b16 %v5081, %v5080
      %v5097 = vpack.c.b16 %v5083, %v5082
      %v5098 = vpack.c.b16 %v5085, %v5084
      %v5099 = vpack.c.b16 %v5087, %v5086
      %v5100 = vpack.c.b16 %v5089, %v5088
      %v5101 = vpack.c.b16 %v5091, %v5090
      %v5102 = vpack.c.b16 %v5093, %v5092
      %v5103 = vpack.c.b16 %v5095, %v5094
      %5112 = vmatprep.subr.bf16.mxu0 0
      %5113 = vmatpush1.bf16.msra.mxu0 %v5096
      %5114 = vmatprep.subr.bf16.mxu0 0
      %5115 = vmatpush1.bf16.msra.mxu0 %v5097
      %5116 = vmatprep.subr.bf16.mxu0 0
      %5117 = vmatpush1.bf16.msra.mxu0 %v5098
      %5118 = vmatprep.subr.bf16.mxu0 0
      %5119 = vmatpush1.bf16.msra.mxu0 %v5099
      %5120 = vmatprep.subr.bf16.mxu0 0
      %5121 = vmatpush1.bf16.msra.mxu0 %v5100
      %5122 = vmatprep.subr.bf16.mxu0 0
      %5123 = vmatpush1.bf16.msra.mxu0 %v5101
      %5124 = vmatprep.subr.bf16.mxu0 0
      %5125 = vmatpush1.bf16.msra.mxu0 %v5102
      %5126 = vmatprep.subr.bf16.mxu0 0
      %5127 = vmatpush1.bf16.msra.mxu0 %v5103
      %5128 = vmatprep.subr.bf16.mxu0 0
      %5129 = vmatpush1.bf16.msra.mxu0 0
      %5130 = vmatprep.subr.bf16.mxu0 0
      %5131 = vmatpush1.bf16.msra.mxu0 0
      %5132 = vmatprep.subr.bf16.mxu0 0
      %5133 = vmatpush1.bf16.msra.mxu0 0
      %5134 = vmatprep.subr.bf16.mxu0 0
      %5135 = vmatpush1.bf16.msra.mxu0 0
      %5136 = vmatprep.subr.bf16.mxu0 0
      %5137 = vmatpush1.bf16.msra.mxu0 0
      %5138 = vmatprep.subr.bf16.mxu0 0
      %5139 = vmatpush1.bf16.msra.mxu0 0
      %5140 = vmatprep.subr.bf16.mxu0 0
      %5141 = vmatpush1.bf16.msra.mxu0 0
      %5142 = vmatprep.subr.bf16.mxu0 0
      %5143 = vmatpush1.bf16.msra.mxu0 0
      %5144 = vmatprep.mubr.bf16.mxu0 0
      %5145 = vmatmul.mubr.bf16.gmra.mrb[0].mxu0 %v1109
      %v5146 = vpop.f32.mrb[0].mxu0
      %v5147 = vadd.f32 %v5062, %v5146
      %v5148 = vpop.f32.mrb[0].mxu0
      %v5149 = vpop.f32.mrb[0].mxu0
      %v5150 = vadd.f32 %v5062, %v5149
      %v5151 = vpop.f32.mrb[0].mxu0
      %5152 = vmatprep.mubr.bf16.mxu0 0
      %5153 = vmatmul.mubr.bf16.gmra.mrb[0].mxu0 %v1110
      %v5154 = vpop.f32.mrb[0].mxu0
      %v5155 = vadd.f32 %v5062, %v5154
      %v5156 = vpop.f32.mrb[0].mxu0
      %v5157 = vpop.f32.mrb[0].mxu0
      %v5158 = vadd.f32 %v5062, %v5157
      %v5159 = vpop.f32.mrb[0].mxu0
      %5160 = vmatprep.mubr.bf16.mxu0 0
      %5161 = vmatmul.mubr.bf16.gmra.mrb[0].mxu0 %v1111
      %v5162 = vpop.f32.mrb[0].mxu0
      %v5163 = vadd.f32 %v5062, %v5162
      %v5164 = vpop.f32.mrb[0].mxu0
      %v5165 = vpop.f32.mrb[0].mxu0
      %v5166 = vadd.f32 %v5062, %v5165
      %v5167 = vpop.f32.mrb[0].mxu0
      %5168 = vmatprep.mubr.bf16.mxu0 0
      %5169 = vmatmul.mubr.bf16.gmra.mrb[0].mxu0 %v1112
      %v5170 = vpop.f32.mrb[0].mxu0
      %v5171 = vadd.f32 %v5062, %v5170
      %v5172 = vpop.f32.mrb[0].mxu0
      %v5173 = vpop.f32.mrb[0].mxu0
      %v5174 = vadd.f32 %v5062, %v5173
      %v5175 = vpop.f32.mrb[0].mxu0
      %5176 = vmatprep.mubr.bf16.mxu0 0
      %5177 = vmatmul.mubr.bf16.gmra.mrb[0].mxu0 %v1113
      %v5178 = vpop.f32.mrb[0].mxu0
      %v5179 = vadd.f32 %v5062, %v5178
      %v5180 = vpop.f32.mrb[0].mxu0
      %v5181 = vpop.f32.mrb[0].mxu0
      %v5182 = vadd.f32 %v5062, %v5181
      %v5183 = vpop.f32.mrb[0].mxu0
      %5184 = vmatprep.mubr.bf16.mxu0 0
      %5185 = vmatmul.mubr.bf16.gmra.mrb[0].mxu0 %v1114
      %v5186 = vpop.f32.mrb[0].mxu0
      %v5187 = vadd.f32 %v5062, %v5186
      %v5188 = vpop.f32.mrb[0].mxu0
      %v5189 = vpop.f32.mrb[0].mxu0
      %v5190 = vadd.f32 %v5062, %v5189
      %v5191 = vpop.f32.mrb[0].mxu0
      %5192 = vmatprep.mubr.bf16.mxu0 0
      %5193 = vmatmul.mubr.bf16.gmra.mrb[0].mxu0 %v1115
      %v5194 = vpop.f32.mrb[0].mxu0
      %v5195 = vadd.f32 %v5062, %v5194
      %v5196 = vpop.f32.mrb[0].mxu0
      %v5197 = vpop.f32.mrb[0].mxu0
      %v5198 = vadd.f32 %v5062, %v5197
      %v5199 = vpop.f32.mrb[0].mxu0
      %5200 = vmatprep.mubr.bf16.mxu0 0
      %5201 = vmatmul.mubr.bf16.gmra.mrb[0].mxu0 %v1116
      %v5202 = vpop.f32.mrb[0].mxu0
      %v5203 = vadd.f32 %v5062, %v5202
      %v5204 = vpop.f32.mrb[0].mxu0
      %v5205 = vpop.f32.mrb[0].mxu0
      %v5206 = vadd.f32 %v5062, %v5205
      %v5207 = vpop.f32.mrb[0].mxu0
      %5208 = vdwg.mxu0
      %v5209 = vpack.c.bf16 %v5150, %v5147
      %v5210 = vpack.c.bf16 %v5158, %v5155
      %v5211 = vpack.c.bf16 %v5166, %v5163
      %v5212 = vpack.c.bf16 %v5174, %v5171
      %v5213 = vpack.c.bf16 %v5182, %v5179
      %v5214 = vpack.c.bf16 %v5190, %v5187
      %v5215 = vpack.c.bf16 %v5198, %v5195
      %v5216 = vpack.c.bf16 %v5206, %v5203
      %v5218 = vsel %vm1696, %v4853, 0
      %v5221 = vsel %vm1696, %v4854, 0
      %v5224 = vsel %vm1696, %v4855, 0
      %v5227 = vsel %vm1696, %v4856, 0
      %v5230 = vsel %vm1696, %v5031, 0
      %v5233 = vsel %vm1696, %v5032, 0
      %v5236 = vsel %vm1696, %v5033, 0
      %v5239 = vsel %vm1696, %v5034, 0
      %5241 = vmatprep.subr.bf16.mxu0 0
      %5242 = vmatpush1.bf16.xpose.msra.mxu0 %v5230
      %5243 = vmatprep.subr.bf16.mxu0 0
      %5244 = vmatpush1.bf16.xpose.msra.mxu0 %v5233
      %5245 = vmatprep.subr.bf16.mxu0 0
      %5246 = vmatpush1.bf16.xpose.msra.mxu0 %v5236
      %5247 = vmatprep.subr.bf16.mxu0 0
      %5248 = vmatpush1.bf16.xpose.msra.mxu0 %v5239
      %5249 = vmatprep.subr.bf16.mxu0 0
      %5250 = vmatpush1.bf16.xpose.msra.mxu0 0
      %5251 = vmatprep.subr.bf16.mxu0 0
      %5252 = vmatpush1.bf16.xpose.msra.mxu0 0
      %5253 = vmatprep.subr.bf16.mxu0 0
      %5254 = vmatpush1.bf16.xpose.msra.mxu0 0
      %5255 = vmatprep.subr.bf16.mxu0 0
      %5256 = vmatpush1.bf16.xpose.msra.mxu0 0
      %5257 = vmatprep.subr.bf16.mxu0 0
      %5258 = vmatpush1.bf16.xpose.msra.mxu0 0
      %5259 = vmatprep.subr.bf16.mxu0 0
      %5260 = vmatpush1.bf16.xpose.msra.mxu0 0
      %5261 = vmatprep.subr.bf16.mxu0 0
      %5262 = vmatpush1.bf16.xpose.msra.mxu0 0
      %5263 = vmatprep.subr.bf16.mxu0 0
      %5264 = vmatpush1.bf16.xpose.msra.mxu0 0
      %5265 = vmatprep.subr.bf16.mxu0 0
      %5266 = vmatpush1.bf16.xpose.msra.mxu0 0
      %5267 = vmatprep.subr.bf16.mxu0 0
      %5268 = vmatpush1.bf16.xpose.msra.mxu0 0
      %5269 = vmatprep.subr.bf16.mxu0 0
      %5270 = vmatpush1.bf16.xpose.msra.mxu0 0
      %5271 = vmatprep.subr.bf16.mxu0 0
      %5272 = vmatpush1.bf16.xpose.msra.mxu0 0
      %5273 = vmatprep.mubr.bf16.mxu0 0
      %5274 = vmatmul.mubr.bf16.gmra.mrb[0].mxu0 %v5218
      %v5275 = vpop.f32.mrb[0].mxu0
      %v5276 = vadd.f32 %v1136, %v5275
      %v5277 = vpop.f32.mrb[0].mxu0
      %v5278 = vpop.f32.mrb[0].mxu0
      %v5279 = vadd.f32 %v1137, %v5278
      %v5280 = vpop.f32.mrb[0].mxu0
      %5281 = vmatprep.mubr.bf16.mxu0 0
      %5282 = vmatmul.mubr.bf16.gmra.mrb[0].mxu0 %v5221
      %v5283 = vpop.f32.mrb[0].mxu0
      %v5284 = vadd.f32 %v1138, %v5283
      %v5285 = vpop.f32.mrb[0].mxu0
      %v5286 = vpop.f32.mrb[0].mxu0
      %v5287 = vadd.f32 %v1139, %v5286
      %v5288 = vpop.f32.mrb[0].mxu0
      %5289 = vmatprep.mubr.bf16.mxu0 0
      %5290 = vmatmul.mubr.bf16.gmra.mrb[0].mxu0 %v5224
      %v5291 = vpop.f32.mrb[0].mxu0
      %v5292 = vadd.f32 %v1140, %v5291
      %v5293 = vpop.f32.mrb[0].mxu0
      %v5294 = vpop.f32.mrb[0].mxu0
      %v5295 = vadd.f32 %v1141, %v5294
      %v5296 = vpop.f32.mrb[0].mxu0
      %5297 = vmatprep.mubr.bf16.mxu0 0
      %5298 = vmatmul.mubr.bf16.gmra.mrb[0].mxu0 %v5227
      %v5299 = vpop.f32.mrb[0].mxu0
      %v5300 = vadd.f32 %v1142, %v5299
      %v5301 = vpop.f32.mrb[0].mxu0
      %v5302 = vpop.f32.mrb[0].mxu0
      %v5303 = vadd.f32 %v1143, %v5302
      %v5304 = vpop.f32.mrb[0].mxu0
      %5305 = vdwg.mxu0
      %v5306 = vsel %vm1786, %v5276, -inf
      %5307 = vmax.xlane.f32.xlu0 %v5306
      %v5308 = vpop.xlane.xlu0 %5307
      %v5309 = vsel %vm1786, %v5279, -inf
      %5310 = vmax.xlane.f32.xlu0 %v5309
      %v5311 = vpop.xlane.xlu0 %5310
      %v5312 = vsel %vm1786, %v5284, -inf
      %5313 = vmax.xlane.f32.xlu0 %v5312
      %v5314 = vpop.xlane.xlu0 %5313
      %v5315 = vsel %vm1786, %v5287, -inf
      %5316 = vmax.xlane.f32.xlu0 %v5315
      %v5317 = vpop.xlane.xlu0 %5316
      %v5318 = vsel %vm1786, %v5292, -inf
      %5319 = vmax.xlane.f32.xlu0 %v5318
      %v5320 = vpop.xlane.xlu0 %5319
      %v5321 = vsel %vm1786, %v5295, -inf
      %5322 = vmax.xlane.f32.xlu0 %v5321
      %v5323 = vpop.xlane.xlu0 %5322
      %v5324 = vsel %vm1786, %v5300, -inf
      %5325 = vmax.xlane.f32.xlu0 %v5324
      %v5326 = vpop.xlane.xlu0 %5325
      %v5327 = vsel %vm1786, %v5303, -inf
      %5328 = vmax.xlane.f32.xlu0 %v5327
      %v5329 = vpop.xlane.xlu0 %5328
      %v5330 = vsub.f32 %v5276, %v5308
      %v5331 = vsub.f32 %v5279, %v5311
      %v5332 = vsub.f32 %v5284, %v5314
      %v5333 = vsub.f32 %v5287, %v5317
      %v5334 = vsub.f32 %v5292, %v5320
      %v5335 = vsub.f32 %v5295, %v5323
      %v5336 = vsub.f32 %v5300, %v5326
      %v5337 = vsub.f32 %v5303, %v5329
      %v5338 = vmul.f32 %v5330, 1.442695
      %v5339 = vpow.pop %v5338
      %v5340 = vmul.f32 %v5331, 1.442695
      %v5341 = vpow.pop %v5340
      %v5342 = vmul.f32 %v5332, 1.442695
      %v5343 = vpow.pop %v5342
      %v5344 = vmul.f32 %v5333, 1.442695
      %v5345 = vpow.pop %v5344
      %v5346 = vmul.f32 %v5334, 1.442695
      %v5347 = vpow.pop %v5346
      %v5348 = vmul.f32 %v5335, 1.442695
      %v5349 = vpow.pop %v5348
      %v5350 = vmul.f32 %v5336, 1.442695
      %v5351 = vpow.pop %v5350
      %v5352 = vmul.f32 %v5337, 1.442695
      %v5353 = vpow.pop %v5352
      %v5354 = vsel %vm1786, %v5339, 0.0
      %5355 = vadd.xlane.f32.xlu0 %v5354
      %v5356 = vpop.xlane.xlu0 %5355
      %v5357 = vsel %vm1786, %v5341, 0.0
      %5358 = vadd.xlane.f32.xlu0 %v5357
      %v5359 = vpop.xlane.xlu0 %5358
      %v5360 = vsel %vm1786, %v5343, 0.0
      %5361 = vadd.xlane.f32.xlu0 %v5360
      %v5362 = vpop.xlane.xlu0 %5361
      %v5363 = vsel %vm1786, %v5345, 0.0
      %5364 = vadd.xlane.f32.xlu0 %v5363
      %v5365 = vpop.xlane.xlu0 %5364
      %v5366 = vsel %vm1786, %v5347, 0.0
      %5367 = vadd.xlane.f32.xlu0 %v5366
      %v5368 = vpop.xlane.xlu0 %5367
      %v5369 = vsel %vm1786, %v5349, 0.0
      %5370 = vadd.xlane.f32.xlu0 %v5369
      %v5371 = vpop.xlane.xlu0 %5370
      %v5372 = vsel %vm1786, %v5351, 0.0
      %5373 = vadd.xlane.f32.xlu0 %v5372
      %v5374 = vpop.xlane.xlu0 %5373
      %v5375 = vsel %vm1786, %v5353, 0.0
      %5376 = vadd.xlane.f32.xlu0 %v5375
      %v5377 = vpop.xlane.xlu0 %5376
      %v5378 = vrcp.pop %v5356
      %v5379 = vrcp.pop %v5359
      %v5380 = vrcp.pop %v5362
      %v5381 = vrcp.pop %v5365
      %v5382 = vrcp.pop %v5368
      %v5383 = vrcp.pop %v5371
      %v5384 = vrcp.pop %v5374
      %v5385 = vrcp.pop %v5377
      %v5386 = vmul.f32 %v5339, %v5378
      %v5387 = vmul.f32 %v5341, %v5379
      %v5388 = vmul.f32 %v5343, %v5380
      %v5389 = vmul.f32 %v5345, %v5381
      %v5390 = vmul.f32 %v5347, %v5382
      %v5391 = vmul.f32 %v5349, %v5383
      %v5392 = vmul.f32 %v5351, %v5384
      %v5393 = vmul.f32 %v5353, %v5385
      %v5394 = vpack.c.bf16 %v5387, %v5386
      %v5395 = vpack.c.bf16 %v5389, %v5388
      %v5396 = vpack.c.bf16 %v5391, %v5390
      %v5397 = vpack.c.bf16 %v5393, %v5392
      %v5399 = vsel %vm1786, %v5394, 0
      %v5402 = vsel %vm1786, %v5395, 0
      %v5405 = vsel %vm1786, %v5396, 0
      %v5408 = vsel %vm1786, %v5397, 0
      %5410 = vmatprep.subr.bf16.mxu0 0
      %5411 = vmatpush1.bf16.msra.mxu0 %v5209
      %5412 = vmatprep.subr.bf16.mxu0 0
      %5413 = vmatpush1.bf16.msra.mxu0 %v5210
      %5414 = vmatprep.subr.bf16.mxu0 0
      %5415 = vmatpush1.bf16.msra.mxu0 %v5211
      %5416 = vmatprep.subr.bf16.mxu0 0
      %5417 = vmatpush1.bf16.msra.mxu0 %v5212
      %5418 = vmatprep.subr.bf16.mxu0 0
      %5419 = vmatpush1.bf16.msra.mxu0 0
      %5420 = vmatprep.subr.bf16.mxu0 0
      %5421 = vmatpush1.bf16.msra.mxu0 0
      %5422 = vmatprep.subr.bf16.mxu0 0
      %5423 = vmatpush1.bf16.msra.mxu0 0
      %5424 = vmatprep.subr.bf16.mxu0 0
      %5425 = vmatpush1.bf16.msra.mxu0 0
      %5426 = vmatprep.subr.bf16.mxu0 0
      %5427 = vmatpush1.bf16.msra.mxu0 0
      %5428 = vmatprep.subr.bf16.mxu0 0
      %5429 = vmatpush1.bf16.msra.mxu0 0
      %5430 = vmatprep.subr.bf16.mxu0 0
      %5431 = vmatpush1.bf16.msra.mxu0 0
      %5432 = vmatprep.subr.bf16.mxu0 0
      %5433 = vmatpush1.bf16.msra.mxu0 0
      %5434 = vmatprep.subr.bf16.mxu0 0
      %5435 = vmatpush1.bf16.msra.mxu0 0
      %5436 = vmatprep.subr.bf16.mxu0 0
      %5437 = vmatpush1.bf16.msra.mxu0 0
      %5438 = vmatprep.subr.bf16.mxu0 0
      %5439 = vmatpush1.bf16.msra.mxu0 0
      %5440 = vmatprep.subr.bf16.mxu0 0
      %5441 = vmatpush1.bf16.msra.mxu0 0
      %5442 = vmatprep.mubr.bf16.mxu0 0
      %5443 = vmatmul.mubr.bf16.gmra.mrb[0].mxu0 %v5399
      %v5444 = vpop.f32.mrb[0].mxu0
      %v5445 = vadd.f32 0.0, %v5444
      %v5446 = vpop.f32.mrb[0].mxu0
      %v5447 = vpop.f32.mrb[0].mxu0
      %v5448 = vadd.f32 0.0, %v5447
      %v5449 = vpop.f32.mrb[0].mxu0
      %5450 = vmatprep.mubr.bf16.mxu0 0
      %5451 = vmatmul.mubr.bf16.gmra.mrb[0].mxu0 %v5402
      %v5452 = vpop.f32.mrb[0].mxu0
      %v5453 = vadd.f32 0.0, %v5452
      %v5454 = vpop.f32.mrb[0].mxu0
      %v5455 = vpop.f32.mrb[0].mxu0
      %v5456 = vadd.f32 0.0, %v5455
      %v5457 = vpop.f32.mrb[0].mxu0
      %5458 = vmatprep.mubr.bf16.mxu0 0
      %5459 = vmatmul.mubr.bf16.gmra.mrb[0].mxu0 %v5405
      %v5460 = vpop.f32.mrb[0].mxu0
      %v5461 = vadd.f32 0.0, %v5460
      %v5462 = vpop.f32.mrb[0].mxu0
      %v5463 = vpop.f32.mrb[0].mxu0
      %v5464 = vadd.f32 0.0, %v5463
      %v5465 = vpop.f32.mrb[0].mxu0
      %5466 = vmatprep.mubr.bf16.mxu0 0
      %5467 = vmatmul.mubr.bf16.gmra.mrb[0].mxu0 %v5408
      %v5468 = vpop.f32.mrb[0].mxu0
      %v5469 = vadd.f32 0.0, %v5468
      %v5470 = vpop.f32.mrb[0].mxu0
      %v5471 = vpop.f32.mrb[0].mxu0
      %v5472 = vadd.f32 0.0, %v5471
      %v5473 = vpop.f32.mrb[0].mxu0
      %5474 = vdwg.mxu0
      %v5476 = vsel %vm1696, %v4857, 0
      %v5479 = vsel %vm1696, %v4858, 0
      %v5482 = vsel %vm1696, %v4859, 0
      %v5485 = vsel %vm1696, %v4860, 0
      %v5488 = vsel %vm1696, %v5035, 0
      %v5491 = vsel %vm1696, %v5036, 0
      %v5494 = vsel %vm1696, %v5037, 0
      %v5497 = vsel %vm1696, %v5038, 0
      %5499 = vmatprep.subr.bf16.mxu0 0
      %5500 = vmatpush1.bf16.xpose.msra.mxu0 %v5230
      %5501 = vmatprep.subr.bf16.mxu0 0
      %5502 = vmatpush1.bf16.xpose.msra.mxu0 %v5233
      %5503 = vmatprep.subr.bf16.mxu0 0
      %5504 = vmatpush1.bf16.xpose.msra.mxu0 %v5236
      %5505 = vmatprep.subr.bf16.mxu0 0
      %5506 = vmatpush1.bf16.xpose.msra.mxu0 %v5239
      %5507 = vmatprep.subr.bf16.mxu0 0
      %5508 = vmatpush1.bf16.xpose.msra.mxu0 %v5488
      %5509 = vmatprep.subr.bf16.mxu0 0
      %5510 = vmatpush1.bf16.xpose.msra.mxu0 %v5491
      %5511 = vmatprep.subr.bf16.mxu0 0
      %5512 = vmatpush1.bf16.xpose.msra.mxu0 %v5494
      %5513 = vmatprep.subr.bf16.mxu0 0
      %5514 = vmatpush1.bf16.xpose.msra.mxu0 %v5497
      %5515 = vmatprep.subr.bf16.mxu0 0
      %5516 = vmatpush1.bf16.xpose.msra.mxu0 0
      %5517 = vmatprep.subr.bf16.mxu0 0
      %5518 = vmatpush1.bf16.xpose.msra.mxu0 0
      %5519 = vmatprep.subr.bf16.mxu0 0
      %5520 = vmatpush1.bf16.xpose.msra.mxu0 0
      %5521 = vmatprep.subr.bf16.mxu0 0
      %5522 = vmatpush1.bf16.xpose.msra.mxu0 0
      %5523 = vmatprep.subr.bf16.mxu0 0
      %5524 = vmatpush1.bf16.xpose.msra.mxu0 0
      %5525 = vmatprep.subr.bf16.mxu0 0
      %5526 = vmatpush1.bf16.xpose.msra.mxu0 0
      %5527 = vmatprep.subr.bf16.mxu0 0
      %5528 = vmatpush1.bf16.xpose.msra.mxu0 0
      %5529 = vmatprep.subr.bf16.mxu0 0
      %5530 = vmatpush1.bf16.xpose.msra.mxu0 0
      %5531 = vmatprep.mubr.bf16.mxu0 0
      %5532 = vmatmul.mubr.bf16.gmra.mrb[0].mxu0 %v5476
      %v5533 = vpop.f32.mrb[0].mxu0
      %v5534 = vadd.f32 %v1160, %v5533
      %v5535 = vpop.f32.mrb[0].mxu0
      %v5536 = vpop.f32.mrb[0].mxu0
      %v5537 = vadd.f32 %v1161, %v5536
      %v5538 = vpop.f32.mrb[0].mxu0
      %5539 = vmatprep.mubr.bf16.mxu0 0
      %5540 = vmatmul.mubr.bf16.gmra.mrb[0].mxu0 %v5479
      %v5541 = vpop.f32.mrb[0].mxu0
      %v5542 = vadd.f32 %v1162, %v5541
      %v5543 = vpop.f32.mrb[0].mxu0
      %v5544 = vpop.f32.mrb[0].mxu0
      %v5545 = vadd.f32 %v1163, %v5544
      %v5546 = vpop.f32.mrb[0].mxu0
      %5547 = vmatprep.mubr.bf16.mxu0 0
      %5548 = vmatmul.mubr.bf16.gmra.mrb[0].mxu0 %v5482
      %v5549 = vpop.f32.mrb[0].mxu0
      %v5550 = vadd.f32 %v1164, %v5549
      %v5551 = vpop.f32.mrb[0].mxu0
      %v5552 = vpop.f32.mrb[0].mxu0
      %v5553 = vadd.f32 %v1165, %v5552
      %v5554 = vpop.f32.mrb[0].mxu0
      %5555 = vmatprep.mubr.bf16.mxu0 0
      %5556 = vmatmul.mubr.bf16.gmra.mrb[0].mxu0 %v5485
      %v5557 = vpop.f32.mrb[0].mxu0
      %v5558 = vadd.f32 %v1166, %v5557
      %v5559 = vpop.f32.mrb[0].mxu0
      %v5560 = vpop.f32.mrb[0].mxu0
      %v5561 = vadd.f32 %v1167, %v5560
      %v5562 = vpop.f32.mrb[0].mxu0
      %5563 = vdwg.mxu0
      %5564 = vmax.xlane.f32.xlu0 %v5534
      %v5565 = vpop.xlane.xlu0 %5564
      %5566 = vmax.xlane.f32.xlu0 %v5537
      %v5567 = vpop.xlane.xlu0 %5566
      %5568 = vmax.xlane.f32.xlu0 %v5542
      %v5569 = vpop.xlane.xlu0 %5568
      %5570 = vmax.xlane.f32.xlu0 %v5545
      %v5571 = vpop.xlane.xlu0 %5570
      %5572 = vmax.xlane.f32.xlu0 %v5550
      %v5573 = vpop.xlane.xlu0 %5572
      %5574 = vmax.xlane.f32.xlu0 %v5553
      %v5575 = vpop.xlane.xlu0 %5574
      %5576 = vmax.xlane.f32.xlu0 %v5558
      %v5577 = vpop.xlane.xlu0 %5576
      %5578 = vmax.xlane.f32.xlu0 %v5561
      %v5579 = vpop.xlane.xlu0 %5578
      %v5580 = vsub.f32 %v5534, %v5565
      %v5581 = vsub.f32 %v5537, %v5567
      %v5582 = vsub.f32 %v5542, %v5569
      %v5583 = vsub.f32 %v5545, %v5571
      %v5584 = vsub.f32 %v5550, %v5573
      %v5585 = vsub.f32 %v5553, %v5575
      %v5586 = vsub.f32 %v5558, %v5577
      %v5587 = vsub.f32 %v5561, %v5579
      %v5588 = vmul.f32 %v5580, 1.442695
      %v5589 = vpow.pop %v5588
      %v5590 = vmul.f32 %v5581, 1.442695
      %v5591 = vpow.pop %v5590
      %v5592 = vmul.f32 %v5582, 1.442695
      %v5593 = vpow.pop %v5592
      %v5594 = vmul.f32 %v5583, 1.442695
      %v5595 = vpow.pop %v5594
      %v5596 = vmul.f32 %v5584, 1.442695
      %v5597 = vpow.pop %v5596
      %v5598 = vmul.f32 %v5585, 1.442695
      %v5599 = vpow.pop %v5598
      %v5600 = vmul.f32 %v5586, 1.442695
      %v5601 = vpow.pop %v5600
      %v5602 = vmul.f32 %v5587, 1.442695
      %v5603 = vpow.pop %v5602
      %5604 = vadd.xlane.f32.xlu0 %v5589
      %v5605 = vpop.xlane.xlu0 %5604
      %5606 = vadd.xlane.f32.xlu0 %v5591
      %v5607 = vpop.xlane.xlu0 %5606
      %5608 = vadd.xlane.f32.xlu0 %v5593
      %v5609 = vpop.xlane.xlu0 %5608
      %5610 = vadd.xlane.f32.xlu0 %v5595
      %v5611 = vpop.xlane.xlu0 %5610
      %5612 = vadd.xlane.f32.xlu0 %v5597
      %v5613 = vpop.xlane.xlu0 %5612
      %5614 = vadd.xlane.f32.xlu0 %v5599
      %v5615 = vpop.xlane.xlu0 %5614
      %5616 = vadd.xlane.f32.xlu0 %v5601
      %v5617 = vpop.xlane.xlu0 %5616
      %5618 = vadd.xlane.f32.xlu0 %v5603
      %v5619 = vpop.xlane.xlu0 %5618
      %v5620 = vrcp.pop %v5605
      %v5621 = vrcp.pop %v5607
      %v5622 = vrcp.pop %v5609
      %v5623 = vrcp.pop %v5611
      %v5624 = vrcp.pop %v5613
      %v5625 = vrcp.pop %v5615
      %v5626 = vrcp.pop %v5617
      %v5627 = vrcp.pop %v5619
      %v5628 = vmul.f32 %v5589, %v5620
      %v5629 = vmul.f32 %v5591, %v5621
      %v5630 = vmul.f32 %v5593, %v5622
      %v5631 = vmul.f32 %v5595, %v5623
      %v5632 = vmul.f32 %v5597, %v5624
      %v5633 = vmul.f32 %v5599, %v5625
      %v5634 = vmul.f32 %v5601, %v5626
      %v5635 = vmul.f32 %v5603, %v5627
      %v5636 = vpack.c.bf16 %v5629, %v5628
      %v5637 = vpack.c.bf16 %v5631, %v5630
      %v5638 = vpack.c.bf16 %v5633, %v5632
      %v5639 = vpack.c.bf16 %v5635, %v5634
      %5640 = vmatprep.subr.bf16.mxu0 0
      %5641 = vmatpush1.bf16.msra.mxu0 %v5209
      %5642 = vmatprep.subr.bf16.mxu0 0
      %5643 = vmatpush1.bf16.msra.mxu0 %v5210
      %5644 = vmatprep.subr.bf16.mxu0 0
      %5645 = vmatpush1.bf16.msra.mxu0 %v5211
      %5646 = vmatprep.subr.bf16.mxu0 0
      %5647 = vmatpush1.bf16.msra.mxu0 %v5212
      %5648 = vmatprep.subr.bf16.mxu0 0
      %5649 = vmatpush1.bf16.msra.mxu0 %v5213
      %5650 = vmatprep.subr.bf16.mxu0 0
      %5651 = vmatpush1.bf16.msra.mxu0 %v5214
      %5652 = vmatprep.subr.bf16.mxu0 0
      %5653 = vmatpush1.bf16.msra.mxu0 %v5215
      %5654 = vmatprep.subr.bf16.mxu0 0
      %5655 = vmatpush1.bf16.msra.mxu0 %v5216
      %5656 = vmatprep.subr.bf16.mxu0 0
      %5657 = vmatpush1.bf16.msra.mxu0 0
      %5658 = vmatprep.subr.bf16.mxu0 0
      %5659 = vmatpush1.bf16.msra.mxu0 0
      %5660 = vmatprep.subr.bf16.mxu0 0
      %5661 = vmatpush1.bf16.msra.mxu0 0
      %5662 = vmatprep.subr.bf16.mxu0 0
      %5663 = vmatpush1.bf16.msra.mxu0 0
      %5664 = vmatprep.subr.bf16.mxu0 0
      %5665 = vmatpush1.bf16.msra.mxu0 0
      %5666 = vmatprep.subr.bf16.mxu0 0
      %5667 = vmatpush1.bf16.msra.mxu0 0
      %5668 = vmatprep.subr.bf16.mxu0 0
      %5669 = vmatpush1.bf16.msra.mxu0 0
      %5670 = vmatprep.subr.bf16.mxu0 0
      %5671 = vmatpush1.bf16.msra.mxu0 0
      %5672 = vmatprep.mubr.bf16.mxu0 0
      %5673 = vmatmul.mubr.bf16.gmra.mrb[0].mxu0 %v5636
      %v5674 = vpop.f32.mrb[0].mxu0
      %v5675 = vadd.f32 0.0, %v5674
      %v5676 = vpop.f32.mrb[0].mxu0
      %v5677 = vpop.f32.mrb[0].mxu0
      %v5678 = vadd.f32 0.0, %v5677
      %v5679 = vpop.f32.mrb[0].mxu0
      %5680 = vmatprep.mubr.bf16.mxu0 0
      %5681 = vmatmul.mubr.bf16.gmra.mrb[0].mxu0 %v5637
      %v5682 = vpop.f32.mrb[0].mxu0
      %v5683 = vadd.f32 0.0, %v5682
      %v5684 = vpop.f32.mrb[0].mxu0
      %v5685 = vpop.f32.mrb[0].mxu0
      %v5686 = vadd.f32 0.0, %v5685
      %v5687 = vpop.f32.mrb[0].mxu0
      %5688 = vmatprep.mubr.bf16.mxu0 0
      %5689 = vmatmul.mubr.bf16.gmra.mrb[0].mxu0 %v5638
      %v5690 = vpop.f32.mrb[0].mxu0
      %v5691 = vadd.f32 0.0, %v5690
      %v5692 = vpop.f32.mrb[0].mxu0
      %v5693 = vpop.f32.mrb[0].mxu0
      %v5694 = vadd.f32 0.0, %v5693
      %v5695 = vpop.f32.mrb[0].mxu0
      %5696 = vmatprep.mubr.bf16.mxu0 0
      %5697 = vmatmul.mubr.bf16.gmra.mrb[0].mxu0 %v5639
      %v5698 = vpop.f32.mrb[0].mxu0
      %v5699 = vadd.f32 0.0, %v5698
      %v5700 = vpop.f32.mrb[0].mxu0
      %v5701 = vpop.f32.mrb[0].mxu0
      %v5702 = vadd.f32 0.0, %v5701
      %v5703 = vpop.f32.mrb[0].mxu0
      %5704 = vdwg.mxu0
      %v5705 = vpack.c.bf16 %v5448, %v5445
      %v5706 = vpack.c.bf16 %v5456, %v5453
      %v5707 = vpack.c.bf16 %v5464, %v5461
      %v5708 = vpack.c.bf16 %v5472, %v5469
      %v5709 = vpack.c.bf16 %v5678, %v5675
      %v5710 = vpack.c.bf16 %v5686, %v5683
      %v5711 = vpack.c.bf16 %v5694, %v5691
      %v5712 = vpack.c.bf16 %v5702, %v5699
      %s5713 = scalar_lea.vmem %s801, 48
      %v5714 = vld [vmem:[%s5713] sm:$0xf]
      %v5715 = vld [vmem:[%s5713 + $0x4] sm:$0xf]
      %v5716 = vld [vmem:[%s5713 + $0x8] sm:$0xf]
      %v5717 = vld [vmem:[%s5713 + $0xc] sm:$0xf]
      %v5722 = vunpack.c.l.b16 %v5714
      %v5723 = vunpack.c.l.b16 %v5715
      %v5724 = vunpack.c.l.b16 %v5716
      %v5725 = vunpack.c.l.b16 %v5717
      %v5726 = vpack.c.b16 %v5723, %v5722
      %v5727 = vpack.c.b16 %v5725, %v5724
      %v5731 = vsel %vm1696, %v5705, 0
      %v5734 = vsel %vm1696, %v5706, 0
      %v5737 = vsel %vm1696, %v5707, 0
      %v5740 = vsel %vm1696, %v5708, 0
      %v5743 = vsel %vm1696, %v5709, 0
      %v5746 = vsel %vm1696, %v5710, 0
      %v5749 = vsel %vm1696, %v5711, 0
      %v5752 = vsel %vm1696, %v5712, 0
      %5754 = vmatprep.subr.bf16.mxu0 0
      %5755 = vmatpush1.bf16.msra.mxu0 %v5726
      %5756 = vmatprep.subr.bf16.mxu0 0
      %5757 = vmatpush1.bf16.msra.mxu0 %v5727
      %5758 = vmatprep.subr.bf16.mxu0 0
      %5759 = vmatpush1.bf16.msra.mxu0 0
      %5760 = vmatprep.subr.bf16.mxu0 0
      %5761 = vmatpush1.bf16.msra.mxu0 0
      %5762 = vmatprep.subr.bf16.mxu0 0
      %5763 = vmatpush1.bf16.msra.mxu0 0
      %5764 = vmatprep.subr.bf16.mxu0 0
      %5765 = vmatpush1.bf16.msra.mxu0 0
      %5766 = vmatprep.subr.bf16.mxu0 0
      %5767 = vmatpush1.bf16.msra.mxu0 0
      %5768 = vmatprep.subr.bf16.mxu0 0
      %5769 = vmatpush1.bf16.msra.mxu0 0
      %5770 = vmatprep.subr.bf16.mxu0 0
      %5771 = vmatpush1.bf16.msra.mxu0 0
      %5772 = vmatprep.subr.bf16.mxu0 0
      %5773 = vmatpush1.bf16.msra.mxu0 0
      %5774 = vmatprep.subr.bf16.mxu0 0
      %5775 = vmatpush1.bf16.msra.mxu0 0
      %5776 = vmatprep.subr.bf16.mxu0 0
      %5777 = vmatpush1.bf16.msra.mxu0 0
      %5778 = vmatprep.subr.bf16.mxu0 0
      %5779 = vmatpush1.bf16.msra.mxu0 0
      %5780 = vmatprep.subr.bf16.mxu0 0
      %5781 = vmatpush1.bf16.msra.mxu0 0
      %5782 = vmatprep.subr.bf16.mxu0 0
      %5783 = vmatpush1.bf16.msra.mxu0 0
      %5784 = vmatprep.subr.bf16.mxu0 0
      %5785 = vmatpush1.bf16.msra.mxu0 0
      %5786 = vmatprep.mubr.bf16.mxu0 0
      %5787 = vmatmul.mubr.bf16.gmra.mrb[0].mxu0 %v5731
      %v5788 = vpop.f32.mrb[0].mxu0
      %v5789 = vadd.f32 0.0, %v5788
      %v5790 = vpop.f32.mrb[0].mxu0
      %v5791 = vpop.f32.mrb[0].mxu0
      %v5792 = vadd.f32 0.0, %v5791
      %v5793 = vpop.f32.mrb[0].mxu0
      %5794 = vmatprep.mubr.bf16.mxu0 0
      %5795 = vmatmul.mubr.bf16.gmra.mrb[0].mxu0 %v5734
      %v5796 = vpop.f32.mrb[0].mxu0
      %v5797 = vadd.f32 0.0, %v5796
      %v5798 = vpop.f32.mrb[0].mxu0
      %v5799 = vpop.f32.mrb[0].mxu0
      %v5800 = vadd.f32 0.0, %v5799
      %v5801 = vpop.f32.mrb[0].mxu0
      %5802 = vmatprep.mubr.bf16.mxu0 0
      %5803 = vmatmul.mubr.bf16.gmra.mrb[0].mxu0 %v5737
      %v5804 = vpop.f32.mrb[0].mxu0
      %v5805 = vadd.f32 0.0, %v5804
      %v5806 = vpop.f32.mrb[0].mxu0
      %v5807 = vpop.f32.mrb[0].mxu0
      %v5808 = vadd.f32 0.0, %v5807
      %v5809 = vpop.f32.mrb[0].mxu0
      %5810 = vmatprep.mubr.bf16.mxu0 0
      %5811 = vmatmul.mubr.bf16.gmra.mrb[0].mxu0 %v5740
      %v5812 = vpop.f32.mrb[0].mxu0
      %v5813 = vadd.f32 0.0, %v5812
      %v5814 = vpop.f32.mrb[0].mxu0
      %v5815 = vpop.f32.mrb[0].mxu0
      %v5816 = vadd.f32 0.0, %v5815
      %v5817 = vpop.f32.mrb[0].mxu0
      %5818 = vmatprep.mubr.bf16.mxu0 0
      %5819 = vmatmul.mubr.bf16.gmra.mrb[0].mxu0 %v5743
      %v5820 = vpop.f32.mrb[0].mxu0
      %v5821 = vadd.f32 0.0, %v5820
      %v5822 = vpop.f32.mrb[0].mxu0
      %v5823 = vpop.f32.mrb[0].mxu0
      %v5824 = vadd.f32 0.0, %v5823
      %v5825 = vpop.f32.mrb[0].mxu0
      %5826 = vmatprep.mubr.bf16.mxu0 0
      %5827 = vmatmul.mubr.bf16.gmra.mrb[0].mxu0 %v5746
      %v5828 = vpop.f32.mrb[0].mxu0
      %v5829 = vadd.f32 0.0, %v5828
      %v5830 = vpop.f32.mrb[0].mxu0
      %v5831 = vpop.f32.mrb[0].mxu0
      %v5832 = vadd.f32 0.0, %v5831
      %v5833 = vpop.f32.mrb[0].mxu0
      %5834 = vmatprep.mubr.bf16.mxu0 0
      %5835 = vmatmul.mubr.bf16.gmra.mrb[0].mxu0 %v5749
      %v5836 = vpop.f32.mrb[0].mxu0
      %v5837 = vadd.f32 0.0, %v5836
      %v5838 = vpop.f32.mrb[0].mxu0
      %v5839 = vpop.f32.mrb[0].mxu0
      %v5840 = vadd.f32 0.0, %v5839
      %v5841 = vpop.f32.mrb[0].mxu0
      %5842 = vmatprep.mubr.bf16.mxu0 0
      %5843 = vmatmul.mubr.bf16.gmra.mrb[0].mxu0 %v5752
      %v5844 = vpop.f32.mrb[0].mxu0
      %v5845 = vadd.f32 0.0, %v5844
      %v5846 = vpop.f32.mrb[0].mxu0
      %v5847 = vpop.f32.mrb[0].mxu0
      %v5848 = vadd.f32 0.0, %v5847
      %v5849 = vpop.f32.mrb[0].mxu0
      %5850 = vdwg.mxu0
      %v5851 = vadd.f32 %v4667, %v5789
      %v5852 = vadd.f32 %v4668, %v5792
      %v5853 = vadd.f32 %v4669, %v5797
      %v5854 = vadd.f32 %v4670, %v5800
      %v5855 = vadd.f32 %v4671, %v5805
      %v5856 = vadd.f32 %v4672, %v5808
      %v5857 = vadd.f32 %v4673, %v5813
      %v5858 = vadd.f32 %v4674, %v5816
      %v5859 = vadd.f32 %v4675, %v5821
      %v5860 = vadd.f32 %v4676, %v5824
      %v5861 = vadd.f32 %v4677, %v5829
      %v5862 = vadd.f32 %v4678, %v5832
      %v5863 = vadd.f32 %v4679, %v5837
      %v5864 = vadd.f32 %v4680, %v5840
      %v5865 = vadd.f32 %v4681, %v5845
      %v5866 = vadd.f32 %v4682, %v5848
      %v5867 = vadd.f32 %v870, %v5851
      %v5868 = vadd.f32 %v871, %v5852
      %v5869 = vadd.f32 %v872, %v5853
      %v5870 = vadd.f32 %v873, %v5854
      %v5871 = vadd.f32 %v874, %v5855
      %v5872 = vadd.f32 %v875, %v5856
      %v5873 = vadd.f32 %v876, %v5857
      %v5874 = vadd.f32 %v877, %v5858
      %v5875 = vadd.f32 %v878, %v5859
      %v5876 = vadd.f32 %v879, %v5860
      %v5877 = vadd.f32 %v880, %v5861
      %v5878 = vadd.f32 %v881, %v5862
      %v5879 = vadd.f32 %v882, %v5863
      %v5880 = vadd.f32 %v883, %v5864
      %v5881 = vadd.f32 %v884, %v5865
      %v5882 = vadd.f32 %v885, %v5866
      %v5883 = vld [vmem:[%s804] sm:$0x1]
      %v5885 = vlaneseq
      %v5886 = vshrl.u32 %v5885, 7
      %v5887 = vsub.s32 0, %v5886
      %v5888 = vrot.slane %v5883, %v5887
      %v5890 = vadd.f32 %v5867, %v5888
      %v5891 = vadd.f32 %v5868, %v5888
      %v5892 = vadd.f32 %v5869, %v5888
      %v5893 = vadd.f32 %v5870, %v5888
      %v5894 = vadd.f32 %v5871, %v5888
      %v5895 = vadd.f32 %v5872, %v5888
      %v5896 = vadd.f32 %v5873, %v5888
      %v5897 = vadd.f32 %v5874, %v5888
      %v5898 = vadd.f32 %v5875, %v5888
      %v5899 = vadd.f32 %v5876, %v5888
      %v5900 = vadd.f32 %v5877, %v5888
      %v5901 = vadd.f32 %v5878, %v5888
      %v5902 = vadd.f32 %v5879, %v5888
      %v5903 = vadd.f32 %v5880, %v5888
      %v5904 = vadd.f32 %v5881, %v5888
      %v5905 = vadd.f32 %v5882, %v5888
      %v5906 = vld [vmem:[%s807] sm:$0x1]
      %v5907 = vld [vmem:[%s810] sm:$0x1]
      %5908 = vadd.xlane.f32.xlu0 %v5890
      %v5909 = vpop.xlane.xlu0 %5908
      %5910 = vadd.xlane.f32.xlu0 %v5891
      %v5911 = vpop.xlane.xlu0 %5910
      %5912 = vadd.xlane.f32.xlu0 %v5892
      %v5913 = vpop.xlane.xlu0 %5912
      %5914 = vadd.xlane.f32.xlu0 %v5893
      %v5915 = vpop.xlane.xlu0 %5914
      %5916 = vadd.xlane.f32.xlu0 %v5894
      %v5917 = vpop.xlane.xlu0 %5916
      %5918 = vadd.xlane.f32.xlu0 %v5895
      %v5919 = vpop.xlane.xlu0 %5918
      %5920 = vadd.xlane.f32.xlu0 %v5896
      %v5921 = vpop.xlane.xlu0 %5920
      %5922 = vadd.xlane.f32.xlu0 %v5897
      %v5923 = vpop.xlane.xlu0 %5922
      %5924 = vadd.xlane.f32.xlu0 %v5898
      %v5925 = vpop.xlane.xlu0 %5924
      %5926 = vadd.xlane.f32.xlu0 %v5899
      %v5927 = vpop.xlane.xlu0 %5926
      %5928 = vadd.xlane.f32.xlu0 %v5900
      %v5929 = vpop.xlane.xlu0 %5928
      %5930 = vadd.xlane.f32.xlu0 %v5901
      %v5931 = vpop.xlane.xlu0 %5930
      %5932 = vadd.xlane.f32.xlu0 %v5902
      %v5933 = vpop.xlane.xlu0 %5932
      %5934 = vadd.xlane.f32.xlu0 %v5903
      %v5935 = vpop.xlane.xlu0 %5934
      %5936 = vadd.xlane.f32.xlu0 %v5904
      %v5937 = vpop.xlane.xlu0 %5936
      %5938 = vadd.xlane.f32.xlu0 %v5905
      %v5939 = vpop.xlane.xlu0 %5938
      %v5940 = vmul.f32 %v5909, %v920
      %v5941 = vmul.f32 %v5911, %v920
      %v5942 = vmul.f32 %v5913, %v920
      %v5943 = vmul.f32 %v5915, %v920
      %v5944 = vmul.f32 %v5917, %v920
      %v5945 = vmul.f32 %v5919, %v920
      %v5946 = vmul.f32 %v5921, %v920
      %v5947 = vmul.f32 %v5923, %v920
      %v5948 = vmul.f32 %v5925, %v920
      %v5949 = vmul.f32 %v5927, %v920
      %v5950 = vmul.f32 %v5929, %v920
      %v5951 = vmul.f32 %v5931, %v920
      %v5952 = vmul.f32 %v5933, %v920
      %v5953 = vmul.f32 %v5935, %v920
      %v5954 = vmul.f32 %v5937, %v920
      %v5955 = vmul.f32 %v5939, %v920
      %v5956 = vsub.f32 %v5890, %v5940
      %v5957 = vsub.f32 %v5891, %v5941
      %v5958 = vsub.f32 %v5892, %v5942
      %v5959 = vsub.f32 %v5893, %v5943
      %v5960 = vsub.f32 %v5894, %v5944
      %v5961 = vsub.f32 %v5895, %v5945
      %v5962 = vsub.f32 %v5896, %v5946
      %v5963 = vsub.f32 %v5897, %v5947
      %v5964 = vsub.f32 %v5898, %v5948
      %v5965 = vsub.f32 %v5899, %v5949
      %v5966 = vsub.f32 %v5900, %v5950
      %v5967 = vsub.f32 %v5901, %v5951
      %v5968 = vsub.f32 %v5902, %v5952
      %v5969 = vsub.f32 %v5903, %v5953
      %v5970 = vsub.f32 %v5904, %v5954
      %v5971 = vsub.f32 %v5905, %v5955
      %v5972 = vmul.f32 %v5956, %v5956
      %v5973 = vmul.f32 %v5957, %v5957
      %v5974 = vmul.f32 %v5958, %v5958
      %v5975 = vmul.f32 %v5959, %v5959
      %v5976 = vmul.f32 %v5960, %v5960
      %v5977 = vmul.f32 %v5961, %v5961
      %v5978 = vmul.f32 %v5962, %v5962
      %v5979 = vmul.f32 %v5963, %v5963
      %v5980 = vmul.f32 %v5964, %v5964
      %v5981 = vmul.f32 %v5965, %v5965
      %v5982 = vmul.f32 %v5966, %v5966
      %v5983 = vmul.f32 %v5967, %v5967
      %v5984 = vmul.f32 %v5968, %v5968
      %v5985 = vmul.f32 %v5969, %v5969
      %v5986 = vmul.f32 %v5970, %v5970
      %v5987 = vmul.f32 %v5971, %v5971
      %5988 = vadd.xlane.f32.xlu0 %v5972
      %v5989 = vpop.xlane.xlu0 %5988
      %5990 = vadd.xlane.f32.xlu0 %v5973
      %v5991 = vpop.xlane.xlu0 %5990
      %5992 = vadd.xlane.f32.xlu0 %v5974
      %v5993 = vpop.xlane.xlu0 %5992
      %5994 = vadd.xlane.f32.xlu0 %v5975
      %v5995 = vpop.xlane.xlu0 %5994
      %5996 = vadd.xlane.f32.xlu0 %v5976
      %v5997 = vpop.xlane.xlu0 %5996
      %5998 = vadd.xlane.f32.xlu0 %v5977
      %v5999 = vpop.xlane.xlu0 %5998
      %6000 = vadd.xlane.f32.xlu0 %v5978
      %v6001 = vpop.xlane.xlu0 %6000
      %6002 = vadd.xlane.f32.xlu0 %v5979
      %v6003 = vpop.xlane.xlu0 %6002
      %6004 = vadd.xlane.f32.xlu0 %v5980
      %v6005 = vpop.xlane.xlu0 %6004
      %6006 = vadd.xlane.f32.xlu0 %v5981
      %v6007 = vpop.xlane.xlu0 %6006
      %6008 = vadd.xlane.f32.xlu0 %v5982
      %v6009 = vpop.xlane.xlu0 %6008
      %6010 = vadd.xlane.f32.xlu0 %v5983
      %v6011 = vpop.xlane.xlu0 %6010
      %6012 = vadd.xlane.f32.xlu0 %v5984
      %v6013 = vpop.xlane.xlu0 %6012
      %6014 = vadd.xlane.f32.xlu0 %v5985
      %v6015 = vpop.xlane.xlu0 %6014
      %6016 = vadd.xlane.f32.xlu0 %v5986
      %v6017 = vpop.xlane.xlu0 %6016
      %6018 = vadd.xlane.f32.xlu0 %v5987
      %v6019 = vpop.xlane.xlu0 %6018
      %v6020 = vmul.f32 %v5989, %v920
      %v6021 = vmul.f32 %v5991, %v920
      %v6022 = vmul.f32 %v5993, %v920
      %v6023 = vmul.f32 %v5995, %v920
      %v6024 = vmul.f32 %v5997, %v920
      %v6025 = vmul.f32 %v5999, %v920
      %v6026 = vmul.f32 %v6001, %v920
      %v6027 = vmul.f32 %v6003, %v920
      %v6028 = vmul.f32 %v6005, %v920
      %v6029 = vmul.f32 %v6007, %v920
      %v6030 = vmul.f32 %v6009, %v920
      %v6031 = vmul.f32 %v6011, %v920
      %v6032 = vmul.f32 %v6013, %v920
      %v6033 = vmul.f32 %v6015, %v920
      %v6034 = vmul.f32 %v6017, %v920
      %v6035 = vmul.f32 %v6019, %v920
      %v6036 = vadd.f32 %v6020, 1e-05
      %v6037 = vadd.f32 %v6021, 1e-05
      %v6038 = vadd.f32 %v6022, 1e-05
      %v6039 = vadd.f32 %v6023, 1e-05
      %v6040 = vadd.f32 %v6024, 1e-05
      %v6041 = vadd.f32 %v6025, 1e-05
      %v6042 = vadd.f32 %v6026, 1e-05
      %v6043 = vadd.f32 %v6027, 1e-05
      %v6044 = vadd.f32 %v6028, 1e-05
      %v6045 = vadd.f32 %v6029, 1e-05
      %v6046 = vadd.f32 %v6030, 1e-05
      %v6047 = vadd.f32 %v6031, 1e-05
      %v6048 = vadd.f32 %v6032, 1e-05
      %v6049 = vadd.f32 %v6033, 1e-05
      %v6050 = vadd.f32 %v6034, 1e-05
      %v6051 = vadd.f32 %v6035, 1e-05
      %v6052 = vrsqrt.pop %v6036
      %v6053 = vrsqrt.pop %v6037
      %v6054 = vrsqrt.pop %v6038
      %v6055 = vrsqrt.pop %v6039
      %v6056 = vrsqrt.pop %v6040
      %v6057 = vrsqrt.pop %v6041
      %v6058 = vrsqrt.pop %v6042
      %v6059 = vrsqrt.pop %v6043
      %v6060 = vrsqrt.pop %v6044
      %v6061 = vrsqrt.pop %v6045
      %v6062 = vrsqrt.pop %v6046
      %v6063 = vrsqrt.pop %v6047
      %v6064 = vrsqrt.pop %v6048
      %v6065 = vrsqrt.pop %v6049
      %v6066 = vrsqrt.pop %v6050
      %v6067 = vrsqrt.pop %v6051
      %v6068 = vmul.f32 %v5956, %v6052
      %v6069 = vmul.f32 %v5957, %v6053
      %v6070 = vmul.f32 %v5958, %v6054
      %v6071 = vmul.f32 %v5959, %v6055
      %v6072 = vmul.f32 %v5960, %v6056
      %v6073 = vmul.f32 %v5961, %v6057
      %v6074 = vmul.f32 %v5962, %v6058
      %v6075 = vmul.f32 %v5963, %v6059
      %v6076 = vmul.f32 %v5964, %v6060
      %v6077 = vmul.f32 %v5965, %v6061
      %v6078 = vmul.f32 %v5966, %v6062
      %v6079 = vmul.f32 %v5967, %v6063
      %v6080 = vmul.f32 %v5968, %v6064
      %v6081 = vmul.f32 %v5969, %v6065
      %v6082 = vmul.f32 %v5970, %v6066
      %v6083 = vmul.f32 %v5971, %v6067
      %v6085 = vlaneseq
      %v6086 = vshrl.u32 %v6085, 7
      %v6087 = vsub.s32 0, %v6086
      %v6088 = vrot.slane %v5906, %v6087
      %v6090 = vmul.f32 %v6068, %v6088
      %v6091 = vmul.f32 %v6069, %v6088
      %v6092 = vmul.f32 %v6070, %v6088
      %v6093 = vmul.f32 %v6071, %v6088
      %v6094 = vmul.f32 %v6072, %v6088
      %v6095 = vmul.f32 %v6073, %v6088
      %v6096 = vmul.f32 %v6074, %v6088
      %v6097 = vmul.f32 %v6075, %v6088
      %v6098 = vmul.f32 %v6076, %v6088
      %v6099 = vmul.f32 %v6077, %v6088
      %v6100 = vmul.f32 %v6078, %v6088
      %v6101 = vmul.f32 %v6079, %v6088
      %v6102 = vmul.f32 %v6080, %v6088
      %v6103 = vmul.f32 %v6081, %v6088
      %v6104 = vmul.f32 %v6082, %v6088
      %v6105 = vmul.f32 %v6083, %v6088
      %v6107 = vlaneseq
      %v6108 = vshrl.u32 %v6107, 7
      %v6109 = vsub.s32 0, %v6108
      %v6110 = vrot.slane %v5907, %v6109
      %v6112 = vadd.f32 %v6090, %v6110
      %v6113 = vadd.f32 %v6091, %v6110
      %v6114 = vadd.f32 %v6092, %v6110
      %v6115 = vadd.f32 %v6093, %v6110
      %v6116 = vadd.f32 %v6094, %v6110
      %v6117 = vadd.f32 %v6095, %v6110
      %v6118 = vadd.f32 %v6096, %v6110
      %v6119 = vadd.f32 %v6097, %v6110
      %v6120 = vadd.f32 %v6098, %v6110
      %v6121 = vadd.f32 %v6099, %v6110
      %v6122 = vadd.f32 %v6100, %v6110
      %v6123 = vadd.f32 %v6101, %v6110
      %v6124 = vadd.f32 %v6102, %v6110
      %v6125 = vadd.f32 %v6103, %v6110
      %v6126 = vadd.f32 %v6104, %v6110
      %v6127 = vadd.f32 %v6105, %v6110
      %v6128 = vpack.c.bf16 %v6113, %v6112
      %v6129 = vpack.c.bf16 %v6115, %v6114
      %v6130 = vpack.c.bf16 %v6117, %v6116
      %v6131 = vpack.c.bf16 %v6119, %v6118
      %v6132 = vpack.c.bf16 %v6121, %v6120
      %v6133 = vpack.c.bf16 %v6123, %v6122
      %v6134 = vpack.c.bf16 %v6125, %v6124
      %v6135 = vpack.c.bf16 %v6127, %v6126
      %v6136 = vld [vmem:[%s815] sm:$0xff]
      %v6137 = vld [vmem:[%s815 + $0x8] sm:$0xff]
      %v6138 = vld [vmem:[%s815 + $0x10] sm:$0xff]
      %v6139 = vld [vmem:[%s815 + $0x18] sm:$0xff]
      %v6140 = vld [vmem:[%s815 + $0x20] sm:$0xff]
      %v6141 = vld [vmem:[%s815 + $0x28] sm:$0xff]
      %v6142 = vld [vmem:[%s815 + $0x30] sm:$0xff]
      %v6143 = vld [vmem:[%s815 + $0x38] sm:$0xff]
      %v6144 = vld [vmem:[%s815 + $0x40] sm:$0xff]
      %v6145 = vld [vmem:[%s815 + $0x48] sm:$0xff]
      %v6146 = vld [vmem:[%s815 + $0x50] sm:$0xff]
      %v6147 = vld [vmem:[%s815 + $0x58] sm:$0xff]
      %v6148 = vld [vmem:[%s815 + $0x60] sm:$0xff]
      %v6149 = vld [vmem:[%s815 + $0x68] sm:$0xff]
      %v6150 = vld [vmem:[%s815 + $0x70] sm:$0xff]
      %v6151 = vld [vmem:[%s815 + $0x78] sm:$0xff]
      %v6152 = vld [vmem:[%s815 + $0x80] sm:$0xff]
      %v6153 = vld [vmem:[%s815 + $0x88] sm:$0xff]
      %v6154 = vld [vmem:[%s815 + $0x90] sm:$0xff]
      %v6155 = vld [vmem:[%s815 + $0x98] sm:$0xff]
      %v6156 = vld [vmem:[%s815 + $0xa0] sm:$0xff]
      %v6157 = vld [vmem:[%s815 + $0xa8] sm:$0xff]
      %v6158 = vld [vmem:[%s815 + $0xb0] sm:$0xff]
      %v6159 = vld [vmem:[%s815 + $0xb8] sm:$0xff]
      %v6160 = vld [vmem:[%s815 + $0xc0] sm:$0xff]
      %v6161 = vld [vmem:[%s815 + $0xc8] sm:$0xff]
      %v6162 = vld [vmem:[%s815 + $0xd0] sm:$0xff]
      %v6163 = vld [vmem:[%s815 + $0xd8] sm:$0xff]
      %v6164 = vld [vmem:[%s815 + $0xe0] sm:$0xff]
      %v6165 = vld [vmem:[%s815 + $0xe8] sm:$0xff]
      %v6166 = vld [vmem:[%s815 + $0xf0] sm:$0xff]
      %v6167 = vld [vmem:[%s815 + $0xf8] sm:$0xff]
      %v6168 = vld [vmem:[%s819] sm:$0xf]
      %v6170 = vlaneseq
      %v6171 = vshrl.u32 %v6170, 7
      %v6172 = vsub.s32 0, %v6171
      %v6173 = vrot.slane %v6168, %v6172
      %v6174 = vlaneseq
      %v6175 = vshrl.u32 %v6174, 7
      %v6176 = vsub.s32 1, %v6175
      %v6177 = vrot.slane %v6168, %v6176
      %v6178 = vlaneseq
      %v6179 = vshrl.u32 %v6178, 7
      %v6180 = vsub.s32 2, %v6179
      %v6181 = vrot.slane %v6168, %v6180
      %v6182 = vlaneseq
      %v6183 = vshrl.u32 %v6182, 7
      %v6184 = vsub.s32 3, %v6183
      %v6185 = vrot.slane %v6168, %v6184
      %v6222 = vunpack.c.l.b16 %v6136
      %v6223 = vunpack.c.h.b16 %v6136
      %v6224 = vunpack.c.l.b16 %v6137
      %v6225 = vunpack.c.h.b16 %v6137
      %v6226 = vunpack.c.l.b16 %v6138
      %v6227 = vunpack.c.h.b16 %v6138
      %v6228 = vunpack.c.l.b16 %v6139
      %v6229 = vunpack.c.h.b16 %v6139
      %v6230 = vunpack.c.l.b16 %v6140
      %v6231 = vunpack.c.h.b16 %v6140
      %v6232 = vunpack.c.l.b16 %v6141
      %v6233 = vunpack.c.h.b16 %v6141
      %v6234 = vunpack.c.l.b16 %v6142
      %v6235 = vunpack.c.h.b16 %v6142
      %v6236 = vunpack.c.l.b16 %v6143
      %v6237 = vunpack.c.h.b16 %v6143
      %v6238 = vunpack.c.l.b16 %v6144
      %v6239 = vunpack.c.h.b16 %v6144
      %v6240 = vunpack.c.l.b16 %v6145
      %v6241 = vunpack.c.h.b16 %v6145
      %v6242 = vunpack.c.l.b16 %v6146
      %v6243 = vunpack.c.h.b16 %v6146
      %v6244 = vunpack.c.l.b16 %v6147
      %v6245 = vunpack.c.h.b16 %v6147
      %v6246 = vunpack.c.l.b16 %v6148
      %v6247 = vunpack.c.h.b16 %v6148
      %v6248 = vunpack.c.l.b16 %v6149
      %v6249 = vunpack.c.h.b16 %v6149
      %v6250 = vunpack.c.l.b16 %v6150
      %v6251 = vunpack.c.h.b16 %v6150
      %v6252 = vunpack.c.l.b16 %v6151
      %v6253 = vunpack.c.h.b16 %v6151
      %v6254 = vunpack.c.l.b16 %v6152
      %v6255 = vunpack.c.h.b16 %v6152
      %v6256 = vunpack.c.l.b16 %v6153
      %v6257 = vunpack.c.h.b16 %v6153
      %v6258 = vunpack.c.l.b16 %v6154
      %v6259 = vunpack.c.h.b16 %v6154
      %v6260 = vunpack.c.l.b16 %v6155
      %v6261 = vunpack.c.h.b16 %v6155
      %v6262 = vunpack.c.l.b16 %v6156
      %v6263 = vunpack.c.h.b16 %v6156
      %v6264 = vunpack.c.l.b16 %v6157
      %v6265 = vunpack.c.h.b16 %v6157
      %v6266 = vunpack.c.l.b16 %v6158
      %v6267 = vunpack.c.h.b16 %v6158
      %v6268 = vunpack.c.l.b16 %v6159
      %v6269 = vunpack.c.h.b16 %v6159
      %v6270 = vunpack.c.l.b16 %v6160
      %v6271 = vunpack.c.h.b16 %v6160
      %v6272 = vunpack.c.l.b16 %v6161
      %v6273 = vunpack.c.h.b16 %v6161
      %v6274 = vunpack.c.l.b16 %v6162
      %v6275 = vunpack.c.h.b16 %v6162
      %v6276 = vunpack.c.l.b16 %v6163
      %v6277 = vunpack.c.h.b16 %v6163
      %v6278 = vunpack.c.l.b16 %v6164
      %v6279 = vunpack.c.h.b16 %v6164
      %v6280 = vunpack.c.l.b16 %v6165
      %v6281 = vunpack.c.h.b16 %v6165
      %v6282 = vunpack.c.l.b16 %v6166
      %v6283 = vunpack.c.h.b16 %v6166
      %v6284 = vunpack.c.l.b16 %v6167
      %v6285 = vunpack.c.h.b16 %v6167
      %v6286 = vpack.c.b16 %v6226, %v6222
      %v6287 = vpack.c.b16 %v6227, %v6223
      %v6288 = vpack.c.b16 %v6228, %v6224
      %v6289 = vpack.c.b16 %v6229, %v6225
      %v6290 = vpack.c.b16 %v6234, %v6230
      %v6291 = vpack.c.b16 %v6235, %v6231
      %v6292 = vpack.c.b16 %v6236, %v6232
      %v6293 = vpack.c.b16 %v6237, %v6233
      %v6294 = vpack.c.b16 %v6242, %v6238
      %v6295 = vpack.c.b16 %v6243, %v6239
      %v6296 = vpack.c.b16 %v6244, %v6240
      %v6297 = vpack.c.b16 %v6245, %v6241
      %v6298 = vpack.c.b16 %v6250, %v6246
      %v6299 = vpack.c.b16 %v6251, %v6247
      %v6300 = vpack.c.b16 %v6252, %v6248
      %v6301 = vpack.c.b16 %v6253, %v6249
      %v6302 = vpack.c.b16 %v6258, %v6254
      %v6303 = vpack.c.b16 %v6259, %v6255
      %v6304 = vpack.c.b16 %v6260, %v6256
      %v6305 = vpack.c.b16 %v6261, %v6257
      %v6306 = vpack.c.b16 %v6266, %v6262
      %v6307 = vpack.c.b16 %v6267, %v6263
      %v6308 = vpack.c.b16 %v6268, %v6264
      %v6309 = vpack.c.b16 %v6269, %v6265
      %v6310 = vpack.c.b16 %v6274, %v6270
      %v6311 = vpack.c.b16 %v6275, %v6271
      %v6312 = vpack.c.b16 %v6276, %v6272
      %v6313 = vpack.c.b16 %v6277, %v6273
      %v6314 = vpack.c.b16 %v6282, %v6278
      %v6315 = vpack.c.b16 %v6283, %v6279
      %v6316 = vpack.c.b16 %v6284, %v6280
      %v6317 = vpack.c.b16 %v6285, %v6281
      %6350 = vmatprep.subr.bf16.mxu0 %v6287
      %6351 = vmatpush1.bf16.msra.mxu0 %v6286
      %6352 = vmatprep.subr.bf16.mxu0 %v6291
      %6353 = vmatpush1.bf16.msra.mxu0 %v6290
      %6354 = vmatprep.subr.bf16.mxu0 %v6295
      %6355 = vmatpush1.bf16.msra.mxu0 %v6294
      %6356 = vmatprep.subr.bf16.mxu0 %v6299
      %6357 = vmatpush1.bf16.msra.mxu0 %v6298
      %6358 = vmatprep.subr.bf16.mxu0 %v6303
      %6359 = vmatpush1.bf16.msra.mxu0 %v6302
      %6360 = vmatprep.subr.bf16.mxu0 %v6307
      %6361 = vmatpush1.bf16.msra.mxu0 %v6306
      %6362 = vmatprep.subr.bf16.mxu0 %v6311
      %6363 = vmatpush1.bf16.msra.mxu0 %v6310
      %6364 = vmatprep.subr.bf16.mxu0 %v6315
      %6365 = vmatpush1.bf16.msra.mxu0 %v6314
      %6366 = vmatprep.subr.bf16.mxu0 0
      %6367 = vmatpush1.bf16.msra.mxu0 0
      %6368 = vmatprep.subr.bf16.mxu0 0
      %6369 = vmatpush1.bf16.msra.mxu0 0
      %6370 = vmatprep.subr.bf16.mxu0 0
      %6371 = vmatpush1.bf16.msra.mxu0 0
      %6372 = vmatprep.subr.bf16.mxu0 0
      %6373 = vmatpush1.bf16.msra.mxu0 0
      %6374 = vmatprep.subr.bf16.mxu0 0
      %6375 = vmatpush1.bf16.msra.mxu0 0
      %6376 = vmatprep.subr.bf16.mxu0 0
      %6377 = vmatpush1.bf16.msra.mxu0 0
      %6378 = vmatprep.subr.bf16.mxu0 0
      %6379 = vmatpush1.bf16.msra.mxu0 0
      %6380 = vmatprep.subr.bf16.mxu0 0
      %6381 = vmatpush1.bf16.msra.mxu0 0
      %6382 = vmatprep.mubr.bf16.mxu0 0
      %6383 = vmatmul.mubr.bf16.gmra.mrb[0].mxu0 %v6128
      %v6384 = vpop.f32.mrb[0].mxu0
      %v6385 = vadd.f32 %v6173, %v6384
      %v6386 = vpop.f32.mrb[0].mxu0
      %v6387 = vadd.f32 %v6177, %v6386
      %v6388 = vpop.f32.mrb[0].mxu0
      %v6389 = vadd.f32 %v6173, %v6388
      %v6390 = vpop.f32.mrb[0].mxu0
      %v6391 = vadd.f32 %v6177, %v6390
      %6392 = vmatprep.mubr.bf16.mxu0 0
      %6393 = vmatmul.mubr.bf16.gmra.mrb[0].mxu0 %v6129
      %v6394 = vpop.f32.mrb[0].mxu0
      %v6395 = vadd.f32 %v6173, %v6394
      %v6396 = vpop.f32.mrb[0].mxu0
      %v6397 = vadd.f32 %v6177, %v6396
      %v6398 = vpop.f32.mrb[0].mxu0
      %v6399 = vadd.f32 %v6173, %v6398
      %v6400 = vpop.f32.mrb[0].mxu0
      %v6401 = vadd.f32 %v6177, %v6400
      %6402 = vmatprep.mubr.bf16.mxu0 0
      %6403 = vmatmul.mubr.bf16.gmra.mrb[0].mxu0 %v6130
      %v6404 = vpop.f32.mrb[0].mxu0
      %v6405 = vadd.f32 %v6173, %v6404
      %v6406 = vpop.f32.mrb[0].mxu0
      %v6407 = vadd.f32 %v6177, %v6406
      %v6408 = vpop.f32.mrb[0].mxu0
      %v6409 = vadd.f32 %v6173, %v6408
      %v6410 = vpop.f32.mrb[0].mxu0
      %v6411 = vadd.f32 %v6177, %v6410
      %6412 = vmatprep.mubr.bf16.mxu0 0
      %6413 = vmatmul.mubr.bf16.gmra.mrb[0].mxu0 %v6131
      %v6414 = vpop.f32.mrb[0].mxu0
      %v6415 = vadd.f32 %v6173, %v6414
      %v6416 = vpop.f32.mrb[0].mxu0
      %v6417 = vadd.f32 %v6177, %v6416
      %v6418 = vpop.f32.mrb[0].mxu0
      %v6419 = vadd.f32 %v6173, %v6418
      %v6420 = vpop.f32.mrb[0].mxu0
      %v6421 = vadd.f32 %v6177, %v6420
      %6422 = vmatprep.mubr.bf16.mxu0 0
      %6423 = vmatmul.mubr.bf16.gmra.mrb[0].mxu0 %v6132
      %v6424 = vpop.f32.mrb[0].mxu0
      %v6425 = vadd.f32 %v6173, %v6424
      %v6426 = vpop.f32.mrb[0].mxu0
      %v6427 = vadd.f32 %v6177, %v6426
      %v6428 = vpop.f32.mrb[0].mxu0
      %v6429 = vadd.f32 %v6173, %v6428
      %v6430 = vpop.f32.mrb[0].mxu0
      %v6431 = vadd.f32 %v6177, %v6430
      %6432 = vmatprep.mubr.bf16.mxu0 0
      %6433 = vmatmul.mubr.bf16.gmra.mrb[0].mxu0 %v6133
      %v6434 = vpop.f32.mrb[0].mxu0
      %v6435 = vadd.f32 %v6173, %v6434
      %v6436 = vpop.f32.mrb[0].mxu0
      %v6437 = vadd.f32 %v6177, %v6436
      %v6438 = vpop.f32.mrb[0].mxu0
      %v6439 = vadd.f32 %v6173, %v6438
      %v6440 = vpop.f32.mrb[0].mxu0
      %v6441 = vadd.f32 %v6177, %v6440
      %6442 = vmatprep.mubr.bf16.mxu0 0
      %6443 = vmatmul.mubr.bf16.gmra.mrb[0].mxu0 %v6134
      %v6444 = vpop.f32.mrb[0].mxu0
      %v6445 = vadd.f32 %v6173, %v6444
      %v6446 = vpop.f32.mrb[0].mxu0
      %v6447 = vadd.f32 %v6177, %v6446
      %v6448 = vpop.f32.mrb[0].mxu0
      %v6449 = vadd.f32 %v6173, %v6448
      %v6450 = vpop.f32.mrb[0].mxu0
      %v6451 = vadd.f32 %v6177, %v6450
      %6452 = vmatprep.mubr.bf16.mxu0 0
      %6453 = vmatmul.mubr.bf16.gmra.mrb[0].mxu0 %v6135
      %v6454 = vpop.f32.mrb[0].mxu0
      %v6455 = vadd.f32 %v6173, %v6454
      %v6456 = vpop.f32.mrb[0].mxu0
      %v6457 = vadd.f32 %v6177, %v6456
      %v6458 = vpop.f32.mrb[0].mxu0
      %v6459 = vadd.f32 %v6173, %v6458
      %v6460 = vpop.f32.mrb[0].mxu0
      %v6461 = vadd.f32 %v6177, %v6460
      %6462 = vdwg.mxu0
      %6463 = vmatprep.subr.bf16.mxu0 %v6289
      %6464 = vmatpush1.bf16.msra.mxu0 %v6288
      %6465 = vmatprep.subr.bf16.mxu0 %v6293
      %6466 = vmatpush1.bf16.msra.mxu0 %v6292
      %6467 = vmatprep.subr.bf16.mxu0 %v6297
      %6468 = vmatpush1.bf16.msra.mxu0 %v6296
      %6469 = vmatprep.subr.bf16.mxu0 %v6301
      %6470 = vmatpush1.bf16.msra.mxu0 %v6300
      %6471 = vmatprep.subr.bf16.mxu0 %v6305
      %6472 = vmatpush1.bf16.msra.mxu0 %v6304
      %6473 = vmatprep.subr.bf16.mxu0 %v6309
      %6474 = vmatpush1.bf16.msra.mxu0 %v6308
      %6475 = vmatprep.subr.bf16.mxu0 %v6313
      %6476 = vmatpush1.bf16.msra.mxu0 %v6312
      %6477 = vmatprep.subr.bf16.mxu0 %v6317
      %6478 = vmatpush1.bf16.msra.mxu0 %v6316
      %6479 = vmatprep.subr.bf16.mxu0 0
      %6480 = vmatpush1.bf16.msra.mxu0 0
      %6481 = vmatprep.subr.bf16.mxu0 0
      %6482 = vmatpush1.bf16.msra.mxu0 0
      %6483 = vmatprep.subr.bf16.mxu0 0
      %6484 = vmatpush1.bf16.msra.mxu0 0
      %6485 = vmatprep.subr.bf16.mxu0 0
      %6486 = vmatpush1.bf16.msra.mxu0 0
      %6487 = vmatprep.subr.bf16.mxu0 0
      %6488 = vmatpush1.bf16.msra.mxu0 0
      %6489 = vmatprep.subr.bf16.mxu0 0
      %6490 = vmatpush1.bf16.msra.mxu0 0
      %6491 = vmatprep.subr.bf16.mxu0 0
      %6492 = vmatpush1.bf16.msra.mxu0 0
      %6493 = vmatprep.subr.bf16.mxu0 0
      %6494 = vmatpush1.bf16.msra.mxu0 0
      %6495 = vmatprep.mubr.bf16.mxu0 0
      %6496 = vmatmul.mubr.bf16.gmra.mrb[0].mxu0 %v6128
      %v6497 = vpop.f32.mrb[0].mxu0
      %v6498 = vadd.f32 %v6181, %v6497
      %v6499 = vpop.f32.mrb[0].mxu0
      %v6500 = vadd.f32 %v6185, %v6499
      %v6501 = vpop.f32.mrb[0].mxu0
      %v6502 = vadd.f32 %v6181, %v6501
      %v6503 = vpop.f32.mrb[0].mxu0
      %v6504 = vadd.f32 %v6185, %v6503
      %6505 = vmatprep.mubr.bf16.mxu0 0
      %6506 = vmatmul.mubr.bf16.gmra.mrb[0].mxu0 %v6129
      %v6507 = vpop.f32.mrb[0].mxu0
      %v6508 = vadd.f32 %v6181, %v6507
      %v6509 = vpop.f32.mrb[0].mxu0
      %v6510 = vadd.f32 %v6185, %v6509
      %v6511 = vpop.f32.mrb[0].mxu0
      %v6512 = vadd.f32 %v6181, %v6511
      %v6513 = vpop.f32.mrb[0].mxu0
      %v6514 = vadd.f32 %v6185, %v6513
      %6515 = vmatprep.mubr.bf16.mxu0 0
      %6516 = vmatmul.mubr.bf16.gmra.mrb[0].mxu0 %v6130
      %v6517 = vpop.f32.mrb[0].mxu0
      %v6518 = vadd.f32 %v6181, %v6517
      %v6519 = vpop.f32.mrb[0].mxu0
      %v6520 = vadd.f32 %v6185, %v6519
      %v6521 = vpop.f32.mrb[0].mxu0
      %v6522 = vadd.f32 %v6181, %v6521
      %v6523 = vpop.f32.mrb[0].mxu0
      %v6524 = vadd.f32 %v6185, %v6523
      %6525 = vmatprep.mubr.bf16.mxu0 0
      %6526 = vmatmul.mubr.bf16.gmra.mrb[0].mxu0 %v6131
      %v6527 = vpop.f32.mrb[0].mxu0
      %v6528 = vadd.f32 %v6181, %v6527
      %v6529 = vpop.f32.mrb[0].mxu0
      %v6530 = vadd.f32 %v6185, %v6529
      %v6531 = vpop.f32.mrb[0].mxu0
      %v6532 = vadd.f32 %v6181, %v6531
      %v6533 = vpop.f32.mrb[0].mxu0
      %v6534 = vadd.f32 %v6185, %v6533
      %6535 = vmatprep.mubr.bf16.mxu0 0
      %6536 = vmatmul.mubr.bf16.gmra.mrb[0].mxu0 %v6132
      %v6537 = vpop.f32.mrb[0].mxu0
      %v6538 = vadd.f32 %v6181, %v6537
      %v6539 = vpop.f32.mrb[0].mxu0
      %v6540 = vadd.f32 %v6185, %v6539
      %v6541 = vpop.f32.mrb[0].mxu0
      %v6542 = vadd.f32 %v6181, %v6541
      %v6543 = vpop.f32.mrb[0].mxu0
      %v6544 = vadd.f32 %v6185, %v6543
      %6545 = vmatprep.mubr.bf16.mxu0 0
      %6546 = vmatmul.mubr.bf16.gmra.mrb[0].mxu0 %v6133
      %v6547 = vpop.f32.mrb[0].mxu0
      %v6548 = vadd.f32 %v6181, %v6547
      %v6549 = vpop.f32.mrb[0].mxu0
      %v6550 = vadd.f32 %v6185, %v6549
      %v6551 = vpop.f32.mrb[0].mxu0
      %v6552 = vadd.f32 %v6181, %v6551
      %v6553 = vpop.f32.mrb[0].mxu0
      %v6554 = vadd.f32 %v6185, %v6553
      %6555 = vmatprep.mubr.bf16.mxu0 0
      %6556 = vmatmul.mubr.bf16.gmra.mrb[0].mxu0 %v6134
      %v6557 = vpop.f32.mrb[0].mxu0
      %v6558 = vadd.f32 %v6181, %v6557
      %v6559 = vpop.f32.mrb[0].mxu0
      %v6560 = vadd.f32 %v6185, %v6559
      %v6561 = vpop.f32.mrb[0].mxu0
      %v6562 = vadd.f32 %v6181, %v6561
      %v6563 = vpop.f32.mrb[0].mxu0
      %v6564 = vadd.f32 %v6185, %v6563
      %6565 = vmatprep.mubr.bf16.mxu0 0
      %6566 = vmatmul.mubr.bf16.gmra.mrb[0].mxu0 %v6135
      %v6567 = vpop.f32.mrb[0].mxu0
      %v6568 = vadd.f32 %v6181, %v6567
      %v6569 = vpop.f32.mrb[0].mxu0
      %v6570 = vadd.f32 %v6185, %v6569
      %v6571 = vpop.f32.mrb[0].mxu0
      %v6572 = vadd.f32 %v6181, %v6571
      %v6573 = vpop.f32.mrb[0].mxu0
      %v6574 = vadd.f32 %v6185, %v6573
      %6575 = vdwg.mxu0
      %v6576 = vmul.f32 %v6385, 0.5
      %v6577 = vmul.f32 %v6387, 0.5
      %v6578 = vmul.f32 %v6498, 0.5
      %v6579 = vmul.f32 %v6500, 0.5
      %v6580 = vmul.f32 %v6389, 0.5
      %v6581 = vmul.f32 %v6391, 0.5
      %v6582 = vmul.f32 %v6502, 0.5
      %v6583 = vmul.f32 %v6504, 0.5
      %v6584 = vmul.f32 %v6395, 0.5
      %v6585 = vmul.f32 %v6397, 0.5
      %v6586 = vmul.f32 %v6508, 0.5
      %v6587 = vmul.f32 %v6510, 0.5
      %v6588 = vmul.f32 %v6399, 0.5
      %v6589 = vmul.f32 %v6401, 0.5
      %v6590 = vmul.f32 %v6512, 0.5
      %v6591 = vmul.f32 %v6514, 0.5
      %v6592 = vmul.f32 %v6405, 0.5
      %v6593 = vmul.f32 %v6407, 0.5
      %v6594 = vmul.f32 %v6518, 0.5
      %v6595 = vmul.f32 %v6520, 0.5
      %v6596 = vmul.f32 %v6409, 0.5
      %v6597 = vmul.f32 %v6411, 0.5
      %v6598 = vmul.f32 %v6522, 0.5
      %v6599 = vmul.f32 %v6524, 0.5
      %v6600 = vmul.f32 %v6415, 0.5
      %v6601 = vmul.f32 %v6417, 0.5
      %v6602 = vmul.f32 %v6528, 0.5
      %v6603 = vmul.f32 %v6530, 0.5
      %v6604 = vmul.f32 %v6419, 0.5
      %v6605 = vmul.f32 %v6421, 0.5
      %v6606 = vmul.f32 %v6532, 0.5
      %v6607 = vmul.f32 %v6534, 0.5
      %v6608 = vmul.f32 %v6425, 0.5
      %v6609 = vmul.f32 %v6427, 0.5
      %v6610 = vmul.f32 %v6538, 0.5
      %v6611 = vmul.f32 %v6540, 0.5
      %v6612 = vmul.f32 %v6429, 0.5
      %v6613 = vmul.f32 %v6431, 0.5
      %v6614 = vmul.f32 %v6542, 0.5
      %v6615 = vmul.f32 %v6544, 0.5
      %v6616 = vmul.f32 %v6435, 0.5
      %v6617 = vmul.f32 %v6437, 0.5
      %v6618 = vmul.f32 %v6548, 0.5
      %v6619 = vmul.f32 %v6550, 0.5
      %v6620 = vmul.f32 %v6439, 0.5
      %v6621 = vmul.f32 %v6441, 0.5
      %v6622 = vmul.f32 %v6552, 0.5
      %v6623 = vmul.f32 %v6554, 0.5
      %v6624 = vmul.f32 %v6445, 0.5
      %v6625 = vmul.f32 %v6447, 0.5
      %v6626 = vmul.f32 %v6558, 0.5
      %v6627 = vmul.f32 %v6560, 0.5
      %v6628 = vmul.f32 %v6449, 0.5
      %v6629 = vmul.f32 %v6451, 0.5
      %v6630 = vmul.f32 %v6562, 0.5
      %v6631 = vmul.f32 %v6564, 0.5
      %v6632 = vmul.f32 %v6455, 0.5
      %v6633 = vmul.f32 %v6457, 0.5
      %v6634 = vmul.f32 %v6568, 0.5
      %v6635 = vmul.f32 %v6570, 0.5
      %v6636 = vmul.f32 %v6459, 0.5
      %v6637 = vmul.f32 %v6461, 0.5
      %v6638 = vmul.f32 %v6572, 0.5
      %v6639 = vmul.f32 %v6574, 0.5
      %v6640 = vmul.f32 %v6385, 0.044715
      %v6641 = vmul.f32 %v6387, 0.044715
      %v6642 = vmul.f32 %v6498, 0.044715
      %v6643 = vmul.f32 %v6500, 0.044715
      %v6644 = vmul.f32 %v6389, 0.044715
      %v6645 = vmul.f32 %v6391, 0.044715
      %v6646 = vmul.f32 %v6502, 0.044715
      %v6647 = vmul.f32 %v6504, 0.044715
      %v6648 = vmul.f32 %v6395, 0.044715
      %v6649 = vmul.f32 %v6397, 0.044715
      %v6650 = vmul.f32 %v6508, 0.044715
      %v6651 = vmul.f32 %v6510, 0.044715
      %v6652 = vmul.f32 %v6399, 0.044715
      %v6653 = vmul.f32 %v6401, 0.044715
      %v6654 = vmul.f32 %v6512, 0.044715
      %v6655 = vmul.f32 %v6514, 0.044715
      %v6656 = vmul.f32 %v6405, 0.044715
      %v6657 = vmul.f32 %v6407, 0.044715
      %v6658 = vmul.f32 %v6518, 0.044715
      %v6659 = vmul.f32 %v6520, 0.044715
      %v6660 = vmul.f32 %v6409, 0.044715
      %v6661 = vmul.f32 %v6411, 0.044715
      %v6662 = vmul.f32 %v6522, 0.044715
      %v6663 = vmul.f32 %v6524, 0.044715
      %v6664 = vmul.f32 %v6415, 0.044715
      %v6665 = vmul.f32 %v6417, 0.044715
      %v6666 = vmul.f32 %v6528, 0.044715
      %v6667 = vmul.f32 %v6530, 0.044715
      %v6668 = vmul.f32 %v6419, 0.044715
      %v6669 = vmul.f32 %v6421, 0.044715
      %v6670 = vmul.f32 %v6532, 0.044715
      %v6671 = vmul.f32 %v6534, 0.044715
      %v6672 = vmul.f32 %v6425, 0.044715
      %v6673 = vmul.f32 %v6427, 0.044715
      %v6674 = vmul.f32 %v6538, 0.044715
      %v6675 = vmul.f32 %v6540, 0.044715
      %v6676 = vmul.f32 %v6429, 0.044715
      %v6677 = vmul.f32 %v6431, 0.044715
      %v6678 = vmul.f32 %v6542, 0.044715
      %v6679 = vmul.f32 %v6544, 0.044715
      %v6680 = vmul.f32 %v6435, 0.044715
      %v6681 = vmul.f32 %v6437, 0.044715
      %v6682 = vmul.f32 %v6548, 0.044715
      %v6683 = vmul.f32 %v6550, 0.044715
      %v6684 = vmul.f32 %v6439, 0.044715
      %v6685 = vmul.f32 %v6441, 0.044715
      %v6686 = vmul.f32 %v6552, 0.044715
      %v6687 = vmul.f32 %v6554, 0.044715
      %v6688 = vmul.f32 %v6445, 0.044715
      %v6689 = vmul.f32 %v6447, 0.044715
      %v6690 = vmul.f32 %v6558, 0.044715
      %v6691 = vmul.f32 %v6560, 0.044715
      %v6692 = vmul.f32 %v6449, 0.044715
      %v6693 = vmul.f32 %v6451, 0.044715
      %v6694 = vmul.f32 %v6562, 0.044715
      %v6695 = vmul.f32 %v6564, 0.044715
      %v6696 = vmul.f32 %v6455, 0.044715
      %v6697 = vmul.f32 %v6457, 0.044715
      %v6698 = vmul.f32 %v6568, 0.044715
      %v6699 = vmul.f32 %v6570, 0.044715
      %v6700 = vmul.f32 %v6459, 0.044715
      %v6701 = vmul.f32 %v6461, 0.044715
      %v6702 = vmul.f32 %v6572, 0.044715
      %v6703 = vmul.f32 %v6574, 0.044715
      %v6704 = vmul.f32 %v6640, %v6385
      %v6705 = vmul.f32 %v6641, %v6387
      %v6706 = vmul.f32 %v6642, %v6498
      %v6707 = vmul.f32 %v6643, %v6500
      %v6708 = vmul.f32 %v6644, %v6389
      %v6709 = vmul.f32 %v6645, %v6391
      %v6710 = vmul.f32 %v6646, %v6502
      %v6711 = vmul.f32 %v6647, %v6504
      %v6712 = vmul.f32 %v6648, %v6395
      %v6713 = vmul.f32 %v6649, %v6397
      %v6714 = vmul.f32 %v6650, %v6508
      %v6715 = vmul.f32 %v6651, %v6510
      %v6716 = vmul.f32 %v6652, %v6399
      %v6717 = vmul.f32 %v6653, %v6401
      %v6718 = vmul.f32 %v6654, %v6512
      %v6719 = vmul.f32 %v6655, %v6514
      %v6720 = vmul.f32 %v6656, %v6405
      %v6721 = vmul.f32 %v6657, %v6407
      %v6722 = vmul.f32 %v6658, %v6518
      %v6723 = vmul.f32 %v6659, %v6520
      %v6724 = vmul.f32 %v6660, %v6409
      %v6725 = vmul.f32 %v6661, %v6411
      %v6726 = vmul.f32 %v6662, %v6522
      %v6727 = vmul.f32 %v6663, %v6524
      %v6728 = vmul.f32 %v6664, %v6415
      %v6729 = vmul.f32 %v6665, %v6417
      %v6730 = vmul.f32 %v6666, %v6528
      %v6731 = vmul.f32 %v6667, %v6530
      %v6732 = vmul.f32 %v6668, %v6419
      %v6733 = vmul.f32 %v6669, %v6421
      %v6734 = vmul.f32 %v6670, %v6532
      %v6735 = vmul.f32 %v6671, %v6534
      %v6736 = vmul.f32 %v6672, %v6425
      %v6737 = vmul.f32 %v6673, %v6427
      %v6738 = vmul.f32 %v6674, %v6538
      %v6739 = vmul.f32 %v6675, %v6540
      %v6740 = vmul.f32 %v6676, %v6429
      %v6741 = vmul.f32 %v6677, %v6431
      %v6742 = vmul.f32 %v6678, %v6542
      %v6743 = vmul.f32 %v6679, %v6544
      %v6744 = vmul.f32 %v6680, %v6435
      %v6745 = vmul.f32 %v6681, %v6437
      %v6746 = vmul.f32 %v6682, %v6548
      %v6747 = vmul.f32 %v6683, %v6550
      %v6748 = vmul.f32 %v6684, %v6439
      %v6749 = vmul.f32 %v6685, %v6441
      %v6750 = vmul.f32 %v6686, %v6552
      %v6751 = vmul.f32 %v6687, %v6554
      %v6752 = vmul.f32 %v6688, %v6445
      %v6753 = vmul.f32 %v6689, %v6447
      %v6754 = vmul.f32 %v6690, %v6558
      %v6755 = vmul.f32 %v6691, %v6560
      %v6756 = vmul.f32 %v6692, %v6449
      %v6757 = vmul.f32 %v6693, %v6451
      %v6758 = vmul.f32 %v6694, %v6562
      %v6759 = vmul.f32 %v6695, %v6564
      %v6760 = vmul.f32 %v6696, %v6455
      %v6761 = vmul.f32 %v6697, %v6457
      %v6762 = vmul.f32 %v6698, %v6568
      %v6763 = vmul.f32 %v6699, %v6570
      %v6764 = vmul.f32 %v6700, %v6459
      %v6765 = vmul.f32 %v6701, %v6461
      %v6766 = vmul.f32 %v6702, %v6572
      %v6767 = vmul.f32 %v6703, %v6574
      %v6768 = vmul.f32 %v6704, %v6385
      %v6769 = vmul.f32 %v6705, %v6387
      %v6770 = vmul.f32 %v6706, %v6498
      %v6771 = vmul.f32 %v6707, %v6500
      %v6772 = vmul.f32 %v6708, %v6389
      %v6773 = vmul.f32 %v6709, %v6391
      %v6774 = vmul.f32 %v6710, %v6502
      %v6775 = vmul.f32 %v6711, %v6504
      %v6776 = vmul.f32 %v6712, %v6395
      %v6777 = vmul.f32 %v6713, %v6397
      %v6778 = vmul.f32 %v6714, %v6508
      %v6779 = vmul.f32 %v6715, %v6510
      %v6780 = vmul.f32 %v6716, %v6399
      %v6781 = vmul.f32 %v6717, %v6401
      %v6782 = vmul.f32 %v6718, %v6512
      %v6783 = vmul.f32 %v6719, %v6514
      %v6784 = vmul.f32 %v6720, %v6405
      %v6785 = vmul.f32 %v6721, %v6407
      %v6786 = vmul.f32 %v6722, %v6518
      %v6787 = vmul.f32 %v6723, %v6520
      %v6788 = vmul.f32 %v6724, %v6409
      %v6789 = vmul.f32 %v6725, %v6411
      %v6790 = vmul.f32 %v6726, %v6522
      %v6791 = vmul.f32 %v6727, %v6524
      %v6792 = vmul.f32 %v6728, %v6415
      %v6793 = vmul.f32 %v6729, %v6417
      %v6794 = vmul.f32 %v6730, %v6528
      %v6795 = vmul.f32 %v6731, %v6530
      %v6796 = vmul.f32 %v6732, %v6419
      %v6797 = vmul.f32 %v6733, %v6421
      %v6798 = vmul.f32 %v6734, %v6532
      %v6799 = vmul.f32 %v6735, %v6534
      %v6800 = vmul.f32 %v6736, %v6425
      %v6801 = vmul.f32 %v6737, %v6427
      %v6802 = vmul.f32 %v6738, %v6538
      %v6803 = vmul.f32 %v6739, %v6540
      %v6804 = vmul.f32 %v6740, %v6429
      %v6805 = vmul.f32 %v6741, %v6431
      %v6806 = vmul.f32 %v6742, %v6542
      %v6807 = vmul.f32 %v6743, %v6544
      %v6808 = vmul.f32 %v6744, %v6435
      %v6809 = vmul.f32 %v6745, %v6437
      %v6810 = vmul.f32 %v6746, %v6548
      %v6811 = vmul.f32 %v6747, %v6550
      %v6812 = vmul.f32 %v6748, %v6439
      %v6813 = vmul.f32 %v6749, %v6441
      %v6814 = vmul.f32 %v6750, %v6552
      %v6815 = vmul.f32 %v6751, %v6554
      %v6816 = vmul.f32 %v6752, %v6445
      %v6817 = vmul.f32 %v6753, %v6447
      %v6818 = vmul.f32 %v6754, %v6558
      %v6819 = vmul.f32 %v6755, %v6560
      %v6820 = vmul.f32 %v6756, %v6449
      %v6821 = vmul.f32 %v6757, %v6451
      %v6822 = vmul.f32 %v6758, %v6562
      %v6823 = vmul.f32 %v6759, %v6564
      %v6824 = vmul.f32 %v6760, %v6455
      %v6825 = vmul.f32 %v6761, %v6457
      %v6826 = vmul.f32 %v6762, %v6568
      %v6827 = vmul.f32 %v6763, %v6570
      %v6828 = vmul.f32 %v6764, %v6459
      %v6829 = vmul.f32 %v6765, %v6461
      %v6830 = vmul.f32 %v6766, %v6572
      %v6831 = vmul.f32 %v6767, %v6574
      %v6832 = vadd.f32 %v6385, %v6768
      %v6833 = vadd.f32 %v6387, %v6769
      %v6834 = vadd.f32 %v6498, %v6770
      %v6835 = vadd.f32 %v6500, %v6771
      %v6836 = vadd.f32 %v6389, %v6772
      %v6837 = vadd.f32 %v6391, %v6773
      %v6838 = vadd.f32 %v6502, %v6774
      %v6839 = vadd.f32 %v6504, %v6775
      %v6840 = vadd.f32 %v6395, %v6776
      %v6841 = vadd.f32 %v6397, %v6777
      %v6842 = vadd.f32 %v6508, %v6778
      %v6843 = vadd.f32 %v6510, %v6779
      %v6844 = vadd.f32 %v6399, %v6780
      %v6845 = vadd.f32 %v6401, %v6781
      %v6846 = vadd.f32 %v6512, %v6782
      %v6847 = vadd.f32 %v6514, %v6783
      %v6848 = vadd.f32 %v6405, %v6784
      %v6849 = vadd.f32 %v6407, %v6785
      %v6850 = vadd.f32 %v6518, %v6786
      %v6851 = vadd.f32 %v6520, %v6787
      %v6852 = vadd.f32 %v6409, %v6788
      %v6853 = vadd.f32 %v6411, %v6789
      %v6854 = vadd.f32 %v6522, %v6790
      %v6855 = vadd.f32 %v6524, %v6791
      %v6856 = vadd.f32 %v6415, %v6792
      %v6857 = vadd.f32 %v6417, %v6793
      %v6858 = vadd.f32 %v6528, %v6794
      %v6859 = vadd.f32 %v6530, %v6795
      %v6860 = vadd.f32 %v6419, %v6796
      %v6861 = vadd.f32 %v6421, %v6797
      %v6862 = vadd.f32 %v6532, %v6798
      %v6863 = vadd.f32 %v6534, %v6799
      %v6864 = vadd.f32 %v6425, %v6800
      %v6865 = vadd.f32 %v6427, %v6801
      %v6866 = vadd.f32 %v6538, %v6802
      %v6867 = vadd.f32 %v6540, %v6803
      %v6868 = vadd.f32 %v6429, %v6804
      %v6869 = vadd.f32 %v6431, %v6805
      %v6870 = vadd.f32 %v6542, %v6806
      %v6871 = vadd.f32 %v6544, %v6807
      %v6872 = vadd.f32 %v6435, %v6808
      %v6873 = vadd.f32 %v6437, %v6809
      %v6874 = vadd.f32 %v6548, %v6810
      %v6875 = vadd.f32 %v6550, %v6811
      %v6876 = vadd.f32 %v6439, %v6812
      %v6877 = vadd.f32 %v6441, %v6813
      %v6878 = vadd.f32 %v6552, %v6814
      %v6879 = vadd.f32 %v6554, %v6815
      %v6880 = vadd.f32 %v6445, %v6816
      %v6881 = vadd.f32 %v6447, %v6817
      %v6882 = vadd.f32 %v6558, %v6818
      %v6883 = vadd.f32 %v6560, %v6819
      %v6884 = vadd.f32 %v6449, %v6820
      %v6885 = vadd.f32 %v6451, %v6821
      %v6886 = vadd.f32 %v6562, %v6822
      %v6887 = vadd.f32 %v6564, %v6823
      %v6888 = vadd.f32 %v6455, %v6824
      %v6889 = vadd.f32 %v6457, %v6825
      %v6890 = vadd.f32 %v6568, %v6826
      %v6891 = vadd.f32 %v6570, %v6827
      %v6892 = vadd.f32 %v6459, %v6828
      %v6893 = vadd.f32 %v6461, %v6829
      %v6894 = vadd.f32 %v6572, %v6830
      %v6895 = vadd.f32 %v6574, %v6831
      %v6896 = vmul.f32 %v6832, 0.7978846
      %v6897 = vmul.f32 %v6833, 0.7978846
      %v6898 = vmul.f32 %v6834, 0.7978846
      %v6899 = vmul.f32 %v6835, 0.7978846
      %v6900 = vmul.f32 %v6836, 0.7978846
      %v6901 = vmul.f32 %v6837, 0.7978846
      %v6902 = vmul.f32 %v6838, 0.7978846
      %v6903 = vmul.f32 %v6839, 0.7978846
      %v6904 = vmul.f32 %v6840, 0.7978846
      %v6905 = vmul.f32 %v6841, 0.7978846
      %v6906 = vmul.f32 %v6842, 0.7978846
      %v6907 = vmul.f32 %v6843, 0.7978846
      %v6908 = vmul.f32 %v6844, 0.7978846
      %v6909 = vmul.f32 %v6845, 0.7978846
      %v6910 = vmul.f32 %v6846, 0.7978846
      %v6911 = vmul.f32 %v6847, 0.7978846
      %v6912 = vmul.f32 %v6848, 0.7978846
      %v6913 = vmul.f32 %v6849, 0.7978846
      %v6914 = vmul.f32 %v6850, 0.7978846
      %v6915 = vmul.f32 %v6851, 0.7978846
      %v6916 = vmul.f32 %v6852, 0.7978846
      %v6917 = vmul.f32 %v6853, 0.7978846
      %v6918 = vmul.f32 %v6854, 0.7978846
      %v6919 = vmul.f32 %v6855, 0.7978846
      %v6920 = vmul.f32 %v6856, 0.7978846
      %v6921 = vmul.f32 %v6857, 0.7978846
      %v6922 = vmul.f32 %v6858, 0.7978846
      %v6923 = vmul.f32 %v6859, 0.7978846
      %v6924 = vmul.f32 %v6860, 0.7978846
      %v6925 = vmul.f32 %v6861, 0.7978846
      %v6926 = vmul.f32 %v6862, 0.7978846
      %v6927 = vmul.f32 %v6863, 0.7978846
      %v6928 = vmul.f32 %v6864, 0.7978846
      %v6929 = vmul.f32 %v6865, 0.7978846
      %v6930 = vmul.f32 %v6866, 0.7978846
      %v6931 = vmul.f32 %v6867, 0.7978846
      %v6932 = vmul.f32 %v6868, 0.7978846
      %v6933 = vmul.f32 %v6869, 0.7978846
      %v6934 = vmul.f32 %v6870, 0.7978846
      %v6935 = vmul.f32 %v6871, 0.7978846
      %v6936 = vmul.f32 %v6872, 0.7978846
      %v6937 = vmul.f32 %v6873, 0.7978846
      %v6938 = vmul.f32 %v6874, 0.7978846
      %v6939 = vmul.f32 %v6875, 0.7978846
      %v6940 = vmul.f32 %v6876, 0.7978846
      %v6941 = vmul.f32 %v6877, 0.7978846
      %v6942 = vmul.f32 %v6878, 0.7978846
      %v6943 = vmul.f32 %v6879, 0.7978846
      %v6944 = vmul.f32 %v6880, 0.7978846
      %v6945 = vmul.f32 %v6881, 0.7978846
      %v6946 = vmul.f32 %v6882, 0.7978846
      %v6947 = vmul.f32 %v6883, 0.7978846
      %v6948 = vmul.f32 %v6884, 0.7978846
      %v6949 = vmul.f32 %v6885, 0.7978846
      %v6950 = vmul.f32 %v6886, 0.7978846
      %v6951 = vmul.f32 %v6887, 0.7978846
      %v6952 = vmul.f32 %v6888, 0.7978846
      %v6953 = vmul.f32 %v6889, 0.7978846
      %v6954 = vmul.f32 %v6890, 0.7978846
      %v6955 = vmul.f32 %v6891, 0.7978846
      %v6956 = vmul.f32 %v6892, 0.7978846
      %v6957 = vmul.f32 %v6893, 0.7978846
      %v6958 = vmul.f32 %v6894, 0.7978846
      %v6959 = vmul.f32 %v6895, 0.7978846
      %v6960 = vtanh.pop %v6896
      %v6961 = vtanh.pop %v6897
      %v6962 = vtanh.pop %v6898
      %v6963 = vtanh.pop %v6899
      %v6964 = vtanh.pop %v6900
      %v6965 = vtanh.pop %v6901
      %v6966 = vtanh.pop %v6902
      %v6967 = vtanh.pop %v6903
      %v6968 = vtanh.pop %v6904
      %v6969 = vtanh.pop %v6905
      %v6970 = vtanh.pop %v6906
      %v6971 = vtanh.pop %v6907
      %v6972 = vtanh.pop %v6908
      %v6973 = vtanh.pop %v6909
      %v6974 = vtanh.pop %v6910
      %v6975 = vtanh.pop %v6911
      %v6976 = vtanh.pop %v6912
      %v6977 = vtanh.pop %v6913
      %v6978 = vtanh.pop %v6914
      %v6979 = vtanh.pop %v6915
      %v6980 = vtanh.pop %v6916
      %v6981 = vtanh.pop %v6917
      %v6982 = vtanh.pop %v6918
      %v6983 = vtanh.pop %v6919
      %v6984 = vtanh.pop %v6920
      %v6985 = vtanh.pop %v6921
      %v6986 = vtanh.pop %v6922
      %v6987 = vtanh.pop %v6923
      %v6988 = vtanh.pop %v6924
      %v6989 = vtanh.pop %v6925
      %v6990 = vtanh.pop %v6926
      %v6991 = vtanh.pop %v6927
      %v6992 = vtanh.pop %v6928
      %v6993 = vtanh.pop %v6929
      %v6994 = vtanh.pop %v6930
      %v6995 = vtanh.pop %v6931
      %v6996 = vtanh.pop %v6932
      %v6997 = vtanh.pop %v6933
      %v6998 = vtanh.pop %v6934
      %v6999 = vtanh.pop %v6935
      %v7000 = vtanh.pop %v6936
      %v7001 = vtanh.pop %v6937
      %v7002 = vtanh.pop %v6938
      %v7003 = vtanh.pop %v6939
      %v7004 = vtanh.pop %v6940
      %v7005 = vtanh.pop %v6941
      %v7006 = vtanh.pop %v6942
      %v7007 = vtanh.pop %v6943
      %v7008 = vtanh.pop %v6944
      %v7009 = vtanh.pop %v6945
      %v7010 = vtanh.pop %v6946
      %v7011 = vtanh.pop %v6947
      %v7012 = vtanh.pop %v6948
      %v7013 = vtanh.pop %v6949
      %v7014 = vtanh.pop %v6950
      %v7015 = vtanh.pop %v6951
      %v7016 = vtanh.pop %v6952
      %v7017 = vtanh.pop %v6953
      %v7018 = vtanh.pop %v6954
      %v7019 = vtanh.pop %v6955
      %v7020 = vtanh.pop %v6956
      %v7021 = vtanh.pop %v6957
      %v7022 = vtanh.pop %v6958
      %v7023 = vtanh.pop %v6959
      %v7024 = vadd.f32 %v6960, 1.0
      %v7025 = vadd.f32 %v6961, 1.0
      %v7026 = vadd.f32 %v6962, 1.0
      %v7027 = vadd.f32 %v6963, 1.0
      %v7028 = vadd.f32 %v6964, 1.0
      %v7029 = vadd.f32 %v6965, 1.0
      %v7030 = vadd.f32 %v6966, 1.0
      %v7031 = vadd.f32 %v6967, 1.0
      %v7032 = vadd.f32 %v6968, 1.0
      %v7033 = vadd.f32 %v6969, 1.0
      %v7034 = vadd.f32 %v6970, 1.0
      %v7035 = vadd.f32 %v6971, 1.0
      %v7036 = vadd.f32 %v6972, 1.0
      %v7037 = vadd.f32 %v6973, 1.0
      %v7038 = vadd.f32 %v6974, 1.0
      %v7039 = vadd.f32 %v6975, 1.0
      %v7040 = vadd.f32 %v6976, 1.0
      %v7041 = vadd.f32 %v6977, 1.0
      %v7042 = vadd.f32 %v6978, 1.0
      %v7043 = vadd.f32 %v6979, 1.0
      %v7044 = vadd.f32 %v6980, 1.0
      %v7045 = vadd.f32 %v6981, 1.0
      %v7046 = vadd.f32 %v6982, 1.0
      %v7047 = vadd.f32 %v6983, 1.0
      %v7048 = vadd.f32 %v6984, 1.0
      %v7049 = vadd.f32 %v6985, 1.0
      %v7050 = vadd.f32 %v6986, 1.0
      %v7051 = vadd.f32 %v6987, 1.0
      %v7052 = vadd.f32 %v6988, 1.0
      %v7053 = vadd.f32 %v6989, 1.0
      %v7054 = vadd.f32 %v6990, 1.0
      %v7055 = vadd.f32 %v6991, 1.0
      %v7056 = vadd.f32 %v6992, 1.0
      %v7057 = vadd.f32 %v6993, 1.0
      %v7058 = vadd.f32 %v6994, 1.0
      %v7059 = vadd.f32 %v6995, 1.0
      %v7060 = vadd.f32 %v6996, 1.0
      %v7061 = vadd.f32 %v6997, 1.0
      %v7062 = vadd.f32 %v6998, 1.0
      %v7063 = vadd.f32 %v6999, 1.0
      %v7064 = vadd.f32 %v7000, 1.0
      %v7065 = vadd.f32 %v7001, 1.0
      %v7066 = vadd.f32 %v7002, 1.0
      %v7067 = vadd.f32 %v7003, 1.0
      %v7068 = vadd.f32 %v7004, 1.0
      %v7069 = vadd.f32 %v7005, 1.0
      %v7070 = vadd.f32 %v7006, 1.0
      %v7071 = vadd.f32 %v7007, 1.0
      %v7072 = vadd.f32 %v7008, 1.0
      %v7073 = vadd.f32 %v7009, 1.0
      %v7074 = vadd.f32 %v7010, 1.0
      %v7075 = vadd.f32 %v7011, 1.0
      %v7076 = vadd.f32 %v7012, 1.0
      %v7077 = vadd.f32 %v7013, 1.0
      %v7078 = vadd.f32 %v7014, 1.0
      %v7079 = vadd.f32 %v7015, 1.0
      %v7080 = vadd.f32 %v7016, 1.0
      %v7081 = vadd.f32 %v7017, 1.0
      %v7082 = vadd.f32 %v7018, 1.0
      %v7083 = vadd.f32 %v7019, 1.0
      %v7084 = vadd.f32 %v7020, 1.0
      %v7085 = vadd.f32 %v7021, 1.0
      %v7086 = vadd.f32 %v7022, 1.0
      %v7087 = vadd.f32 %v7023, 1.0
      %v7088 = vmul.f32 %v6576, %v7024
      %v7089 = vmul.f32 %v6577, %v7025
      %v7090 = vmul.f32 %v6578, %v7026
      %v7091 = vmul.f32 %v6579, %v7027
      %v7092 = vmul.f32 %v6580, %v7028
      %v7093 = vmul.f32 %v6581, %v7029
      %v7094 = vmul.f32 %v6582, %v7030
      %v7095 = vmul.f32 %v6583, %v7031
      %v7096 = vmul.f32 %v6584, %v7032
      %v7097 = vmul.f32 %v6585, %v7033
      %v7098 = vmul.f32 %v6586, %v7034
      %v7099 = vmul.f32 %v6587, %v7035
      %v7100 = vmul.f32 %v6588, %v7036
      %v7101 = vmul.f32 %v6589, %v7037
      %v7102 = vmul.f32 %v6590, %v7038
      %v7103 = vmul.f32 %v6591, %v7039
      %v7104 = vmul.f32 %v6592, %v7040
      %v7105 = vmul.f32 %v6593, %v7041
      %v7106 = vmul.f32 %v6594, %v7042
      %v7107 = vmul.f32 %v6595, %v7043
      %v7108 = vmul.f32 %v6596, %v7044
      %v7109 = vmul.f32 %v6597, %v7045
      %v7110 = vmul.f32 %v6598, %v7046
      %v7111 = vmul.f32 %v6599, %v7047
      %v7112 = vmul.f32 %v6600, %v7048
      %v7113 = vmul.f32 %v6601, %v7049
      %v7114 = vmul.f32 %v6602, %v7050
      %v7115 = vmul.f32 %v6603, %v7051
      %v7116 = vmul.f32 %v6604, %v7052
      %v7117 = vmul.f32 %v6605, %v7053
      %v7118 = vmul.f32 %v6606, %v7054
      %v7119 = vmul.f32 %v6607, %v7055
      %v7120 = vmul.f32 %v6608, %v7056
      %v7121 = vmul.f32 %v6609, %v7057
      %v7122 = vmul.f32 %v6610, %v7058
      %v7123 = vmul.f32 %v6611, %v7059
      %v7124 = vmul.f32 %v6612, %v7060
      %v7125 = vmul.f32 %v6613, %v7061
      %v7126 = vmul.f32 %v6614, %v7062
      %v7127 = vmul.f32 %v6615, %v7063
      %v7128 = vmul.f32 %v6616, %v7064
      %v7129 = vmul.f32 %v6617, %v7065
      %v7130 = vmul.f32 %v6618, %v7066
      %v7131 = vmul.f32 %v6619, %v7067
      %v7132 = vmul.f32 %v6620, %v7068
      %v7133 = vmul.f32 %v6621, %v7069
      %v7134 = vmul.f32 %v6622, %v7070
      %v7135 = vmul.f32 %v6623, %v7071
      %v7136 = vmul.f32 %v6624, %v7072
      %v7137 = vmul.f32 %v6625, %v7073
      %v7138 = vmul.f32 %v6626, %v7074
      %v7139 = vmul.f32 %v6627, %v7075
      %v7140 = vmul.f32 %v6628, %v7076
      %v7141 = vmul.f32 %v6629, %v7077
      %v7142 = vmul.f32 %v6630, %v7078
      %v7143 = vmul.f32 %v6631, %v7079
      %v7144 = vmul.f32 %v6632, %v7080
      %v7145 = vmul.f32 %v6633, %v7081
      %v7146 = vmul.f32 %v6634, %v7082
      %v7147 = vmul.f32 %v6635, %v7083
      %v7148 = vmul.f32 %v6636, %v7084
      %v7149 = vmul.f32 %v6637, %v7085
      %v7150 = vmul.f32 %v6638, %v7086
      %v7151 = vmul.f32 %v6639, %v7087
      %v7152 = vpack.c.bf16 %v7092, %v7088
      %v7153 = vpack.c.bf16 %v7093, %v7089
      %v7154 = vpack.c.bf16 %v7094, %v7090
      %v7155 = vpack.c.bf16 %v7095, %v7091
      %v7156 = vpack.c.bf16 %v7100, %v7096
      %v7157 = vpack.c.bf16 %v7101, %v7097
      %v7158 = vpack.c.bf16 %v7102, %v7098
      %v7159 = vpack.c.bf16 %v7103, %v7099
      %v7160 = vpack.c.bf16 %v7108, %v7104
      %v7161 = vpack.c.bf16 %v7109, %v7105
      %v7162 = vpack.c.bf16 %v7110, %v7106
      %v7163 = vpack.c.bf16 %v7111, %v7107
      %v7164 = vpack.c.bf16 %v7116, %v7112
      %v7165 = vpack.c.bf16 %v7117, %v7113
      %v7166 = vpack.c.bf16 %v7118, %v7114
      %v7167 = vpack.c.bf16 %v7119, %v7115
      %v7168 = vpack.c.bf16 %v7124, %v7120
      %v7169 = vpack.c.bf16 %v7125, %v7121
      %v7170 = vpack.c.bf16 %v7126, %v7122
      %v7171 = vpack.c.bf16 %v7127, %v7123
      %v7172 = vpack.c.bf16 %v7132, %v7128
      %v7173 = vpack.c.bf16 %v7133, %v7129
      %v7174 = vpack.c.bf16 %v7134, %v7130
      %v7175 = vpack.c.bf16 %v7135, %v7131
      %v7176 = vpack.c.bf16 %v7140, %v7136
      %v7177 = vpack.c.bf16 %v7141, %v7137
      %v7178 = vpack.c.bf16 %v7142, %v7138
      %v7179 = vpack.c.bf16 %v7143, %v7139
      %v7180 = vpack.c.bf16 %v7148, %v7144
      %v7181 = vpack.c.bf16 %v7149, %v7145
      %v7182 = vpack.c.bf16 %v7150, %v7146
      %v7183 = vpack.c.bf16 %v7151, %v7147
      %v7184 = vld [vmem:[%s824] sm:$0xf]
      %v7185 = vld [vmem:[%s824 + $0x4] sm:$0xf]
      %v7186 = vld [vmem:[%s824 + $0x8] sm:$0xf]
      %v7187 = vld [vmem:[%s824 + $0xc] sm:$0xf]
      %v7188 = vld [vmem:[%s824 + $0x10] sm:$0xf]
      %v7189 = vld [vmem:[%s824 + $0x14] sm:$0xf]
      %v7190 = vld [vmem:[%s824 + $0x18] sm:$0xf]
      %v7191 = vld [vmem:[%s824 + $0x1c] sm:$0xf]
      %v7192 = vld [vmem:[%s824 + $0x20] sm:$0xf]
      %v7193 = vld [vmem:[%s824 + $0x24] sm:$0xf]
      %v7194 = vld [vmem:[%s824 + $0x28] sm:$0xf]
      %v7195 = vld [vmem:[%s824 + $0x2c] sm:$0xf]
      %v7196 = vld [vmem:[%s824 + $0x30] sm:$0xf]
      %v7197 = vld [vmem:[%s824 + $0x34] sm:$0xf]
      %v7198 = vld [vmem:[%s824 + $0x38] sm:$0xf]
      %v7199 = vld [vmem:[%s824 + $0x3c] sm:$0xf]
      %v7200 = vld [vmem:[%s824 + $0x40] sm:$0xf]
      %v7201 = vld [vmem:[%s824 + $0x44] sm:$0xf]
      %v7202 = vld [vmem:[%s824 + $0x48] sm:$0xf]
      %v7203 = vld [vmem:[%s824 + $0x4c] sm:$0xf]
      %v7204 = vld [vmem:[%s824 + $0x50] sm:$0xf]
      %v7205 = vld [vmem:[%s824 + $0x54] sm:$0xf]
      %v7206 = vld [vmem:[%s824 + $0x58] sm:$0xf]
      %v7207 = vld [vmem:[%s824 + $0x5c] sm:$0xf]
      %v7208 = vld [vmem:[%s824 + $0x60] sm:$0xf]
      %v7209 = vld [vmem:[%s824 + $0x64] sm:$0xf]
      %v7210 = vld [vmem:[%s824 + $0x68] sm:$0xf]
      %v7211 = vld [vmem:[%s824 + $0x6c] sm:$0xf]
      %v7212 = vld [vmem:[%s824 + $0x70] sm:$0xf]
      %v7213 = vld [vmem:[%s824 + $0x74] sm:$0xf]
      %v7214 = vld [vmem:[%s824 + $0x78] sm:$0xf]
      %v7215 = vld [vmem:[%s824 + $0x7c] sm:$0xf]
      %v7216 = vld [vmem:[%s824 + $0x80] sm:$0xf]
      %v7217 = vld [vmem:[%s824 + $0x84] sm:$0xf]
      %v7218 = vld [vmem:[%s824 + $0x88] sm:$0xf]
      %v7219 = vld [vmem:[%s824 + $0x8c] sm:$0xf]
      %v7220 = vld [vmem:[%s824 + $0x90] sm:$0xf]
      %v7221 = vld [vmem:[%s824 + $0x94] sm:$0xf]
      %v7222 = vld [vmem:[%s824 + $0x98] sm:$0xf]
      %v7223 = vld [vmem:[%s824 + $0x9c] sm:$0xf]
      %v7224 = vld [vmem:[%s824 + $0xa0] sm:$0xf]
      %v7225 = vld [vmem:[%s824 + $0xa4] sm:$0xf]
      %v7226 = vld [vmem:[%s824 + $0xa8] sm:$0xf]
      %v7227 = vld [vmem:[%s824 + $0xac] sm:$0xf]
      %v7228 = vld [vmem:[%s824 + $0xb0] sm:$0xf]
      %v7229 = vld [vmem:[%s824 + $0xb4] sm:$0xf]
      %v7230 = vld [vmem:[%s824 + $0xb8] sm:$0xf]
      %v7231 = vld [vmem:[%s824 + $0xbc] sm:$0xf]
      %v7232 = vld [vmem:[%s824 + $0xc0] sm:$0xf]
      %v7233 = vld [vmem:[%s824 + $0xc4] sm:$0xf]
      %v7234 = vld [vmem:[%s824 + $0xc8] sm:$0xf]
      %v7235 = vld [vmem:[%s824 + $0xcc] sm:$0xf]
      %v7236 = vld [vmem:[%s824 + $0xd0] sm:$0xf]
      %v7237 = vld [vmem:[%s824 + $0xd4] sm:$0xf]
      %v7238 = vld [vmem:[%s824 + $0xd8] sm:$0xf]
      %v7239 = vld [vmem:[%s824 + $0xdc] sm:$0xf]
      %v7240 = vld [vmem:[%s824 + $0xe0] sm:$0xf]
      %v7241 = vld [vmem:[%s824 + $0xe4] sm:$0xf]
      %v7242 = vld [vmem:[%s824 + $0xe8] sm:$0xf]
      %v7243 = vld [vmem:[%s824 + $0xec] sm:$0xf]
      %v7244 = vld [vmem:[%s824 + $0xf0] sm:$0xf]
      %v7245 = vld [vmem:[%s824 + $0xf4] sm:$0xf]
      %v7246 = vld [vmem:[%s824 + $0xf8] sm:$0xf]
      %v7247 = vld [vmem:[%s824 + $0xfc] sm:$0xf]
      %v7312 = vunpack.c.l.b16 %v7184
      %v7313 = vunpack.c.l.b16 %v7185
      %v7314 = vunpack.c.l.b16 %v7186
      %v7315 = vunpack.c.l.b16 %v7187
      %v7316 = vunpack.c.l.b16 %v7188
      %v7317 = vunpack.c.l.b16 %v7189
      %v7318 = vunpack.c.l.b16 %v7190
      %v7319 = vunpack.c.l.b16 %v7191
      %v7320 = vunpack.c.l.b16 %v7192
      %v7321 = vunpack.c.l.b16 %v7193
      %v7322 = vunpack.c.l.b16 %v7194
      %v7323 = vunpack.c.l.b16 %v7195
      %v7324 = vunpack.c.l.b16 %v7196
      %v7325 = vunpack.c.l.b16 %v7197
      %v7326 = vunpack.c.l.b16 %v7198
      %v7327 = vunpack.c.l.b16 %v7199
      %v7328 = vunpack.c.l.b16 %v7200
      %v7329 = vunpack.c.l.b16 %v7201
      %v7330 = vunpack.c.l.b16 %v7202
      %v7331 = vunpack.c.l.b16 %v7203
      %v7332 = vunpack.c.l.b16 %v7204
      %v7333 = vunpack.c.l.b16 %v7205
      %v7334 = vunpack.c.l.b16 %v7206
      %v7335 = vunpack.c.l.b16 %v7207
      %v7336 = vunpack.c.l.b16 %v7208
      %v7337 = vunpack.c.l.b16 %v7209
      %v7338 = vunpack.c.l.b16 %v7210
      %v7339 = vunpack.c.l.b16 %v7211
      %v7340 = vunpack.c.l.b16 %v7212
      %v7341 = vunpack.c.l.b16 %v7213
      %v7342 = vunpack.c.l.b16 %v7214
      %v7343 = vunpack.c.l.b16 %v7215
      %v7344 = vunpack.c.l.b16 %v7216
      %v7345 = vunpack.c.l.b16 %v7217
      %v7346 = vunpack.c.l.b16 %v7218
      %v7347 = vunpack.c.l.b16 %v7219
      %v7348 = vunpack.c.l.b16 %v7220
      %v7349 = vunpack.c.l.b16 %v7221
      %v7350 = vunpack.c.l.b16 %v7222
      %v7351 = vunpack.c.l.b16 %v7223
      %v7352 = vunpack.c.l.b16 %v7224
      %v7353 = vunpack.c.l.b16 %v7225
      %v7354 = vunpack.c.l.b16 %v7226
      %v7355 = vunpack.c.l.b16 %v7227
      %v7356 = vunpack.c.l.b16 %v7228
      %v7357 = vunpack.c.l.b16 %v7229
      %v7358 = vunpack.c.l.b16 %v7230
      %v7359 = vunpack.c.l.b16 %v7231
      %v7360 = vunpack.c.l.b16 %v7232
      %v7361 = vunpack.c.l.b16 %v7233
      %v7362 = vunpack.c.l.b16 %v7234
      %v7363 = vunpack.c.l.b16 %v7235
      %v7364 = vunpack.c.l.b16 %v7236
      %v7365 = vunpack.c.l.b16 %v7237
      %v7366 = vunpack.c.l.b16 %v7238
      %v7367 = vunpack.c.l.b16 %v7239
      %v7368 = vunpack.c.l.b16 %v7240
      %v7369 = vunpack.c.l.b16 %v7241
      %v7370 = vunpack.c.l.b16 %v7242
      %v7371 = vunpack.c.l.b16 %v7243
      %v7372 = vunpack.c.l.b16 %v7244
      %v7373 = vunpack.c.l.b16 %v7245
      %v7374 = vunpack.c.l.b16 %v7246
      %v7375 = vunpack.c.l.b16 %v7247
      %v7376 = vpack.c.b16 %v7313, %v7312
      %v7377 = vpack.c.b16 %v7315, %v7314
      %v7378 = vpack.c.b16 %v7317, %v7316
      %v7379 = vpack.c.b16 %v7319, %v7318
      %v7380 = vpack.c.b16 %v7321, %v7320
      %v7381 = vpack.c.b16 %v7323, %v7322
      %v7382 = vpack.c.b16 %v7325, %v7324
      %v7383 = vpack.c.b16 %v7327, %v7326
      %v7384 = vpack.c.b16 %v7329, %v7328
      %v7385 = vpack.c.b16 %v7331, %v7330
      %v7386 = vpack.c.b16 %v7333, %v7332
      %v7387 = vpack.c.b16 %v7335, %v7334
      %v7388 = vpack.c.b16 %v7337, %v7336
      %v7389 = vpack.c.b16 %v7339, %v7338
      %v7390 = vpack.c.b16 %v7341, %v7340
      %v7391 = vpack.c.b16 %v7343, %v7342
      %v7392 = vpack.c.b16 %v7345, %v7344
      %v7393 = vpack.c.b16 %v7347, %v7346
      %v7394 = vpack.c.b16 %v7349, %v7348
      %v7395 = vpack.c.b16 %v7351, %v7350
      %v7396 = vpack.c.b16 %v7353, %v7352
      %v7397 = vpack.c.b16 %v7355, %v7354
      %v7398 = vpack.c.b16 %v7357, %v7356
      %v7399 = vpack.c.b16 %v7359, %v7358
      %v7400 = vpack.c.b16 %v7361, %v7360
      %v7401 = vpack.c.b16 %v7363, %v7362
      %v7402 = vpack.c.b16 %v7365, %v7364
      %v7403 = vpack.c.b16 %v7367, %v7366
      %v7404 = vpack.c.b16 %v7369, %v7368
      %v7405 = vpack.c.b16 %v7371, %v7370
      %v7406 = vpack.c.b16 %v7373, %v7372
      %v7407 = vpack.c.b16 %v7375, %v7374
      %7440 = vmatprep.subr.bf16.mxu0 0
      %7441 = vmatpush1.bf16.msra.mxu0 %v7376
      %7442 = vmatprep.subr.bf16.mxu0 0
      %7443 = vmatpush1.bf16.msra.mxu0 %v7377
      %7444 = vmatprep.subr.bf16.mxu0 0
      %7445 = vmatpush1.bf16.msra.mxu0 %v7378
      %7446 = vmatprep.subr.bf16.mxu0 0
      %7447 = vmatpush1.bf16.msra.mxu0 %v7379
      %7448 = vmatprep.subr.bf16.mxu0 0
      %7449 = vmatpush1.bf16.msra.mxu0 %v7380
      %7450 = vmatprep.subr.bf16.mxu0 0
      %7451 = vmatpush1.bf16.msra.mxu0 %v7381
      %7452 = vmatprep.subr.bf16.mxu0 0
      %7453 = vmatpush1.bf16.msra.mxu0 %v7382
      %7454 = vmatprep.subr.bf16.mxu0 0
      %7455 = vmatpush1.bf16.msra.mxu0 %v7383
      %7456 = vmatprep.subr.bf16.mxu0 0
      %7457 = vmatpush1.bf16.msra.mxu0 %v7384
      %7458 = vmatprep.subr.bf16.mxu0 0
      %7459 = vmatpush1.bf16.msra.mxu0 %v7385
      %7460 = vmatprep.subr.bf16.mxu0 0
      %7461 = vmatpush1.bf16.msra.mxu0 %v7386
      %7462 = vmatprep.subr.bf16.mxu0 0
      %7463 = vmatpush1.bf16.msra.mxu0 %v7387
      %7464 = vmatprep.subr.bf16.mxu0 0
      %7465 = vmatpush1.bf16.msra.mxu0 %v7388
      %7466 = vmatprep.subr.bf16.mxu0 0
      %7467 = vmatpush1.bf16.msra.mxu0 %v7389
      %7468 = vmatprep.subr.bf16.mxu0 0
      %7469 = vmatpush1.bf16.msra.mxu0 %v7390
      %7470 = vmatprep.subr.bf16.mxu0 0
      %7471 = vmatpush1.bf16.msra.mxu0 %v7391
      %7472 = vmatprep.mubr.bf16.mxu0 %v7153
      %7473 = vmatmul.mubr.bf16.gmra.mrb[0].mxu0 %v7152
      %v7474 = vpop.f32.mrb[0].mxu0
      %v7475 = vadd.f32 0.0, %v7474
      %v7476 = vpop.f32.mrb[0].mxu0
      %v7477 = vpop.f32.mrb[0].mxu0
      %v7478 = vadd.f32 0.0, %v7477
      %v7479 = vpop.f32.mrb[0].mxu0
      %7480 = vmatprep.mubr.bf16.mxu0 %v7157
      %7481 = vmatmul.mubr.bf16.gmra.mrb[0].mxu0 %v7156
      %v7482 = vpop.f32.mrb[0].mxu0
      %v7483 = vadd.f32 0.0, %v7482
      %v7484 = vpop.f32.mrb[0].mxu0
      %v7485 = vpop.f32.mrb[0].mxu0
      %v7486 = vadd.f32 0.0, %v7485
      %v7487 = vpop.f32.mrb[0].mxu0
      %7488 = vmatprep.mubr.bf16.mxu0 %v7161
      %7489 = vmatmul.mubr.bf16.gmra.mrb[0].mxu0 %v7160
      %v7490 = vpop.f32.mrb[0].mxu0
      %v7491 = vadd.f32 0.0, %v7490
      %v7492 = vpop.f32.mrb[0].mxu0
      %v7493 = vpop.f32.mrb[0].mxu0
      %v7494 = vadd.f32 0.0, %v7493
      %v7495 = vpop.f32.mrb[0].mxu0
      %7496 = vmatprep.mubr.bf16.mxu0 %v7165
      %7497 = vmatmul.mubr.bf16.gmra.mrb[0].mxu0 %v7164
      %v7498 = vpop.f32.mrb[0].mxu0
      %v7499 = vadd.f32 0.0, %v7498
      %v7500 = vpop.f32.mrb[0].mxu0
      %v7501 = vpop.f32.mrb[0].mxu0
      %v7502 = vadd.f32 0.0, %v7501
      %v7503 = vpop.f32.mrb[0].mxu0
      %7504 = vmatprep.mubr.bf16.mxu0 %v7169
      %7505 = vmatmul.mubr.bf16.gmra.mrb[0].mxu0 %v7168
      %v7506 = vpop.f32.mrb[0].mxu0
      %v7507 = vadd.f32 0.0, %v7506
      %v7508 = vpop.f32.mrb[0].mxu0
      %v7509 = vpop.f32.mrb[0].mxu0
      %v7510 = vadd.f32 0.0, %v7509
      %v7511 = vpop.f32.mrb[0].mxu0
      %7512 = vmatprep.mubr.bf16.mxu0 %v7173
      %7513 = vmatmul.mubr.bf16.gmra.mrb[0].mxu0 %v7172
      %v7514 = vpop.f32.mrb[0].mxu0
      %v7515 = vadd.f32 0.0, %v7514
      %v7516 = vpop.f32.mrb[0].mxu0
      %v7517 = vpop.f32.mrb[0].mxu0
      %v7518 = vadd.f32 0.0, %v7517
      %v7519 = vpop.f32.mrb[0].mxu0
      %7520 = vmatprep.mubr.bf16.mxu0 %v7177
      %7521 = vmatmul.mubr.bf16.gmra.mrb[0].mxu0 %v7176
      %v7522 = vpop.f32.mrb[0].mxu0
      %v7523 = vadd.f32 0.0, %v7522
      %v7524 = vpop.f32.mrb[0].mxu0
      %v7525 = vpop.f32.mrb[0].mxu0
      %v7526 = vadd.f32 0.0, %v7525
      %v7527 = vpop.f32.mrb[0].mxu0
      %7528 = vmatprep.mubr.bf16.mxu0 %v7181
      %7529 = vmatmul.mubr.bf16.gmra.mrb[0].mxu0 %v7180
      %v7530 = vpop.f32.mrb[0].mxu0
      %v7531 = vadd.f32 0.0, %v7530
      %v7532 = vpop.f32.mrb[0].mxu0
      %v7533 = vpop.f32.mrb[0].mxu0
      %v7534 = vadd.f32 0.0, %v7533
      %v7535 = vpop.f32.mrb[0].mxu0
      %7536 = vdwg.mxu0
      %7537 = vmatprep.subr.bf16.mxu0 0
      %7538 = vmatpush1.bf16.msra.mxu0 %v7392
      %7539 = vmatprep.subr.bf16.mxu0 0
      %7540 = vmatpush1.bf16.msra.mxu0 %v7393
      %7541 = vmatprep.subr.bf16.mxu0 0
      %7542 = vmatpush1.bf16.msra.mxu0 %v7394
      %7543 = vmatprep.subr.bf16.mxu0 0
      %7544 = vmatpush1.bf16.msra.mxu0 %v7395
      %7545 = vmatprep.subr.bf16.mxu0 0
      %7546 = vmatpush1.bf16.msra.mxu0 %v7396
      %7547 = vmatprep.subr.bf16.mxu0 0
      %7548 = vmatpush1.bf16.msra.mxu0 %v7397
      %7549 = vmatprep.subr.bf16.mxu0 0
      %7550 = vmatpush1.bf16.msra.mxu0 %v7398
      %7551 = vmatprep.subr.bf16.mxu0 0
      %7552 = vmatpush1.bf16.msra.mxu0 %v7399
      %7553 = vmatprep.subr.bf16.mxu0 0
      %7554 = vmatpush1.bf16.msra.mxu0 %v7400
      %7555 = vmatprep.subr.bf16.mxu0 0
      %7556 = vmatpush1.bf16.msra.mxu0 %v7401
      %7557 = vmatprep.subr.bf16.mxu0 0
      %7558 = vmatpush1.bf16.msra.mxu0 %v7402
      %7559 = vmatprep.subr.bf16.mxu0 0
      %7560 = vmatpush1.bf16.msra.mxu0 %v7403
      %7561 = vmatprep.subr.bf16.mxu0 0
      %7562 = vmatpush1.bf16.msra.mxu0 %v7404
      %7563 = vmatprep.subr.bf16.mxu0 0
      %7564 = vmatpush1.bf16.msra.mxu0 %v7405
      %7565 = vmatprep.subr.bf16.mxu0 0
      %7566 = vmatpush1.bf16.msra.mxu0 %v7406
      %7567 = vmatprep.subr.bf16.mxu0 0
      %7568 = vmatpush1.bf16.msra.mxu0 %v7407
      %7569 = vmatprep.mubr.bf16.mxu0 %v7155
      %7570 = vmatmul.mubr.bf16.gmra.mrb[0].mxu0 %v7154
      %v7571 = vpop.f32.mrb[0].mxu0
      %v7572 = vadd.f32 %v7475, %v7571
      %v7573 = vpop.f32.mrb[0].mxu0
      %v7574 = vpop.f32.mrb[0].mxu0
      %v7575 = vadd.f32 %v7478, %v7574
      %v7576 = vpop.f32.mrb[0].mxu0
      %7577 = vmatprep.mubr.bf16.mxu0 %v7159
      %7578 = vmatmul.mubr.bf16.gmra.mrb[0].mxu0 %v7158
      %v7579 = vpop.f32.mrb[0].mxu0
      %v7580 = vadd.f32 %v7483, %v7579
      %v7581 = vpop.f32.mrb[0].mxu0
      %v7582 = vpop.f32.mrb[0].mxu0
      %v7583 = vadd.f32 %v7486, %v7582
      %v7584 = vpop.f32.mrb[0].mxu0
      %7585 = vmatprep.mubr.bf16.mxu0 %v7163
      %7586 = vmatmul.mubr.bf16.gmra.mrb[0].mxu0 %v7162
      %v7587 = vpop.f32.mrb[0].mxu0
      %v7588 = vadd.f32 %v7491, %v7587
      %v7589 = vpop.f32.mrb[0].mxu0
      %v7590 = vpop.f32.mrb[0].mxu0
      %v7591 = vadd.f32 %v7494, %v7590
      %v7592 = vpop.f32.mrb[0].mxu0
      %7593 = vmatprep.mubr.bf16.mxu0 %v7167
      %7594 = vmatmul.mubr.bf16.gmra.mrb[0].mxu0 %v7166
      %v7595 = vpop.f32.mrb[0].mxu0
      %v7596 = vadd.f32 %v7499, %v7595
      %v7597 = vpop.f32.mrb[0].mxu0
      %v7598 = vpop.f32.mrb[0].mxu0
      %v7599 = vadd.f32 %v7502, %v7598
      %v7600 = vpop.f32.mrb[0].mxu0
      %7601 = vmatprep.mubr.bf16.mxu0 %v7171
      %7602 = vmatmul.mubr.bf16.gmra.mrb[0].mxu0 %v7170
      %v7603 = vpop.f32.mrb[0].mxu0
      %v7604 = vadd.f32 %v7507, %v7603
      %v7605 = vpop.f32.mrb[0].mxu0
      %v7606 = vpop.f32.mrb[0].mxu0
      %v7607 = vadd.f32 %v7510, %v7606
      %v7608 = vpop.f32.mrb[0].mxu0
      %7609 = vmatprep.mubr.bf16.mxu0 %v7175
      %7610 = vmatmul.mubr.bf16.gmra.mrb[0].mxu0 %v7174
      %v7611 = vpop.f32.mrb[0].mxu0
      %v7612 = vadd.f32 %v7515, %v7611
      %v7613 = vpop.f32.mrb[0].mxu0
      %v7614 = vpop.f32.mrb[0].mxu0
      %v7615 = vadd.f32 %v7518, %v7614
      %v7616 = vpop.f32.mrb[0].mxu0
      %7617 = vmatprep.mubr.bf16.mxu0 %v7179
      %7618 = vmatmul.mubr.bf16.gmra.mrb[0].mxu0 %v7178
      %v7619 = vpop.f32.mrb[0].mxu0
      %v7620 = vadd.f32 %v7523, %v7619
      %v7621 = vpop.f32.mrb[0].mxu0
      %v7622 = vpop.f32.mrb[0].mxu0
      %v7623 = vadd.f32 %v7526, %v7622
      %v7624 = vpop.f32.mrb[0].mxu0
      %7625 = vmatprep.mubr.bf16.mxu0 %v7183
      %7626 = vmatmul.mubr.bf16.gmra.mrb[0].mxu0 %v7182
      %v7627 = vpop.f32.mrb[0].mxu0
      %v7628 = vadd.f32 %v7531, %v7627
      %v7629 = vpop.f32.mrb[0].mxu0
      %v7630 = vpop.f32.mrb[0].mxu0
      %v7631 = vadd.f32 %v7534, %v7630
      %v7632 = vpop.f32.mrb[0].mxu0
      %7633 = vdwg.mxu0
      %v7634 = vadd.f32 %v5890, %v7572
      %v7635 = vadd.f32 %v5891, %v7575
      %v7636 = vadd.f32 %v5892, %v7580
      %v7637 = vadd.f32 %v5893, %v7583
      %v7638 = vadd.f32 %v5894, %v7588
      %v7639 = vadd.f32 %v5895, %v7591
      %v7640 = vadd.f32 %v5896, %v7596
      %v7641 = vadd.f32 %v5897, %v7599
      %v7642 = vadd.f32 %v5898, %v7604
      %v7643 = vadd.f32 %v5899, %v7607
      %v7644 = vadd.f32 %v5900, %v7612
      %v7645 = vadd.f32 %v5901, %v7615
      %v7646 = vadd.f32 %v5902, %v7620
      %v7647 = vadd.f32 %v5903, %v7623
      %v7648 = vadd.f32 %v5904, %v7628
      %v7649 = vadd.f32 %v5905, %v7631
      %v7650 = vld [vmem:[%s827] sm:$0x1]
      %v7652 = vlaneseq
      %v7653 = vshrl.u32 %v7652, 7
      %v7654 = vsub.s32 0, %v7653
      %v7655 = vrot.slane %v7650, %v7654
      %v7657 = vadd.f32 %v7634, %v7655
      %v7658 = vadd.f32 %v7635, %v7655
      %v7659 = vadd.f32 %v7636, %v7655
      %v7660 = vadd.f32 %v7637, %v7655
      %v7661 = vadd.f32 %v7638, %v7655
      %v7662 = vadd.f32 %v7639, %v7655
      %v7663 = vadd.f32 %v7640, %v7655
      %v7664 = vadd.f32 %v7641, %v7655
      %v7665 = vadd.f32 %v7642, %v7655
      %v7666 = vadd.f32 %v7643, %v7655
      %v7667 = vadd.f32 %v7644, %v7655
      %v7668 = vadd.f32 %v7645, %v7655
      %v7669 = vadd.f32 %v7646, %v7655
      %v7670 = vadd.f32 %v7647, %v7655
      %v7671 = vadd.f32 %v7648, %v7655
      %v7672 = vadd.f32 %v7649, %v7655
      %7673 = vst [vmem:[%s832] sm:$0xff] %v7657
      %7674 = vst [vmem:[%s832 + $0x8] sm:$0xff] %v7658
      %7675 = vst [vmem:[%s832 + $0x10] sm:$0xff] %v7659
      %7676 = vst [vmem:[%s832 + $0x18] sm:$0xff] %v7660
      %7677 = vst [vmem:[%s832 + $0x20] sm:$0xff] %v7661
      %7678 = vst [vmem:[%s832 + $0x28] sm:$0xff] %v7662
      %7679 = vst [vmem:[%s832 + $0x30] sm:$0xff] %v7663
      %7680 = vst [vmem:[%s832 + $0x38] sm:$0xff] %v7664
      %7681 = vst [vmem:[%s832 + $0x40] sm:$0xff] %v7665
      %7682 = vst [vmem:[%s832 + $0x48] sm:$0xff] %v7666
      %7683 = vst [vmem:[%s832 + $0x50] sm:$0xff] %v7667
      %7684 = vst [vmem:[%s832 + $0x58] sm:$0xff] %v7668
      %7685 = vst [vmem:[%s832 + $0x60] sm:$0xff] %v7669
      %7686 = vst [vmem:[%s832 + $0x68] sm:$0xff] %v7670
      %7687 = vst [vmem:[%s832 + $0x70] sm:$0xff] %v7671
      %7688 = vst [vmem:[%s832 + $0x78] sm:$0xff] %v7672
      %p7689 = scmp.lt.s32.totalorder %s32, 3
      %s7690 = scalar_select %p7689, %s32, 3
      %s7691 = smul.addr %s7690, 16
      %s7692 = smul.addr %s7691, 8
      %s7693 = scalar_lea.vmem %s17, %s7692
      // Predicated region
      $region93: #{_lambda_.2} parent=87 // pred_check
        %p7694 = pneg %p500
      $region94: #{_lambda_.2} parent=87 // pred_check_branch
        %7696 = sbr.rel (%p7694) target = $region96
      $region95: #{_lambda_.2} parent=87 // pred_region
        _
      $region96: #{_lambda_.2} parent=87 // pred_fallthru
        _
    $region88: #{_lambda_.2} parent=5 // pred_fallthru
      _
    %p7697 = scmp.le.s32.totalorder 2, %s23
    // Predicated region
    $region97: #{_lambda_.2} parent=5 // pred_check
      %p7698 = pneg %p7697
    $region98: #{_lambda_.2} parent=5 // pred_check_branch
      %7700 = sbr.rel (%p7698) target = $region100
    $region99: #{_lambda_.2} parent=5 // pred_region
      %s7701 = ssub.s32 %s23, 2
      // Predicated region
      $region101: #{_lambda_.2} parent=99 // pred_check
        %p7702 = pneg %p506
      $region102: #{_lambda_.2} parent=99 // pred_check_branch
        %7704 = sbr.rel (%p7702) target = $region104
      $region103: #{_lambda_.2} parent=99 // pred_region
        %p7705 = scmp.lt.s32.totalorder %s34, 3
        %s7706 = scalar_select %p7705, %s34, 3
        %s7707 = smul.addr %s7706, 16
        %s7708 = smul.addr %s7707, 8
        %s7709 = scalar_lea.vmem %s17, %s7708
      $region104: #{_lambda_.2} parent=99 // pred_fallthru
        _
    $region100: #{_lambda_.2} parent=5 // pred_fallthru
      _
  $region6: #{_lambda_.2} parent=0 // loop_footer
    %s27 = sadd.s32 1, %s23
  $region7: #{_lambda_.2} parent=0 // loop_footer_branch
    %22 = sbr.rel target = $region3
  $region8: #{_lambda_.2} parent=0 // loop_exit
    _

</llo_original>
